<compile_context>
chip_gen: v7x
topology: tpu7x:2x2x1
jax: 0.10.0
libtpu: 0.0.40
codegen_flags: <defaults>
</compile_context>

<pallas_src>
import functools

import jax
import jax.numpy as jnp
import numpy as np
from jax.experimental import pallas as pl
from jax.experimental.pallas import tpu as pltpu

EPS = 1e-5


# ---------------------------------------------------------------------------
# VMEM budget / tile selection
# ---------------------------------------------------------------------------
def _vmem_limit_bytes():
    """Per-generation scoped-VMEM cap (v5e/v6e: 128 MiB physical, v7x: 64 MiB)."""
    cap = 64 * 1024 * 1024
    try:
        cap = int(pltpu.get_tpu_info().vmem_capacity_bytes)
    except Exception:
        pass
    return max(32 * 1024 * 1024, min((cap * 3) // 4, 100 * 1024 * 1024))


def _pick_row_tile(hw, bytes_per_row, budget, max_rows=None):
    """Largest row tile dividing hw that is a multiple of 128 (lane-aligned) or
    the whole image, such that ~4x (double-buffered in+out blocks) fits budget."""
    cands = [t for t in range(hw, 0, -1) if hw % t == 0 and (t == hw or t % 128 == 0)]
    pool = [t for t in cands if max_rows is None or t <= max_rows] or [cands[-1]]
    for t in pool:
        if 4 * t * bytes_per_row <= budget:
            return t
    return pool[-1]


# ---------------------------------------------------------------------------
# Shared in-kernel helper: BN-stats accumulation + final scale/shift folding
# ---------------------------------------------------------------------------
def _accumulate_and_finalize_bn(y_f32, g_ref, b_ref, ss_ref, sum_ref, sq_ref,
                                *, is_first, is_last, inv_n, eps):
    """Accumulate per-channel sum / sumsq of the f32 activation tile; on the last
    grid step fold batch-stat BN into a per-channel affine ss = [scale; shift]."""

    @pl.when(is_first)
    def _init():
        sum_ref[...] = jnp.zeros_like(sum_ref)
        sq_ref[...] = jnp.zeros_like(sq_ref)

    sum_ref[...] += jnp.sum(y_f32, axis=0, keepdims=True)
    sq_ref[...] += jnp.sum(y_f32 * y_f32, axis=0, keepdims=True)

    @pl.when(is_last)
    def _finalize():
        mean = sum_ref[...] * inv_n
        # Biased (training-mode) variance.
        # TODO(synk): E[x^2]-E[x]^2 in f32 can lose precision for very large
        #             N*H*W; switch to a compensated accumulation if needed.
        var = sq_ref[...] * inv_n - mean * mean
        scale = g_ref[...] * jax.lax.rsqrt(var + eps)
        shift = b_ref[...] - mean * scale
        ss_ref[...] = jnp.concatenate([scale, shift], axis=0)  # (2, C): [scale; shift]


# ---------------------------------------------------------------------------
# Kernel bodies
# ---------------------------------------------------------------------------
def _conv1_nchw_stats_kernel(x_ref, w_ref, g_ref, b_ref, y_ref, ss_ref,
                             sum_ref, sq_ref, *, inv_n, eps):
    """Stage 1: conv1 (1x1) fed straight from the NCHW input tile
    (in-kernel transpose, no standalone layout pass) + BN1 statistics."""
    xt = x_ref[0].T                                              # (TR, C_in) f32
    y = jnp.dot(xt.astype(jnp.bfloat16), w_ref[...],
                preferred_element_type=jnp.float32)              # (TR, planes) f32
    y_ref[0] = y.astype(y_ref.dtype)

    is_first = jnp.logical_and(pl.program_id(0) == 0, pl.program_id(1) == 0)
    is_last = jnp.logical_and(pl.program_id(0) == pl.num_programs(0) - 1,
                              pl.program_id(1) == pl.num_programs(1) - 1)
    _accumulate_and_finalize_bn(y, g_ref, b_ref, ss_ref, sum_ref, sq_ref,
                                is_first=is_first, is_last=is_last,
                                inv_n=inv_n, eps=eps)


def _bn_relu_conv3x3_stats_kernel(x_ref, ssp_ref, w_ref, g_ref, b_ref,
                                  y_ref, ss_ref,
                                  pad_ref, acc_ref, sum_ref, sq_ref,
                                  *, H, W, C, inv_n, eps):
    """Stage 2: BN1(fold)+ReLU + conv2 (3x3, pad=1, stride=1) + BN2 statistics.

    Persistent zero-padded VMEM scratch (border zeroed once at step 0); the
    9 shifted taps are read from the scratch and accumulated on the MXU —
    no (H*W, 9*C) patch matrix, no concatenate copies.
    """
    step = pl.program_id(0)

    @pl.when(step == 0)
    def _zero_pad():
        pad_ref[...] = jnp.zeros_like(pad_ref)   # border stays zero afterwards

    ssp = ssp_ref[...]                                           # (2, C) f32
    scale = ssp[0:1].reshape(1, 1, C)
    shift = ssp[1:2].reshape(1, 1, C)
    a = jnp.maximum(x_ref[0].astype(jnp.float32) * scale + shift, 0.0)  # (H, W, C)
    pad_ref[pl.ds(1, H), pl.ds(1, W), :] = a

    w_taps = w_ref[...]                                          # (9, C, C2) bf16
    for kh in range(3):
        for kw in range(3):
            tap = pad_ref[pl.ds(kh, H), pl.ds(kw, W), :].reshape(H * W, C)
            d = jnp.dot(tap.astype(jnp.bfloat16), w_taps[kh * 3 + kw],
                        preferred_element_type=jnp.float32)      # (H*W, C2)
            if kh == 0 and kw == 0:
                acc_ref[...] = d
            else:
                acc_ref[...] += d

    y = acc_ref[...]                                             # (H*W, C2) f32
    y_ref[0] = y.astype(y_ref.dtype)
    _accumulate_and_finalize_bn(y, g_ref, b_ref, ss_ref, sum_ref, sq_ref,
                                is_first=(step == 0),
                                is_last=(step == pl.num_programs(0) - 1),
                                inv_n=inv_n, eps=eps)


def _bn_relu_conv1x1_stats_kernel(x_ref, ssp_ref, w_ref, g_ref, b_ref,
                                  y_ref, ss_ref, sum_ref, sq_ref, *, inv_n, eps):
    """Stage 3: BN2(fold)+ReLU + conv3 (1x1) + BN3 statistics."""
    ssp = ssp_ref[...]                                           # (2, C_in) f32
    a = jnp.maximum(x_ref[0].astype(jnp.float32) * ssp[0:1, :] + ssp[1:2, :], 0.0)
    y = jnp.dot(a.astype(jnp.bfloat16), w_ref[...],
                preferred_element_type=jnp.float32)              # (TR, C_out) f32
    y_ref[0] = y.astype(y_ref.dtype)

    is_first = jnp.logical_and(pl.program_id(0) == 0, pl.program_id(1) == 0)
    is_last = jnp.logical_and(pl.program_id(0) == pl.num_programs(0) - 1,
                              pl.program_id(1) == pl.num_programs(1) - 1)
    _accumulate_and_finalize_bn(y, g_ref, b_ref, ss_ref, sum_ref, sq_ref,
                                is_first=is_first, is_last=is_last,
                                inv_n=inv_n, eps=eps)


def _bn_residual_relu_nchw_kernel(y_ref, ss_ref, r_ref, o_ref):
    """Stage 4: BN3(fold) + identity residual + ReLU, written back in NCHW
    (in-kernel tile transpose, residual read directly from the f32 NCHW input)."""
    ss = ss_ref[...]
    y = y_ref[0].astype(jnp.float32) * ss[0:1, :] + ss[1:2, :]   # (TR, C) NHWC rows
    o_ref[0] = jnp.maximum(y.T + r_ref[0], 0.0).astype(o_ref.dtype)  # (C, TR) NCHW


# ---------------------------------------------------------------------------
# Stage wrappers (pallas_call plumbing)
# ---------------------------------------------------------------------------
def _stage1_conv1(x3, w1, g1, b1, tr, vmem_limit):
    n, c_in, hw = x3.shape
    planes = w1.shape[1]
    m = n * hw
    kernel = functools.partial(_conv1_nchw_stats_kernel, inv_n=1.0 / m, eps=EPS)
    return pl.pallas_call(
        kernel,
        grid=(n, hw // tr),
        in_specs=[
            pl.BlockSpec((1, c_in, tr), lambda i, s: (i, 0, s)),
            pl.BlockSpec((c_in, planes), lambda i, s: (0, 0)),
            pl.BlockSpec((1, planes), lambda i, s: (0, 0)),
            pl.BlockSpec((1, planes), lambda i, s: (0, 0)),
        ],
        out_specs=[
            pl.BlockSpec((1, tr, planes), lambda i, s: (i, s, 0)),
            pl.BlockSpec((2, planes), lambda i, s: (0, 0)),
        ],
        out_shape=[
            jax.ShapeDtypeStruct((n, hw, planes), jnp.bfloat16),
            jax.ShapeDtypeStruct((2, planes), jnp.float32),
        ],
        scratch_shapes=[pltpu.VMEM((1, planes), jnp.float32),
                        pltpu.VMEM((1, planes), jnp.float32)],
        compiler_params=pltpu.CompilerParams(
            dimension_semantics=("arbitrary", "arbitrary"),
            vmem_limit_bytes=vmem_limit),
    )(x3, w1, g1, b1)


def _stage2_conv3x3(y1, ss1, w2_taps, g2, b2, h, w, vmem_limit):
    n, hw, c = y1.shape
    c2 = w2_taps.shape[2]
    m = n * hw
    x4 = y1.reshape(n, h, w, c)       # free (metadata-only) reshape of NHWC rows
    kernel = functools.partial(_bn_relu_conv3x3_stats_kernel,
                               H=h, W=w, C=c, inv_n=1.0 / m, eps=EPS)
    return pl.pallas_call(
        kernel,
        grid=(n,),
        in_specs=[
            pl.BlockSpec((1, h, w, c), lambda i: (i, 0, 0, 0)),
            pl.BlockSpec((2, c), lambda i: (0, 0)),
            pl.BlockSpec((9, c, c2), lambda i: (0, 0, 0)),
            pl.BlockSpec((1, c2), lambda i: (0, 0)),
            pl.BlockSpec((1, c2), lambda i: (0, 0)),
        ],
        out_specs=[
            pl.BlockSpec((1, hw, c2), lambda i: (i, 0, 0)),
            pl.BlockSpec((2, c2), lambda i: (0, 0)),
        ],
        out_shape=[
            jax.ShapeDtypeStruct((n, hw, c2), jnp.bfloat16),
            jax.ShapeDtypeStruct((2, c2), jnp.float32),
        ],
        scratch_shapes=[
            pltpu.VMEM((h + 2, w + 2, c), jnp.float32),   # persistent zero-padded act
            pltpu.VMEM((hw, c2), jnp.float32),            # conv accumulator
            pltpu.VMEM((1, c2), jnp.float32),
            pltpu.VMEM((1, c2), jnp.float32),
        ],
        compiler_params=pltpu.CompilerParams(
            dimension_semantics=("arbitrary",),
            vmem_limit_bytes=vmem_limit),
    )(x4, ss1, w2_taps, g2, b2)


def _stage3_conv3(y2, ss2, w3, g3, b3, tr, vmem_limit):
    n, hw, c = y2.shape
    c_out = w3.shape[1]
    m = n * hw
    kernel = functools.partial(_bn_relu_conv1x1_stats_kernel, inv_n=1.0 / m, eps=EPS)
    return pl.pallas_call(
        kernel,
        grid=(n, hw // tr),
        in_specs=[
            pl.BlockSpec((1, tr, c), lambda i, s: (i, s, 0)),
            pl.BlockSpec((2, c), lambda i, s: (0, 0)),
            pl.BlockSpec((c, c_out), lambda i, s: (0, 0)),
            pl.BlockSpec((1, c_out), lambda i, s: (0, 0)),
            pl.BlockSpec((1, c_out), lambda i, s: (0, 0)),
        ],
        out_specs=[
            pl.BlockSpec((1, tr, c_out), lambda i, s: (i, s, 0)),
            pl.BlockSpec((2, c_out), lambda i, s: (0, 0)),
        ],
        out_shape=[
            jax.ShapeDtypeStruct((n, hw, c_out), jnp.bfloat16),
            jax.ShapeDtypeStruct((2, c_out), jnp.float32),
        ],
        scratch_shapes=[pltpu.VMEM((1, c_out), jnp.float32),
                        pltpu.VMEM((1, c_out), jnp.float32)],
        compiler_params=pltpu.CompilerParams(
            dimension_semantics=("arbitrary", "arbitrary"),
            vmem_limit_bytes=vmem_limit),
    )(y2, ss2, w3, g3, b3)


def _stage4_residual(y3, ss3, x3, tr, vmem_limit):
    n, c_out, hw = x3.shape
    return pl.pallas_call(
        _bn_residual_relu_nchw_kernel,
        grid=(n, hw // tr),
        in_specs=[
            pl.BlockSpec((1, tr, c_out), lambda i, s: (i, s, 0)),
            pl.BlockSpec((2, c_out), lambda i, s: (0, 0)),
            pl.BlockSpec((1, c_out, tr), lambda i, s: (i, 0, s)),
        ],
        out_specs=pl.BlockSpec((1, c_out, tr), lambda i, s: (i, 0, s)),
        out_shape=jax.ShapeDtypeStruct((n, c_out, hw), jnp.float32),
        compiler_params=pltpu.CompilerParams(
            dimension_semantics=("parallel", "parallel"),
            vmem_limit_bytes=vmem_limit),
    )(y3, ss3, x3)


# ---------------------------------------------------------------------------
# Full bottleneck forward
# ---------------------------------------------------------------------------
def bottleneck_forward(x_nchw, params, planes, max_tile_rows=None):
    n, c_in, h, w = x_nchw.shape
    c_out = planes * 4
    assert c_in == c_out, "identity residual (downsample=None) requires inplanes == planes*4"
    hw = h * w

    f32, bf16 = jnp.float32, jnp.bfloat16
    # Free (metadata-only) reshape: NCHW stays in place; the C<->HW layout flip
    # happens in-kernel per tile (stages 1 and 4), never as a standalone HBM pass.
    x3 = x_nchw.astype(f32).reshape(n, c_in, hw)

    # Conv biases are dropped: with batch-stat (training-mode) BN they are
    # exactly cancelled by the mean subtraction.
    w1 = params["w1"].reshape(planes, c_in).T.astype(bf16)                    # (Cin, planes)
    w2 = jnp.transpose(params["w2"], (2, 3, 1, 0)).reshape(9, planes, planes).astype(bf16)
    w3 = params["w3"].reshape(c_out, planes).T.astype(bf16)                   # (planes, Cout)
    g1, b1 = params["g1"][None].astype(f32), params["beta1"][None].astype(f32)
    g2, b2 = params["g2"][None].astype(f32), params["beta2"][None].astype(f32)
    g3, b3 = params["g3"][None].astype(f32), params["beta3"][None].astype(f32)

    vmem = _vmem_limit_bytes()
    budget = vmem // 3

    # Stage 1: conv1 (1x1) from NCHW tiles + BN1 statistics.
    tr1 = _pick_row_tile(hw, c_in * 4 + planes * 2, budget, max_tile_rows)
    y1, ss1 = _stage1_conv1(x3, w1, g1, b1, tr1, vmem)

    # Stage 2: BN1(fold)+ReLU + conv2 (3x3) + BN2 statistics, per image.
    y2, ss2 = _stage2_conv3x3(y1, ss1, w2, g2, b2, h, w, vmem)

    # Stage 3: BN2(fold)+ReLU + conv3 (1x1) + BN3 statistics.
    tr3 = _pick_row_tile(hw, planes * 2 + c_out * 2, budget, max_tile_rows)
    y3, ss3 = _stage3_conv3(y2, ss2, w3, g3, b3, tr3, vmem)

    # Stage 4: BN3(fold) + identity residual + ReLU, NCHW output ("parallel" grid).
    tr4 = _pick_row_tile(hw, c_out * (2 + 4 + 4), budget, max_tile_rows)
    out3 = _stage4_residual(y3, ss3, x3, tr4, vmem)

    return out3.reshape(n, c_out, h, w)


# ---------------------------------------------------------------------------
# Pure-JAX reference (mirrors the PyTorch forward, biases included) for validation
# ---------------------------------------------------------------------------
def reference_forward(x, params, planes):
    def conv(x, w, b, pad):
        y = jax.lax.conv_general_dilated(
            x, w, (1, 1), [(pad, pad), (pad, pad)],
            dimension_numbers=("NCHW", "OIHW", "NCHW"))
        return y + b[None, :, None, None]

    def bn(x, g, beta):
        mean = jnp.mean(x, axis=(0, 2, 3), keepdims=True)
        var = jnp.mean((x - mean) ** 2, axis=(0, 2, 3), keepdims=True)
        return (x - mean) * jax.lax.rsqrt(var + EPS) * g[None, :, None, None] \
            + beta[None, :, None, None]

    out = jax.nn.relu(bn(conv(x, params["w1"], params["b1"], 0), params["g1"], params["beta1"]))
    out = jax.nn.relu(bn(conv(out, params["w2"], params["b2"], 1), params["g2"], params["beta2"]))
    out = bn(conv(out, params["w3"], params["b3"], 0), params["g3"], params["beta3"])
    return jax.nn.relu(out + x)


# ---------------------------------------------------------------------------
if __name__ == "__main__":
    key = jax.random.PRNGKey(0)
    keys = jax.random.split(key, 13)

    N, H, W = 2, 16, 16
    planes = 4
    inplanes = planes * 4                                  # 16 (identity residual)

    def rnd(k, shape, scale=0.1):
        return scale * jax.random.normal(k, shape, jnp.float32)

    params = {
        "w1": rnd(keys[0], (planes, inplanes, 1, 1)),
        "b1": rnd(keys[1], (planes,)),
        "g1": 1.0 + rnd(keys[2], (planes,)),
        "beta1": rnd(keys[3], (planes,)),
        "w2": rnd(keys[4], (planes, planes, 3, 3)),
        "b2": rnd(keys[5], (planes,)),
        "g2": 1.0 + rnd(keys[6], (planes,)),
        "beta2": rnd(keys[7], (planes,)),
        "w3": rnd(keys[8], (planes * 4, planes, 1, 1)),
        "b3": rnd(keys[9], (planes * 4,)),
        "g3": 1.0 + rnd(keys[10], (planes * 4,)),
        "beta3": rnd(keys[11], (planes * 4,)),
    }

    x = jax.random.normal(keys[12], (N, inplanes, H, W), jnp.float32)

    # max_tile_rows=128 forces multi-step grids at this small size so the tiled
    # BN-statistics accumulation path is actually exercised.
    fwd = jax.jit(functools.partial(bottleneck_forward, planes=planes, max_tile_rows=128))
    out = fwd(x, params)
    jax.block_until_ready(out)

    ref = reference_forward(x, params, planes)
    # bf16 intermediate activations / MXU operands across three BN-normalized
    # stages => expect ~1-3% deviation from the all-f32 reference.
    np.testing.assert_allclose(np.asarray(out), np.asarray(ref), atol=8e-2, rtol=8e-2)

    print("KERNEL_OK")
</pallas_src>

<mosaic_0001>
module attributes {stable_mosaic.version = 11 : i64} {
  func.func @_conv1_nchw_stats_kernel(%arg0: i32, %arg1: i32, %arg2: memref<1x16x128xf32, #tpu.memory_space<vmem>>, %arg3: memref<16x4xbf16, #tpu.memory_space<vmem>>, %arg4: memref<1x4xf32, #tpu.memory_space<vmem>>, %arg5: memref<1x4xf32, #tpu.memory_space<vmem>>, %arg6: memref<1x128x4xbf16, #tpu.memory_space<vmem>>, %arg7: memref<2x4xf32, #tpu.memory_space<vmem>>, %arg8: memref<1x4xf32, #tpu.memory_space<vmem>>, %arg9: memref<1x4xf32, #tpu.memory_space<vmem>>) attributes {dimension_semantics = [#tpu.dimension_semantics<arbitrary>, #tpu.dimension_semantics<arbitrary>], iteration_bounds = array<i64: 2, 2>, scalar_prefetch = 0 : i64, scratch_operands = 2 : i64, tpu.core_type = #tpu.core_type<tc>, window_params = [{transform_indices = @transform_0, window_bounds = array<i64: 1, 16, 128>}, {pipeline_mode = #tpu.pipeline_mode<synchronous>, transform_indices = @transform_1, window_bounds = array<i64: 16, 4>}, {pipeline_mode = #tpu.pipeline_mode<synchronous>, transform_indices = @transform_2, window_bounds = array<i64: 1, 4>}, {pipeline_mode = #tpu.pipeline_mode<synchronous>, transform_indices = @transform_3, window_bounds = array<i64: 1, 4>}, {transform_indices = @transform_4, window_bounds = array<i64: 1, 128, 4>}, {pipeline_mode = #tpu.pipeline_mode<synchronous>, transform_indices = @transform_5, window_bounds = array<i64: 2, 4>}]} {
    %c0 = arith.constant 0 : index
    %c0_0 = arith.constant 0 : index
    %c0_1 = arith.constant 0 : index
    %0 = vector.load %arg2[%c0, %c0_0, %c0_1] : memref<1x16x128xf32, #tpu.memory_space<vmem>>, vector<1x16x128xf32>
    %1 = vector.shape_cast %0 : vector<1x16x128xf32> to vector<16x128xf32>
    %2 = tpu.transpose %1, [1, 0] : vector<16x128xf32> -> vector<128x16xf32>
    %3 = arith.truncf %2 : vector<128x16xf32> to vector<128x16xbf16>
    %c0_2 = arith.constant 0 : index
    %c0_3 = arith.constant 0 : index
    %4 = vector.load %arg3[%c0_2, %c0_3] : memref<16x4xbf16, #tpu.memory_space<vmem>>, vector<16x4xbf16>
    %cst = arith.constant dense<0.000000e+00> : vector<128x4xf32>
    %5 = tpu.matmul %3, %4, %cst {dimension_numbers = #tpu.dot_dimension_numbers<[1], [0], [0], [1], [0, 0, 1, 1], [], []>} : vector<128x16xbf16>, vector<16x4xbf16>, vector<128x4xf32> -> vector<128x4xf32>
    %6 = arith.truncf %5 : vector<128x4xf32> to vector<128x4xbf16>
    %c0_4 = arith.constant 0 : index
    %c0_5 = arith.constant 0 : index
    %c0_6 = arith.constant 0 : index
    %7 = vector.load %arg6[%c0_4, %c0_5, %c0_6] : memref<1x128x4xbf16, #tpu.memory_space<vmem>>, vector<1x128x4xbf16>
    %8 = vector.shape_cast %7 : vector<1x128x4xbf16> to vector<128x4xbf16>
    %9 = vector.shape_cast %6 : vector<128x4xbf16> to vector<1x128x4xbf16>
    tpu.vector_store %arg6[%c0_4, %c0_5, %c0_6], %9 {strides = array<i32>} : memref<1x128x4xbf16, #tpu.memory_space<vmem>>, vector<1x128x4xbf16>,
    %c0_i32 = arith.constant 0 : i32
    %10 = arith.cmpi eq, %arg0, %c0_i32 : i32
    %c0_i32_7 = arith.constant 0 : i32
    %11 = arith.cmpi eq, %arg1, %c0_i32_7 : i32
    %12 = arith.andi %10, %11 : i1
    %c1_i32 = arith.constant 1 : i32
    %13 = arith.cmpi eq, %arg0, %c1_i32 : i32
    %c1_i32_8 = arith.constant 1 : i32
    %14 = arith.cmpi eq, %arg1, %c1_i32_8 : i32
    %15 = arith.andi %13, %14 : i1
    %16 = arith.extui %12 : i1 to i32
    %c0_i32_9 = arith.constant 0 : i32
    %17 = arith.cmpi ne, %16, %c0_i32_9 : i32
    scf.if %17 {
      %cst_21 = arith.constant 0.000000e+00 : f32
      %31 = vector.broadcast %cst_21 : f32 to vector<1x4xf32>
      %c0_22 = arith.constant 0 : index
      %c0_23 = arith.constant 0 : index
      %32 = vector.load %arg8[%c0_22, %c0_23] : memref<1x4xf32, #tpu.memory_space<vmem>>, vector<1x4xf32>
      tpu.vector_store %arg8[%c0_22, %c0_23], %31 {strides = array<i32>} : memref<1x4xf32, #tpu.memory_space<vmem>>, vector<1x4xf32>,
      %cst_24 = arith.constant 0.000000e+00 : f32
      %33 = vector.broadcast %cst_24 : f32 to vector<1x4xf32>
      %c0_25 = arith.constant 0 : index
      %c0_26 = arith.constant 0 : index
      %34 = vector.load %arg9[%c0_25, %c0_26] : memref<1x4xf32, #tpu.memory_space<vmem>>, vector<1x4xf32>
      tpu.vector_store %arg9[%c0_25, %c0_26], %33 {strides = array<i32>} : memref<1x4xf32, #tpu.memory_space<vmem>>, vector<1x4xf32>,
    } else {
    }
    %c0_10 = arith.constant 0 : index
    %c0_11 = arith.constant 0 : index
    %18 = vector.load %arg8[%c0_10, %c0_11] : memref<1x4xf32, #tpu.memory_space<vmem>>, vector<1x4xf32>
    %cst_12 = arith.constant dense<0.000000e+00> : vector<4xf32>
    %19 = vector.multi_reduction <add>, %5, %cst_12 [0] : vector<128x4xf32> to vector<4xf32>
    %20 = vector.shape_cast %19 : vector<4xf32> to vector<1x4xf32>
    %21 = arith.addf %18, %20 : vector<1x4xf32>
    %c0_13 = arith.constant 0 : index
    %c0_14 = arith.constant 0 : index
    %22 = vector.load %arg8[%c0_13, %c0_14] : memref<1x4xf32, #tpu.memory_space<vmem>>, vector<1x4xf32>
    tpu.vector_store %arg8[%c0_13, %c0_14], %21 {strides = array<i32>} : memref<1x4xf32, #tpu.memory_space<vmem>>, vector<1x4xf32>,
    %c0_15 = arith.constant 0 : index
    %c0_16 = arith.constant 0 : index
    %23 = vector.load %arg9[%c0_15, %c0_16] : memref<1x4xf32, #tpu.memory_space<vmem>>, vector<1x4xf32>
    %24 = arith.mulf %5, %5 : vector<128x4xf32>
    %cst_17 = arith.constant dense<0.000000e+00> : vector<4xf32>
    %25 = vector.multi_reduction <add>, %24, %cst_17 [0] : vector<128x4xf32> to vector<4xf32>
    %26 = vector.shape_cast %25 : vector<4xf32> to vector<1x4xf32>
    %27 = arith.addf %23, %26 : vector<1x4xf32>
    %c0_18 = arith.constant 0 : index
    %c0_19 = arith.constant 0 : index
    %28 = vector.load %arg9[%c0_18, %c0_19] : memref<1x4xf32, #tpu.memory_space<vmem>>, vector<1x4xf32>
    tpu.vector_store %arg9[%c0_18, %c0_19], %27 {strides = array<i32>} : memref<1x4xf32, #tpu.memory_space<vmem>>, vector<1x4xf32>,
    %29 = arith.extui %15 : i1 to i32
    %c0_i32_20 = arith.constant 0 : i32
    %30 = arith.cmpi ne, %29, %c0_i32_20 : i32
    scf.if %30 {
      %c0_21 = arith.constant 0 : index
      %c0_22 = arith.constant 0 : index
      %31 = vector.load %arg8[%c0_21, %c0_22] : memref<1x4xf32, #tpu.memory_space<vmem>>, vector<1x4xf32>
      %cst_23 = arith.constant 0.001953125 : f32
      %32 = vector.broadcast %cst_23 : f32 to vector<1x4xf32>
      %33 = arith.mulf %31, %32 : vector<1x4xf32>
      %c0_24 = arith.constant 0 : index
      %c0_25 = arith.constant 0 : index
      %34 = vector.load %arg9[%c0_24, %c0_25] : memref<1x4xf32, #tpu.memory_space<vmem>>, vector<1x4xf32>
      %cst_26 = arith.constant 0.001953125 : f32
      %35 = vector.broadcast %cst_26 : f32 to vector<1x4xf32>
      %36 = arith.mulf %34, %35 : vector<1x4xf32>
      %37 = arith.mulf %33, %33 : vector<1x4xf32>
      %38 = arith.subf %36, %37 : vector<1x4xf32>
      %c0_27 = arith.constant 0 : index
      %c0_28 = arith.constant 0 : index
      %39 = vector.load %arg4[%c0_27, %c0_28] : memref<1x4xf32, #tpu.memory_space<vmem>>, vector<1x4xf32>
      %cst_29 = arith.constant 9.99999974E-6 : f32
      %40 = vector.broadcast %cst_29 : f32 to vector<1x4xf32>
      %41 = arith.addf %38, %40 : vector<1x4xf32>
      %42 = math.rsqrt %41 : vector<1x4xf32>
      %43 = arith.mulf %39, %42 : vector<1x4xf32>
      %c0_30 = arith.constant 0 : index
      %c0_31 = arith.constant 0 : index
      %44 = vector.load %arg5[%c0_30, %c0_31] : memref<1x4xf32, #tpu.memory_space<vmem>>, vector<1x4xf32>
      %45 = arith.mulf %33, %43 : vector<1x4xf32>
      %46 = arith.subf %44, %45 : vector<1x4xf32>
      %47 = tpu.concatenate %43, %46 in 0 : vector<1x4xf32>, vector<1x4xf32> -> vector<2x4xf32>
      %c0_32 = arith.constant 0 : index
      %c0_33 = arith.constant 0 : index
      %48 = vector.load %arg7[%c0_32, %c0_33] : memref<2x4xf32, #tpu.memory_space<vmem>>, vector<2x4xf32>
      tpu.vector_store %arg7[%c0_32, %c0_33], %47 {strides = array<i32>} : memref<2x4xf32, #tpu.memory_space<vmem>>, vector<2x4xf32>,
    } else {
    }
    return
  }
  func.func @transform_0(%arg0: i32, %arg1: i32) -> (i32, i32, i32) {
    %c0_i32 = arith.constant 0 : i32
    %c0_i32_0 = arith.constant 0 : i32
    return %arg0, %c0_i32, %arg1 : i32, i32, i32
  }
  func.func @transform_1(%arg0: i32, %arg1: i32) -> (i32, i32) {
    %c0_i32 = arith.constant 0 : i32
    %c0_i32_0 = arith.constant 0 : i32
    %c0_i32_1 = arith.constant 0 : i32
    return %c0_i32, %c0_i32_0 : i32, i32
  }
  func.func @transform_2(%arg0: i32, %arg1: i32) -> (i32, i32) {
    %c0_i32 = arith.constant 0 : i32
    %c0_i32_0 = arith.constant 0 : i32
    %c0_i32_1 = arith.constant 0 : i32
    return %c0_i32, %c0_i32_0 : i32, i32
  }
  func.func @transform_3(%arg0: i32, %arg1: i32) -> (i32, i32) {
    %c0_i32 = arith.constant 0 : i32
    %c0_i32_0 = arith.constant 0 : i32
    %c0_i32_1 = arith.constant 0 : i32
    return %c0_i32, %c0_i32_0 : i32, i32
  }
  func.func @transform_4(%arg0: i32, %arg1: i32) -> (i32, i32, i32) {
    %c0_i32 = arith.constant 0 : i32
    %c0_i32_0 = arith.constant 0 : i32
    return %arg0, %arg1, %c0_i32 : i32, i32, i32
  }
  func.func @transform_5(%arg0: i32, %arg1: i32) -> (i32, i32) {
    %c0_i32 = arith.constant 0 : i32
    %c0_i32_0 = arith.constant 0 : i32
    %c0_i32_1 = arith.constant 0 : i32
    return %c0_i32, %c0_i32_0 : i32, i32
  }
}

module attributes {stable_mosaic.version = 11 : i64} {
  func.func @_bn_relu_conv3x3_stats_kernel(%arg0: i32, %arg1: memref<1x16x16x4xbf16, #tpu.memory_space<vmem>>, %arg2: memref<2x4xf32, #tpu.memory_space<vmem>>, %arg3: memref<9x4x4xbf16, #tpu.memory_space<vmem>>, %arg4: memref<1x4xf32, #tpu.memory_space<vmem>>, %arg5: memref<1x4xf32, #tpu.memory_space<vmem>>, %arg6: memref<1x256x4xbf16, #tpu.memory_space<vmem>>, %arg7: memref<2x4xf32, #tpu.memory_space<vmem>>, %arg8: memref<18x18x4xf32, #tpu.memory_space<vmem>>, %arg9: memref<256x4xf32, #tpu.memory_space<vmem>>, %arg10: memref<1x4xf32, #tpu.memory_space<vmem>>, %arg11: memref<1x4xf32, #tpu.memory_space<vmem>>) attributes {dimension_semantics = [#tpu.dimension_semantics<arbitrary>], iteration_bounds = array<i64: 2>, scalar_prefetch = 0 : i64, scratch_operands = 4 : i64, tpu.core_type = #tpu.core_type<tc>, window_params = [{transform_indices = @transform_0, window_bounds = array<i64: 1, 16, 16, 4>}, {pipeline_mode = #tpu.pipeline_mode<synchronous>, transform_indices = @transform_1, window_bounds = array<i64: 2, 4>}, {pipeline_mode = #tpu.pipeline_mode<synchronous>, transform_indices = @transform_2, window_bounds = array<i64: 9, 4, 4>}, {pipeline_mode = #tpu.pipeline_mode<synchronous>, transform_indices = @transform_3, window_bounds = array<i64: 1, 4>}, {pipeline_mode = #tpu.pipeline_mode<synchronous>, transform_indices = @transform_4, window_bounds = array<i64: 1, 4>}, {transform_indices = @transform_5, window_bounds = array<i64: 1, 256, 4>}, {pipeline_mode = #tpu.pipeline_mode<synchronous>, transform_indices = @transform_6, window_bounds = array<i64: 2, 4>}]} {
    %c0_i32 = arith.constant 0 : i32
    %0 = arith.cmpi eq, %arg0, %c0_i32 : i32
    %1 = arith.extui %0 : i1 to i32
    %c0_i32_0 = arith.constant 0 : i32
    %2 = arith.cmpi ne, %1, %c0_i32_0 : i32
    scf.if %2 {
      %cst_98 = arith.constant 0.000000e+00 : f32
      %120 = vector.broadcast %cst_98 : f32 to vector<18x18x4xf32>
      %c0_99 = arith.constant 0 : index
      %c0_100 = arith.constant 0 : index
      %c0_101 = arith.constant 0 : index
      %121 = vector.load %arg8[%c0_99, %c0_100, %c0_101] : memref<18x18x4xf32, #tpu.memory_space<vmem>>, vector<18x18x4xf32>
      tpu.vector_store %arg8[%c0_99, %c0_100, %c0_101], %120 {strides = array<i32>} : memref<18x18x4xf32, #tpu.memory_space<vmem>>, vector<18x18x4xf32>,
    } else {
    }
    %c0 = arith.constant 0 : index
    %c0_1 = arith.constant 0 : index
    %3 = vector.load %arg2[%c0, %c0_1] : memref<2x4xf32, #tpu.memory_space<vmem>>, vector<2x4xf32>
    %4 = vector.extract_strided_slice %3 {offsets = [0, 0], sizes = [1, 4], strides = [1, 1]} : vector<2x4xf32> to vector<1x4xf32>
    %5 = vector.shape_cast %4 : vector<1x4xf32> to vector<1x1x4xf32>
    %6 = vector.extract_strided_slice %3 {offsets = [1, 0], sizes = [1, 4], strides = [1, 1]} : vector<2x4xf32> to vector<1x4xf32>
    %7 = vector.shape_cast %6 : vector<1x4xf32> to vector<1x1x4xf32>
    %c0_2 = arith.constant 0 : index
    %c0_3 = arith.constant 0 : index
    %c0_4 = arith.constant 0 : index
    %c0_5 = arith.constant 0 : index
    %8 = vector.load %arg1[%c0_2, %c0_3, %c0_4, %c0_5] : memref<1x16x16x4xbf16, #tpu.memory_space<vmem>>, vector<1x16x16x4xbf16>
    %9 = vector.shape_cast %8 : vector<1x16x16x4xbf16> to vector<16x16x4xbf16>
    %10 = arith.extf %9 : vector<16x16x4xbf16> to vector<16x16x4xf32>
    %11 = vector.broadcast %5 : vector<1x1x4xf32> to vector<16x16x4xf32>
    %12 = arith.mulf %10, %11 : vector<16x16x4xf32>
    %13 = vector.broadcast %7 : vector<1x1x4xf32> to vector<16x16x4xf32>
    %14 = arith.addf %12, %13 : vector<16x16x4xf32>
    %cst = arith.constant 0.000000e+00 : f32
    %15 = vector.broadcast %cst : f32 to vector<16x16x4xf32>
    %16 = arith.maximumf %14, %15 : vector<16x16x4xf32>
    %c1 = arith.constant 1 : index
    %c1_6 = arith.constant 1 : index
    %c0_7 = arith.constant 0 : index
    %17 = vector.load %arg8[%c1, %c1_6, %c0_7] : memref<18x18x4xf32, #tpu.memory_space<vmem>>, vector<16x16x4xf32>
    tpu.vector_store %arg8[%c1, %c1_6, %c0_7], %16 {strides = array<i32>} : memref<18x18x4xf32, #tpu.memory_space<vmem>>, vector<16x16x4xf32>,
    %c0_8 = arith.constant 0 : index
    %c0_9 = arith.constant 0 : index
    %c0_10 = arith.constant 0 : index
    %18 = vector.load %arg3[%c0_8, %c0_9, %c0_10] : memref<9x4x4xbf16, #tpu.memory_space<vmem>>, vector<9x4x4xbf16>
    %c0_11 = arith.constant 0 : index
    %c0_12 = arith.constant 0 : index
    %c0_13 = arith.constant 0 : index
    %19 = vector.load %arg8[%c0_11, %c0_12, %c0_13] : memref<18x18x4xf32, #tpu.memory_space<vmem>>, vector<16x16x4xf32>
    %20 = vector.shape_cast %19 : vector<16x16x4xf32> to vector<256x4xf32>
    %21 = arith.truncf %20 : vector<256x4xf32> to vector<256x4xbf16>
    %22 = vector.extract_strided_slice %18 {offsets = [0, 0, 0], sizes = [1, 4, 4], strides = [1, 1, 1]} : vector<9x4x4xbf16> to vector<1x4x4xbf16>
    %23 = vector.shape_cast %22 : vector<1x4x4xbf16> to vector<4x4xbf16>
    %cst_14 = arith.constant dense<0.000000e+00> : vector<256x4xf32>
    %24 = tpu.matmul %21, %23, %cst_14 {dimension_numbers = #tpu.dot_dimension_numbers<[1], [0], [0], [1], [0, 0, 1, 1], [], []>} : vector<256x4xbf16>, vector<4x4xbf16>, vector<256x4xf32> -> vector<256x4xf32>
    %c0_15 = arith.constant 0 : index
    %c0_16 = arith.constant 0 : index
    %25 = vector.load %arg9[%c0_15, %c0_16] : memref<256x4xf32, #tpu.memory_space<vmem>>, vector<256x4xf32>
    tpu.vector_store %arg9[%c0_15, %c0_16], %24 {strides = array<i32>} : memref<256x4xf32, #tpu.memory_space<vmem>>, vector<256x4xf32>,
    %c0_17 = arith.constant 0 : index
    %c1_18 = arith.constant 1 : index
    %c0_19 = arith.constant 0 : index
    %26 = vector.load %arg8[%c0_17, %c1_18, %c0_19] : memref<18x18x4xf32, #tpu.memory_space<vmem>>, vector<16x16x4xf32>
    %27 = vector.shape_cast %26 : vector<16x16x4xf32> to vector<256x4xf32>
    %28 = arith.truncf %27 : vector<256x4xf32> to vector<256x4xbf16>
    %29 = vector.extract_strided_slice %18 {offsets = [1, 0, 0], sizes = [1, 4, 4], strides = [1, 1, 1]} : vector<9x4x4xbf16> to vector<1x4x4xbf16>
    %30 = vector.shape_cast %29 : vector<1x4x4xbf16> to vector<4x4xbf16>
    %cst_20 = arith.constant dense<0.000000e+00> : vector<256x4xf32>
    %31 = tpu.matmul %28, %30, %cst_20 {dimension_numbers = #tpu.dot_dimension_numbers<[1], [0], [0], [1], [0, 0, 1, 1], [], []>} : vector<256x4xbf16>, vector<4x4xbf16>, vector<256x4xf32> -> vector<256x4xf32>
    %c0_21 = arith.constant 0 : index
    %c0_22 = arith.constant 0 : index
    %32 = vector.load %arg9[%c0_21, %c0_22] : memref<256x4xf32, #tpu.memory_space<vmem>>, vector<256x4xf32>
    %33 = arith.addf %32, %31 : vector<256x4xf32>
    %c0_23 = arith.constant 0 : index
    %c0_24 = arith.constant 0 : index
    %34 = vector.load %arg9[%c0_23, %c0_24] : memref<256x4xf32, #tpu.memory_space<vmem>>, vector<256x4xf32>
    tpu.vector_store %arg9[%c0_23, %c0_24], %33 {strides = array<i32>} : memref<256x4xf32, #tpu.memory_space<vmem>>, vector<256x4xf32>,
    %c0_25 = arith.constant 0 : index
    %c2 = arith.constant 2 : index
    %c0_26 = arith.constant 0 : index
    %35 = vector.load %arg8[%c0_25, %c2, %c0_26] : memref<18x18x4xf32, #tpu.memory_space<vmem>>, vector<16x16x4xf32>
    %36 = vector.shape_cast %35 : vector<16x16x4xf32> to vector<256x4xf32>
    %37 = arith.truncf %36 : vector<256x4xf32> to vector<256x4xbf16>
    %38 = vector.extract_strided_slice %18 {offsets = [2, 0, 0], sizes = [1, 4, 4], strides = [1, 1, 1]} : vector<9x4x4xbf16> to vector<1x4x4xbf16>
    %39 = vector.shape_cast %38 : vector<1x4x4xbf16> to vector<4x4xbf16>
    %cst_27 = arith.constant dense<0.000000e+00> : vector<256x4xf32>
    %40 = tpu.matmul %37, %39, %cst_27 {dimension_numbers = #tpu.dot_dimension_numbers<[1], [0], [0], [1], [0, 0, 1, 1], [], []>} : vector<256x4xbf16>, vector<4x4xbf16>, vector<256x4xf32> -> vector<256x4xf32>
    %c0_28 = arith.constant 0 : index
    %c0_29 = arith.constant 0 : index
    %41 = vector.load %arg9[%c0_28, %c0_29] : memref<256x4xf32, #tpu.memory_space<vmem>>, vector<256x4xf32>
    %42 = arith.addf %41, %40 : vector<256x4xf32>
    %c0_30 = arith.constant 0 : index
    %c0_31 = arith.constant 0 : index
    %43 = vector.load %arg9[%c0_30, %c0_31] : memref<256x4xf32, #tpu.memory_space<vmem>>, vector<256x4xf32>
    tpu.vector_store %arg9[%c0_30, %c0_31], %42 {strides = array<i32>} : memref<256x4xf32, #tpu.memory_space<vmem>>, vector<256x4xf32>,
    %c1_32 = arith.constant 1 : index
    %c0_33 = arith.constant 0 : index
    %c0_34 = arith.constant 0 : index
    %44 = vector.load %arg8[%c1_32, %c0_33, %c0_34] : memref<18x18x4xf32, #tpu.memory_space<vmem>>, vector<16x16x4xf32>
    %45 = vector.shape_cast %44 : vector<16x16x4xf32> to vector<256x4xf32>
    %46 = arith.truncf %45 : vector<256x4xf32> to vector<256x4xbf16>
    %47 = vector.extract_strided_slice %18 {offsets = [3, 0, 0], sizes = [1, 4, 4], strides = [1, 1, 1]} : vector<9x4x4xbf16> to vector<1x4x4xbf16>
    %48 = vector.shape_cast %47 : vector<1x4x4xbf16> to vector<4x4xbf16>
    %cst_35 = arith.constant dense<0.000000e+00> : vector<256x4xf32>
    %49 = tpu.matmul %46, %48, %cst_35 {dimension_numbers = #tpu.dot_dimension_numbers<[1], [0], [0], [1], [0, 0, 1, 1], [], []>} : vector<256x4xbf16>, vector<4x4xbf16>, vector<256x4xf32> -> vector<256x4xf32>
    %c0_36 = arith.constant 0 : index
    %c0_37 = arith.constant 0 : index
    %50 = vector.load %arg9[%c0_36, %c0_37] : memref<256x4xf32, #tpu.memory_space<vmem>>, vector<256x4xf32>
    %51 = arith.addf %50, %49 : vector<256x4xf32>
    %c0_38 = arith.constant 0 : index
    %c0_39 = arith.constant 0 : index
    %52 = vector.load %arg9[%c0_38, %c0_39] : memref<256x4xf32, #tpu.memory_space<vmem>>, vector<256x4xf32>
    tpu.vector_store %arg9[%c0_38, %c0_39], %51 {strides = array<i32>} : memref<256x4xf32, #tpu.memory_space<vmem>>, vector<256x4xf32>,
    %c1_40 = arith.constant 1 : index
    %c1_41 = arith.constant 1 : index
    %c0_42 = arith.constant 0 : index
    %53 = vector.load %arg8[%c1_40, %c1_41, %c0_42] : memref<18x18x4xf32, #tpu.memory_space<vmem>>, vector<16x16x4xf32>
    %54 = vector.shape_cast %53 : vector<16x16x4xf32> to vector<256x4xf32>
    %55 = arith.truncf %54 : vector<256x4xf32> to vector<256x4xbf16>
    %56 = vector.extract_strided_slice %18 {offsets = [4, 0, 0], sizes = [1, 4, 4], strides = [1, 1, 1]} : vector<9x4x4xbf16> to vector<1x4x4xbf16>
    %57 = vector.shape_cast %56 : vector<1x4x4xbf16> to vector<4x4xbf16>
    %cst_43 = arith.constant dense<0.000000e+00> : vector<256x4xf32>
    %58 = tpu.matmul %55, %57, %cst_43 {dimension_numbers = #tpu.dot_dimension_numbers<[1], [0], [0], [1], [0, 0, 1, 1], [], []>} : vector<256x4xbf16>, vector<4x4xbf16>, vector<256x4xf32> -> vector<256x4xf32>
    %c0_44 = arith.constant 0 : index
    %c0_45 = arith.constant 0 : index
    %59 = vector.load %arg9[%c0_44, %c0_45] : memref<256x4xf32, #tpu.memory_space<vmem>>, vector<256x4xf32>
    %60 = arith.addf %59, %58 : vector<256x4xf32>
    %c0_46 = arith.constant 0 : index
    %c0_47 = arith.constant 0 : index
    %61 = vector.load %arg9[%c0_46, %c0_47] : memref<256x4xf32, #tpu.memory_space<vmem>>, vector<256x4xf32>
    tpu.vector_store %arg9[%c0_46, %c0_47], %60 {strides = array<i32>} : memref<256x4xf32, #tpu.memory_space<vmem>>, vector<256x4xf32>,
    %c1_48 = arith.constant 1 : index
    %c2_49 = arith.constant 2 : index
    %c0_50 = arith.constant 0 : index
    %62 = vector.load %arg8[%c1_48, %c2_49, %c0_50] : memref<18x18x4xf32, #tpu.memory_space<vmem>>, vector<16x16x4xf32>
    %63 = vector.shape_cast %62 : vector<16x16x4xf32> to vector<256x4xf32>
    %64 = arith.truncf %63 : vector<256x4xf32> to vector<256x4xbf16>
    %65 = vector.extract_strided_slice %18 {offsets = [5, 0, 0], sizes = [1, 4, 4], strides = [1, 1, 1]} : vector<9x4x4xbf16> to vector<1x4x4xbf16>
    %66 = vector.shape_cast %65 : vector<1x4x4xbf16> to vector<4x4xbf16>
    %cst_51 = arith.constant dense<0.000000e+00> : vector<256x4xf32>
    %67 = tpu.matmul %64, %66, %cst_51 {dimension_numbers = #tpu.dot_dimension_numbers<[1], [0], [0], [1], [0, 0, 1, 1], [], []>} : vector<256x4xbf16>, vector<4x4xbf16>, vector<256x4xf32> -> vector<256x4xf32>
    %c0_52 = arith.constant 0 : index
    %c0_53 = arith.constant 0 : index
    %68 = vector.load %arg9[%c0_52, %c0_53] : memref<256x4xf32, #tpu.memory_space<vmem>>, vector<256x4xf32>
    %69 = arith.addf %68, %67 : vector<256x4xf32>
    %c0_54 = arith.constant 0 : index
    %c0_55 = arith.constant 0 : index
    %70 = vector.load %arg9[%c0_54, %c0_55] : memref<256x4xf32, #tpu.memory_space<vmem>>, vector<256x4xf32>
    tpu.vector_store %arg9[%c0_54, %c0_55], %69 {strides = array<i32>} : memref<256x4xf32, #tpu.memory_space<vmem>>, vector<256x4xf32>,
    %c2_56 = arith.constant 2 : index
    %c0_57 = arith.constant 0 : index
    %c0_58 = arith.constant 0 : index
    %71 = vector.load %arg8[%c2_56, %c0_57, %c0_58] : memref<18x18x4xf32, #tpu.memory_space<vmem>>, vector<16x16x4xf32>
    %72 = vector.shape_cast %71 : vector<16x16x4xf32> to vector<256x4xf32>
    %73 = arith.truncf %72 : vector<256x4xf32> to vector<256x4xbf16>
    %74 = vector.extract_strided_slice %18 {offsets = [6, 0, 0], sizes = [1, 4, 4], strides = [1, 1, 1]} : vector<9x4x4xbf16> to vector<1x4x4xbf16>
    %75 = vector.shape_cast %74 : vector<1x4x4xbf16> to vector<4x4xbf16>
    %cst_59 = arith.constant dense<0.000000e+00> : vector<256x4xf32>
    %76 = tpu.matmul %73, %75, %cst_59 {dimension_numbers = #tpu.dot_dimension_numbers<[1], [0], [0], [1], [0, 0, 1, 1], [], []>} : vector<256x4xbf16>, vector<4x4xbf16>, vector<256x4xf32> -> vector<256x4xf32>
    %c0_60 = arith.constant 0 : index
    %c0_61 = arith.constant 0 : index
    %77 = vector.load %arg9[%c0_60, %c0_61] : memref<256x4xf32, #tpu.memory_space<vmem>>, vector<256x4xf32>
    %78 = arith.addf %77, %76 : vector<256x4xf32>
    %c0_62 = arith.constant 0 : index
    %c0_63 = arith.constant 0 : index
    %79 = vector.load %arg9[%c0_62, %c0_63] : memref<256x4xf32, #tpu.memory_space<vmem>>, vector<256x4xf32>
    tpu.vector_store %arg9[%c0_62, %c0_63], %78 {strides = array<i32>} : memref<256x4xf32, #tpu.memory_space<vmem>>, vector<256x4xf32>,
    %c2_64 = arith.constant 2 : index
    %c1_65 = arith.constant 1 : index
    %c0_66 = arith.constant 0 : index
    %80 = vector.load %arg8[%c2_64, %c1_65, %c0_66] : memref<18x18x4xf32, #tpu.memory_space<vmem>>, vector<16x16x4xf32>
    %81 = vector.shape_cast %80 : vector<16x16x4xf32> to vector<256x4xf32>
    %82 = arith.truncf %81 : vector<256x4xf32> to vector<256x4xbf16>
    %83 = vector.extract_strided_slice %18 {offsets = [7, 0, 0], sizes = [1, 4, 4], strides = [1, 1, 1]} : vector<9x4x4xbf16> to vector<1x4x4xbf16>
    %84 = vector.shape_cast %83 : vector<1x4x4xbf16> to vector<4x4xbf16>
    %cst_67 = arith.constant dense<0.000000e+00> : vector<256x4xf32>
    %85 = tpu.matmul %82, %84, %cst_67 {dimension_numbers = #tpu.dot_dimension_numbers<[1], [0], [0], [1], [0, 0, 1, 1], [], []>} : vector<256x4xbf16>, vector<4x4xbf16>, vector<256x4xf32> -> vector<256x4xf32>
    %c0_68 = arith.constant 0 : index
    %c0_69 = arith.constant 0 : index
    %86 = vector.load %arg9[%c0_68, %c0_69] : memref<256x4xf32, #tpu.memory_space<vmem>>, vector<256x4xf32>
    %87 = arith.addf %86, %85 : vector<256x4xf32>
    %c0_70 = arith.constant 0 : index
    %c0_71 = arith.constant 0 : index
    %88 = vector.load %arg9[%c0_70, %c0_71] : memref<256x4xf32, #tpu.memory_space<vmem>>, vector<256x4xf32>
    tpu.vector_store %arg9[%c0_70, %c0_71], %87 {strides = array<i32>} : memref<256x4xf32, #tpu.memory_space<vmem>>, vector<256x4xf32>,
    %c2_72 = arith.constant 2 : index
    %c2_73 = arith.constant 2 : index
    %c0_74 = arith.constant 0 : index
    %89 = vector.load %arg8[%c2_72, %c2_73, %c0_74] : memref<18x18x4xf32, #tpu.memory_space<vmem>>, vector<16x16x4xf32>
    %90 = vector.shape_cast %89 : vector<16x16x4xf32> to vector<256x4xf32>
    %91 = arith.truncf %90 : vector<256x4xf32> to vector<256x4xbf16>
    %92 = vector.extract_strided_slice %18 {offsets = [8, 0, 0], sizes = [1, 4, 4], strides = [1, 1, 1]} : vector<9x4x4xbf16> to vector<1x4x4xbf16>
    %93 = vector.shape_cast %92 : vector<1x4x4xbf16> to vector<4x4xbf16>
    %cst_75 = arith.constant dense<0.000000e+00> : vector<256x4xf32>
    %94 = tpu.matmul %91, %93, %cst_75 {dimension_numbers = #tpu.dot_dimension_numbers<[1], [0], [0], [1], [0, 0, 1, 1], [], []>} : vector<256x4xbf16>, vector<4x4xbf16>, vector<256x4xf32> -> vector<256x4xf32>
    %c0_76 = arith.constant 0 : index
    %c0_77 = arith.constant 0 : index
    %95 = vector.load %arg9[%c0_76, %c0_77] : memref<256x4xf32, #tpu.memory_space<vmem>>, vector<256x4xf32>
    %96 = arith.addf %95, %94 : vector<256x4xf32>
    %c0_78 = arith.constant 0 : index
    %c0_79 = arith.constant 0 : index
    %97 = vector.load %arg9[%c0_78, %c0_79] : memref<256x4xf32, #tpu.memory_space<vmem>>, vector<256x4xf32>
    tpu.vector_store %arg9[%c0_78, %c0_79], %96 {strides = array<i32>} : memref<256x4xf32, #tpu.memory_space<vmem>>, vector<256x4xf32>,
    %c0_80 = arith.constant 0 : index
    %c0_81 = arith.constant 0 : index
    %98 = vector.load %arg9[%c0_80, %c0_81] : memref<256x4xf32, #tpu.memory_space<vmem>>, vector<256x4xf32>
    %99 = arith.truncf %98 : vector<256x4xf32> to vector<256x4xbf16>
    %c0_82 = arith.constant 0 : index
    %c0_83 = arith.constant 0 : index
    %c0_84 = arith.constant 0 : index
    %100 = vector.load %arg6[%c0_82, %c0_83, %c0_84] : memref<1x256x4xbf16, #tpu.memory_space<vmem>>, vector<1x256x4xbf16>
    %101 = vector.shape_cast %100 : vector<1x256x4xbf16> to vector<256x4xbf16>
    %102 = vector.shape_cast %99 : vector<256x4xbf16> to vector<1x256x4xbf16>
    tpu.vector_store %arg6[%c0_82, %c0_83, %c0_84], %102 {strides = array<i32>} : memref<1x256x4xbf16, #tpu.memory_space<vmem>>, vector<1x256x4xbf16>,
    %c0_i32_85 = arith.constant 0 : i32
    %103 = arith.cmpi eq, %arg0, %c0_i32_85 : i32
    %c1_i32 = arith.constant 1 : i32
    %104 = arith.cmpi eq, %arg0, %c1_i32 : i32
    %105 = arith.extui %103 : i1 to i32
    %c0_i32_86 = arith.constant 0 : i32
    %106 = arith.cmpi ne, %105, %c0_i32_86 : i32
    scf.if %106 {
      %cst_98 = arith.constant 0.000000e+00 : f32
      %120 = vector.broadcast %cst_98 : f32 to vector<1x4xf32>
      %c0_99 = arith.constant 0 : index
      %c0_100 = arith.constant 0 : index
      %121 = vector.load %arg10[%c0_99, %c0_100] : memref<1x4xf32, #tpu.memory_space<vmem>>, vector<1x4xf32>
      tpu.vector_store %arg10[%c0_99, %c0_100], %120 {strides = array<i32>} : memref<1x4xf32, #tpu.memory_space<vmem>>, vector<1x4xf32>,
      %cst_101 = arith.constant 0.000000e+00 : f32
      %122 = vector.broadcast %cst_101 : f32 to vector<1x4xf32>
      %c0_102 = arith.constant 0 : index
      %c0_103 = arith.constant 0 : index
      %123 = vector.load %arg11[%c0_102, %c0_103] : memref<1x4xf32, #tpu.memory_space<vmem>>, vector<1x4xf32>
      tpu.vector_store %arg11[%c0_102, %c0_103], %122 {strides = array<i32>} : memref<1x4xf32, #tpu.memory_space<vmem>>, vector<1x4xf32>,
    } else {
    }
    %c0_87 = arith.constant 0 : index
    %c0_88 = arith.constant 0 : index
    %107 = vector.load %arg10[%c0_87, %c0_88] : memref<1x4xf32, #tpu.memory_space<vmem>>, vector<1x4xf32>
    %cst_89 = arith.constant dense<0.000000e+00> : vector<4xf32>
    %108 = vector.multi_reduction <add>, %98, %cst_89 [0] : vector<256x4xf32> to vector<4xf32>
    %109 = vector.shape_cast %108 : vector<4xf32> to vector<1x4xf32>
    %110 = arith.addf %107, %109 : vector<1x4xf32>
    %c0_90 = arith.constant 0 : index
    %c0_91 = arith.constant 0 : index
    %111 = vector.load %arg10[%c0_90, %c0_91] : memref<1x4xf32, #tpu.memory_space<vmem>>, vector<1x4xf32>
    tpu.vector_store %arg10[%c0_90, %c0_91], %110 {strides = array<i32>} : memref<1x4xf32, #tpu.memory_space<vmem>>, vector<1x4xf32>,
    %c0_92 = arith.constant 0 : index
    %c0_93 = arith.constant 0 : index
    %112 = vector.load %arg11[%c0_92, %c0_93] : memref<1x4xf32, #tpu.memory_space<vmem>>, vector<1x4xf32>
    %113 = arith.mulf %98, %98 : vector<256x4xf32>
    %cst_94 = arith.constant dense<0.000000e+00> : vector<4xf32>
    %114 = vector.multi_reduction <add>, %113, %cst_94 [0] : vector<256x4xf32> to vector<4xf32>
    %115 = vector.shape_cast %114 : vector<4xf32> to vector<1x4xf32>
    %116 = arith.addf %112, %115 : vector<1x4xf32>
    %c0_95 = arith.constant 0 : index
    %c0_96 = arith.constant 0 : index
    %117 = vector.load %arg11[%c0_95, %c0_96] : memref<1x4xf32, #tpu.memory_space<vmem>>, vector<1x4xf32>
    tpu.vector_store %arg11[%c0_95, %c0_96], %116 {strides = array<i32>} : memref<1x4xf32, #tpu.memory_space<vmem>>, vector<1x4xf32>,
    %118 = arith.extui %104 : i1 to i32
    %c0_i32_97 = arith.constant 0 : i32
    %119 = arith.cmpi ne, %118, %c0_i32_97 : i32
    scf.if %119 {
      %c0_98 = arith.constant 0 : index
      %c0_99 = arith.constant 0 : index
      %120 = vector.load %arg10[%c0_98, %c0_99] : memref<1x4xf32, #tpu.memory_space<vmem>>, vector<1x4xf32>
      %cst_100 = arith.constant 0.001953125 : f32
      %121 = vector.broadcast %cst_100 : f32 to vector<1x4xf32>
      %122 = arith.mulf %120, %121 : vector<1x4xf32>
      %c0_101 = arith.constant 0 : index
      %c0_102 = arith.constant 0 : index
      %123 = vector.load %arg11[%c0_101, %c0_102] : memref<1x4xf32, #tpu.memory_space<vmem>>, vector<1x4xf32>
      %cst_103 = arith.constant 0.001953125 : f32
      %124 = vector.broadcast %cst_103 : f32 to vector<1x4xf32>
      %125 = arith.mulf %123, %124 : vector<1x4xf32>
      %126 = arith.mulf %122, %122 : vector<1x4xf32>
      %127 = arith.subf %125, %126 : vector<1x4xf32>
      %c0_104 = arith.constant 0 : index
      %c0_105 = arith.constant 0 : index
      %128 = vector.load %arg4[%c0_104, %c0_105] : memref<1x4xf32, #tpu.memory_space<vmem>>, vector<1x4xf32>
      %cst_106 = arith.constant 9.99999974E-6 : f32
      %129 = vector.broadcast %cst_106 : f32 to vector<1x4xf32>
      %130 = arith.addf %127, %129 : vector<1x4xf32>
      %131 = math.rsqrt %130 : vector<1x4xf32>
      %132 = arith.mulf %128, %131 : vector<1x4xf32>
      %c0_107 = arith.constant 0 : index
      %c0_108 = arith.constant 0 : index
      %133 = vector.load %arg5[%c0_107, %c0_108] : memref<1x4xf32, #tpu.memory_space<vmem>>, vector<1x4xf32>
      %134 = arith.mulf %122, %132 : vector<1x4xf32>
      %135 = arith.subf %133, %134 : vector<1x4xf32>
      %136 = tpu.concatenate %132, %135 in 0 : vector<1x4xf32>, vector<1x4xf32> -> vector<2x4xf32>
      %c0_109 = arith.constant 0 : index
      %c0_110 = arith.constant 0 : index
      %137 = vector.load %arg7[%c0_109, %c0_110] : memref<2x4xf32, #tpu.memory_space<vmem>>, vector<2x4xf32>
      tpu.vector_store %arg7[%c0_109, %c0_110], %136 {strides = array<i32>} : memref<2x4xf32, #tpu.memory_space<vmem>>, vector<2x4xf32>,
    } else {
    }
    return
  }
  func.func @transform_0(%arg0: i32) -> (i32, i32, i32, i32) {
    %c0_i32 = arith.constant 0 : i32
    %c0_i32_0 = arith.constant 0 : i32
    %c0_i32_1 = arith.constant 0 : i32
    %c0_i32_2 = arith.constant 0 : i32
    return %arg0, %c0_i32, %c0_i32_0, %c0_i32_1 : i32, i32, i32, i32
  }
  func.func @transform_1(%arg0: i32) -> (i32, i32) {
    %c0_i32 = arith.constant 0 : i32
    %c0_i32_0 = arith.constant 0 : i32
    %c0_i32_1 = arith.constant 0 : i32
    return %c0_i32, %c0_i32_0 : i32, i32
  }
  func.func @transform_2(%arg0: i32) -> (i32, i32, i32) {
    %c0_i32 = arith.constant 0 : i32
    %c0_i32_0 = arith.constant 0 : i32
    %c0_i32_1 = arith.constant 0 : i32
    %c0_i32_2 = arith.constant 0 : i32
    return %c0_i32, %c0_i32_0, %c0_i32_1 : i32, i32, i32
  }
  func.func @transform_3(%arg0: i32) -> (i32, i32) {
    %c0_i32 = arith.constant 0 : i32
    %c0_i32_0 = arith.constant 0 : i32
    %c0_i32_1 = arith.constant 0 : i32
    return %c0_i32, %c0_i32_0 : i32, i32
  }
  func.func @transform_4(%arg0: i32) -> (i32, i32) {
    %c0_i32 = arith.constant 0 : i32
    %c0_i32_0 = arith.constant 0 : i32
    %c0_i32_1 = arith.constant 0 : i32
    return %c0_i32, %c0_i32_0 : i32, i32
  }
  func.func @transform_5(%arg0: i32) -> (i32, i32, i32) {
    %c0_i32 = arith.constant 0 : i32
    %c0_i32_0 = arith.constant 0 : i32
    %c0_i32_1 = arith.constant 0 : i32
    return %arg0, %c0_i32, %c0_i32_0 : i32, i32, i32
  }
  func.func @transform_6(%arg0: i32) -> (i32, i32) {
    %c0_i32 = arith.constant 0 : i32
    %c0_i32_0 = arith.constant 0 : i32
    %c0_i32_1 = arith.constant 0 : i32
    return %c0_i32, %c0_i32_0 : i32, i32
  }
}

module attributes {stable_mosaic.version = 11 : i64} {
  func.func @_bn_residual_relu_nchw_kernel(%arg0: i32, %arg1: i32, %arg2: memref<1x128x16xbf16, #tpu.memory_space<vmem>>, %arg3: memref<2x16xf32, #tpu.memory_space<vmem>>, %arg4: memref<1x16x128xf32, #tpu.memory_space<vmem>>, %arg5: memref<1x16x128xf32, #tpu.memory_space<vmem>>) attributes {dimension_semantics = [#tpu.dimension_semantics<parallel>, #tpu.dimension_semantics<parallel>], iteration_bounds = array<i64: 2, 2>, scalar_prefetch = 0 : i64, scratch_operands = 0 : i64, tpu.core_type = #tpu.core_type<tc>, window_params = [{transform_indices = @transform_0, window_bounds = array<i64: 1, 128, 16>}, {pipeline_mode = #tpu.pipeline_mode<synchronous>, transform_indices = @transform_1, window_bounds = array<i64: 2, 16>}, {transform_indices = @transform_2, window_bounds = array<i64: 1, 16, 128>}, {transform_indices = @transform_3, window_bounds = array<i64: 1, 16, 128>}]} {
    %c0 = arith.constant 0 : index
    %c0_0 = arith.constant 0 : index
    %0 = vector.load %arg3[%c0, %c0_0] : memref<2x16xf32, #tpu.memory_space<vmem>>, vector<2x16xf32>
    %c0_1 = arith.constant 0 : index
    %c0_2 = arith.constant 0 : index
    %c0_3 = arith.constant 0 : index
    %1 = vector.load %arg2[%c0_1, %c0_2, %c0_3] : memref<1x128x16xbf16, #tpu.memory_space<vmem>>, vector<1x128x16xbf16>
    %2 = vector.shape_cast %1 : vector<1x128x16xbf16> to vector<128x16xbf16>
    %3 = arith.extf %2 : vector<128x16xbf16> to vector<128x16xf32>
    %4 = vector.extract_strided_slice %0 {offsets = [0, 0], sizes = [1, 16], strides = [1, 1]} : vector<2x16xf32> to vector<1x16xf32>
    %5 = vector.broadcast %4 : vector<1x16xf32> to vector<128x16xf32>
    %6 = arith.mulf %3, %5 : vector<128x16xf32>
    %7 = vector.extract_strided_slice %0 {offsets = [1, 0], sizes = [1, 16], strides = [1, 1]} : vector<2x16xf32> to vector<1x16xf32>
    %8 = vector.broadcast %7 : vector<1x16xf32> to vector<128x16xf32>
    %9 = arith.addf %6, %8 : vector<128x16xf32>
    %10 = tpu.transpose %9, [1, 0] : vector<128x16xf32> -> vector<16x128xf32>
    %c0_4 = arith.constant 0 : index
    %c0_5 = arith.constant 0 : index
    %c0_6 = arith.constant 0 : index
    %11 = vector.load %arg4[%c0_4, %c0_5, %c0_6] : memref<1x16x128xf32, #tpu.memory_space<vmem>>, vector<1x16x128xf32>
    %12 = vector.shape_cast %11 : vector<1x16x128xf32> to vector<16x128xf32>
    %13 = arith.addf %10, %12 : vector<16x128xf32>
    %cst = arith.constant 0.000000e+00 : f32
    %14 = vector.broadcast %cst : f32 to vector<16x128xf32>
    %15 = arith.maximumf %13, %14 : vector<16x128xf32>
    %c0_7 = arith.constant 0 : index
    %c0_8 = arith.constant 0 : index
    %c0_9 = arith.constant 0 : index
    %16 = vector.load %arg5[%c0_7, %c0_8, %c0_9] : memref<1x16x128xf32, #tpu.memory_space<vmem>>, vector<1x16x128xf32>
    %17 = vector.shape_cast %16 : vector<1x16x128xf32> to vector<16x128xf32>
    %18 = vector.shape_cast %15 : vector<16x128xf32> to vector<1x16x128xf32>
    tpu.vector_store %arg5[%c0_7, %c0_8, %c0_9], %18 {strides = array<i32>} : memref<1x16x128xf32, #tpu.memory_space<vmem>>, vector<1x16x128xf32>,
    return
  }
  func.func @transform_0(%arg0: i32, %arg1: i32) -> (i32, i32, i32) {
    %c0_i32 = arith.constant 0 : i32
    %c0_i32_0 = arith.constant 0 : i32
    return %arg0, %arg1, %c0_i32 : i32, i32, i32
  }
  func.func @transform_1(%arg0: i32, %arg1: i32) -> (i32, i32) {
    %c0_i32 = arith.constant 0 : i32
    %c0_i32_0 = arith.constant 0 : i32
    %c0_i32_1 = arith.constant 0 : i32
    return %c0_i32, %c0_i32_0 : i32, i32
  }
  func.func @transform_2(%arg0: i32, %arg1: i32) -> (i32, i32, i32) {
    %c0_i32 = arith.constant 0 : i32
    %c0_i32_0 = arith.constant 0 : i32
    return %arg0, %c0_i32, %arg1 : i32, i32, i32
  }
  func.func @transform_3(%arg0: i32, %arg1: i32) -> (i32, i32, i32) {
    %c0_i32 = arith.constant 0 : i32
    %c0_i32_0 = arith.constant 0 : i32
    return %arg0, %c0_i32, %arg1 : i32, i32, i32
  }
}

module attributes {stable_mosaic.version = 11 : i64} {
  func.func @_bn_relu_conv1x1_stats_kernel(%arg0: i32, %arg1: i32, %arg2: memref<1x128x4xbf16, #tpu.memory_space<vmem>>, %arg3: memref<2x4xf32, #tpu.memory_space<vmem>>, %arg4: memref<4x16xbf16, #tpu.memory_space<vmem>>, %arg5: memref<1x16xf32, #tpu.memory_space<vmem>>, %arg6: memref<1x16xf32, #tpu.memory_space<vmem>>, %arg7: memref<1x128x16xbf16, #tpu.memory_space<vmem>>, %arg8: memref<2x16xf32, #tpu.memory_space<vmem>>, %arg9: memref<1x16xf32, #tpu.memory_space<vmem>>, %arg10: memref<1x16xf32, #tpu.memory_space<vmem>>) attributes {dimension_semantics = [#tpu.dimension_semantics<arbitrary>, #tpu.dimension_semantics<arbitrary>], iteration_bounds = array<i64: 2, 2>, scalar_prefetch = 0 : i64, scratch_operands = 2 : i64, tpu.core_type = #tpu.core_type<tc>, window_params = [{transform_indices = @transform_0, window_bounds = array<i64: 1, 128, 4>}, {pipeline_mode = #tpu.pipeline_mode<synchronous>, transform_indices = @transform_1, window_bounds = array<i64: 2, 4>}, {pipeline_mode = #tpu.pipeline_mode<synchronous>, transform_indices = @transform_2, window_bounds = array<i64: 4, 16>}, {pipeline_mode = #tpu.pipeline_mode<synchronous>, transform_indices = @transform_3, window_bounds = array<i64: 1, 16>}, {pipeline_mode = #tpu.pipeline_mode<synchronous>, transform_indices = @transform_4, window_bounds = array<i64: 1, 16>}, {transform_indices = @transform_5, window_bounds = array<i64: 1, 128, 16>}, {pipeline_mode = #tpu.pipeline_mode<synchronous>, transform_indices = @transform_6, window_bounds = array<i64: 2, 16>}]} {
    %c0 = arith.constant 0 : index
    %c0_0 = arith.constant 0 : index
    %0 = vector.load %arg3[%c0, %c0_0] : memref<2x4xf32, #tpu.memory_space<vmem>>, vector<2x4xf32>
    %c0_1 = arith.constant 0 : index
    %c0_2 = arith.constant 0 : index
    %c0_3 = arith.constant 0 : index
    %1 = vector.load %arg2[%c0_1, %c0_2, %c0_3] : memref<1x128x4xbf16, #tpu.memory_space<vmem>>, vector<1x128x4xbf16>
    %2 = vector.shape_cast %1 : vector<1x128x4xbf16> to vector<128x4xbf16>
    %3 = arith.extf %2 : vector<128x4xbf16> to vector<128x4xf32>
    %4 = vector.extract_strided_slice %0 {offsets = [0, 0], sizes = [1, 4], strides = [1, 1]} : vector<2x4xf32> to vector<1x4xf32>
    %5 = vector.broadcast %4 : vector<1x4xf32> to vector<128x4xf32>
    %6 = arith.mulf %3, %5 : vector<128x4xf32>
    %7 = vector.extract_strided_slice %0 {offsets = [1, 0], sizes = [1, 4], strides = [1, 1]} : vector<2x4xf32> to vector<1x4xf32>
    %8 = vector.broadcast %7 : vector<1x4xf32> to vector<128x4xf32>
    %9 = arith.addf %6, %8 : vector<128x4xf32>
    %cst = arith.constant 0.000000e+00 : f32
    %10 = vector.broadcast %cst : f32 to vector<128x4xf32>
    %11 = arith.maximumf %9, %10 : vector<128x4xf32>
    %12 = arith.truncf %11 : vector<128x4xf32> to vector<128x4xbf16>
    %c0_4 = arith.constant 0 : index
    %c0_5 = arith.constant 0 : index
    %13 = vector.load %arg4[%c0_4, %c0_5] : memref<4x16xbf16, #tpu.memory_space<vmem>>, vector<4x16xbf16>
    %cst_6 = arith.constant dense<0.000000e+00> : vector<128x16xf32>
    %14 = tpu.matmul %12, %13, %cst_6 {dimension_numbers = #tpu.dot_dimension_numbers<[1], [0], [0], [1], [0, 0, 1, 1], [], []>} : vector<128x4xbf16>, vector<4x16xbf16>, vector<128x16xf32> -> vector<128x16xf32>
    %15 = arith.truncf %14 : vector<128x16xf32> to vector<128x16xbf16>
    %c0_7 = arith.constant 0 : index
    %c0_8 = arith.constant 0 : index
    %c0_9 = arith.constant 0 : index
    %16 = vector.load %arg7[%c0_7, %c0_8, %c0_9] : memref<1x128x16xbf16, #tpu.memory_space<vmem>>, vector<1x128x16xbf16>
    %17 = vector.shape_cast %16 : vector<1x128x16xbf16> to vector<128x16xbf16>
    %18 = vector.shape_cast %15 : vector<128x16xbf16> to vector<1x128x16xbf16>
    tpu.vector_store %arg7[%c0_7, %c0_8, %c0_9], %18 {strides = array<i32>} : memref<1x128x16xbf16, #tpu.memory_space<vmem>>, vector<1x128x16xbf16>,
    %c0_i32 = arith.constant 0 : i32
    %19 = arith.cmpi eq, %arg0, %c0_i32 : i32
    %c0_i32_10 = arith.constant 0 : i32
    %20 = arith.cmpi eq, %arg1, %c0_i32_10 : i32
    %21 = arith.andi %19, %20 : i1
    %c1_i32 = arith.constant 1 : i32
    %22 = arith.cmpi eq, %arg0, %c1_i32 : i32
    %c1_i32_11 = arith.constant 1 : i32
    %23 = arith.cmpi eq, %arg1, %c1_i32_11 : i32
    %24 = arith.andi %22, %23 : i1
    %25 = arith.extui %21 : i1 to i32
    %c0_i32_12 = arith.constant 0 : i32
    %26 = arith.cmpi ne, %25, %c0_i32_12 : i32
    scf.if %26 {
      %cst_24 = arith.constant 0.000000e+00 : f32
      %40 = vector.broadcast %cst_24 : f32 to vector<1x16xf32>
      %c0_25 = arith.constant 0 : index
      %c0_26 = arith.constant 0 : index
      %41 = vector.load %arg9[%c0_25, %c0_26] : memref<1x16xf32, #tpu.memory_space<vmem>>, vector<1x16xf32>
      tpu.vector_store %arg9[%c0_25, %c0_26], %40 {strides = array<i32>} : memref<1x16xf32, #tpu.memory_space<vmem>>, vector<1x16xf32>,
      %cst_27 = arith.constant 0.000000e+00 : f32
      %42 = vector.broadcast %cst_27 : f32 to vector<1x16xf32>
      %c0_28 = arith.constant 0 : index
      %c0_29 = arith.constant 0 : index
      %43 = vector.load %arg10[%c0_28, %c0_29] : memref<1x16xf32, #tpu.memory_space<vmem>>, vector<1x16xf32>
      tpu.vector_store %arg10[%c0_28, %c0_29], %42 {strides = array<i32>} : memref<1x16xf32, #tpu.memory_space<vmem>>, vector<1x16xf32>,
    } else {
    }
    %c0_13 = arith.constant 0 : index
    %c0_14 = arith.constant 0 : index
    %27 = vector.load %arg9[%c0_13, %c0_14] : memref<1x16xf32, #tpu.memory_space<vmem>>, vector<1x16xf32>
    %cst_15 = arith.constant dense<0.000000e+00> : vector<16xf32>
    %28 = vector.multi_reduction <add>, %14, %cst_15 [0] : vector<128x16xf32> to vector<16xf32>
    %29 = vector.shape_cast %28 : vector<16xf32> to vector<1x16xf32>
    %30 = arith.addf %27, %29 : vector<1x16xf32>
    %c0_16 = arith.constant 0 : index
    %c0_17 = arith.constant 0 : index
    %31 = vector.load %arg9[%c0_16, %c0_17] : memref<1x16xf32, #tpu.memory_space<vmem>>, vector<1x16xf32>
    tpu.vector_store %arg9[%c0_16, %c0_17], %30 {strides = array<i32>} : memref<1x16xf32, #tpu.memory_space<vmem>>, vector<1x16xf32>,
    %c0_18 = arith.constant 0 : index
    %c0_19 = arith.constant 0 : index
    %32 = vector.load %arg10[%c0_18, %c0_19] : memref<1x16xf32, #tpu.memory_space<vmem>>, vector<1x16xf32>
    %33 = arith.mulf %14, %14 : vector<128x16xf32>
    %cst_20 = arith.constant dense<0.000000e+00> : vector<16xf32>
    %34 = vector.multi_reduction <add>, %33, %cst_20 [0] : vector<128x16xf32> to vector<16xf32>
    %35 = vector.shape_cast %34 : vector<16xf32> to vector<1x16xf32>
    %36 = arith.addf %32, %35 : vector<1x16xf32>
    %c0_21 = arith.constant 0 : index
    %c0_22 = arith.constant 0 : index
    %37 = vector.load %arg10[%c0_21, %c0_22] : memref<1x16xf32, #tpu.memory_space<vmem>>, vector<1x16xf32>
    tpu.vector_store %arg10[%c0_21, %c0_22], %36 {strides = array<i32>} : memref<1x16xf32, #tpu.memory_space<vmem>>, vector<1x16xf32>,
    %38 = arith.extui %24 : i1 to i32
    %c0_i32_23 = arith.constant 0 : i32
    %39 = arith.cmpi ne, %38, %c0_i32_23 : i32
    scf.if %39 {
      %c0_24 = arith.constant 0 : index
      %c0_25 = arith.constant 0 : index
      %40 = vector.load %arg9[%c0_24, %c0_25] : memref<1x16xf32, #tpu.memory_space<vmem>>, vector<1x16xf32>
      %cst_26 = arith.constant 0.001953125 : f32
      %41 = vector.broadcast %cst_26 : f32 to vector<1x16xf32>
      %42 = arith.mulf %40, %41 : vector<1x16xf32>
      %c0_27 = arith.constant 0 : index
      %c0_28 = arith.constant 0 : index
      %43 = vector.load %arg10[%c0_27, %c0_28] : memref<1x16xf32, #tpu.memory_space<vmem>>, vector<1x16xf32>
      %cst_29 = arith.constant 0.001953125 : f32
      %44 = vector.broadcast %cst_29 : f32 to vector<1x16xf32>
      %45 = arith.mulf %43, %44 : vector<1x16xf32>
      %46 = arith.mulf %42, %42 : vector<1x16xf32>
      %47 = arith.subf %45, %46 : vector<1x16xf32>
      %c0_30 = arith.constant 0 : index
      %c0_31 = arith.constant 0 : index
      %48 = vector.load %arg5[%c0_30, %c0_31] : memref<1x16xf32, #tpu.memory_space<vmem>>, vector<1x16xf32>
      %cst_32 = arith.constant 9.99999974E-6 : f32
      %49 = vector.broadcast %cst_32 : f32 to vector<1x16xf32>
      %50 = arith.addf %47, %49 : vector<1x16xf32>
      %51 = math.rsqrt %50 : vector<1x16xf32>
      %52 = arith.mulf %48, %51 : vector<1x16xf32>
      %c0_33 = arith.constant 0 : index
      %c0_34 = arith.constant 0 : index
      %53 = vector.load %arg6[%c0_33, %c0_34] : memref<1x16xf32, #tpu.memory_space<vmem>>, vector<1x16xf32>
      %54 = arith.mulf %42, %52 : vector<1x16xf32>
      %55 = arith.subf %53, %54 : vector<1x16xf32>
      %56 = tpu.concatenate %52, %55 in 0 : vector<1x16xf32>, vector<1x16xf32> -> vector<2x16xf32>
      %c0_35 = arith.constant 0 : index
      %c0_36 = arith.constant 0 : index
      %57 = vector.load %arg8[%c0_35, %c0_36] : memref<2x16xf32, #tpu.memory_space<vmem>>, vector<2x16xf32>
      tpu.vector_store %arg8[%c0_35, %c0_36], %56 {strides = array<i32>} : memref<2x16xf32, #tpu.memory_space<vmem>>, vector<2x16xf32>,
    } else {
    }
    return
  }
  func.func @transform_0(%arg0: i32, %arg1: i32) -> (i32, i32, i32) {
    %c0_i32 = arith.constant 0 : i32
    %c0_i32_0 = arith.constant 0 : i32
    return %arg0, %arg1, %c0_i32 : i32, i32, i32
  }
  func.func @transform_1(%arg0: i32, %arg1: i32) -> (i32, i32) {
    %c0_i32 = arith.constant 0 : i32
    %c0_i32_0 = arith.constant 0 : i32
    %c0_i32_1 = arith.constant 0 : i32
    return %c0_i32, %c0_i32_0 : i32, i32
  }
  func.func @transform_2(%arg0: i32, %arg1: i32) -> (i32, i32) {
    %c0_i32 = arith.constant 0 : i32
    %c0_i32_0 = arith.constant 0 : i32
    %c0_i32_1 = arith.constant 0 : i32
    return %c0_i32, %c0_i32_0 : i32, i32
  }
  func.func @transform_3(%arg0: i32, %arg1: i32) -> (i32, i32) {
    %c0_i32 = arith.constant 0 : i32
    %c0_i32_0 = arith.constant 0 : i32
    %c0_i32_1 = arith.constant 0 : i32
    return %c0_i32, %c0_i32_0 : i32, i32
  }
  func.func @transform_4(%arg0: i32, %arg1: i32) -> (i32, i32) {
    %c0_i32 = arith.constant 0 : i32
    %c0_i32_0 = arith.constant 0 : i32
    %c0_i32_1 = arith.constant 0 : i32
    return %c0_i32, %c0_i32_0 : i32, i32
  }
  func.func @transform_5(%arg0: i32, %arg1: i32) -> (i32, i32, i32) {
    %c0_i32 = arith.constant 0 : i32
    %c0_i32_0 = arith.constant 0 : i32
    return %arg0, %arg1, %c0_i32 : i32, i32, i32
  }
  func.func @transform_6(%arg0: i32, %arg1: i32) -> (i32, i32) {
    %c0_i32 = arith.constant 0 : i32
    %c0_i32_0 = arith.constant 0 : i32
    %c0_i32_1 = arith.constant 0 : i32
    return %c0_i32, %c0_i32_0 : i32, i32
  }
}

</mosaic_0001>

<llo_original>
// kernel: bottleneck_forward.4
$region0: #{bottleneck_forward.4}
  #allocation0 [shape = 'u32[]', space=smem, size = 0x4, offset = 0x4, fixed_abs, tag = 'smem constant byte address 0x4 - core index']
  #allocation1 [shape = 'u32[144,128]{1,0:T(1,128)}', space=vmem, size = 0x12000, scoped, tag = 'internal scratch']
  #allocation2 [shape = 'f32[1,4]{1,0:T(1,128)}', space=vmem, size = 0x200, scoped, tag = 'scratch operand']
  #allocation3 [shape = 'f32[1,4]{1,0:T(1,128)}', space=vmem, size = 0x200, scoped, tag = 'scratch operand']
  %s0 = inlined_call_operand.vmem [shape: f32[2,16,256], index: 0, kind: input, shape index: {}]
  %s1 = inlined_call_operand.vmem [shape: bf16[16,4], index: 1, kind: input, shape index: {}]
  %s2 = inlined_call_operand.vmem [shape: f32[1,4], index: 2, kind: input, shape index: {}]
  %s3 = inlined_call_operand.vmem [shape: f32[1,4], index: 3, kind: input, shape index: {}]
  %s4 = inlined_call_operand.vmem [shape: bf16[2,256,4], index: 4, kind: output, shape index: {0}]
  %s5 = inlined_call_operand.vmem [shape: f32[2,4], index: 5, kind: output, shape index: {1}]
  %6 = xla_tuple %s4, %s5
  %s7 = sld [smem:[#allocation0]]
  $region103: #{bottleneck_forward.4} parent=0
    _
  %s9 = ssub.s32 1, %s7
  %s10 = scalar_select 0, %s9, %s7
  $region1: #{bottleneck_forward.4} parent=0
    #allocation4 [shape = 'u8[16384]{0}', space=vmem, size = 0x4000, scoped, tag = 'input window, operand 0']
    loop: start=0, step=1, limit=6
    $region2: #{bottleneck_forward.4} parent=1 // loop_pre_header
      _
    $region3: #{bottleneck_forward.4} parent=1 // loop_header
      %s12 = sphi 0, %s16
      %p13 = scmp.ge.s32.totalorder %s12, 6
      %s19 = sphi 0, %s31
      %s20 = sphi 0, %s27
      %s21 = sphi 0, %s19
      %s22 = sphi 0, %s20
      %s23 = sphi 0, %s21
      %s24 = sphi 0, %s22
      %s36 = sphi 0, %s38
      %s39 = sphi 0, %s36
      %s40 = sphi 0, %s39
      %s56 = sphi 0, %s40
      %s60 = sphi 0, %s60
      %s62 = sphi 0, %s60
      %s63 = sphi 0, %s62
      %s77 = sphi 0, %s63
      %s81 = sphi 0, %s81
      %s83 = sphi 0, %s81
      %s84 = sphi 0, %s83
      %s98 = sphi 0, %s84
      %s102 = sphi 0, %s102
      %s104 = sphi 0, %s102
      %s105 = sphi 0, %s104
      %s119 = sphi 0, %s105
      %s127 = sphi 0, %s129
      %s130 = sphi 0, %s127
      %s131 = sphi 0, %s130
      %s147 = sphi 0, %s131
      %s151 = sphi 0, %s151
      %s153 = sphi 0, %s151
      %s154 = sphi 0, %s153
      %s168 = sphi 0, %s154
    $region4: #{bottleneck_forward.4} parent=1 // loop_header_branch
      %15 = sbr.rel (%p13) target = $region8
    $region5: #{bottleneck_forward.4} parent=1 // loop_body
      %s17 = ssub.s32 %s12, 1
      %s18 = ssub.s32 %s12, 2
      %s25 = sadd.s32 1, %s20
      %p26 = scmp.ge.s32.totalorder %s25, 2
      %s27 = scalar_select %p26, 0, %s25
      %s28 = sadd.s32 1, %s19
      %s29 = scalar_select %p26, %s28, %s19
      %p30 = scmp.ge.s32.totalorder %s29, 2
      %s31 = scalar_select %p30, 0, %s29
      %s32 = ssub.s32 %s19, %s31
      %s33 = ssub.s32 %s20, %s27
      %s34 = sor.u32 %s32, %s33
      %p35 = scmp.eq.s32.totalorder %s34, 0
      %s37 = sadd.s32 %s36, 1
      %s38 = scalar_select %p35, %s36, %s37
      %p41 = pneg %p35
      %p42 = scmp.eq.s32.totalorder %s12, 3
      %p43 = por %p41, %p42
      %p44 = scmp.ne.s32.totalorder %s36, %s39
      %p45 = scmp.eq.s32.totalorder %s12, 0
      %p46 = por %p44, %p45
      %p47 = scmp.ne.s32.totalorder %s36, %s39
      %p48 = scmp.eq.s32.totalorder %s17, 3
      %p49 = por %p47, %p48
      %p50 = scmp.ne.s32.totalorder %s39, %s40
      %p51 = scmp.eq.s32.totalorder %s17, 0
      %p52 = por %p50, %p51
      %p53 = scmp.ne.s32.totalorder %s39, %s40
      %p54 = scmp.eq.s32.totalorder %s18, 3
      %p55 = por %p53, %p54
      %p57 = scmp.ne.s32.totalorder %s40, %s56
      %p58 = scmp.eq.s32.totalorder %s18, 0
      %p59 = por %p57, %p58
      %s61 = sadd.s32 %s60, 1
      %p64 = scmp.eq.s32.totalorder %s12, 3
      %p65 = scmp.ne.s32.totalorder %s60, %s62
      %p66 = scmp.eq.s32.totalorder %s12, 0
      %p67 = por %p65, %p66
      %p68 = scmp.ne.s32.totalorder %s60, %s62
      %p69 = scmp.eq.s32.totalorder %s17, 3
      %p70 = por %p68, %p69
      %p71 = scmp.ne.s32.totalorder %s62, %s63
      %p72 = scmp.eq.s32.totalorder %s17, 0
      %p73 = por %p71, %p72
      %p74 = scmp.ne.s32.totalorder %s62, %s63
      %p75 = scmp.eq.s32.totalorder %s18, 3
      %p76 = por %p74, %p75
      %p78 = scmp.ne.s32.totalorder %s63, %s77
      %p79 = scmp.eq.s32.totalorder %s18, 0
      %p80 = por %p78, %p79
      %s82 = sadd.s32 %s81, 1
      %p85 = scmp.eq.s32.totalorder %s12, 3
      %p86 = scmp.ne.s32.totalorder %s81, %s83
      %p87 = scmp.eq.s32.totalorder %s12, 0
      %p88 = por %p86, %p87
      %p89 = scmp.ne.s32.totalorder %s81, %s83
      %p90 = scmp.eq.s32.totalorder %s17, 3
      %p91 = por %p89, %p90
      %p92 = scmp.ne.s32.totalorder %s83, %s84
      %p93 = scmp.eq.s32.totalorder %s17, 0
      %p94 = por %p92, %p93
      %p95 = scmp.ne.s32.totalorder %s83, %s84
      %p96 = scmp.eq.s32.totalorder %s18, 3
      %p97 = por %p95, %p96
      %p99 = scmp.ne.s32.totalorder %s84, %s98
      %p100 = scmp.eq.s32.totalorder %s18, 0
      %p101 = por %p99, %p100
      %s103 = sadd.s32 %s102, 1
      %p106 = scmp.eq.s32.totalorder %s12, 3
      %p107 = scmp.ne.s32.totalorder %s102, %s104
      %p108 = scmp.eq.s32.totalorder %s12, 0
      %p109 = por %p107, %p108
      %p110 = scmp.ne.s32.totalorder %s102, %s104
      %p111 = scmp.eq.s32.totalorder %s17, 3
      %p112 = por %p110, %p111
      %p113 = scmp.ne.s32.totalorder %s104, %s105
      %p114 = scmp.eq.s32.totalorder %s17, 0
      %p115 = por %p113, %p114
      %p116 = scmp.ne.s32.totalorder %s104, %s105
      %p117 = scmp.eq.s32.totalorder %s18, 3
      %p118 = por %p116, %p117
      %p120 = scmp.ne.s32.totalorder %s105, %s119
      %p121 = scmp.eq.s32.totalorder %s18, 0
      %p122 = por %p120, %p121
      %s123 = ssub.s32 %s19, %s31
      %s124 = ssub.s32 %s20, %s27
      %s125 = sor.u32 %s123, %s124
      %p126 = scmp.eq.s32.totalorder %s125, 0
      %s128 = sadd.s32 %s127, 1
      %s129 = scalar_select %p126, %s127, %s128
      %p132 = pneg %p126
      %p133 = scmp.eq.s32.totalorder %s12, 3
      %p134 = por %p132, %p133
      %p135 = scmp.ne.s32.totalorder %s127, %s130
      %p136 = scmp.eq.s32.totalorder %s12, 0
      %p137 = por %p135, %p136
      %p138 = scmp.ne.s32.totalorder %s127, %s130
      %p139 = scmp.eq.s32.totalorder %s17, 3
      %p140 = por %p138, %p139
      %p141 = scmp.ne.s32.totalorder %s130, %s131
      %p142 = scmp.eq.s32.totalorder %s17, 0
      %p143 = por %p141, %p142
      %p144 = scmp.ne.s32.totalorder %s130, %s131
      %p145 = scmp.eq.s32.totalorder %s18, 3
      %p146 = por %p144, %p145
      %p148 = scmp.ne.s32.totalorder %s131, %s147
      %p149 = scmp.eq.s32.totalorder %s18, 0
      %p150 = por %p148, %p149
      %s152 = sadd.s32 %s151, 1
      %p155 = scmp.eq.s32.totalorder %s12, 3
      %p156 = scmp.ne.s32.totalorder %s151, %s153
      %p157 = scmp.eq.s32.totalorder %s12, 0
      %p158 = por %p156, %p157
      %p159 = scmp.ne.s32.totalorder %s151, %s153
      %p160 = scmp.eq.s32.totalorder %s17, 3
      %p161 = por %p159, %p160
      %p162 = scmp.ne.s32.totalorder %s153, %s154
      %p163 = scmp.eq.s32.totalorder %s17, 0
      %p164 = por %p162, %p163
      %p165 = scmp.ne.s32.totalorder %s153, %s154
      %p166 = scmp.eq.s32.totalorder %s18, 3
      %p167 = por %p165, %p166
      %p169 = scmp.ne.s32.totalorder %s154, %s168
      %p170 = scmp.eq.s32.totalorder %s18, 0
      %p171 = por %p169, %p170
      %p172 = scmp.le.s32.totalorder 1, %s12
      %p173 = scmp.lt.s32.totalorder %s12, 5
      %p174 = pnand %p172, %p173
      %p175 = pneg %p174
      // Predicated region
      $region9: #{bottleneck_forward.4} parent=5 // pred_check
        _
      $region10: #{bottleneck_forward.4} parent=5 // pred_check_branch
        %177 = sbr.rel (%p174) target = $region12
      $region11: #{bottleneck_forward.4} parent=5 // pred_region
        %s178 = ssub.s32 %s12, 1
        // Predicated region
        $region13: #{bottleneck_forward.4} parent=11 // pred_check
          %p179 = pneg %p73
        $region14: #{bottleneck_forward.4} parent=11 // pred_check_branch
          %181 = sbr.rel (%p179) target = $region16
        $region15: #{bottleneck_forward.4} parent=11 // pred_region
          _
        $region16: #{bottleneck_forward.4} parent=11 // pred_fallthru
          _
        // Predicated region
        $region17: #{bottleneck_forward.4} parent=11 // pred_check
          %p182 = pneg %p94
        $region18: #{bottleneck_forward.4} parent=11 // pred_check_branch
          %184 = sbr.rel (%p182) target = $region20
        $region19: #{bottleneck_forward.4} parent=11 // pred_region
          _
        $region20: #{bottleneck_forward.4} parent=11 // pred_fallthru
          _
        // Predicated region
        $region21: #{bottleneck_forward.4} parent=11 // pred_check
          %p185 = pneg %p115
        $region22: #{bottleneck_forward.4} parent=11 // pred_check_branch
          %187 = sbr.rel (%p185) target = $region24
        $region23: #{bottleneck_forward.4} parent=11 // pred_region
          _
        $region24: #{bottleneck_forward.4} parent=11 // pred_fallthru
          _
      $region12: #{bottleneck_forward.4} parent=5 // pred_fallthru
        _
      %p188 = scmp.lt.s32.totalorder %s12, 4
      // Predicated region
      $region25: #{bottleneck_forward.4} parent=5 // pred_check
        %p189 = pneg %p188
      $region26: #{bottleneck_forward.4} parent=5 // pred_check_branch
        %191 = sbr.rel (%p189) target = $region28
      $region27: #{bottleneck_forward.4} parent=5 // pred_region
        // Predicated region
        $region29: #{bottleneck_forward.4} parent=27 // pred_check
          %p192 = pneg %p46
        $region30: #{bottleneck_forward.4} parent=27 // pred_check_branch
          %194 = sbr.rel (%p192) target = $region32
        $region31: #{bottleneck_forward.4} parent=27 // pred_region
          %s195 = sand.u32 %s36, 1
          %s196 = sand.u32 %s36, 1
          %s197 = smul.addr %s196, 16
          %s198 = scalar_lea.vmem [#allocation4], %s197
          %s199 = smul.addr %s19, 4
          %s200 = sadd.s32 %s20, %s199
          %s201 = smul.addr %s200, 8
          %s202 = scalar_lea.vmem %s0, %s201
          // Predicated region
          $region33: #{bottleneck_forward.4} parent=31 // pred_check
            _
          $region34: #{bottleneck_forward.4} parent=31 // pred_check_branch
            %204 = sbr.rel (0) target = $region36
          $region35: #{bottleneck_forward.4} parent=31 // pred_region
            // Predicated region
            $region37: #{bottleneck_forward.4} parent=35 // pred_check
              _
            $region38: #{bottleneck_forward.4} parent=35 // pred_check_branch
              %206 = sbr.rel (0) target = $region40
            $region39: #{bottleneck_forward.4} parent=35 // pred_region
              // Predicated region
              $region52: #{bottleneck_forward.4} parent=39 // pred_check
                _
              $region53: #{bottleneck_forward.4} parent=39 // pred_check_branch
                %223 = sbr.rel (0) target = $region55
              $region54: #{bottleneck_forward.4} parent=39 // pred_region
                loop: start=0, step=1, limit=1
                $region56: #{bottleneck_forward.4} parent=54 // loop_pre_header
                  _
                $region57: #{bottleneck_forward.4} parent=54 // loop_header
                  %s225 = sphi 0, %s229
                  %p226 = scmp.ge.s32.totalorder %s225, 1
                  %s230 = sphi %s202, %s202
                  %s231 = sphi %s198, %s198
                $region58: #{bottleneck_forward.4} parent=54 // loop_header_branch
                  %228 = sbr.rel (%p226) target = $region62
                $region59: #{bottleneck_forward.4} parent=54 // loop_body
                  %v232 = vld [vmem:[%s230] sm:$0xff]
                  %233 = vst [vmem:[%s231] sm:$0xff] %v232
                  %v234 = vld [vmem:[%s230 + $0x10] sm:$0xff]
                  %235 = vst [vmem:[%s231 + $0x8] sm:$0xff] %v234
                $region60: #{bottleneck_forward.4} parent=54 // loop_footer
                  %s229 = sadd.s32 1, %s225
                $region61: #{bottleneck_forward.4} parent=54 // loop_footer_branch
                  %224 = sbr.rel target = $region57
                $region62: #{bottleneck_forward.4} parent=54 // loop_exit
                  _
              $region55: #{bottleneck_forward.4} parent=39 // pred_fallthru
                _
              // Predicated region
              $region63: #{bottleneck_forward.4} parent=39 // pred_check
                _
              $region64: #{bottleneck_forward.4} parent=39 // pred_check_branch
                %237 = sbr.rel target = $region66
              $region65: #{bottleneck_forward.4} parent=39 // pred_region
                _
              $region66: #{bottleneck_forward.4} parent=39 // pred_fallthru
                _
            $region40: #{bottleneck_forward.4} parent=35 // pred_fallthru
              _
            // Predicated region
            $region41: #{bottleneck_forward.4} parent=35 // pred_check
              _
            $region42: #{bottleneck_forward.4} parent=35 // pred_check_branch
              %208 = sbr.rel target = $region44
            $region43: #{bottleneck_forward.4} parent=35 // pred_region
              loop: start=0, step=1, limit=1
              $region45: #{bottleneck_forward.4} parent=43 // loop_pre_header
                _
              $region46: #{bottleneck_forward.4} parent=43 // loop_header
                %s211 = sphi 0, %s215
                %p212 = scmp.ge.s32.totalorder %s211, 1
                %s216 = sphi %s202, %s202
                %s217 = sphi %s198, %s198
              $region47: #{bottleneck_forward.4} parent=43 // loop_header_branch
                %214 = sbr.rel (%p212) target = $region51
              $region48: #{bottleneck_forward.4} parent=43 // loop_body
                %v218 = vld [vmem:[%s216] sm:$0xff]
                %219 = vst [vmem:[%s217] sm:$0xff] %v218
                %v220 = vld [vmem:[%s216 + $0x10] sm:$0xff]
                %221 = vst [vmem:[%s217 + $0x8] sm:$0xff] %v220
              $region49: #{bottleneck_forward.4} parent=43 // loop_footer
                %s215 = sadd.s32 1, %s211
              $region50: #{bottleneck_forward.4} parent=43 // loop_footer_branch
                %210 = sbr.rel target = $region46
              $region51: #{bottleneck_forward.4} parent=43 // loop_exit
                _
            $region44: #{bottleneck_forward.4} parent=35 // pred_fallthru
              _
          $region36: #{bottleneck_forward.4} parent=31 // pred_fallthru
            _
          %238 = vnop
        $region32: #{bottleneck_forward.4} parent=27 // pred_fallthru
          _
      $region28: #{bottleneck_forward.4} parent=5 // pred_fallthru
        _
      %p239 = scmp.le.s32.totalorder 1, %s12
      %p240 = scmp.lt.s32.totalorder %s12, 5
      %p241 = pnand %p239, %p240
      %p242 = pneg %p241
      // Predicated region
      $region67: #{bottleneck_forward.4} parent=5 // pred_check
        _
      $region68: #{bottleneck_forward.4} parent=5 // pred_check_branch
        %244 = sbr.rel (%p241) target = $region70
      $region69: #{bottleneck_forward.4} parent=5 // pred_region
        %s245 = ssub.s32 %s12, 1
        %s246 = sand.u32 %s39, 1
        %s247 = sand.u32 %s39, 1
        %s248 = smul.addr %s247, 16
        %s249 = scalar_lea.vmem [#allocation4], %s248
        // Predicated region
        $region71: #{bottleneck_forward.4} parent=69 // pred_check
          %p250 = pneg %p52
        $region72: #{bottleneck_forward.4} parent=69 // pred_check_branch
          %252 = sbr.rel (%p250) target = $region74
        $region73: #{bottleneck_forward.4} parent=69 // pred_region
          _
        $region74: #{bottleneck_forward.4} parent=69 // pred_fallthru
          _
        %s253 = sand.u32 %s39, 1
        %s254 = sand.u32 %s39, 1
        %s255 = smul.addr %s254, 16
        %s256 = scalar_lea.vmem [#allocation4], %s255
        %p257 = pneg %p52
        %p258 = pneg %p49
        %p259 = pneg %p73
        %p260 = pneg %p70
        %p261 = pneg %p94
        %p262 = pneg %p91
        %p263 = pneg %p115
        %p264 = pneg %p112
        %p265 = pneg %p143
        %p266 = pneg %p140
        %s267 = smul.u32 16, %s22
        %p268 = scmp.lt.s32.totalorder %s21, 1
        %s269 = scalar_select %p268, %s21, 1
        %p270 = scmp.lt.s32.totalorder %s267, 31
        %s271 = scalar_select %p270, %s267, 31
        %s272 = smul.addr %s269, 32
        %s273 = sadd.s32 %s271, %s272
        %s274 = smul.addr %s273, 4
        %s275 = scalar_lea.vmem %s4, %s274
        %p276 = pneg %p164
        %p277 = pneg %p161
        %s278 = smul.u32 16, %s22
        %p279 = scmp.lt.s32.totalorder %s21, 1
        %s280 = scalar_select %p279, %s21, 1
        %p281 = scmp.lt.s32.totalorder %s278, 31
        %s282 = scalar_select %p281, %s278, 31
        %s283 = smul.addr %s280, 32
        %s284 = sadd.s32 %s282, %s283
        %s285 = smul.addr %s284, 4
        %s286 = scalar_lea.vmem %s4, %s285
        %s287 = smul.u32 16, %s22
        %v289 = vld [vmem:[%s249] sm:$0xff]
        %v290 = vld [vmem:[%s249 + $0x8] sm:$0xff]
        %291 = vxpose.xlu0.b32.start [1/16] %v289, 128
        %292 = vxpose.xlu0.b32.cont [2/16] %v290, 128
        %293 = vxpose.xlu0.b32.cont [3/16] 0.0, 128
        %294 = vxpose.xlu0.b32.cont [4/16] 0.0, 128
        %295 = vxpose.xlu0.b32.cont [5/16] 0.0, 128
        %296 = vxpose.xlu0.b32.cont [6/16] 0.0, 128
        %297 = vxpose.xlu0.b32.cont [7/16] 0.0, 128
        %298 = vxpose.xlu0.b32.cont [8/16] 0.0, 128
        %299 = vxpose.xlu0.b32.cont [9/16] 0.0, 128
        %300 = vxpose.xlu0.b32.cont [10/16] 0.0, 128
        %301 = vxpose.xlu0.b32.cont [11/16] 0.0, 128
        %302 = vxpose.xlu0.b32.cont [12/16] 0.0, 128
        %303 = vxpose.xlu0.b32.cont [13/16] 0.0, 128
        %304 = vxpose.xlu0.b32.cont [14/16] 0.0, 128
        %305 = vxpose.xlu0.b32.cont [15/16] 0.0, 128
        %306 = vxpose.xlu0.b32.end [16/16] 0.0, 128
        %v307 = vpop.trf.xlu0
        %v308 = vpop.trf.xlu0
        %v309 = vpop.trf.xlu0
        %v310 = vpop.trf.xlu0
        %v311 = vpop.trf.xlu0
        %v312 = vpop.trf.xlu0
        %v313 = vpop.trf.xlu0
        %v314 = vpop.trf.xlu0
        %v315 = vpop.trf.xlu0
        %v316 = vpop.trf.xlu0
        %v317 = vpop.trf.xlu0
        %v318 = vpop.trf.xlu0
        %v319 = vpop.trf.xlu0
        %v320 = vpop.trf.xlu0
        %v321 = vpop.trf.xlu0
        %v322 = vpop.trf.xlu0
        %v323 = vpack.c.bf16 %v308, %v307
        %v324 = vpack.c.bf16 %v310, %v309
        %v325 = vpack.c.bf16 %v312, %v311
        %v326 = vpack.c.bf16 %v314, %v313
        %v327 = vpack.c.bf16 %v316, %v315
        %v328 = vpack.c.bf16 %v318, %v317
        %v329 = vpack.c.bf16 %v320, %v319
        %v330 = vpack.c.bf16 %v322, %v321
        %v331 = vld [vmem:[%s1] sm:$0xf]
        %v332 = vld [vmem:[%s1 + $0x4] sm:$0xf]
        %v335 = vunpack.c.l.b16 %v331
        %v336 = vunpack.c.l.b16 %v332
        %v337 = vpack.c.b16 %v336, %v335
        %vm339 = vcmask 130048
        %v341 = vsel %vm339, %v323, 0
        %v344 = vsel %vm339, %v324, 0
        %v347 = vsel %vm339, %v325, 0
        %v350 = vsel %vm339, %v326, 0
        %v353 = vsel %vm339, %v327, 0
        %v356 = vsel %vm339, %v328, 0
        %v359 = vsel %vm339, %v329, 0
        %v362 = vsel %vm339, %v330, 0
        %364 = vmatprep.subr.bf16.mxu0 0
        %365 = vmatpush1.bf16.msra.mxu0 %v337
        %366 = vmatprep.subr.bf16.mxu0 0
        %367 = vmatpush1.bf16.msra.mxu0 0
        %368 = vmatprep.subr.bf16.mxu0 0
        %369 = vmatpush1.bf16.msra.mxu0 0
        %370 = vmatprep.subr.bf16.mxu0 0
        %371 = vmatpush1.bf16.msra.mxu0 0
        %372 = vmatprep.subr.bf16.mxu0 0
        %373 = vmatpush1.bf16.msra.mxu0 0
        %374 = vmatprep.subr.bf16.mxu0 0
        %375 = vmatpush1.bf16.msra.mxu0 0
        %376 = vmatprep.subr.bf16.mxu0 0
        %377 = vmatpush1.bf16.msra.mxu0 0
        %378 = vmatprep.subr.bf16.mxu0 0
        %379 = vmatpush1.bf16.msra.mxu0 0
        %380 = vmatprep.subr.bf16.mxu0 0
        %381 = vmatpush1.bf16.msra.mxu0 0
        %382 = vmatprep.subr.bf16.mxu0 0
        %383 = vmatpush1.bf16.msra.mxu0 0
        %384 = vmatprep.subr.bf16.mxu0 0
        %385 = vmatpush1.bf16.msra.mxu0 0
        %386 = vmatprep.subr.bf16.mxu0 0
        %387 = vmatpush1.bf16.msra.mxu0 0
        %388 = vmatprep.subr.bf16.mxu0 0
        %389 = vmatpush1.bf16.msra.mxu0 0
        %390 = vmatprep.subr.bf16.mxu0 0
        %391 = vmatpush1.bf16.msra.mxu0 0
        %392 = vmatprep.subr.bf16.mxu0 0
        %393 = vmatpush1.bf16.msra.mxu0 0
        %394 = vmatprep.subr.bf16.mxu0 0
        %395 = vmatpush1.bf16.msra.mxu0 0
        %396 = vmatprep.mubr.bf16.mxu0 0
        %397 = vmatmul.mubr.bf16.gmra.mrb[0].mxu0 %v341
        %v398 = vpop.f32.mrb[0].mxu0
        %v399 = vadd.f32 0.0, %v398
        %v400 = vpop.f32.mrb[0].mxu0
        %v401 = vpop.f32.mrb[0].mxu0
        %v402 = vadd.f32 0.0, %v401
        %v403 = vpop.f32.mrb[0].mxu0
        %404 = vmatprep.mubr.bf16.mxu0 0
        %405 = vmatmul.mubr.bf16.gmra.mrb[0].mxu0 %v344
        %v406 = vpop.f32.mrb[0].mxu0
        %v407 = vadd.f32 0.0, %v406
        %v408 = vpop.f32.mrb[0].mxu0
        %v409 = vpop.f32.mrb[0].mxu0
        %v410 = vadd.f32 0.0, %v409
        %v411 = vpop.f32.mrb[0].mxu0
        %412 = vmatprep.mubr.bf16.mxu0 0
        %413 = vmatmul.mubr.bf16.gmra.mrb[0].mxu0 %v347
        %v414 = vpop.f32.mrb[0].mxu0
        %v415 = vadd.f32 0.0, %v414
        %v416 = vpop.f32.mrb[0].mxu0
        %v417 = vpop.f32.mrb[0].mxu0
        %v418 = vadd.f32 0.0, %v417
        %v419 = vpop.f32.mrb[0].mxu0
        %420 = vmatprep.mubr.bf16.mxu0 0
        %421 = vmatmul.mubr.bf16.gmra.mrb[0].mxu0 %v350
        %v422 = vpop.f32.mrb[0].mxu0
        %v423 = vadd.f32 0.0, %v422
        %v424 = vpop.f32.mrb[0].mxu0
        %v425 = vpop.f32.mrb[0].mxu0
        %v426 = vadd.f32 0.0, %v425
        %v427 = vpop.f32.mrb[0].mxu0
        %428 = vmatprep.mubr.bf16.mxu0 0
        %429 = vmatmul.mubr.bf16.gmra.mrb[0].mxu0 %v353
        %v430 = vpop.f32.mrb[0].mxu0
        %v431 = vadd.f32 0.0, %v430
        %v432 = vpop.f32.mrb[0].mxu0
        %v433 = vpop.f32.mrb[0].mxu0
        %v434 = vadd.f32 0.0, %v433
        %v435 = vpop.f32.mrb[0].mxu0
        %436 = vmatprep.mubr.bf16.mxu0 0
        %437 = vmatmul.mubr.bf16.gmra.mrb[0].mxu0 %v356
        %v438 = vpop.f32.mrb[0].mxu0
        %v439 = vadd.f32 0.0, %v438
        %v440 = vpop.f32.mrb[0].mxu0
        %v441 = vpop.f32.mrb[0].mxu0
        %v442 = vadd.f32 0.0, %v441
        %v443 = vpop.f32.mrb[0].mxu0
        %444 = vmatprep.mubr.bf16.mxu0 0
        %445 = vmatmul.mubr.bf16.gmra.mrb[0].mxu0 %v359
        %v446 = vpop.f32.mrb[0].mxu0
        %v447 = vadd.f32 0.0, %v446
        %v448 = vpop.f32.mrb[0].mxu0
        %v449 = vpop.f32.mrb[0].mxu0
        %v450 = vadd.f32 0.0, %v449
        %v451 = vpop.f32.mrb[0].mxu0
        %452 = vmatprep.mubr.bf16.mxu0 0
        %453 = vmatmul.mubr.bf16.gmra.mrb[0].mxu0 %v362
        %v454 = vpop.f32.mrb[0].mxu0
        %v455 = vadd.f32 0.0, %v454
        %v456 = vpop.f32.mrb[0].mxu0
        %v457 = vpop.f32.mrb[0].mxu0
        %v458 = vadd.f32 0.0, %v457
        %v459 = vpop.f32.mrb[0].mxu0
        %460 = vdwg.mxu0
        %v461 = vpack.c.bf16 %v402, %v399
        %v462 = vpack.c.bf16 %v410, %v407
        %v463 = vpack.c.bf16 %v418, %v415
        %v464 = vpack.c.bf16 %v426, %v423
        %v465 = vpack.c.bf16 %v434, %v431
        %v466 = vpack.c.bf16 %v442, %v439
        %v467 = vpack.c.bf16 %v450, %v447
        %v468 = vpack.c.bf16 %v458, %v455
        %v477 = vunpack.c.l.b16 %v461
        %v478 = vunpack.c.h.b16 %v461
        %v479 = vunpack.c.l.b16 %v462
        %v480 = vunpack.c.h.b16 %v462
        %v481 = vunpack.c.l.b16 %v463
        %v482 = vunpack.c.h.b16 %v463
        %v483 = vunpack.c.l.b16 %v464
        %v484 = vunpack.c.h.b16 %v464
        %v485 = vunpack.c.l.b16 %v465
        %v486 = vunpack.c.h.b16 %v465
        %v487 = vunpack.c.l.b16 %v466
        %v488 = vunpack.c.h.b16 %v466
        %v489 = vunpack.c.l.b16 %v467
        %v490 = vunpack.c.h.b16 %v467
        %v491 = vunpack.c.l.b16 %v468
        %v492 = vunpack.c.h.b16 %v468
        %v493 = vpack.c.b16 %v477, %v477
        %v494 = vpack.c.b16 %v478, %v478
        %v495 = vpack.c.b16 %v479, %v479
        %v496 = vpack.c.b16 %v480, %v480
        %v497 = vpack.c.b16 %v481, %v481
        %v498 = vpack.c.b16 %v482, %v482
        %v499 = vpack.c.b16 %v483, %v483
        %v500 = vpack.c.b16 %v484, %v484
        %v501 = vpack.c.b16 %v485, %v485
        %v502 = vpack.c.b16 %v486, %v486
        %v503 = vpack.c.b16 %v487, %v487
        %v504 = vpack.c.b16 %v488, %v488
        %v505 = vpack.c.b16 %v489, %v489
        %v506 = vpack.c.b16 %v490, %v490
        %v507 = vpack.c.b16 %v491, %v491
        %v508 = vpack.c.b16 %v492, %v492
        %vm525 = vcmask 27648
        %526 = vst.msk [vmem:[%s286] sm:$0xf] %vm525, %v493
        %527 = vst.msk [vmem:[%s286 + $0x4] sm:$0xf] %vm525, %v494
        %528 = vst.msk [vmem:[%s286 + $0x8] sm:$0xf] %vm525, %v495
        %529 = vst.msk [vmem:[%s286 + $0xc] sm:$0xf] %vm525, %v496
        %530 = vst.msk [vmem:[%s286 + $0x10] sm:$0xf] %vm525, %v497
        %531 = vst.msk [vmem:[%s286 + $0x14] sm:$0xf] %vm525, %v498
        %532 = vst.msk [vmem:[%s286 + $0x18] sm:$0xf] %vm525, %v499
        %533 = vst.msk [vmem:[%s286 + $0x1c] sm:$0xf] %vm525, %v500
        %534 = vst.msk [vmem:[%s286 + $0x20] sm:$0xf] %vm525, %v501
        %535 = vst.msk [vmem:[%s286 + $0x24] sm:$0xf] %vm525, %v502
        %536 = vst.msk [vmem:[%s286 + $0x28] sm:$0xf] %vm525, %v503
        %537 = vst.msk [vmem:[%s286 + $0x2c] sm:$0xf] %vm525, %v504
        %538 = vst.msk [vmem:[%s286 + $0x30] sm:$0xf] %vm525, %v505
        %539 = vst.msk [vmem:[%s286 + $0x34] sm:$0xf] %vm525, %v506
        %540 = vst.msk [vmem:[%s286 + $0x38] sm:$0xf] %vm525, %v507
        %541 = vst.msk [vmem:[%s286 + $0x3c] sm:$0xf] %vm525, %v508
        %p542 = scmp.eq.s32.totalorder %s21, 0
        %p543 = scmp.eq.s32.totalorder %s22, 0
        %p544 = pnand %p542, %p543
        %p545 = pneg %p544
        %p546 = scmp.eq.s32.totalorder %s21, 1
        %p547 = scmp.eq.s32.totalorder %s22, 1
        %p548 = pnand %p546, %p547
        %p549 = pneg %p548
        // Predicated region
        $region75: #{bottleneck_forward.4} parent=69 // pred_check
          _
        $region76: #{bottleneck_forward.4} parent=69 // pred_check_branch
          %551 = sbr.rel (%p544) target = $region78
        $region77: #{bottleneck_forward.4} parent=69 // pred_region
          %vm552 = vcmask 24576
          %553 = vst.msk [vmem:[#allocation2] sm:$0x1] %vm552, 0.0
          %554 = vst.msk [vmem:[#allocation3] sm:$0x1] %vm552, 0.0
        $region78: #{bottleneck_forward.4} parent=69 // pred_fallthru
          _
        %v555 = vld [vmem:[#allocation2] sm:$0x1]
        %vm556 = vcmask 31744
        %v557 = vsel %vm556, %v399, 0.0
        %v558 = vsel %vm556, %v402, 0.0
        %v559 = vadd.f32 %v557, %v558
        %v560 = vsel %vm556, %v407, 0.0
        %v561 = vadd.f32 %v559, %v560
        %v562 = vsel %vm556, %v410, 0.0
        %v563 = vadd.f32 %v561, %v562
        %v564 = vsel %vm556, %v415, 0.0
        %v565 = vadd.f32 %v563, %v564
        %v566 = vsel %vm556, %v418, 0.0
        %v567 = vadd.f32 %v565, %v566
        %v568 = vsel %vm556, %v423, 0.0
        %v569 = vadd.f32 %v567, %v568
        %v570 = vsel %vm556, %v426, 0.0
        %v571 = vadd.f32 %v569, %v570
        %v572 = vsel %vm556, %v431, 0.0
        %v573 = vadd.f32 %v571, %v572
        %v574 = vsel %vm556, %v434, 0.0
        %v575 = vadd.f32 %v573, %v574
        %v576 = vsel %vm556, %v439, 0.0
        %v577 = vadd.f32 %v575, %v576
        %v578 = vsel %vm556, %v442, 0.0
        %v579 = vadd.f32 %v577, %v578
        %v580 = vsel %vm556, %v447, 0.0
        %v581 = vadd.f32 %v579, %v580
        %v582 = vsel %vm556, %v450, 0.0
        %v583 = vadd.f32 %v581, %v582
        %v584 = vsel %vm556, %v455, 0.0
        %v585 = vadd.f32 %v583, %v584
        %v586 = vsel %vm556, %v458, 0.0
        %v587 = vadd.f32 %v585, %v586
        %v588 = vrot.slane %v587, 4
        %v589 = vadd.f32 %v587, %v588
        %v590 = vrot.slane %v589, 2
        %v591 = vadd.f32 %v589, %v590
        %v592 = vrot.slane %v591, 1
        %v593 = vadd.f32 %v591, %v592
        %v594 = vadd.f32 %v555, %v593
        %vm595 = vcmask 24576
        %596 = vst.msk [vmem:[#allocation2] sm:$0x1] %vm595, %v594
        %v597 = vld [vmem:[#allocation3] sm:$0x1]
        %v598 = vmul.f32 %v399, %v399
        %v599 = vmul.f32 %v402, %v402
        %v600 = vmul.f32 %v407, %v407
        %v601 = vmul.f32 %v410, %v410
        %v602 = vmul.f32 %v415, %v415
        %v603 = vmul.f32 %v418, %v418
        %v604 = vmul.f32 %v423, %v423
        %v605 = vmul.f32 %v426, %v426
        %v606 = vmul.f32 %v431, %v431
        %v607 = vmul.f32 %v434, %v434
        %v608 = vmul.f32 %v439, %v439
        %v609 = vmul.f32 %v442, %v442
        %v610 = vmul.f32 %v447, %v447
        %v611 = vmul.f32 %v450, %v450
        %v612 = vmul.f32 %v455, %v455
        %v613 = vmul.f32 %v458, %v458
        %v614 = vsel %vm556, %v598, 0.0
        %v615 = vsel %vm556, %v599, 0.0
        %v616 = vadd.f32 %v614, %v615
        %v617 = vsel %vm556, %v600, 0.0
        %v618 = vadd.f32 %v616, %v617
        %v619 = vsel %vm556, %v601, 0.0
        %v620 = vadd.f32 %v618, %v619
        %v621 = vsel %vm556, %v602, 0.0
        %v622 = vadd.f32 %v620, %v621
        %v623 = vsel %vm556, %v603, 0.0
        %v624 = vadd.f32 %v622, %v623
        %v625 = vsel %vm556, %v604, 0.0
        %v626 = vadd.f32 %v624, %v625
        %v627 = vsel %vm556, %v605, 0.0
        %v628 = vadd.f32 %v626, %v627
        %v629 = vsel %vm556, %v606, 0.0
        %v630 = vadd.f32 %v628, %v629
        %v631 = vsel %vm556, %v607, 0.0
        %v632 = vadd.f32 %v630, %v631
        %v633 = vsel %vm556, %v608, 0.0
        %v634 = vadd.f32 %v632, %v633
        %v635 = vsel %vm556, %v609, 0.0
        %v636 = vadd.f32 %v634, %v635
        %v637 = vsel %vm556, %v610, 0.0
        %v638 = vadd.f32 %v636, %v637
        %v639 = vsel %vm556, %v611, 0.0
        %v640 = vadd.f32 %v638, %v639
        %v641 = vsel %vm556, %v612, 0.0
        %v642 = vadd.f32 %v640, %v641
        %v643 = vsel %vm556, %v613, 0.0
        %v644 = vadd.f32 %v642, %v643
        %v645 = vrot.slane %v644, 4
        %v646 = vadd.f32 %v644, %v645
        %v647 = vrot.slane %v646, 2
        %v648 = vadd.f32 %v646, %v647
        %v649 = vrot.slane %v648, 1
        %v650 = vadd.f32 %v648, %v649
        %v651 = vadd.f32 %v597, %v650
        %652 = vst.msk [vmem:[#allocation3] sm:$0x1] %vm595, %v651
        // Predicated region
        $region79: #{bottleneck_forward.4} parent=69 // pred_check
          _
        $region80: #{bottleneck_forward.4} parent=69 // pred_check_branch
          %654 = sbr.rel (%p548) target = $region82
        $region81: #{bottleneck_forward.4} parent=69 // pred_region
          %v655 = vld [vmem:[#allocation2] sm:$0x1]
          %v656 = vmul.f32 %v655, 0.001953125
          %v657 = vld [vmem:[#allocation3] sm:$0x1]
          %v658 = vmul.f32 %v657, 0.001953125
          %v659 = vmul.f32 %v656, %v656
          %v660 = vsub.f32 %v658, %v659
          %v661 = vld [vmem:[%s2] sm:$0x1]
          %v662 = vadd.f32 %v660, 1e-05
          %v663 = vrsqrt.pop %v662
          %v664 = vmul.f32 %v661, %v663
          %v665 = vld [vmem:[%s3] sm:$0x1]
          %v666 = vmul.f32 %v656, %v664
          %v667 = vsub.f32 %v665, %v666
          %v669 = vlaneseq
          %v670 = vshrl.u32 %v669, 7
          %v671 = vsub.s32 0, %v670
          %v672 = vrot.slane %v667, %v671
          %vm674 = vcmask 1040384
          %v675 = vsel %vm674, %v664, %v672
          %vm676 = vcmask 25600
          %677 = vst.msk [vmem:[%s5] sm:$0x3] %vm676, %v675
        $region82: #{bottleneck_forward.4} parent=69 // pred_fallthru
          _
        %s678 = smul.u32 16, %s22
        %p679 = scmp.lt.s32.totalorder %s21, 1
        %s680 = scalar_select %p679, %s21, 1
        %p681 = scmp.lt.s32.totalorder %s678, 31
        %s682 = scalar_select %p681, %s678, 31
        %s683 = smul.addr %s680, 32
        %s684 = sadd.s32 %s682, %s683
        %s685 = smul.addr %s684, 4
        %s686 = scalar_lea.vmem %s4, %s685
        // Predicated region
        $region83: #{bottleneck_forward.4} parent=69 // pred_check
          %p687 = pneg %p140
        $region84: #{bottleneck_forward.4} parent=69 // pred_check_branch
          %689 = sbr.rel (%p687) target = $region86
        $region85: #{bottleneck_forward.4} parent=69 // pred_region
          %s690 = smul.u32 16, %s22
        $region86: #{bottleneck_forward.4} parent=69 // pred_fallthru
          _
        // Predicated region
        $region87: #{bottleneck_forward.4} parent=69 // pred_check
          %p691 = pneg %p161
        $region88: #{bottleneck_forward.4} parent=69 // pred_check_branch
          %693 = sbr.rel (%p691) target = $region90
        $region89: #{bottleneck_forward.4} parent=69 // pred_region
          _
        $region90: #{bottleneck_forward.4} parent=69 // pred_fallthru
          _
        // Predicated region
        $region91: #{bottleneck_forward.4} parent=69 // pred_check
          %p694 = pneg %p161
        $region92: #{bottleneck_forward.4} parent=69 // pred_check_branch
          %696 = sbr.rel (%p694) target = $region94
        $region93: #{bottleneck_forward.4} parent=69 // pred_region
          _
        $region94: #{bottleneck_forward.4} parent=69 // pred_fallthru
          _
      $region70: #{bottleneck_forward.4} parent=5 // pred_fallthru
        _
      %p697 = scmp.le.s32.totalorder 2, %s12
      // Predicated region
      $region95: #{bottleneck_forward.4} parent=5 // pred_check
        %p698 = pneg %p697
      $region96: #{bottleneck_forward.4} parent=5 // pred_check_branch
        %700 = sbr.rel (%p698) target = $region98
      $region97: #{bottleneck_forward.4} parent=5 // pred_region
        %s701 = ssub.s32 %s12, 2
        // Predicated region
        $region99: #{bottleneck_forward.4} parent=97 // pred_check
          %p702 = pneg %p146
        $region100: #{bottleneck_forward.4} parent=97 // pred_check_branch
          %704 = sbr.rel (%p702) target = $region102
        $region101: #{bottleneck_forward.4} parent=97 // pred_region
          %s705 = smul.u32 16, %s24
          %p706 = scmp.lt.s32.totalorder %s23, 1
          %s707 = scalar_select %p706, %s23, 1
          %p708 = scmp.lt.s32.totalorder %s705, 31
          %s709 = scalar_select %p708, %s705, 31
          %s710 = smul.addr %s707, 32
          %s711 = sadd.s32 %s709, %s710
          %s712 = smul.addr %s711, 4
          %s713 = scalar_lea.vmem %s4, %s712
        $region102: #{bottleneck_forward.4} parent=97 // pred_fallthru
          _
      $region98: #{bottleneck_forward.4} parent=5 // pred_fallthru
        _
    $region6: #{bottleneck_forward.4} parent=1 // loop_footer
      %s16 = sadd.s32 1, %s12
    $region7: #{bottleneck_forward.4} parent=1 // loop_footer_branch
      %11 = sbr.rel target = $region3
    $region8: #{bottleneck_forward.4} parent=1 // loop_exit
      _

// kernel: bottleneck_forward.7
$region0: #{bottleneck_forward.7}
  #allocation0 [shape = 'u32[]', space=smem, size = 0x4, offset = 0x4, fixed_abs, tag = 'smem constant byte address 0x4 - core index']
  #allocation1 [shape = 'u32[144,128]{1,0:T(1,128)}', space=vmem, size = 0x12000, scoped, tag = 'internal scratch']
  %s0 = inlined_call_operand.vmem [shape: bf16[2,256,16], index: 0, kind: input, shape index: {}]
  %s1 = inlined_call_operand.vmem [shape: f32[2,16], index: 1, kind: input, shape index: {}]
  %s2 = inlined_call_operand.vmem [shape: f32[2,16,256], index: 2, kind: input, shape index: {}]
  %s3 = inlined_call_operand.vmem [shape: f32[2,16,256], index: 3, kind: output, shape index: {}]
  %s4 = sld [smem:[#allocation0]]
  $region117: #{bottleneck_forward.7} parent=0
    _
  %s6 = ssub.s32 1, %s4
  %s7 = scalar_select 0, %s6, %s4
  $region1: #{bottleneck_forward.7} parent=0
    #allocation2 [shape = 'u8[16384]{0}', space=vmem, size = 0x4000, scoped, tag = 'input window, operand 2']
    #allocation3 [shape = 'u8[16384]{0}', space=vmem, size = 0x4000, scoped, tag = 'output window, operand 0']
    loop: start=0, step=1, limit=6
    $region2: #{bottleneck_forward.7} parent=1 // loop_pre_header
      _
    $region3: #{bottleneck_forward.7} parent=1 // loop_header
      %s9 = sphi 0, %s13
      %p10 = scmp.ge.s32.totalorder %s9, 6
      %s16 = sphi 0, %s28
      %s17 = sphi 0, %s24
      %s18 = sphi 0, %s16
      %s19 = sphi 0, %s17
      %s20 = sphi 0, %s18
      %s21 = sphi 0, %s19
      %s33 = sphi 0, %s35
      %s36 = sphi 0, %s33
      %s37 = sphi 0, %s36
      %s53 = sphi 0, %s37
      %s57 = sphi 0, %s57
      %s59 = sphi 0, %s57
      %s60 = sphi 0, %s59
      %s74 = sphi 0, %s60
      %s82 = sphi 0, %s84
      %s85 = sphi 0, %s82
      %s86 = sphi 0, %s85
      %s102 = sphi 0, %s86
      %s110 = sphi 0, %s112
      %s113 = sphi 0, %s110
      %s114 = sphi 0, %s113
      %s130 = sphi 0, %s114
    $region4: #{bottleneck_forward.7} parent=1 // loop_header_branch
      %12 = sbr.rel (%p10) target = $region8
    $region5: #{bottleneck_forward.7} parent=1 // loop_body
      %s14 = ssub.s32 %s9, 1
      %s15 = ssub.s32 %s9, 2
      %s22 = sadd.s32 1, %s17
      %p23 = scmp.ge.s32.totalorder %s22, 2
      %s24 = scalar_select %p23, 0, %s22
      %s25 = sadd.s32 1, %s16
      %s26 = scalar_select %p23, %s25, %s16
      %p27 = scmp.ge.s32.totalorder %s26, 2
      %s28 = scalar_select %p27, 0, %s26
      %s29 = ssub.s32 %s16, %s28
      %s30 = ssub.s32 %s17, %s24
      %s31 = sor.u32 %s29, %s30
      %p32 = scmp.eq.s32.totalorder %s31, 0
      %s34 = sadd.s32 %s33, 1
      %s35 = scalar_select %p32, %s33, %s34
      %p38 = pneg %p32
      %p39 = scmp.eq.s32.totalorder %s9, 3
      %p40 = por %p38, %p39
      %p41 = scmp.ne.s32.totalorder %s33, %s36
      %p42 = scmp.eq.s32.totalorder %s9, 0
      %p43 = por %p41, %p42
      %p44 = scmp.ne.s32.totalorder %s33, %s36
      %p45 = scmp.eq.s32.totalorder %s14, 3
      %p46 = por %p44, %p45
      %p47 = scmp.ne.s32.totalorder %s36, %s37
      %p48 = scmp.eq.s32.totalorder %s14, 0
      %p49 = por %p47, %p48
      %p50 = scmp.ne.s32.totalorder %s36, %s37
      %p51 = scmp.eq.s32.totalorder %s15, 3
      %p52 = por %p50, %p51
      %p54 = scmp.ne.s32.totalorder %s37, %s53
      %p55 = scmp.eq.s32.totalorder %s15, 0
      %p56 = por %p54, %p55
      %s58 = sadd.s32 %s57, 1
      %p61 = scmp.eq.s32.totalorder %s9, 3
      %p62 = scmp.ne.s32.totalorder %s57, %s59
      %p63 = scmp.eq.s32.totalorder %s9, 0
      %p64 = por %p62, %p63
      %p65 = scmp.ne.s32.totalorder %s57, %s59
      %p66 = scmp.eq.s32.totalorder %s14, 3
      %p67 = por %p65, %p66
      %p68 = scmp.ne.s32.totalorder %s59, %s60
      %p69 = scmp.eq.s32.totalorder %s14, 0
      %p70 = por %p68, %p69
      %p71 = scmp.ne.s32.totalorder %s59, %s60
      %p72 = scmp.eq.s32.totalorder %s15, 3
      %p73 = por %p71, %p72
      %p75 = scmp.ne.s32.totalorder %s60, %s74
      %p76 = scmp.eq.s32.totalorder %s15, 0
      %p77 = por %p75, %p76
      %s78 = ssub.s32 %s16, %s28
      %s79 = ssub.s32 %s17, %s24
      %s80 = sor.u32 %s78, %s79
      %p81 = scmp.eq.s32.totalorder %s80, 0
      %s83 = sadd.s32 %s82, 1
      %s84 = scalar_select %p81, %s82, %s83
      %p87 = pneg %p81
      %p88 = scmp.eq.s32.totalorder %s9, 3
      %p89 = por %p87, %p88
      %p90 = scmp.ne.s32.totalorder %s82, %s85
      %p91 = scmp.eq.s32.totalorder %s9, 0
      %p92 = por %p90, %p91
      %p93 = scmp.ne.s32.totalorder %s82, %s85
      %p94 = scmp.eq.s32.totalorder %s14, 3
      %p95 = por %p93, %p94
      %p96 = scmp.ne.s32.totalorder %s85, %s86
      %p97 = scmp.eq.s32.totalorder %s14, 0
      %p98 = por %p96, %p97
      %p99 = scmp.ne.s32.totalorder %s85, %s86
      %p100 = scmp.eq.s32.totalorder %s15, 3
      %p101 = por %p99, %p100
      %p103 = scmp.ne.s32.totalorder %s86, %s102
      %p104 = scmp.eq.s32.totalorder %s15, 0
      %p105 = por %p103, %p104
      %s106 = ssub.s32 %s16, %s28
      %s107 = ssub.s32 %s17, %s24
      %s108 = sor.u32 %s106, %s107
      %p109 = scmp.eq.s32.totalorder %s108, 0
      %s111 = sadd.s32 %s110, 1
      %s112 = scalar_select %p109, %s110, %s111
      %p115 = pneg %p109
      %p116 = scmp.eq.s32.totalorder %s9, 3
      %p117 = por %p115, %p116
      %p118 = scmp.ne.s32.totalorder %s110, %s113
      %p119 = scmp.eq.s32.totalorder %s9, 0
      %p120 = por %p118, %p119
      %p121 = scmp.ne.s32.totalorder %s110, %s113
      %p122 = scmp.eq.s32.totalorder %s14, 3
      %p123 = por %p121, %p122
      %p124 = scmp.ne.s32.totalorder %s113, %s114
      %p125 = scmp.eq.s32.totalorder %s14, 0
      %p126 = por %p124, %p125
      %p127 = scmp.ne.s32.totalorder %s113, %s114
      %p128 = scmp.eq.s32.totalorder %s15, 3
      %p129 = por %p127, %p128
      %p131 = scmp.ne.s32.totalorder %s114, %s130
      %p132 = scmp.eq.s32.totalorder %s15, 0
      %p133 = por %p131, %p132
      %p134 = scmp.le.s32.totalorder 1, %s9
      %p135 = scmp.lt.s32.totalorder %s9, 5
      %p136 = pnand %p134, %p135
      %p137 = pneg %p136
      // Predicated region
      $region9: #{bottleneck_forward.7} parent=5 // pred_check
        _
      $region10: #{bottleneck_forward.7} parent=5 // pred_check_branch
        %139 = sbr.rel (%p136) target = $region12
      $region11: #{bottleneck_forward.7} parent=5 // pred_region
        %s140 = ssub.s32 %s9, 1
        // Predicated region
        $region13: #{bottleneck_forward.7} parent=11 // pred_check
          %p141 = pneg %p70
        $region14: #{bottleneck_forward.7} parent=11 // pred_check_branch
          %143 = sbr.rel (%p141) target = $region16
        $region15: #{bottleneck_forward.7} parent=11 // pred_region
          _
        $region16: #{bottleneck_forward.7} parent=11 // pred_fallthru
          _
      $region12: #{bottleneck_forward.7} parent=5 // pred_fallthru
        _
      %p144 = scmp.lt.s32.totalorder %s9, 4
      // Predicated region
      $region17: #{bottleneck_forward.7} parent=5 // pred_check
        %p145 = pneg %p144
      $region18: #{bottleneck_forward.7} parent=5 // pred_check_branch
        %147 = sbr.rel (%p145) target = $region20
      $region19: #{bottleneck_forward.7} parent=5 // pred_region
        // Predicated region
        $region21: #{bottleneck_forward.7} parent=19 // pred_check
          %p148 = pneg %p43
        $region22: #{bottleneck_forward.7} parent=19 // pred_check_branch
          %150 = sbr.rel (%p148) target = $region24
        $region23: #{bottleneck_forward.7} parent=19 // pred_region
          %s151 = smul.u32 16, %s17
          %p152 = scmp.lt.s32.totalorder %s16, 1
          %s153 = scalar_select %p152, %s16, 1
          %p154 = scmp.lt.s32.totalorder %s151, 31
          %s155 = scalar_select %p154, %s151, 31
          %s156 = smul.addr %s153, 32
          %s157 = sadd.s32 %s155, %s156
          %s158 = smul.addr %s157, 4
          %s159 = scalar_lea.vmem %s0, %s158
          %s160 = smul.u32 16, %s17
        $region24: #{bottleneck_forward.7} parent=19 // pred_fallthru
          _
        // Predicated region
        $region25: #{bottleneck_forward.7} parent=19 // pred_check
          %p161 = pneg %p92
        $region26: #{bottleneck_forward.7} parent=19 // pred_check_branch
          %163 = sbr.rel (%p161) target = $region28
        $region27: #{bottleneck_forward.7} parent=19 // pred_region
          %s164 = sand.u32 %s82, 1
          %s165 = sand.u32 %s82, 1
          %s166 = smul.addr %s165, 16
          %s167 = scalar_lea.vmem [#allocation2], %s166
          %s168 = smul.addr %s16, 4
          %s169 = sadd.s32 %s17, %s168
          %s170 = smul.addr %s169, 8
          %s171 = scalar_lea.vmem %s2, %s170
          // Predicated region
          $region29: #{bottleneck_forward.7} parent=27 // pred_check
            _
          $region30: #{bottleneck_forward.7} parent=27 // pred_check_branch
            %173 = sbr.rel (0) target = $region32
          $region31: #{bottleneck_forward.7} parent=27 // pred_region
            // Predicated region
            $region33: #{bottleneck_forward.7} parent=31 // pred_check
              _
            $region34: #{bottleneck_forward.7} parent=31 // pred_check_branch
              %175 = sbr.rel (0) target = $region36
            $region35: #{bottleneck_forward.7} parent=31 // pred_region
              // Predicated region
              $region48: #{bottleneck_forward.7} parent=35 // pred_check
                _
              $region49: #{bottleneck_forward.7} parent=35 // pred_check_branch
                %192 = sbr.rel (0) target = $region51
              $region50: #{bottleneck_forward.7} parent=35 // pred_region
                loop: start=0, step=1, limit=1
                $region52: #{bottleneck_forward.7} parent=50 // loop_pre_header
                  _
                $region53: #{bottleneck_forward.7} parent=50 // loop_header
                  %s194 = sphi 0, %s198
                  %p195 = scmp.ge.s32.totalorder %s194, 1
                  %s199 = sphi %s171, %s171
                  %s200 = sphi %s167, %s167
                $region54: #{bottleneck_forward.7} parent=50 // loop_header_branch
                  %197 = sbr.rel (%p195) target = $region58
                $region55: #{bottleneck_forward.7} parent=50 // loop_body
                  %v201 = vld [vmem:[%s199] sm:$0xff]
                  %202 = vst [vmem:[%s200] sm:$0xff] %v201
                  %v203 = vld [vmem:[%s199 + $0x10] sm:$0xff]
                  %204 = vst [vmem:[%s200 + $0x8] sm:$0xff] %v203
                $region56: #{bottleneck_forward.7} parent=50 // loop_footer
                  %s198 = sadd.s32 1, %s194
                $region57: #{bottleneck_forward.7} parent=50 // loop_footer_branch
                  %193 = sbr.rel target = $region53
                $region58: #{bottleneck_forward.7} parent=50 // loop_exit
                  _
              $region51: #{bottleneck_forward.7} parent=35 // pred_fallthru
                _
              // Predicated region
              $region59: #{bottleneck_forward.7} parent=35 // pred_check
                _
              $region60: #{bottleneck_forward.7} parent=35 // pred_check_branch
                %206 = sbr.rel target = $region62
              $region61: #{bottleneck_forward.7} parent=35 // pred_region
                _
              $region62: #{bottleneck_forward.7} parent=35 // pred_fallthru
                _
            $region36: #{bottleneck_forward.7} parent=31 // pred_fallthru
              _
            // Predicated region
            $region37: #{bottleneck_forward.7} parent=31 // pred_check
              _
            $region38: #{bottleneck_forward.7} parent=31 // pred_check_branch
              %177 = sbr.rel target = $region40
            $region39: #{bottleneck_forward.7} parent=31 // pred_region
              loop: start=0, step=1, limit=1
              $region41: #{bottleneck_forward.7} parent=39 // loop_pre_header
                _
              $region42: #{bottleneck_forward.7} parent=39 // loop_header
                %s180 = sphi 0, %s184
                %p181 = scmp.ge.s32.totalorder %s180, 1
                %s185 = sphi %s171, %s171
                %s186 = sphi %s167, %s167
              $region43: #{bottleneck_forward.7} parent=39 // loop_header_branch
                %183 = sbr.rel (%p181) target = $region47
              $region44: #{bottleneck_forward.7} parent=39 // loop_body
                %v187 = vld [vmem:[%s185] sm:$0xff]
                %188 = vst [vmem:[%s186] sm:$0xff] %v187
                %v189 = vld [vmem:[%s185 + $0x10] sm:$0xff]
                %190 = vst [vmem:[%s186 + $0x8] sm:$0xff] %v189
              $region45: #{bottleneck_forward.7} parent=39 // loop_footer
                %s184 = sadd.s32 1, %s180
              $region46: #{bottleneck_forward.7} parent=39 // loop_footer_branch
                %179 = sbr.rel target = $region42
              $region47: #{bottleneck_forward.7} parent=39 // loop_exit
                _
            $region40: #{bottleneck_forward.7} parent=31 // pred_fallthru
              _
          $region32: #{bottleneck_forward.7} parent=27 // pred_fallthru
            _
          %207 = vnop
        $region28: #{bottleneck_forward.7} parent=19 // pred_fallthru
          _
      $region20: #{bottleneck_forward.7} parent=5 // pred_fallthru
        _
      %p208 = scmp.le.s32.totalorder 1, %s9
      %p209 = scmp.lt.s32.totalorder %s9, 5
      %p210 = pnand %p208, %p209
      %p211 = pneg %p210
      // Predicated region
      $region63: #{bottleneck_forward.7} parent=5 // pred_check
        _
      $region64: #{bottleneck_forward.7} parent=5 // pred_check_branch
        %213 = sbr.rel (%p210) target = $region66
      $region65: #{bottleneck_forward.7} parent=5 // pred_region
        %s214 = ssub.s32 %s9, 1
        %s215 = sand.u32 %s85, 1
        %s216 = sand.u32 %s85, 1
        %s217 = smul.addr %s216, 16
        %s218 = scalar_lea.vmem [#allocation2], %s217
        // Predicated region
        $region67: #{bottleneck_forward.7} parent=65 // pred_check
          %p219 = pneg %p98
        $region68: #{bottleneck_forward.7} parent=65 // pred_check_branch
          %221 = sbr.rel (%p219) target = $region70
        $region69: #{bottleneck_forward.7} parent=65 // pred_region
          _
        $region70: #{bottleneck_forward.7} parent=65 // pred_fallthru
          _
        %s222 = smul.u32 16, %s19
        %p223 = scmp.lt.s32.totalorder %s18, 1
        %s224 = scalar_select %p223, %s18, 1
        %p225 = scmp.lt.s32.totalorder %s222, 31
        %s226 = scalar_select %p225, %s222, 31
        %s227 = smul.addr %s224, 32
        %s228 = sadd.s32 %s226, %s227
        %s229 = smul.addr %s228, 4
        %s230 = scalar_lea.vmem %s0, %s229
        %p231 = pneg %p49
        %p232 = pneg %p46
        %p233 = pneg %p70
        %p234 = pneg %p67
        %s235 = sand.u32 %s85, 1
        %s236 = sand.u32 %s85, 1
        %s237 = smul.addr %s236, 16
        %s238 = scalar_lea.vmem [#allocation2], %s237
        %p239 = pneg %p98
        %p240 = pneg %p95
        %p241 = pneg %p126
        %p242 = pneg %p123
        %s243 = sand.u32 %s113, 1
        %s244 = sand.u32 %s113, 1
        %s245 = smul.addr %s244, 16
        %s246 = scalar_lea.vmem [#allocation3], %s245
        %s247 = smul.u32 16, %s19
        %p248 = scmp.lt.s32.totalorder %s18, 1
        %s249 = scalar_select %p248, %s18, 1
        %p250 = scmp.lt.s32.totalorder %s247, 31
        %s251 = scalar_select %p250, %s247, 31
        %s252 = smul.addr %s249, 32
        %s253 = sadd.s32 %s251, %s252
        %s254 = smul.addr %s253, 4
        %s255 = scalar_lea.vmem %s0, %s254
        %s256 = smul.u32 16, %s19
        %v257 = vld [vmem:[%s1] sm:$0x3]
        %v258 = vld [vmem:[%s255] sm:$0xf]
        %v259 = vld [vmem:[%s255 + $0x4] sm:$0xf]
        %v260 = vld [vmem:[%s255 + $0x8] sm:$0xf]
        %v261 = vld [vmem:[%s255 + $0xc] sm:$0xf]
        %v262 = vld [vmem:[%s255 + $0x10] sm:$0xf]
        %v263 = vld [vmem:[%s255 + $0x14] sm:$0xf]
        %v264 = vld [vmem:[%s255 + $0x18] sm:$0xf]
        %v265 = vld [vmem:[%s255 + $0x1c] sm:$0xf]
        %v266 = vld [vmem:[%s255 + $0x20] sm:$0xf]
        %v267 = vld [vmem:[%s255 + $0x24] sm:$0xf]
        %v268 = vld [vmem:[%s255 + $0x28] sm:$0xf]
        %v269 = vld [vmem:[%s255 + $0x2c] sm:$0xf]
        %v270 = vld [vmem:[%s255 + $0x30] sm:$0xf]
        %v271 = vld [vmem:[%s255 + $0x34] sm:$0xf]
        %v272 = vld [vmem:[%s255 + $0x38] sm:$0xf]
        %v273 = vld [vmem:[%s255 + $0x3c] sm:$0xf]
        %v274 = vunpack.c.l.bf16 %v258
        %v275 = vunpack.c.l.bf16 %v259
        %v276 = vunpack.c.l.bf16 %v260
        %v277 = vunpack.c.l.bf16 %v261
        %v278 = vunpack.c.l.bf16 %v262
        %v279 = vunpack.c.l.bf16 %v263
        %v280 = vunpack.c.l.bf16 %v264
        %v281 = vunpack.c.l.bf16 %v265
        %v282 = vunpack.c.l.bf16 %v266
        %v283 = vunpack.c.l.bf16 %v267
        %v284 = vunpack.c.l.bf16 %v268
        %v285 = vunpack.c.l.bf16 %v269
        %v286 = vunpack.c.l.bf16 %v270
        %v287 = vunpack.c.l.bf16 %v271
        %v288 = vunpack.c.l.bf16 %v272
        %v289 = vunpack.c.l.bf16 %v273
        %v290 = vlaneseq
        %v291 = vshrl.u32 %v290, 7
        %v292 = vsub.s32 0, %v291
        %v293 = vrot.slane %v257, %v292
        %v294 = vmul.f32 %v274, %v293
        %v295 = vmul.f32 %v275, %v293
        %v296 = vmul.f32 %v276, %v293
        %v297 = vmul.f32 %v277, %v293
        %v298 = vmul.f32 %v278, %v293
        %v299 = vmul.f32 %v279, %v293
        %v300 = vmul.f32 %v280, %v293
        %v301 = vmul.f32 %v281, %v293
        %v302 = vmul.f32 %v282, %v293
        %v303 = vmul.f32 %v283, %v293
        %v304 = vmul.f32 %v284, %v293
        %v305 = vmul.f32 %v285, %v293
        %v306 = vmul.f32 %v286, %v293
        %v307 = vmul.f32 %v287, %v293
        %v308 = vmul.f32 %v288, %v293
        %v309 = vmul.f32 %v289, %v293
        %v310 = vlaneseq
        %v311 = vshrl.u32 %v310, 7
        %v312 = vsub.s32 1, %v311
        %v313 = vrot.slane %v257, %v312
        %v314 = vadd.f32 %v294, %v313
        %v315 = vadd.f32 %v295, %v313
        %v316 = vadd.f32 %v296, %v313
        %v317 = vadd.f32 %v297, %v313
        %v318 = vadd.f32 %v298, %v313
        %v319 = vadd.f32 %v299, %v313
        %v320 = vadd.f32 %v300, %v313
        %v321 = vadd.f32 %v301, %v313
        %v322 = vadd.f32 %v302, %v313
        %v323 = vadd.f32 %v303, %v313
        %v324 = vadd.f32 %v304, %v313
        %v325 = vadd.f32 %v305, %v313
        %v326 = vadd.f32 %v306, %v313
        %v327 = vadd.f32 %v307, %v313
        %v328 = vadd.f32 %v308, %v313
        %v329 = vadd.f32 %v309, %v313
        %330 = vxpose.xlu0.b32.start [1/16] %v314, 128
        %331 = vxpose.xlu0.b32.cont [2/16] %v315, 128
        %332 = vxpose.xlu0.b32.cont [3/16] %v316, 128
        %333 = vxpose.xlu0.b32.cont [4/16] %v317, 128
        %334 = vxpose.xlu0.b32.cont [5/16] %v318, 128
        %335 = vxpose.xlu0.b32.cont [6/16] %v319, 128
        %336 = vxpose.xlu0.b32.cont [7/16] %v320, 128
        %337 = vxpose.xlu0.b32.cont [8/16] %v321, 128
        %338 = vxpose.xlu0.b32.cont [9/16] %v322, 128
        %339 = vxpose.xlu0.b32.cont [10/16] %v323, 128
        %340 = vxpose.xlu0.b32.cont [11/16] %v324, 128
        %341 = vxpose.xlu0.b32.cont [12/16] %v325, 128
        %342 = vxpose.xlu0.b32.cont [13/16] %v326, 128
        %343 = vxpose.xlu0.b32.cont [14/16] %v327, 128
        %344 = vxpose.xlu0.b32.cont [15/16] %v328, 128
        %345 = vxpose.xlu0.b32.end [16/16] %v329, 128
        %v346 = vpop.trf.xlu0
        %v347 = vpop.trf.xlu0
        %v348 = vpop.trf.xlu0
        %v349 = vpop.trf.xlu0
        %v350 = vpop.trf.xlu0
        %v351 = vpop.trf.xlu0
        %v352 = vpop.trf.xlu0
        %v353 = vpop.trf.xlu0
        %v354 = vpop.trf.xlu0
        %v355 = vpop.trf.xlu0
        %v356 = vpop.trf.xlu0
        %v357 = vpop.trf.xlu0
        %v358 = vpop.trf.xlu0
        %v359 = vpop.trf.xlu0
        %v360 = vpop.trf.xlu0
        %v361 = vpop.trf.xlu0
        %v362 = vld [vmem:[%s218] sm:$0xff]
        %v363 = vld [vmem:[%s218 + $0x8] sm:$0xff]
        %v364 = vadd.f32 %v346, %v362
        %v365 = vadd.f32 %v347, %v363
        %v366 = vmax.f32 %v364, 0.0
        %v367 = vmax.f32 %v365, 0.0
        %368 = vst [vmem:[%s246] sm:$0xff] %v366
        %369 = vst [vmem:[%s246 + $0x8] sm:$0xff] %v367
        %s370 = sand.u32 %s113, 1
        %s371 = sand.u32 %s113, 1
        %s372 = smul.addr %s371, 16
        %s373 = scalar_lea.vmem [#allocation3], %s372
        // Predicated region
        $region71: #{bottleneck_forward.7} parent=65 // pred_check
          %p374 = pneg %p123
        $region72: #{bottleneck_forward.7} parent=65 // pred_check_branch
          %376 = sbr.rel (%p374) target = $region74
        $region73: #{bottleneck_forward.7} parent=65 // pred_region
          %s377 = smul.addr %s18, 4
          %s378 = sadd.s32 %s19, %s377
          %s379 = smul.addr %s378, 8
          %s380 = scalar_lea.vmem %s3, %s379
          // Predicated region
          $region75: #{bottleneck_forward.7} parent=73 // pred_check
            _
          $region76: #{bottleneck_forward.7} parent=73 // pred_check_branch
            %382 = sbr.rel (0) target = $region78
          $region77: #{bottleneck_forward.7} parent=73 // pred_region
            // Predicated region
            $region79: #{bottleneck_forward.7} parent=77 // pred_check
              _
            $region80: #{bottleneck_forward.7} parent=77 // pred_check_branch
              %384 = sbr.rel (0) target = $region82
            $region81: #{bottleneck_forward.7} parent=77 // pred_region
              // Predicated region
              $region94: #{bottleneck_forward.7} parent=81 // pred_check
                _
              $region95: #{bottleneck_forward.7} parent=81 // pred_check_branch
                %401 = sbr.rel (0) target = $region97
              $region96: #{bottleneck_forward.7} parent=81 // pred_region
                loop: start=0, step=1, limit=1
                $region98: #{bottleneck_forward.7} parent=96 // loop_pre_header
                  _
                $region99: #{bottleneck_forward.7} parent=96 // loop_header
                  %s403 = sphi 0, %s407
                  %p404 = scmp.ge.s32.totalorder %s403, 1
                  %s408 = sphi %s373, %s373
                  %s409 = sphi %s380, %s380
                $region100: #{bottleneck_forward.7} parent=96 // loop_header_branch
                  %406 = sbr.rel (%p404) target = $region104
                $region101: #{bottleneck_forward.7} parent=96 // loop_body
                  %v410 = vld [vmem:[%s408] sm:$0xff]
                  %411 = vst [vmem:[%s409] sm:$0xff] %v410
                  %v412 = vld [vmem:[%s408 + $0x8] sm:$0xff]
                  %413 = vst [vmem:[%s409 + $0x10] sm:$0xff] %v412
                $region102: #{bottleneck_forward.7} parent=96 // loop_footer
                  %s407 = sadd.s32 1, %s403
                $region103: #{bottleneck_forward.7} parent=96 // loop_footer_branch
                  %402 = sbr.rel target = $region99
                $region104: #{bottleneck_forward.7} parent=96 // loop_exit
                  _
              $region97: #{bottleneck_forward.7} parent=81 // pred_fallthru
                _
              // Predicated region
              $region105: #{bottleneck_forward.7} parent=81 // pred_check
                _
              $region106: #{bottleneck_forward.7} parent=81 // pred_check_branch
                %415 = sbr.rel target = $region108
              $region107: #{bottleneck_forward.7} parent=81 // pred_region
                _
              $region108: #{bottleneck_forward.7} parent=81 // pred_fallthru
                _
            $region82: #{bottleneck_forward.7} parent=77 // pred_fallthru
              _
            // Predicated region
            $region83: #{bottleneck_forward.7} parent=77 // pred_check
              _
            $region84: #{bottleneck_forward.7} parent=77 // pred_check_branch
              %386 = sbr.rel target = $region86
            $region85: #{bottleneck_forward.7} parent=77 // pred_region
              loop: start=0, step=1, limit=1
              $region87: #{bottleneck_forward.7} parent=85 // loop_pre_header
                _
              $region88: #{bottleneck_forward.7} parent=85 // loop_header
                %s389 = sphi 0, %s393
                %p390 = scmp.ge.s32.totalorder %s389, 1
                %s394 = sphi %s373, %s373
                %s395 = sphi %s380, %s380
              $region89: #{bottleneck_forward.7} parent=85 // loop_header_branch
                %392 = sbr.rel (%p390) target = $region93
              $region90: #{bottleneck_forward.7} parent=85 // loop_body
                %v396 = vld [vmem:[%s394] sm:$0xff]
                %397 = vst [vmem:[%s395] sm:$0xff] %v396
                %v398 = vld [vmem:[%s394 + $0x8] sm:$0xff]
                %399 = vst [vmem:[%s395 + $0x10] sm:$0xff] %v398
              $region91: #{bottleneck_forward.7} parent=85 // loop_footer
                %s393 = sadd.s32 1, %s389
              $region92: #{bottleneck_forward.7} parent=85 // loop_footer_branch
                %388 = sbr.rel target = $region88
              $region93: #{bottleneck_forward.7} parent=85 // loop_exit
                _
            $region86: #{bottleneck_forward.7} parent=77 // pred_fallthru
              _
          $region78: #{bottleneck_forward.7} parent=73 // pred_fallthru
            _
          %416 = vnop
        $region74: #{bottleneck_forward.7} parent=65 // pred_fallthru
          _
      $region66: #{bottleneck_forward.7} parent=5 // pred_fallthru
        _
      %p417 = scmp.le.s32.totalorder 2, %s9
      // Predicated region
      $region109: #{bottleneck_forward.7} parent=5 // pred_check
        %p418 = pneg %p417
      $region110: #{bottleneck_forward.7} parent=5 // pred_check_branch
        %420 = sbr.rel (%p418) target = $region112
      $region111: #{bottleneck_forward.7} parent=5 // pred_region
        %s421 = ssub.s32 %s9, 2
        // Predicated region
        $region113: #{bottleneck_forward.7} parent=111 // pred_check
          %p422 = pneg %p129
        $region114: #{bottleneck_forward.7} parent=111 // pred_check_branch
          %424 = sbr.rel (%p422) target = $region116
        $region115: #{bottleneck_forward.7} parent=111 // pred_region
          %s425 = sand.u32 %s114, 1
          %s426 = sand.u32 %s114, 1
          %s427 = smul.addr %s426, 16
          %s428 = scalar_lea.vmem [#allocation3], %s427
        $region116: #{bottleneck_forward.7} parent=111 // pred_fallthru
          _
      $region112: #{bottleneck_forward.7} parent=5 // pred_fallthru
        _
    $region6: #{bottleneck_forward.7} parent=1 // loop_footer
      %s13 = sadd.s32 1, %s9
    $region7: #{bottleneck_forward.7} parent=1 // loop_footer_branch
      %8 = sbr.rel target = $region3
    $region8: #{bottleneck_forward.7} parent=1 // loop_exit
      _

// kernel: bottleneck_forward.6
$region0: #{bottleneck_forward.6}
  #allocation0 [shape = 'u32[]', space=smem, size = 0x4, offset = 0x4, fixed_abs, tag = 'smem constant byte address 0x4 - core index']
  #allocation1 [shape = 'u32[144,128]{1,0:T(1,128)}', space=vmem, size = 0x12000, scoped, tag = 'internal scratch']
  #allocation2 [shape = 'f32[1,16]{1,0:T(1,128)}', space=vmem, size = 0x200, scoped, tag = 'scratch operand']
  #allocation3 [shape = 'f32[1,16]{1,0:T(1,128)}', space=vmem, size = 0x200, scoped, tag = 'scratch operand']
  %s0 = inlined_call_operand.vmem [shape: bf16[2,256,4], index: 0, kind: input, shape index: {}]
  %s1 = inlined_call_operand.vmem [shape: f32[2,4], index: 1, kind: input, shape index: {}]
  %s2 = inlined_call_operand.vmem [shape: bf16[4,16], index: 2, kind: input, shape index: {}]
  %s3 = inlined_call_operand.vmem [shape: f32[1,16], index: 3, kind: input, shape index: {}]
  %s4 = inlined_call_operand.vmem [shape: f32[1,16], index: 4, kind: input, shape index: {}]
  %s5 = inlined_call_operand.vmem [shape: bf16[2,256,16], index: 5, kind: output, shape index: {0}]
  %s6 = inlined_call_operand.vmem [shape: f32[2,16], index: 6, kind: output, shape index: {1}]
  %7 = xla_tuple %s5, %s6
  %s8 = sld [smem:[#allocation0]]
  $region69: #{bottleneck_forward.6} parent=0
    _
  %s10 = ssub.s32 1, %s8
  %s11 = scalar_select 0, %s10, %s8
  loop: start=0, step=1, limit=6
  $region2: #{bottleneck_forward.6} parent=0 // loop_pre_header
    _
  $region3: #{bottleneck_forward.6} parent=0 // loop_header
    %s13 = sphi 0, %s17
    %p14 = scmp.ge.s32.totalorder %s13, 6
    %s20 = sphi 0, %s32
    %s21 = sphi 0, %s28
    %s22 = sphi 0, %s20
    %s23 = sphi 0, %s21
    %s24 = sphi 0, %s22
    %s25 = sphi 0, %s23
    %s37 = sphi 0, %s39
    %s40 = sphi 0, %s37
    %s41 = sphi 0, %s40
    %s57 = sphi 0, %s41
    %s61 = sphi 0, %s61
    %s63 = sphi 0, %s61
    %s64 = sphi 0, %s63
    %s78 = sphi 0, %s64
    %s82 = sphi 0, %s82
    %s84 = sphi 0, %s82
    %s85 = sphi 0, %s84
    %s99 = sphi 0, %s85
    %s103 = sphi 0, %s103
    %s105 = sphi 0, %s103
    %s106 = sphi 0, %s105
    %s120 = sphi 0, %s106
    %s124 = sphi 0, %s124
    %s126 = sphi 0, %s124
    %s127 = sphi 0, %s126
    %s141 = sphi 0, %s127
    %s149 = sphi 0, %s151
    %s152 = sphi 0, %s149
    %s153 = sphi 0, %s152
    %s169 = sphi 0, %s153
    %s173 = sphi 0, %s173
    %s175 = sphi 0, %s173
    %s176 = sphi 0, %s175
    %s190 = sphi 0, %s176
  $region4: #{bottleneck_forward.6} parent=0 // loop_header_branch
    %16 = sbr.rel (%p14) target = $region8
  $region5: #{bottleneck_forward.6} parent=0 // loop_body
    %s18 = ssub.s32 %s13, 1
    %s19 = ssub.s32 %s13, 2
    %s26 = sadd.s32 1, %s21
    %p27 = scmp.ge.s32.totalorder %s26, 2
    %s28 = scalar_select %p27, 0, %s26
    %s29 = sadd.s32 1, %s20
    %s30 = scalar_select %p27, %s29, %s20
    %p31 = scmp.ge.s32.totalorder %s30, 2
    %s32 = scalar_select %p31, 0, %s30
    %s33 = ssub.s32 %s20, %s32
    %s34 = ssub.s32 %s21, %s28
    %s35 = sor.u32 %s33, %s34
    %p36 = scmp.eq.s32.totalorder %s35, 0
    %s38 = sadd.s32 %s37, 1
    %s39 = scalar_select %p36, %s37, %s38
    %p42 = pneg %p36
    %p43 = scmp.eq.s32.totalorder %s13, 3
    %p44 = por %p42, %p43
    %p45 = scmp.ne.s32.totalorder %s37, %s40
    %p46 = scmp.eq.s32.totalorder %s13, 0
    %p47 = por %p45, %p46
    %p48 = scmp.ne.s32.totalorder %s37, %s40
    %p49 = scmp.eq.s32.totalorder %s18, 3
    %p50 = por %p48, %p49
    %p51 = scmp.ne.s32.totalorder %s40, %s41
    %p52 = scmp.eq.s32.totalorder %s18, 0
    %p53 = por %p51, %p52
    %p54 = scmp.ne.s32.totalorder %s40, %s41
    %p55 = scmp.eq.s32.totalorder %s19, 3
    %p56 = por %p54, %p55
    %p58 = scmp.ne.s32.totalorder %s41, %s57
    %p59 = scmp.eq.s32.totalorder %s19, 0
    %p60 = por %p58, %p59
    %s62 = sadd.s32 %s61, 1
    %p65 = scmp.eq.s32.totalorder %s13, 3
    %p66 = scmp.ne.s32.totalorder %s61, %s63
    %p67 = scmp.eq.s32.totalorder %s13, 0
    %p68 = por %p66, %p67
    %p69 = scmp.ne.s32.totalorder %s61, %s63
    %p70 = scmp.eq.s32.totalorder %s18, 3
    %p71 = por %p69, %p70
    %p72 = scmp.ne.s32.totalorder %s63, %s64
    %p73 = scmp.eq.s32.totalorder %s18, 0
    %p74 = por %p72, %p73
    %p75 = scmp.ne.s32.totalorder %s63, %s64
    %p76 = scmp.eq.s32.totalorder %s19, 3
    %p77 = por %p75, %p76
    %p79 = scmp.ne.s32.totalorder %s64, %s78
    %p80 = scmp.eq.s32.totalorder %s19, 0
    %p81 = por %p79, %p80
    %s83 = sadd.s32 %s82, 1
    %p86 = scmp.eq.s32.totalorder %s13, 3
    %p87 = scmp.ne.s32.totalorder %s82, %s84
    %p88 = scmp.eq.s32.totalorder %s13, 0
    %p89 = por %p87, %p88
    %p90 = scmp.ne.s32.totalorder %s82, %s84
    %p91 = scmp.eq.s32.totalorder %s18, 3
    %p92 = por %p90, %p91
    %p93 = scmp.ne.s32.totalorder %s84, %s85
    %p94 = scmp.eq.s32.totalorder %s18, 0
    %p95 = por %p93, %p94
    %p96 = scmp.ne.s32.totalorder %s84, %s85
    %p97 = scmp.eq.s32.totalorder %s19, 3
    %p98 = por %p96, %p97
    %p100 = scmp.ne.s32.totalorder %s85, %s99
    %p101 = scmp.eq.s32.totalorder %s19, 0
    %p102 = por %p100, %p101
    %s104 = sadd.s32 %s103, 1
    %p107 = scmp.eq.s32.totalorder %s13, 3
    %p108 = scmp.ne.s32.totalorder %s103, %s105
    %p109 = scmp.eq.s32.totalorder %s13, 0
    %p110 = por %p108, %p109
    %p111 = scmp.ne.s32.totalorder %s103, %s105
    %p112 = scmp.eq.s32.totalorder %s18, 3
    %p113 = por %p111, %p112
    %p114 = scmp.ne.s32.totalorder %s105, %s106
    %p115 = scmp.eq.s32.totalorder %s18, 0
    %p116 = por %p114, %p115
    %p117 = scmp.ne.s32.totalorder %s105, %s106
    %p118 = scmp.eq.s32.totalorder %s19, 3
    %p119 = por %p117, %p118
    %p121 = scmp.ne.s32.totalorder %s106, %s120
    %p122 = scmp.eq.s32.totalorder %s19, 0
    %p123 = por %p121, %p122
    %s125 = sadd.s32 %s124, 1
    %p128 = scmp.eq.s32.totalorder %s13, 3
    %p129 = scmp.ne.s32.totalorder %s124, %s126
    %p130 = scmp.eq.s32.totalorder %s13, 0
    %p131 = por %p129, %p130
    %p132 = scmp.ne.s32.totalorder %s124, %s126
    %p133 = scmp.eq.s32.totalorder %s18, 3
    %p134 = por %p132, %p133
    %p135 = scmp.ne.s32.totalorder %s126, %s127
    %p136 = scmp.eq.s32.totalorder %s18, 0
    %p137 = por %p135, %p136
    %p138 = scmp.ne.s32.totalorder %s126, %s127
    %p139 = scmp.eq.s32.totalorder %s19, 3
    %p140 = por %p138, %p139
    %p142 = scmp.ne.s32.totalorder %s127, %s141
    %p143 = scmp.eq.s32.totalorder %s19, 0
    %p144 = por %p142, %p143
    %s145 = ssub.s32 %s20, %s32
    %s146 = ssub.s32 %s21, %s28
    %s147 = sor.u32 %s145, %s146
    %p148 = scmp.eq.s32.totalorder %s147, 0
    %s150 = sadd.s32 %s149, 1
    %s151 = scalar_select %p148, %s149, %s150
    %p154 = pneg %p148
    %p155 = scmp.eq.s32.totalorder %s13, 3
    %p156 = por %p154, %p155
    %p157 = scmp.ne.s32.totalorder %s149, %s152
    %p158 = scmp.eq.s32.totalorder %s13, 0
    %p159 = por %p157, %p158
    %p160 = scmp.ne.s32.totalorder %s149, %s152
    %p161 = scmp.eq.s32.totalorder %s18, 3
    %p162 = por %p160, %p161
    %p163 = scmp.ne.s32.totalorder %s152, %s153
    %p164 = scmp.eq.s32.totalorder %s18, 0
    %p165 = por %p163, %p164
    %p166 = scmp.ne.s32.totalorder %s152, %s153
    %p167 = scmp.eq.s32.totalorder %s19, 3
    %p168 = por %p166, %p167
    %p170 = scmp.ne.s32.totalorder %s153, %s169
    %p171 = scmp.eq.s32.totalorder %s19, 0
    %p172 = por %p170, %p171
    %s174 = sadd.s32 %s173, 1
    %p177 = scmp.eq.s32.totalorder %s13, 3
    %p178 = scmp.ne.s32.totalorder %s173, %s175
    %p179 = scmp.eq.s32.totalorder %s13, 0
    %p180 = por %p178, %p179
    %p181 = scmp.ne.s32.totalorder %s173, %s175
    %p182 = scmp.eq.s32.totalorder %s18, 3
    %p183 = por %p181, %p182
    %p184 = scmp.ne.s32.totalorder %s175, %s176
    %p185 = scmp.eq.s32.totalorder %s18, 0
    %p186 = por %p184, %p185
    %p187 = scmp.ne.s32.totalorder %s175, %s176
    %p188 = scmp.eq.s32.totalorder %s19, 3
    %p189 = por %p187, %p188
    %p191 = scmp.ne.s32.totalorder %s176, %s190
    %p192 = scmp.eq.s32.totalorder %s19, 0
    %p193 = por %p191, %p192
    %p194 = scmp.le.s32.totalorder 1, %s13
    %p195 = scmp.lt.s32.totalorder %s13, 5
    %p196 = pnand %p194, %p195
    %p197 = pneg %p196
    // Predicated region
    $region9: #{bottleneck_forward.6} parent=5 // pred_check
      _
    $region10: #{bottleneck_forward.6} parent=5 // pred_check_branch
      %199 = sbr.rel (%p196) target = $region12
    $region11: #{bottleneck_forward.6} parent=5 // pred_region
      %s200 = ssub.s32 %s13, 1
      // Predicated region
      $region13: #{bottleneck_forward.6} parent=11 // pred_check
        %p201 = pneg %p74
      $region14: #{bottleneck_forward.6} parent=11 // pred_check_branch
        %203 = sbr.rel (%p201) target = $region16
      $region15: #{bottleneck_forward.6} parent=11 // pred_region
        _
      $region16: #{bottleneck_forward.6} parent=11 // pred_fallthru
        _
      // Predicated region
      $region17: #{bottleneck_forward.6} parent=11 // pred_check
        %p204 = pneg %p95
      $region18: #{bottleneck_forward.6} parent=11 // pred_check_branch
        %206 = sbr.rel (%p204) target = $region20
      $region19: #{bottleneck_forward.6} parent=11 // pred_region
        _
      $region20: #{bottleneck_forward.6} parent=11 // pred_fallthru
        _
      // Predicated region
      $region21: #{bottleneck_forward.6} parent=11 // pred_check
        %p207 = pneg %p116
      $region22: #{bottleneck_forward.6} parent=11 // pred_check_branch
        %209 = sbr.rel (%p207) target = $region24
      $region23: #{bottleneck_forward.6} parent=11 // pred_region
        _
      $region24: #{bottleneck_forward.6} parent=11 // pred_fallthru
        _
      // Predicated region
      $region25: #{bottleneck_forward.6} parent=11 // pred_check
        %p210 = pneg %p137
      $region26: #{bottleneck_forward.6} parent=11 // pred_check_branch
        %212 = sbr.rel (%p210) target = $region28
      $region27: #{bottleneck_forward.6} parent=11 // pred_region
        _
      $region28: #{bottleneck_forward.6} parent=11 // pred_fallthru
        _
    $region12: #{bottleneck_forward.6} parent=5 // pred_fallthru
      _
    %p213 = scmp.lt.s32.totalorder %s13, 4
    // Predicated region
    $region29: #{bottleneck_forward.6} parent=5 // pred_check
      %p214 = pneg %p213
    $region30: #{bottleneck_forward.6} parent=5 // pred_check_branch
      %216 = sbr.rel (%p214) target = $region32
    $region31: #{bottleneck_forward.6} parent=5 // pred_region
      // Predicated region
      $region33: #{bottleneck_forward.6} parent=31 // pred_check
        %p217 = pneg %p47
      $region34: #{bottleneck_forward.6} parent=31 // pred_check_branch
        %219 = sbr.rel (%p217) target = $region36
      $region35: #{bottleneck_forward.6} parent=31 // pred_region
        %s220 = smul.u32 16, %s21
        %p221 = scmp.lt.s32.totalorder %s20, 1
        %s222 = scalar_select %p221, %s20, 1
        %p223 = scmp.lt.s32.totalorder %s220, 31
        %s224 = scalar_select %p223, %s220, 31
        %s225 = smul.addr %s222, 32
        %s226 = sadd.s32 %s224, %s225
        %s227 = smul.addr %s226, 4
        %s228 = scalar_lea.vmem %s0, %s227
        %s229 = smul.u32 16, %s21
      $region36: #{bottleneck_forward.6} parent=31 // pred_fallthru
        _
    $region32: #{bottleneck_forward.6} parent=5 // pred_fallthru
      _
    %p230 = scmp.le.s32.totalorder 1, %s13
    %p231 = scmp.lt.s32.totalorder %s13, 5
    %p232 = pnand %p230, %p231
    %p233 = pneg %p232
    // Predicated region
    $region37: #{bottleneck_forward.6} parent=5 // pred_check
      _
    $region38: #{bottleneck_forward.6} parent=5 // pred_check_branch
      %235 = sbr.rel (%p232) target = $region40
    $region39: #{bottleneck_forward.6} parent=5 // pred_region
      %s236 = ssub.s32 %s13, 1
      %s237 = smul.u32 16, %s23
      %p238 = scmp.lt.s32.totalorder %s22, 1
      %s239 = scalar_select %p238, %s22, 1
      %p240 = scmp.lt.s32.totalorder %s237, 31
      %s241 = scalar_select %p240, %s237, 31
      %s242 = smul.addr %s239, 32
      %s243 = sadd.s32 %s241, %s242
      %s244 = smul.addr %s243, 4
      %s245 = scalar_lea.vmem %s0, %s244
      %p246 = pneg %p53
      %p247 = pneg %p50
      %p248 = pneg %p74
      %p249 = pneg %p71
      %p250 = pneg %p95
      %p251 = pneg %p92
      %p252 = pneg %p116
      %p253 = pneg %p113
      %p254 = pneg %p137
      %p255 = pneg %p134
      %p256 = pneg %p165
      %p257 = pneg %p162
      %s258 = smul.u32 16, %s23
      %p259 = scmp.lt.s32.totalorder %s22, 1
      %s260 = scalar_select %p259, %s22, 1
      %p261 = scmp.lt.s32.totalorder %s258, 31
      %s262 = scalar_select %p261, %s258, 31
      %s263 = smul.addr %s260, 32
      %s264 = sadd.s32 %s262, %s263
      %s265 = smul.addr %s264, 4
      %s266 = scalar_lea.vmem %s5, %s265
      %p267 = pneg %p186
      %p268 = pneg %p183
      %s269 = smul.u32 16, %s23
      %p270 = scmp.lt.s32.totalorder %s22, 1
      %s271 = scalar_select %p270, %s22, 1
      %p272 = scmp.lt.s32.totalorder %s269, 31
      %s273 = scalar_select %p272, %s269, 31
      %s274 = smul.addr %s271, 32
      %s275 = sadd.s32 %s273, %s274
      %s276 = smul.addr %s275, 4
      %s277 = scalar_lea.vmem %s0, %s276
      %s278 = smul.u32 16, %s23
      %s279 = smul.u32 16, %s23
      %p280 = scmp.lt.s32.totalorder %s22, 1
      %s281 = scalar_select %p280, %s22, 1
      %p282 = scmp.lt.s32.totalorder %s279, 31
      %s283 = scalar_select %p282, %s279, 31
      %s284 = smul.addr %s281, 32
      %s285 = sadd.s32 %s283, %s284
      %s286 = smul.addr %s285, 4
      %s287 = scalar_lea.vmem %s5, %s286
      %s288 = smul.u32 16, %s23
      %v290 = vld [vmem:[%s1] sm:$0x3]
      %v291 = vld [vmem:[%s277] sm:$0xf]
      %v292 = vld [vmem:[%s277 + $0x4] sm:$0xf]
      %v293 = vld [vmem:[%s277 + $0x8] sm:$0xf]
      %v294 = vld [vmem:[%s277 + $0xc] sm:$0xf]
      %v295 = vld [vmem:[%s277 + $0x10] sm:$0xf]
      %v296 = vld [vmem:[%s277 + $0x14] sm:$0xf]
      %v297 = vld [vmem:[%s277 + $0x18] sm:$0xf]
      %v298 = vld [vmem:[%s277 + $0x1c] sm:$0xf]
      %v299 = vld [vmem:[%s277 + $0x20] sm:$0xf]
      %v300 = vld [vmem:[%s277 + $0x24] sm:$0xf]
      %v301 = vld [vmem:[%s277 + $0x28] sm:$0xf]
      %v302 = vld [vmem:[%s277 + $0x2c] sm:$0xf]
      %v303 = vld [vmem:[%s277 + $0x30] sm:$0xf]
      %v304 = vld [vmem:[%s277 + $0x34] sm:$0xf]
      %v305 = vld [vmem:[%s277 + $0x38] sm:$0xf]
      %v306 = vld [vmem:[%s277 + $0x3c] sm:$0xf]
      %v307 = vunpack.c.l.bf16 %v291
      %v308 = vunpack.c.l.bf16 %v292
      %v309 = vunpack.c.l.bf16 %v293
      %v310 = vunpack.c.l.bf16 %v294
      %v311 = vunpack.c.l.bf16 %v295
      %v312 = vunpack.c.l.bf16 %v296
      %v313 = vunpack.c.l.bf16 %v297
      %v314 = vunpack.c.l.bf16 %v298
      %v315 = vunpack.c.l.bf16 %v299
      %v316 = vunpack.c.l.bf16 %v300
      %v317 = vunpack.c.l.bf16 %v301
      %v318 = vunpack.c.l.bf16 %v302
      %v319 = vunpack.c.l.bf16 %v303
      %v320 = vunpack.c.l.bf16 %v304
      %v321 = vunpack.c.l.bf16 %v305
      %v322 = vunpack.c.l.bf16 %v306
      %v323 = vlaneseq
      %v324 = vshrl.u32 %v323, 7
      %v325 = vsub.s32 0, %v324
      %v326 = vrot.slane %v290, %v325
      %v327 = vmul.f32 %v307, %v326
      %v328 = vmul.f32 %v308, %v326
      %v329 = vmul.f32 %v309, %v326
      %v330 = vmul.f32 %v310, %v326
      %v331 = vmul.f32 %v311, %v326
      %v332 = vmul.f32 %v312, %v326
      %v333 = vmul.f32 %v313, %v326
      %v334 = vmul.f32 %v314, %v326
      %v335 = vmul.f32 %v315, %v326
      %v336 = vmul.f32 %v316, %v326
      %v337 = vmul.f32 %v317, %v326
      %v338 = vmul.f32 %v318, %v326
      %v339 = vmul.f32 %v319, %v326
      %v340 = vmul.f32 %v320, %v326
      %v341 = vmul.f32 %v321, %v326
      %v342 = vmul.f32 %v322, %v326
      %v343 = vlaneseq
      %v344 = vshrl.u32 %v343, 7
      %v345 = vsub.s32 1, %v344
      %v346 = vrot.slane %v290, %v345
      %v347 = vadd.f32 %v327, %v346
      %v348 = vadd.f32 %v328, %v346
      %v349 = vadd.f32 %v329, %v346
      %v350 = vadd.f32 %v330, %v346
      %v351 = vadd.f32 %v331, %v346
      %v352 = vadd.f32 %v332, %v346
      %v353 = vadd.f32 %v333, %v346
      %v354 = vadd.f32 %v334, %v346
      %v355 = vadd.f32 %v335, %v346
      %v356 = vadd.f32 %v336, %v346
      %v357 = vadd.f32 %v337, %v346
      %v358 = vadd.f32 %v338, %v346
      %v359 = vadd.f32 %v339, %v346
      %v360 = vadd.f32 %v340, %v346
      %v361 = vadd.f32 %v341, %v346
      %v362 = vadd.f32 %v342, %v346
      %v363 = vmax.f32 %v347, 0.0
      %v364 = vmax.f32 %v348, 0.0
      %v365 = vmax.f32 %v349, 0.0
      %v366 = vmax.f32 %v350, 0.0
      %v367 = vmax.f32 %v351, 0.0
      %v368 = vmax.f32 %v352, 0.0
      %v369 = vmax.f32 %v353, 0.0
      %v370 = vmax.f32 %v354, 0.0
      %v371 = vmax.f32 %v355, 0.0
      %v372 = vmax.f32 %v356, 0.0
      %v373 = vmax.f32 %v357, 0.0
      %v374 = vmax.f32 %v358, 0.0
      %v375 = vmax.f32 %v359, 0.0
      %v376 = vmax.f32 %v360, 0.0
      %v377 = vmax.f32 %v361, 0.0
      %v378 = vmax.f32 %v362, 0.0
      %v379 = vpack.c.bf16 %v364, %v363
      %v380 = vpack.c.bf16 %v366, %v365
      %v381 = vpack.c.bf16 %v368, %v367
      %v382 = vpack.c.bf16 %v370, %v369
      %v383 = vpack.c.bf16 %v372, %v371
      %v384 = vpack.c.bf16 %v374, %v373
      %v385 = vpack.c.bf16 %v376, %v375
      %v386 = vpack.c.bf16 %v378, %v377
      %v387 = vld [vmem:[%s2] sm:$0x3]
      %vm388 = vcmask 31744
      %v390 = vsel %vm388, %v379, 0
      %v393 = vsel %vm388, %v380, 0
      %v396 = vsel %vm388, %v381, 0
      %v399 = vsel %vm388, %v382, 0
      %v402 = vsel %vm388, %v383, 0
      %v405 = vsel %vm388, %v384, 0
      %v408 = vsel %vm388, %v385, 0
      %v411 = vsel %vm388, %v386, 0
      %vm413 = vcmask 1041408
      %v415 = vsel %vm413, %v387, 0
      %417 = vmatprep.subr.bf16.mxu0 0
      %418 = vmatpush1.bf16.msra.mxu0 %v415
      %419 = vmatprep.subr.bf16.mxu0 0
      %420 = vmatpush1.bf16.msra.mxu0 0
      %421 = vmatprep.subr.bf16.mxu0 0
      %422 = vmatpush1.bf16.msra.mxu0 0
      %423 = vmatprep.subr.bf16.mxu0 0
      %424 = vmatpush1.bf16.msra.mxu0 0
      %425 = vmatprep.subr.bf16.mxu0 0
      %426 = vmatpush1.bf16.msra.mxu0 0
      %427 = vmatprep.subr.bf16.mxu0 0
      %428 = vmatpush1.bf16.msra.mxu0 0
      %429 = vmatprep.subr.bf16.mxu0 0
      %430 = vmatpush1.bf16.msra.mxu0 0
      %431 = vmatprep.subr.bf16.mxu0 0
      %432 = vmatpush1.bf16.msra.mxu0 0
      %433 = vmatprep.subr.bf16.mxu0 0
      %434 = vmatpush1.bf16.msra.mxu0 0
      %435 = vmatprep.subr.bf16.mxu0 0
      %436 = vmatpush1.bf16.msra.mxu0 0
      %437 = vmatprep.subr.bf16.mxu0 0
      %438 = vmatpush1.bf16.msra.mxu0 0
      %439 = vmatprep.subr.bf16.mxu0 0
      %440 = vmatpush1.bf16.msra.mxu0 0
      %441 = vmatprep.subr.bf16.mxu0 0
      %442 = vmatpush1.bf16.msra.mxu0 0
      %443 = vmatprep.subr.bf16.mxu0 0
      %444 = vmatpush1.bf16.msra.mxu0 0
      %445 = vmatprep.subr.bf16.mxu0 0
      %446 = vmatpush1.bf16.msra.mxu0 0
      %447 = vmatprep.subr.bf16.mxu0 0
      %448 = vmatpush1.bf16.msra.mxu0 0
      %449 = vmatprep.mubr.bf16.mxu0 0
      %450 = vmatmul.mubr.bf16.gmra.mrb[0].mxu0 %v390
      %v451 = vpop.f32.mrb[0].mxu0
      %v452 = vadd.f32 0.0, %v451
      %v453 = vpop.f32.mrb[0].mxu0
      %v454 = vpop.f32.mrb[0].mxu0
      %v455 = vadd.f32 0.0, %v454
      %v456 = vpop.f32.mrb[0].mxu0
      %457 = vmatprep.mubr.bf16.mxu0 0
      %458 = vmatmul.mubr.bf16.gmra.mrb[0].mxu0 %v393
      %v459 = vpop.f32.mrb[0].mxu0
      %v460 = vadd.f32 0.0, %v459
      %v461 = vpop.f32.mrb[0].mxu0
      %v462 = vpop.f32.mrb[0].mxu0
      %v463 = vadd.f32 0.0, %v462
      %v464 = vpop.f32.mrb[0].mxu0
      %465 = vmatprep.mubr.bf16.mxu0 0
      %466 = vmatmul.mubr.bf16.gmra.mrb[0].mxu0 %v396
      %v467 = vpop.f32.mrb[0].mxu0
      %v468 = vadd.f32 0.0, %v467
      %v469 = vpop.f32.mrb[0].mxu0
      %v470 = vpop.f32.mrb[0].mxu0
      %v471 = vadd.f32 0.0, %v470
      %v472 = vpop.f32.mrb[0].mxu0
      %473 = vmatprep.mubr.bf16.mxu0 0
      %474 = vmatmul.mubr.bf16.gmra.mrb[0].mxu0 %v399
      %v475 = vpop.f32.mrb[0].mxu0
      %v476 = vadd.f32 0.0, %v475
      %v477 = vpop.f32.mrb[0].mxu0
      %v478 = vpop.f32.mrb[0].mxu0
      %v479 = vadd.f32 0.0, %v478
      %v480 = vpop.f32.mrb[0].mxu0
      %481 = vmatprep.mubr.bf16.mxu0 0
      %482 = vmatmul.mubr.bf16.gmra.mrb[0].mxu0 %v402
      %v483 = vpop.f32.mrb[0].mxu0
      %v484 = vadd.f32 0.0, %v483
      %v485 = vpop.f32.mrb[0].mxu0
      %v486 = vpop.f32.mrb[0].mxu0
      %v487 = vadd.f32 0.0, %v486
      %v488 = vpop.f32.mrb[0].mxu0
      %489 = vmatprep.mubr.bf16.mxu0 0
      %490 = vmatmul.mubr.bf16.gmra.mrb[0].mxu0 %v405
      %v491 = vpop.f32.mrb[0].mxu0
      %v492 = vadd.f32 0.0, %v491
      %v493 = vpop.f32.mrb[0].mxu0
      %v494 = vpop.f32.mrb[0].mxu0
      %v495 = vadd.f32 0.0, %v494
      %v496 = vpop.f32.mrb[0].mxu0
      %497 = vmatprep.mubr.bf16.mxu0 0
      %498 = vmatmul.mubr.bf16.gmra.mrb[0].mxu0 %v408
      %v499 = vpop.f32.mrb[0].mxu0
      %v500 = vadd.f32 0.0, %v499
      %v501 = vpop.f32.mrb[0].mxu0
      %v502 = vpop.f32.mrb[0].mxu0
      %v503 = vadd.f32 0.0, %v502
      %v504 = vpop.f32.mrb[0].mxu0
      %505 = vmatprep.mubr.bf16.mxu0 0
      %506 = vmatmul.mubr.bf16.gmra.mrb[0].mxu0 %v411
      %v507 = vpop.f32.mrb[0].mxu0
      %v508 = vadd.f32 0.0, %v507
      %v509 = vpop.f32.mrb[0].mxu0
      %v510 = vpop.f32.mrb[0].mxu0
      %v511 = vadd.f32 0.0, %v510
      %v512 = vpop.f32.mrb[0].mxu0
      %513 = vdwg.mxu0
      %v514 = vpack.c.bf16 %v455, %v452
      %v515 = vpack.c.bf16 %v463, %v460
      %v516 = vpack.c.bf16 %v471, %v468
      %v517 = vpack.c.bf16 %v479, %v476
      %v518 = vpack.c.bf16 %v487, %v484
      %v519 = vpack.c.bf16 %v495, %v492
      %v520 = vpack.c.bf16 %v503, %v500
      %v521 = vpack.c.bf16 %v511, %v508
      %v530 = vunpack.c.l.b16 %v514
      %v531 = vunpack.c.h.b16 %v514
      %v532 = vunpack.c.l.b16 %v515
      %v533 = vunpack.c.h.b16 %v515
      %v534 = vunpack.c.l.b16 %v516
      %v535 = vunpack.c.h.b16 %v516
      %v536 = vunpack.c.l.b16 %v517
      %v537 = vunpack.c.h.b16 %v517
      %v538 = vunpack.c.l.b16 %v518
      %v539 = vunpack.c.h.b16 %v518
      %v540 = vunpack.c.l.b16 %v519
      %v541 = vunpack.c.h.b16 %v519
      %v542 = vunpack.c.l.b16 %v520
      %v543 = vunpack.c.h.b16 %v520
      %v544 = vunpack.c.l.b16 %v521
      %v545 = vunpack.c.h.b16 %v521
      %v546 = vpack.c.b16 %v530, %v530
      %v547 = vpack.c.b16 %v531, %v531
      %v548 = vpack.c.b16 %v532, %v532
      %v549 = vpack.c.b16 %v533, %v533
      %v550 = vpack.c.b16 %v534, %v534
      %v551 = vpack.c.b16 %v535, %v535
      %v552 = vpack.c.b16 %v536, %v536
      %v553 = vpack.c.b16 %v537, %v537
      %v554 = vpack.c.b16 %v538, %v538
      %v555 = vpack.c.b16 %v539, %v539
      %v556 = vpack.c.b16 %v540, %v540
      %v557 = vpack.c.b16 %v541, %v541
      %v558 = vpack.c.b16 %v542, %v542
      %v559 = vpack.c.b16 %v543, %v543
      %v560 = vpack.c.b16 %v544, %v544
      %v561 = vpack.c.b16 %v545, %v545
      %vm578 = vcmask 125952
      %579 = vst.msk [vmem:[%s287] sm:$0xf] %vm578, %v546
      %580 = vst.msk [vmem:[%s287 + $0x4] sm:$0xf] %vm578, %v547
      %581 = vst.msk [vmem:[%s287 + $0x8] sm:$0xf] %vm578, %v548
      %582 = vst.msk [vmem:[%s287 + $0xc] sm:$0xf] %vm578, %v549
      %583 = vst.msk [vmem:[%s287 + $0x10] sm:$0xf] %vm578, %v550
      %584 = vst.msk [vmem:[%s287 + $0x14] sm:$0xf] %vm578, %v551
      %585 = vst.msk [vmem:[%s287 + $0x18] sm:$0xf] %vm578, %v552
      %586 = vst.msk [vmem:[%s287 + $0x1c] sm:$0xf] %vm578, %v553
      %587 = vst.msk [vmem:[%s287 + $0x20] sm:$0xf] %vm578, %v554
      %588 = vst.msk [vmem:[%s287 + $0x24] sm:$0xf] %vm578, %v555
      %589 = vst.msk [vmem:[%s287 + $0x28] sm:$0xf] %vm578, %v556
      %590 = vst.msk [vmem:[%s287 + $0x2c] sm:$0xf] %vm578, %v557
      %591 = vst.msk [vmem:[%s287 + $0x30] sm:$0xf] %vm578, %v558
      %592 = vst.msk [vmem:[%s287 + $0x34] sm:$0xf] %vm578, %v559
      %593 = vst.msk [vmem:[%s287 + $0x38] sm:$0xf] %vm578, %v560
      %594 = vst.msk [vmem:[%s287 + $0x3c] sm:$0xf] %vm578, %v561
      %p595 = scmp.eq.s32.totalorder %s22, 0
      %p596 = scmp.eq.s32.totalorder %s23, 0
      %p597 = pnand %p595, %p596
      %p598 = pneg %p597
      %p599 = scmp.eq.s32.totalorder %s22, 1
      %p600 = scmp.eq.s32.totalorder %s23, 1
      %p601 = pnand %p599, %p600
      %p602 = pneg %p601
      // Predicated region
      $region41: #{bottleneck_forward.6} parent=39 // pred_check
        _
      $region42: #{bottleneck_forward.6} parent=39 // pred_check_branch
        %604 = sbr.rel (%p597) target = $region44
      $region43: #{bottleneck_forward.6} parent=39 // pred_region
        %vm605 = vcmask 122880
        %606 = vst.msk [vmem:[#allocation2] sm:$0x1] %vm605, 0.0
        %607 = vst.msk [vmem:[#allocation3] sm:$0x1] %vm605, 0.0
      $region44: #{bottleneck_forward.6} parent=39 // pred_fallthru
        _
      %v608 = vld [vmem:[#allocation2] sm:$0x1]
      %vm609 = vcmask 130048
      %v610 = vsel %vm609, %v452, 0.0
      %v611 = vsel %vm609, %v455, 0.0
      %v612 = vadd.f32 %v610, %v611
      %v613 = vsel %vm609, %v460, 0.0
      %v614 = vadd.f32 %v612, %v613
      %v615 = vsel %vm609, %v463, 0.0
      %v616 = vadd.f32 %v614, %v615
      %v617 = vsel %vm609, %v468, 0.0
      %v618 = vadd.f32 %v616, %v617
      %v619 = vsel %vm609, %v471, 0.0
      %v620 = vadd.f32 %v618, %v619
      %v621 = vsel %vm609, %v476, 0.0
      %v622 = vadd.f32 %v620, %v621
      %v623 = vsel %vm609, %v479, 0.0
      %v624 = vadd.f32 %v622, %v623
      %v625 = vsel %vm609, %v484, 0.0
      %v626 = vadd.f32 %v624, %v625
      %v627 = vsel %vm609, %v487, 0.0
      %v628 = vadd.f32 %v626, %v627
      %v629 = vsel %vm609, %v492, 0.0
      %v630 = vadd.f32 %v628, %v629
      %v631 = vsel %vm609, %v495, 0.0
      %v632 = vadd.f32 %v630, %v631
      %v633 = vsel %vm609, %v500, 0.0
      %v634 = vadd.f32 %v632, %v633
      %v635 = vsel %vm609, %v503, 0.0
      %v636 = vadd.f32 %v634, %v635
      %v637 = vsel %vm609, %v508, 0.0
      %v638 = vadd.f32 %v636, %v637
      %v639 = vsel %vm609, %v511, 0.0
      %v640 = vadd.f32 %v638, %v639
      %v641 = vrot.slane %v640, 4
      %v642 = vadd.f32 %v640, %v641
      %v643 = vrot.slane %v642, 2
      %v644 = vadd.f32 %v642, %v643
      %v645 = vrot.slane %v644, 1
      %v646 = vadd.f32 %v644, %v645
      %v647 = vadd.f32 %v608, %v646
      %vm648 = vcmask 122880
      %649 = vst.msk [vmem:[#allocation2] sm:$0x1] %vm648, %v647
      %v650 = vld [vmem:[#allocation3] sm:$0x1]
      %v651 = vmul.f32 %v452, %v452
      %v652 = vmul.f32 %v455, %v455
      %v653 = vmul.f32 %v460, %v460
      %v654 = vmul.f32 %v463, %v463
      %v655 = vmul.f32 %v468, %v468
      %v656 = vmul.f32 %v471, %v471
      %v657 = vmul.f32 %v476, %v476
      %v658 = vmul.f32 %v479, %v479
      %v659 = vmul.f32 %v484, %v484
      %v660 = vmul.f32 %v487, %v487
      %v661 = vmul.f32 %v492, %v492
      %v662 = vmul.f32 %v495, %v495
      %v663 = vmul.f32 %v500, %v500
      %v664 = vmul.f32 %v503, %v503
      %v665 = vmul.f32 %v508, %v508
      %v666 = vmul.f32 %v511, %v511
      %v667 = vsel %vm609, %v651, 0.0
      %v668 = vsel %vm609, %v652, 0.0
      %v669 = vadd.f32 %v667, %v668
      %v670 = vsel %vm609, %v653, 0.0
      %v671 = vadd.f32 %v669, %v670
      %v672 = vsel %vm609, %v654, 0.0
      %v673 = vadd.f32 %v671, %v672
      %v674 = vsel %vm609, %v655, 0.0
      %v675 = vadd.f32 %v673, %v674
      %v676 = vsel %vm609, %v656, 0.0
      %v677 = vadd.f32 %v675, %v676
      %v678 = vsel %vm609, %v657, 0.0
      %v679 = vadd.f32 %v677, %v678
      %v680 = vsel %vm609, %v658, 0.0
      %v681 = vadd.f32 %v679, %v680
      %v682 = vsel %vm609, %v659, 0.0
      %v683 = vadd.f32 %v681, %v682
      %v684 = vsel %vm609, %v660, 0.0
      %v685 = vadd.f32 %v683, %v684
      %v686 = vsel %vm609, %v661, 0.0
      %v687 = vadd.f32 %v685, %v686
      %v688 = vsel %vm609, %v662, 0.0
      %v689 = vadd.f32 %v687, %v688
      %v690 = vsel %vm609, %v663, 0.0
      %v691 = vadd.f32 %v689, %v690
      %v692 = vsel %vm609, %v664, 0.0
      %v693 = vadd.f32 %v691, %v692
      %v694 = vsel %vm609, %v665, 0.0
      %v695 = vadd.f32 %v693, %v694
      %v696 = vsel %vm609, %v666, 0.0
      %v697 = vadd.f32 %v695, %v696
      %v698 = vrot.slane %v697, 4
      %v699 = vadd.f32 %v697, %v698
      %v700 = vrot.slane %v699, 2
      %v701 = vadd.f32 %v699, %v700
      %v702 = vrot.slane %v701, 1
      %v703 = vadd.f32 %v701, %v702
      %v704 = vadd.f32 %v650, %v703
      %705 = vst.msk [vmem:[#allocation3] sm:$0x1] %vm648, %v704
      // Predicated region
      $region45: #{bottleneck_forward.6} parent=39 // pred_check
        _
      $region46: #{bottleneck_forward.6} parent=39 // pred_check_branch
        %707 = sbr.rel (%p601) target = $region48
      $region47: #{bottleneck_forward.6} parent=39 // pred_region
        %v708 = vld [vmem:[#allocation2] sm:$0x1]
        %v709 = vmul.f32 %v708, 0.001953125
        %v710 = vld [vmem:[#allocation3] sm:$0x1]
        %v711 = vmul.f32 %v710, 0.001953125
        %v712 = vmul.f32 %v709, %v709
        %v713 = vsub.f32 %v711, %v712
        %v714 = vld [vmem:[%s3] sm:$0x1]
        %v715 = vadd.f32 %v713, 1e-05
        %v716 = vrsqrt.pop %v715
        %v717 = vmul.f32 %v714, %v716
        %v718 = vld [vmem:[%s4] sm:$0x1]
        %v719 = vmul.f32 %v709, %v717
        %v720 = vsub.f32 %v718, %v719
        %v722 = vlaneseq
        %v723 = vshrl.u32 %v722, 7
        %v724 = vsub.s32 0, %v723
        %v725 = vrot.slane %v720, %v724
        %vm727 = vcmask 1040384
        %v728 = vsel %vm727, %v717, %v725
        %vm729 = vcmask 123904
        %730 = vst.msk [vmem:[%s6] sm:$0x3] %vm729, %v728
      $region48: #{bottleneck_forward.6} parent=39 // pred_fallthru
        _
      %s731 = smul.u32 16, %s23
      %p732 = scmp.lt.s32.totalorder %s22, 1
      %s733 = scalar_select %p732, %s22, 1
      %p734 = scmp.lt.s32.totalorder %s731, 31
      %s735 = scalar_select %p734, %s731, 31
      %s736 = smul.addr %s733, 32
      %s737 = sadd.s32 %s735, %s736
      %s738 = smul.addr %s737, 4
      %s739 = scalar_lea.vmem %s5, %s738
      // Predicated region
      $region49: #{bottleneck_forward.6} parent=39 // pred_check
        %p740 = pneg %p162
      $region50: #{bottleneck_forward.6} parent=39 // pred_check_branch
        %742 = sbr.rel (%p740) target = $region52
      $region51: #{bottleneck_forward.6} parent=39 // pred_region
        %s743 = smul.u32 16, %s23
      $region52: #{bottleneck_forward.6} parent=39 // pred_fallthru
        _
      // Predicated region
      $region53: #{bottleneck_forward.6} parent=39 // pred_check
        %p744 = pneg %p183
      $region54: #{bottleneck_forward.6} parent=39 // pred_check_branch
        %746 = sbr.rel (%p744) target = $region56
      $region55: #{bottleneck_forward.6} parent=39 // pred_region
        _
      $region56: #{bottleneck_forward.6} parent=39 // pred_fallthru
        _
      // Predicated region
      $region57: #{bottleneck_forward.6} parent=39 // pred_check
        %p747 = pneg %p183
      $region58: #{bottleneck_forward.6} parent=39 // pred_check_branch
        %749 = sbr.rel (%p747) target = $region60
      $region59: #{bottleneck_forward.6} parent=39 // pred_region
        _
      $region60: #{bottleneck_forward.6} parent=39 // pred_fallthru
        _
    $region40: #{bottleneck_forward.6} parent=5 // pred_fallthru
      _
    %p750 = scmp.le.s32.totalorder 2, %s13
    // Predicated region
    $region61: #{bottleneck_forward.6} parent=5 // pred_check
      %p751 = pneg %p750
    $region62: #{bottleneck_forward.6} parent=5 // pred_check_branch
      %753 = sbr.rel (%p751) target = $region64
    $region63: #{bottleneck_forward.6} parent=5 // pred_region
      %s754 = ssub.s32 %s13, 2
      // Predicated region
      $region65: #{bottleneck_forward.6} parent=63 // pred_check
        %p755 = pneg %p168
      $region66: #{bottleneck_forward.6} parent=63 // pred_check_branch
        %757 = sbr.rel (%p755) target = $region68
      $region67: #{bottleneck_forward.6} parent=63 // pred_region
        %s758 = smul.u32 16, %s25
        %p759 = scmp.lt.s32.totalorder %s24, 1
        %s760 = scalar_select %p759, %s24, 1
        %p761 = scmp.lt.s32.totalorder %s758, 31
        %s762 = scalar_select %p761, %s758, 31
        %s763 = smul.addr %s760, 32
        %s764 = sadd.s32 %s762, %s763
        %s765 = smul.addr %s764, 4
        %s766 = scalar_lea.vmem %s5, %s765
      $region68: #{bottleneck_forward.6} parent=63 // pred_fallthru
        _
    $region64: #{bottleneck_forward.6} parent=5 // pred_fallthru
      _
  $region6: #{bottleneck_forward.6} parent=0 // loop_footer
    %s17 = sadd.s32 1, %s13
  $region7: #{bottleneck_forward.6} parent=0 // loop_footer_branch
    %12 = sbr.rel target = $region3
  $region8: #{bottleneck_forward.6} parent=0 // loop_exit
    _

// kernel: bottleneck_forward.5
$region0: #{bottleneck_forward.5}
  #allocation0 [shape = 'u32[]', space=smem, size = 0x4, offset = 0x4, fixed_abs, tag = 'smem constant byte address 0x4 - core index']
  #allocation1 [shape = 'u32[144,128]{1,0:T(1,128)}', space=vmem, size = 0x12000, scoped, tag = 'internal scratch']
  #allocation2 [shape = 'f32[18,18,4]{2,1,0:T(8,128)}', space=vmem, size = 0x36000, scoped, tag = 'scratch operand']
  #allocation3 [shape = 'f32[256,4]{1,0:T(8,128)}', space=vmem, size = 0x20000, scoped, tag = 'scratch operand']
  #allocation4 [shape = 'f32[1,4]{1,0:T(1,128)}', space=vmem, size = 0x200, scoped, tag = 'scratch operand']
  #allocation5 [shape = 'f32[1,4]{1,0:T(1,128)}', space=vmem, size = 0x200, scoped, tag = 'scratch operand']
  %s0 = inlined_call_operand.vmem [shape: bf16[2,16,16,4], index: 0, kind: input, shape index: {}]
  %s1 = inlined_call_operand.vmem [shape: f32[2,4], index: 1, kind: input, shape index: {}]
  %s2 = inlined_call_operand.vmem [shape: bf16[9,4,4], index: 2, kind: input, shape index: {}]
  %s3 = inlined_call_operand.vmem [shape: f32[1,4], index: 3, kind: input, shape index: {}]
  %s4 = inlined_call_operand.vmem [shape: f32[1,4], index: 4, kind: input, shape index: {}]
  %s5 = inlined_call_operand.vmem [shape: bf16[2,256,4], index: 5, kind: output, shape index: {0}]
  %s6 = inlined_call_operand.vmem [shape: f32[2,4], index: 6, kind: output, shape index: {1}]
  %7 = xla_tuple %s5, %s6
  %s8 = sld [smem:[#allocation0]]
  $region73: #{bottleneck_forward.5} parent=0
    _
  %s10 = ssub.s32 1, %s8
  %s11 = scalar_select 0, %s10, %s8
  loop: start=0, step=1, limit=4
  $region2: #{bottleneck_forward.5} parent=0 // loop_pre_header
    _
  $region3: #{bottleneck_forward.5} parent=0 // loop_header
    %s13 = sphi 0, %s17
    %p14 = scmp.ge.s32.totalorder %s13, 4
    %s23 = sphi 0, %s25
    %s26 = sphi 0, %s23
    %s27 = sphi 0, %s26
    %s43 = sphi 0, %s27
    %s47 = sphi 0, %s47
    %s49 = sphi 0, %s47
    %s50 = sphi 0, %s49
    %s64 = sphi 0, %s50
    %s68 = sphi 0, %s68
    %s70 = sphi 0, %s68
    %s71 = sphi 0, %s70
    %s85 = sphi 0, %s71
    %s89 = sphi 0, %s89
    %s91 = sphi 0, %s89
    %s92 = sphi 0, %s91
    %s106 = sphi 0, %s92
    %s110 = sphi 0, %s110
    %s112 = sphi 0, %s110
    %s113 = sphi 0, %s112
    %s127 = sphi 0, %s113
    %s133 = sphi 0, %s135
    %s136 = sphi 0, %s133
    %s137 = sphi 0, %s136
    %s153 = sphi 0, %s137
    %s157 = sphi 0, %s157
    %s159 = sphi 0, %s157
    %s160 = sphi 0, %s159
    %s174 = sphi 0, %s160
  $region4: #{bottleneck_forward.5} parent=0 // loop_header_branch
    %16 = sbr.rel (%p14) target = $region8
  $region5: #{bottleneck_forward.5} parent=0 // loop_body
    %s18 = ssub.s32 %s13, 1
    %s19 = ssub.s32 %s13, 2
    %s20 = sadd.s32 %s13, 1
    %s21 = ssub.s32 %s13, %s20
    %p22 = scmp.eq.s32.totalorder %s21, 0
    %s24 = sadd.s32 %s23, 1
    %s25 = scalar_select %p22, %s23, %s24
    %p28 = pneg %p22
    %p29 = scmp.eq.s32.totalorder %s13, 1
    %p30 = por %p28, %p29
    %p31 = scmp.ne.s32.totalorder %s23, %s26
    %p32 = scmp.eq.s32.totalorder %s13, 0
    %p33 = por %p31, %p32
    %p34 = scmp.ne.s32.totalorder %s23, %s26
    %p35 = scmp.eq.s32.totalorder %s18, 1
    %p36 = por %p34, %p35
    %p37 = scmp.ne.s32.totalorder %s26, %s27
    %p38 = scmp.eq.s32.totalorder %s18, 0
    %p39 = por %p37, %p38
    %p40 = scmp.ne.s32.totalorder %s26, %s27
    %p41 = scmp.eq.s32.totalorder %s19, 1
    %p42 = por %p40, %p41
    %p44 = scmp.ne.s32.totalorder %s27, %s43
    %p45 = scmp.eq.s32.totalorder %s19, 0
    %p46 = por %p44, %p45
    %s48 = sadd.s32 %s47, 1
    %p51 = scmp.eq.s32.totalorder %s13, 1
    %p52 = scmp.ne.s32.totalorder %s47, %s49
    %p53 = scmp.eq.s32.totalorder %s13, 0
    %p54 = por %p52, %p53
    %p55 = scmp.ne.s32.totalorder %s47, %s49
    %p56 = scmp.eq.s32.totalorder %s18, 1
    %p57 = por %p55, %p56
    %p58 = scmp.ne.s32.totalorder %s49, %s50
    %p59 = scmp.eq.s32.totalorder %s18, 0
    %p60 = por %p58, %p59
    %p61 = scmp.ne.s32.totalorder %s49, %s50
    %p62 = scmp.eq.s32.totalorder %s19, 1
    %p63 = por %p61, %p62
    %p65 = scmp.ne.s32.totalorder %s50, %s64
    %p66 = scmp.eq.s32.totalorder %s19, 0
    %p67 = por %p65, %p66
    %s69 = sadd.s32 %s68, 1
    %p72 = scmp.eq.s32.totalorder %s13, 1
    %p73 = scmp.ne.s32.totalorder %s68, %s70
    %p74 = scmp.eq.s32.totalorder %s13, 0
    %p75 = por %p73, %p74
    %p76 = scmp.ne.s32.totalorder %s68, %s70
    %p77 = scmp.eq.s32.totalorder %s18, 1
    %p78 = por %p76, %p77
    %p79 = scmp.ne.s32.totalorder %s70, %s71
    %p80 = scmp.eq.s32.totalorder %s18, 0
    %p81 = por %p79, %p80
    %p82 = scmp.ne.s32.totalorder %s70, %s71
    %p83 = scmp.eq.s32.totalorder %s19, 1
    %p84 = por %p82, %p83
    %p86 = scmp.ne.s32.totalorder %s71, %s85
    %p87 = scmp.eq.s32.totalorder %s19, 0
    %p88 = por %p86, %p87
    %s90 = sadd.s32 %s89, 1
    %p93 = scmp.eq.s32.totalorder %s13, 1
    %p94 = scmp.ne.s32.totalorder %s89, %s91
    %p95 = scmp.eq.s32.totalorder %s13, 0
    %p96 = por %p94, %p95
    %p97 = scmp.ne.s32.totalorder %s89, %s91
    %p98 = scmp.eq.s32.totalorder %s18, 1
    %p99 = por %p97, %p98
    %p100 = scmp.ne.s32.totalorder %s91, %s92
    %p101 = scmp.eq.s32.totalorder %s18, 0
    %p102 = por %p100, %p101
    %p103 = scmp.ne.s32.totalorder %s91, %s92
    %p104 = scmp.eq.s32.totalorder %s19, 1
    %p105 = por %p103, %p104
    %p107 = scmp.ne.s32.totalorder %s92, %s106
    %p108 = scmp.eq.s32.totalorder %s19, 0
    %p109 = por %p107, %p108
    %s111 = sadd.s32 %s110, 1
    %p114 = scmp.eq.s32.totalorder %s13, 1
    %p115 = scmp.ne.s32.totalorder %s110, %s112
    %p116 = scmp.eq.s32.totalorder %s13, 0
    %p117 = por %p115, %p116
    %p118 = scmp.ne.s32.totalorder %s110, %s112
    %p119 = scmp.eq.s32.totalorder %s18, 1
    %p120 = por %p118, %p119
    %p121 = scmp.ne.s32.totalorder %s112, %s113
    %p122 = scmp.eq.s32.totalorder %s18, 0
    %p123 = por %p121, %p122
    %p124 = scmp.ne.s32.totalorder %s112, %s113
    %p125 = scmp.eq.s32.totalorder %s19, 1
    %p126 = por %p124, %p125
    %p128 = scmp.ne.s32.totalorder %s113, %s127
    %p129 = scmp.eq.s32.totalorder %s19, 0
    %p130 = por %p128, %p129
    %s131 = ssub.s32 %s13, %s20
    %p132 = scmp.eq.s32.totalorder %s131, 0
    %s134 = sadd.s32 %s133, 1
    %s135 = scalar_select %p132, %s133, %s134
    %p138 = pneg %p132
    %p139 = scmp.eq.s32.totalorder %s13, 1
    %p140 = por %p138, %p139
    %p141 = scmp.ne.s32.totalorder %s133, %s136
    %p142 = scmp.eq.s32.totalorder %s13, 0
    %p143 = por %p141, %p142
    %p144 = scmp.ne.s32.totalorder %s133, %s136
    %p145 = scmp.eq.s32.totalorder %s18, 1
    %p146 = por %p144, %p145
    %p147 = scmp.ne.s32.totalorder %s136, %s137
    %p148 = scmp.eq.s32.totalorder %s18, 0
    %p149 = por %p147, %p148
    %p150 = scmp.ne.s32.totalorder %s136, %s137
    %p151 = scmp.eq.s32.totalorder %s19, 1
    %p152 = por %p150, %p151
    %p154 = scmp.ne.s32.totalorder %s137, %s153
    %p155 = scmp.eq.s32.totalorder %s19, 0
    %p156 = por %p154, %p155
    %s158 = sadd.s32 %s157, 1
    %p161 = scmp.eq.s32.totalorder %s13, 1
    %p162 = scmp.ne.s32.totalorder %s157, %s159
    %p163 = scmp.eq.s32.totalorder %s13, 0
    %p164 = por %p162, %p163
    %p165 = scmp.ne.s32.totalorder %s157, %s159
    %p166 = scmp.eq.s32.totalorder %s18, 1
    %p167 = por %p165, %p166
    %p168 = scmp.ne.s32.totalorder %s159, %s160
    %p169 = scmp.eq.s32.totalorder %s18, 0
    %p170 = por %p168, %p169
    %p171 = scmp.ne.s32.totalorder %s159, %s160
    %p172 = scmp.eq.s32.totalorder %s19, 1
    %p173 = por %p171, %p172
    %p175 = scmp.ne.s32.totalorder %s160, %s174
    %p176 = scmp.eq.s32.totalorder %s19, 0
    %p177 = por %p175, %p176
    %p178 = scmp.le.s32.totalorder 1, %s13
    %p179 = scmp.lt.s32.totalorder %s13, 3
    %p180 = pnand %p178, %p179
    %p181 = pneg %p180
    // Predicated region
    $region9: #{bottleneck_forward.5} parent=5 // pred_check
      _
    $region10: #{bottleneck_forward.5} parent=5 // pred_check_branch
      %183 = sbr.rel (%p180) target = $region12
    $region11: #{bottleneck_forward.5} parent=5 // pred_region
      %s184 = ssub.s32 %s13, 1
      // Predicated region
      $region13: #{bottleneck_forward.5} parent=11 // pred_check
        %p185 = pneg %p60
      $region14: #{bottleneck_forward.5} parent=11 // pred_check_branch
        %187 = sbr.rel (%p185) target = $region16
      $region15: #{bottleneck_forward.5} parent=11 // pred_region
        _
      $region16: #{bottleneck_forward.5} parent=11 // pred_fallthru
        _
      // Predicated region
      $region17: #{bottleneck_forward.5} parent=11 // pred_check
        %p188 = pneg %p81
      $region18: #{bottleneck_forward.5} parent=11 // pred_check_branch
        %190 = sbr.rel (%p188) target = $region20
      $region19: #{bottleneck_forward.5} parent=11 // pred_region
        _
      $region20: #{bottleneck_forward.5} parent=11 // pred_fallthru
        _
      // Predicated region
      $region21: #{bottleneck_forward.5} parent=11 // pred_check
        %p191 = pneg %p102
      $region22: #{bottleneck_forward.5} parent=11 // pred_check_branch
        %193 = sbr.rel (%p191) target = $region24
      $region23: #{bottleneck_forward.5} parent=11 // pred_region
        _
      $region24: #{bottleneck_forward.5} parent=11 // pred_fallthru
        _
      // Predicated region
      $region25: #{bottleneck_forward.5} parent=11 // pred_check
        %p194 = pneg %p123
      $region26: #{bottleneck_forward.5} parent=11 // pred_check_branch
        %196 = sbr.rel (%p194) target = $region28
      $region27: #{bottleneck_forward.5} parent=11 // pred_region
        _
      $region28: #{bottleneck_forward.5} parent=11 // pred_fallthru
        _
    $region12: #{bottleneck_forward.5} parent=5 // pred_fallthru
      _
    %p197 = scmp.lt.s32.totalorder %s13, 2
    // Predicated region
    $region29: #{bottleneck_forward.5} parent=5 // pred_check
      %p198 = pneg %p197
    $region30: #{bottleneck_forward.5} parent=5 // pred_check_branch
      %200 = sbr.rel (%p198) target = $region32
    $region31: #{bottleneck_forward.5} parent=5 // pred_region
      // Predicated region
      $region33: #{bottleneck_forward.5} parent=31 // pred_check
        %p201 = pneg %p33
      $region34: #{bottleneck_forward.5} parent=31 // pred_check_branch
        %203 = sbr.rel (%p201) target = $region36
      $region35: #{bottleneck_forward.5} parent=31 // pred_region
        %p204 = scmp.lt.s32.totalorder %s13, 1
        %s205 = scalar_select %p204, %s13, 1
        %s206 = smul.addr %s205, 32
        %s207 = smul.addr %s206, 4
        %s208 = scalar_lea.vmem %s0, %s207
      $region36: #{bottleneck_forward.5} parent=31 // pred_fallthru
        _
    $region32: #{bottleneck_forward.5} parent=5 // pred_fallthru
      _
    %p209 = scmp.le.s32.totalorder 1, %s13
    %p210 = scmp.lt.s32.totalorder %s13, 3
    %p211 = pnand %p209, %p210
    %p212 = pneg %p211
    // Predicated region
    $region37: #{bottleneck_forward.5} parent=5 // pred_check
      _
    $region38: #{bottleneck_forward.5} parent=5 // pred_check_branch
      %214 = sbr.rel (%p211) target = $region40
    $region39: #{bottleneck_forward.5} parent=5 // pred_region
      %s215 = ssub.s32 %s13, 1
      %p216 = scmp.lt.s32.totalorder %s18, 1
      %s217 = scalar_select %p216, %s18, 1
      %s218 = smul.addr %s217, 32
      %s219 = smul.addr %s218, 4
      %s220 = scalar_lea.vmem %s0, %s219
      %p221 = pneg %p39
      %p222 = pneg %p36
      %p223 = pneg %p60
      %p224 = pneg %p57
      %p225 = pneg %p81
      %p226 = pneg %p78
      %p227 = pneg %p102
      %p228 = pneg %p99
      %p229 = pneg %p123
      %p230 = pneg %p120
      %p231 = pneg %p149
      %p232 = pneg %p146
      %p233 = scmp.lt.s32.totalorder %s18, 1
      %s234 = scalar_select %p233, %s18, 1
      %s235 = smul.addr %s234, 32
      %s236 = smul.addr %s235, 4
      %s237 = scalar_lea.vmem %s5, %s236
      %p238 = pneg %p170
      %p239 = pneg %p167
      %p240 = scmp.lt.s32.totalorder %s18, 1
      %s241 = scalar_select %p240, %s18, 1
      %s242 = smul.addr %s241, 32
      %s243 = smul.addr %s242, 4
      %s244 = scalar_lea.vmem %s0, %s243
      %p245 = scmp.lt.s32.totalorder %s18, 1
      %s246 = scalar_select %p245, %s18, 1
      %s247 = smul.addr %s246, 32
      %s248 = smul.addr %s247, 4
      %s249 = scalar_lea.vmem %s5, %s248
      %p251 = scmp.eq.s32.totalorder %s18, 0
      // Predicated region
      $region41: #{bottleneck_forward.5} parent=39 // pred_check
        %p252 = pneg %p251
      $region42: #{bottleneck_forward.5} parent=39 // pred_check_branch
        %254 = sbr.rel (%p252) target = $region44
      $region43: #{bottleneck_forward.5} parent=39 // pred_region
        %vm255 = vcmask 31744
        %256 = vst.msk [vmem:[#allocation2] sm:$0xff] %vm255, 0.0
        %257 = vst.msk [vmem:[#allocation2 + $0x8] sm:$0xff] %vm255, 0.0
        %vm258 = vcmask 25600
        %259 = vst.msk [vmem:[#allocation2 + $0x10] sm:$0x3] %vm258, 0.0
        %260 = vst.msk [vmem:[#allocation2 + $0x18] sm:$0xff] %vm255, 0.0
        %261 = vst.msk [vmem:[#allocation2 + $0x20] sm:$0xff] %vm255, 0.0
        %262 = vst.msk [vmem:[#allocation2 + $0x28] sm:$0x3] %vm258, 0.0
        %263 = vst.msk [vmem:[#allocation2 + $0x30] sm:$0xff] %vm255, 0.0
        %264 = vst.msk [vmem:[#allocation2 + $0x38] sm:$0xff] %vm255, 0.0
        %265 = vst.msk [vmem:[#allocation2 + $0x40] sm:$0x3] %vm258, 0.0
        %266 = vst.msk [vmem:[#allocation2 + $0x48] sm:$0xff] %vm255, 0.0
        %267 = vst.msk [vmem:[#allocation2 + $0x50] sm:$0xff] %vm255, 0.0
        %268 = vst.msk [vmem:[#allocation2 + $0x58] sm:$0x3] %vm258, 0.0
        %269 = vst.msk [vmem:[#allocation2 + $0x60] sm:$0xff] %vm255, 0.0
        %270 = vst.msk [vmem:[#allocation2 + $0x68] sm:$0xff] %vm255, 0.0
        %271 = vst.msk [vmem:[#allocation2 + $0x70] sm:$0x3] %vm258, 0.0
        %272 = vst.msk [vmem:[#allocation2 + $0x78] sm:$0xff] %vm255, 0.0
        %273 = vst.msk [vmem:[#allocation2 + $0x80] sm:$0xff] %vm255, 0.0
        %274 = vst.msk [vmem:[#allocation2 + $0x88] sm:$0x3] %vm258, 0.0
        %275 = vst.msk [vmem:[#allocation2 + $0x90] sm:$0xff] %vm255, 0.0
        %276 = vst.msk [vmem:[#allocation2 + $0x98] sm:$0xff] %vm255, 0.0
        %277 = vst.msk [vmem:[#allocation2 + $0xa0] sm:$0x3] %vm258, 0.0
        %278 = vst.msk [vmem:[#allocation2 + $0xa8] sm:$0xff] %vm255, 0.0
        %279 = vst.msk [vmem:[#allocation2 + $0xb0] sm:$0xff] %vm255, 0.0
        %280 = vst.msk [vmem:[#allocation2 + $0xb8] sm:$0x3] %vm258, 0.0
        %281 = vst.msk [vmem:[#allocation2 + $0xc0] sm:$0xff] %vm255, 0.0
        %282 = vst.msk [vmem:[#allocation2 + $0xc8] sm:$0xff] %vm255, 0.0
        %283 = vst.msk [vmem:[#allocation2 + $0xd0] sm:$0x3] %vm258, 0.0
        %284 = vst.msk [vmem:[#allocation2 + $0xd8] sm:$0xff] %vm255, 0.0
        %285 = vst.msk [vmem:[#allocation2 + $0xe0] sm:$0xff] %vm255, 0.0
        %286 = vst.msk [vmem:[#allocation2 + $0xe8] sm:$0x3] %vm258, 0.0
        %287 = vst.msk [vmem:[#allocation2 + $0xf0] sm:$0xff] %vm255, 0.0
        %288 = vst.msk [vmem:[#allocation2 + $0xf8] sm:$0xff] %vm255, 0.0
        %289 = vst.msk [vmem:[#allocation2 + $0x100] sm:$0x3] %vm258, 0.0
        %290 = vst.msk [vmem:[#allocation2 + $0x108] sm:$0xff] %vm255, 0.0
        %291 = vst.msk [vmem:[#allocation2 + $0x110] sm:$0xff] %vm255, 0.0
        %292 = vst.msk [vmem:[#allocation2 + $0x118] sm:$0x3] %vm258, 0.0
        %293 = vst.msk [vmem:[#allocation2 + $0x120] sm:$0xff] %vm255, 0.0
        %294 = vst.msk [vmem:[#allocation2 + $0x128] sm:$0xff] %vm255, 0.0
        %295 = vst.msk [vmem:[#allocation2 + $0x130] sm:$0x3] %vm258, 0.0
        %296 = vst.msk [vmem:[#allocation2 + $0x138] sm:$0xff] %vm255, 0.0
        %297 = vst.msk [vmem:[#allocation2 + $0x140] sm:$0xff] %vm255, 0.0
        %298 = vst.msk [vmem:[#allocation2 + $0x148] sm:$0x3] %vm258, 0.0
        %299 = vst.msk [vmem:[#allocation2 + $0x150] sm:$0xff] %vm255, 0.0
        %300 = vst.msk [vmem:[#allocation2 + $0x158] sm:$0xff] %vm255, 0.0
        %301 = vst.msk [vmem:[#allocation2 + $0x160] sm:$0x3] %vm258, 0.0
        %302 = vst.msk [vmem:[#allocation2 + $0x168] sm:$0xff] %vm255, 0.0
        %303 = vst.msk [vmem:[#allocation2 + $0x170] sm:$0xff] %vm255, 0.0
        %304 = vst.msk [vmem:[#allocation2 + $0x178] sm:$0x3] %vm258, 0.0
        %305 = vst.msk [vmem:[#allocation2 + $0x180] sm:$0xff] %vm255, 0.0
        %306 = vst.msk [vmem:[#allocation2 + $0x188] sm:$0xff] %vm255, 0.0
        %307 = vst.msk [vmem:[#allocation2 + $0x190] sm:$0x3] %vm258, 0.0
        %308 = vst.msk [vmem:[#allocation2 + $0x198] sm:$0xff] %vm255, 0.0
        %309 = vst.msk [vmem:[#allocation2 + $0x1a0] sm:$0xff] %vm255, 0.0
        %310 = vst.msk [vmem:[#allocation2 + $0x1a8] sm:$0x3] %vm258, 0.0
      $region44: #{bottleneck_forward.5} parent=39 // pred_fallthru
        _
      %v311 = vld [vmem:[%s1] sm:$0x3]
      %v312 = vld [vmem:[%s244] sm:$0xf]
      %v313 = vld [vmem:[%s244 + $0x4] sm:$0xf]
      %v314 = vld [vmem:[%s244 + $0x8] sm:$0xf]
      %v315 = vld [vmem:[%s244 + $0xc] sm:$0xf]
      %v316 = vld [vmem:[%s244 + $0x10] sm:$0xf]
      %v317 = vld [vmem:[%s244 + $0x14] sm:$0xf]
      %v318 = vld [vmem:[%s244 + $0x18] sm:$0xf]
      %v319 = vld [vmem:[%s244 + $0x1c] sm:$0xf]
      %v320 = vld [vmem:[%s244 + $0x20] sm:$0xf]
      %v321 = vld [vmem:[%s244 + $0x24] sm:$0xf]
      %v322 = vld [vmem:[%s244 + $0x28] sm:$0xf]
      %v323 = vld [vmem:[%s244 + $0x2c] sm:$0xf]
      %v324 = vld [vmem:[%s244 + $0x30] sm:$0xf]
      %v325 = vld [vmem:[%s244 + $0x34] sm:$0xf]
      %v326 = vld [vmem:[%s244 + $0x38] sm:$0xf]
      %v327 = vld [vmem:[%s244 + $0x3c] sm:$0xf]
      %v328 = vld [vmem:[%s244 + $0x40] sm:$0xf]
      %v329 = vld [vmem:[%s244 + $0x44] sm:$0xf]
      %v330 = vld [vmem:[%s244 + $0x48] sm:$0xf]
      %v331 = vld [vmem:[%s244 + $0x4c] sm:$0xf]
      %v332 = vld [vmem:[%s244 + $0x50] sm:$0xf]
      %v333 = vld [vmem:[%s244 + $0x54] sm:$0xf]
      %v334 = vld [vmem:[%s244 + $0x58] sm:$0xf]
      %v335 = vld [vmem:[%s244 + $0x5c] sm:$0xf]
      %v336 = vld [vmem:[%s244 + $0x60] sm:$0xf]
      %v337 = vld [vmem:[%s244 + $0x64] sm:$0xf]
      %v338 = vld [vmem:[%s244 + $0x68] sm:$0xf]
      %v339 = vld [vmem:[%s244 + $0x6c] sm:$0xf]
      %v340 = vld [vmem:[%s244 + $0x70] sm:$0xf]
      %v341 = vld [vmem:[%s244 + $0x74] sm:$0xf]
      %v342 = vld [vmem:[%s244 + $0x78] sm:$0xf]
      %v343 = vld [vmem:[%s244 + $0x7c] sm:$0xf]
      %v344 = vunpack.c.l.bf16 %v312
      %v345 = vunpack.c.l.bf16 %v313
      %v346 = vunpack.c.l.bf16 %v314
      %v347 = vunpack.c.l.bf16 %v315
      %v348 = vunpack.c.l.bf16 %v316
      %v349 = vunpack.c.l.bf16 %v317
      %v350 = vunpack.c.l.bf16 %v318
      %v351 = vunpack.c.l.bf16 %v319
      %v352 = vunpack.c.l.bf16 %v320
      %v353 = vunpack.c.l.bf16 %v321
      %v354 = vunpack.c.l.bf16 %v322
      %v355 = vunpack.c.l.bf16 %v323
      %v356 = vunpack.c.l.bf16 %v324
      %v357 = vunpack.c.l.bf16 %v325
      %v358 = vunpack.c.l.bf16 %v326
      %v359 = vunpack.c.l.bf16 %v327
      %v360 = vunpack.c.l.bf16 %v328
      %v361 = vunpack.c.l.bf16 %v329
      %v362 = vunpack.c.l.bf16 %v330
      %v363 = vunpack.c.l.bf16 %v331
      %v364 = vunpack.c.l.bf16 %v332
      %v365 = vunpack.c.l.bf16 %v333
      %v366 = vunpack.c.l.bf16 %v334
      %v367 = vunpack.c.l.bf16 %v335
      %v368 = vunpack.c.l.bf16 %v336
      %v369 = vunpack.c.l.bf16 %v337
      %v370 = vunpack.c.l.bf16 %v338
      %v371 = vunpack.c.l.bf16 %v339
      %v372 = vunpack.c.l.bf16 %v340
      %v373 = vunpack.c.l.bf16 %v341
      %v374 = vunpack.c.l.bf16 %v342
      %v375 = vunpack.c.l.bf16 %v343
      %v376 = vlaneseq
      %v377 = vshrl.u32 %v376, 7
      %v378 = vsub.s32 0, %v377
      %v379 = vrot.slane %v311, %v378
      %v380 = vmul.f32 %v344, %v379
      %v381 = vmul.f32 %v345, %v379
      %v382 = vmul.f32 %v346, %v379
      %v383 = vmul.f32 %v347, %v379
      %v384 = vmul.f32 %v348, %v379
      %v385 = vmul.f32 %v349, %v379
      %v386 = vmul.f32 %v350, %v379
      %v387 = vmul.f32 %v351, %v379
      %v388 = vmul.f32 %v352, %v379
      %v389 = vmul.f32 %v353, %v379
      %v390 = vmul.f32 %v354, %v379
      %v391 = vmul.f32 %v355, %v379
      %v392 = vmul.f32 %v356, %v379
      %v393 = vmul.f32 %v357, %v379
      %v394 = vmul.f32 %v358, %v379
      %v395 = vmul.f32 %v359, %v379
      %v396 = vmul.f32 %v360, %v379
      %v397 = vmul.f32 %v361, %v379
      %v398 = vmul.f32 %v362, %v379
      %v399 = vmul.f32 %v363, %v379
      %v400 = vmul.f32 %v364, %v379
      %v401 = vmul.f32 %v365, %v379
      %v402 = vmul.f32 %v366, %v379
      %v403 = vmul.f32 %v367, %v379
      %v404 = vmul.f32 %v368, %v379
      %v405 = vmul.f32 %v369, %v379
      %v406 = vmul.f32 %v370, %v379
      %v407 = vmul.f32 %v371, %v379
      %v408 = vmul.f32 %v372, %v379
      %v409 = vmul.f32 %v373, %v379
      %v410 = vmul.f32 %v374, %v379
      %v411 = vmul.f32 %v375, %v379
      %v412 = vlaneseq
      %v413 = vshrl.u32 %v412, 7
      %v414 = vsub.s32 1, %v413
      %v415 = vrot.slane %v311, %v414
      %v416 = vadd.f32 %v380, %v415
      %v417 = vadd.f32 %v381, %v415
      %v418 = vadd.f32 %v382, %v415
      %v419 = vadd.f32 %v383, %v415
      %v420 = vadd.f32 %v384, %v415
      %v421 = vadd.f32 %v385, %v415
      %v422 = vadd.f32 %v386, %v415
      %v423 = vadd.f32 %v387, %v415
      %v424 = vadd.f32 %v388, %v415
      %v425 = vadd.f32 %v389, %v415
      %v426 = vadd.f32 %v390, %v415
      %v427 = vadd.f32 %v391, %v415
      %v428 = vadd.f32 %v392, %v415
      %v429 = vadd.f32 %v393, %v415
      %v430 = vadd.f32 %v394, %v415
      %v431 = vadd.f32 %v395, %v415
      %v432 = vadd.f32 %v396, %v415
      %v433 = vadd.f32 %v397, %v415
      %v434 = vadd.f32 %v398, %v415
      %v435 = vadd.f32 %v399, %v415
      %v436 = vadd.f32 %v400, %v415
      %v437 = vadd.f32 %v401, %v415
      %v438 = vadd.f32 %v402, %v415
      %v439 = vadd.f32 %v403, %v415
      %v440 = vadd.f32 %v404, %v415
      %v441 = vadd.f32 %v405, %v415
      %v442 = vadd.f32 %v406, %v415
      %v443 = vadd.f32 %v407, %v415
      %v444 = vadd.f32 %v408, %v415
      %v445 = vadd.f32 %v409, %v415
      %v446 = vadd.f32 %v410, %v415
      %v447 = vadd.f32 %v411, %v415
      %v448 = vmax.f32 %v416, 0.0
      %v449 = vmax.f32 %v417, 0.0
      %v450 = vmax.f32 %v418, 0.0
      %v451 = vmax.f32 %v419, 0.0
      %v452 = vmax.f32 %v420, 0.0
      %v453 = vmax.f32 %v421, 0.0
      %v454 = vmax.f32 %v422, 0.0
      %v455 = vmax.f32 %v423, 0.0
      %v456 = vmax.f32 %v424, 0.0
      %v457 = vmax.f32 %v425, 0.0
      %v458 = vmax.f32 %v426, 0.0
      %v459 = vmax.f32 %v427, 0.0
      %v460 = vmax.f32 %v428, 0.0
      %v461 = vmax.f32 %v429, 0.0
      %v462 = vmax.f32 %v430, 0.0
      %v463 = vmax.f32 %v431, 0.0
      %v464 = vmax.f32 %v432, 0.0
      %v465 = vmax.f32 %v433, 0.0
      %v466 = vmax.f32 %v434, 0.0
      %v467 = vmax.f32 %v435, 0.0
      %v468 = vmax.f32 %v436, 0.0
      %v469 = vmax.f32 %v437, 0.0
      %v470 = vmax.f32 %v438, 0.0
      %v471 = vmax.f32 %v439, 0.0
      %v472 = vmax.f32 %v440, 0.0
      %v473 = vmax.f32 %v441, 0.0
      %v474 = vmax.f32 %v442, 0.0
      %v475 = vmax.f32 %v443, 0.0
      %v476 = vmax.f32 %v444, 0.0
      %v477 = vmax.f32 %v445, 0.0
      %v478 = vmax.f32 %v446, 0.0
      %v479 = vmax.f32 %v447, 0.0
      %s480 = scalar_lea.vmem [#allocation2], 24
      %vm481 = vcmask 31744
      %482 = vst.msk [vmem:[%s480 + $0x1] sm:$0xff] %vm481, %v448
      %483 = vst.msk [vmem:[%s480 + $0x9] sm:$0xff] %vm481, %v449
      %484 = vst.msk [vmem:[%s480 + $0x19] sm:$0xff] %vm481, %v450
      %485 = vst.msk [vmem:[%s480 + $0x21] sm:$0xff] %vm481, %v451
      %486 = vst.msk [vmem:[%s480 + $0x31] sm:$0xff] %vm481, %v452
      %487 = vst.msk [vmem:[%s480 + $0x39] sm:$0xff] %vm481, %v453
      %488 = vst.msk [vmem:[%s480 + $0x49] sm:$0xff] %vm481, %v454
      %489 = vst.msk [vmem:[%s480 + $0x51] sm:$0xff] %vm481, %v455
      %490 = vst.msk [vmem:[%s480 + $0x61] sm:$0xff] %vm481, %v456
      %491 = vst.msk [vmem:[%s480 + $0x69] sm:$0xff] %vm481, %v457
      %492 = vst.msk [vmem:[%s480 + $0x79] sm:$0xff] %vm481, %v458
      %493 = vst.msk [vmem:[%s480 + $0x81] sm:$0xff] %vm481, %v459
      %494 = vst.msk [vmem:[%s480 + $0x91] sm:$0xff] %vm481, %v460
      %495 = vst.msk [vmem:[%s480 + $0x99] sm:$0xff] %vm481, %v461
      %496 = vst.msk [vmem:[%s480 + $0xa9] sm:$0xff] %vm481, %v462
      %497 = vst.msk [vmem:[%s480 + $0xb1] sm:$0xff] %vm481, %v463
      %498 = vst.msk [vmem:[%s480 + $0xc1] sm:$0xff] %vm481, %v464
      %499 = vst.msk [vmem:[%s480 + $0xc9] sm:$0xff] %vm481, %v465
      %500 = vst.msk [vmem:[%s480 + $0xd9] sm:$0xff] %vm481, %v466
      %501 = vst.msk [vmem:[%s480 + $0xe1] sm:$0xff] %vm481, %v467
      %502 = vst.msk [vmem:[%s480 + $0xf1] sm:$0xff] %vm481, %v468
      %503 = vst.msk [vmem:[%s480 + $0xf9] sm:$0xff] %vm481, %v469
      %504 = vst.msk [vmem:[%s480 + $0x109] sm:$0xff] %vm481, %v470
      %505 = vst.msk [vmem:[%s480 + $0x111] sm:$0xff] %vm481, %v471
      %506 = vst.msk [vmem:[%s480 + $0x121] sm:$0xff] %vm481, %v472
      %507 = vst.msk [vmem:[%s480 + $0x129] sm:$0xff] %vm481, %v473
      %508 = vst.msk [vmem:[%s480 + $0x139] sm:$0xff] %vm481, %v474
      %509 = vst.msk [vmem:[%s480 + $0x141] sm:$0xff] %vm481, %v475
      %510 = vst.msk [vmem:[%s480 + $0x151] sm:$0xff] %vm481, %v476
      %511 = vst.msk [vmem:[%s480 + $0x159] sm:$0xff] %vm481, %v477
      %512 = vst.msk [vmem:[%s480 + $0x169] sm:$0xff] %vm481, %v478
      %513 = vst.msk [vmem:[%s480 + $0x171] sm:$0xff] %vm481, %v479
      %v514 = vld [vmem:[%s2] sm:$0x3]
      %v515 = vld [vmem:[%s2 + $0x2] sm:$0x3]
      %v516 = vld [vmem:[%s2 + $0x4] sm:$0x3]
      %v517 = vld [vmem:[%s2 + $0x6] sm:$0x3]
      %v518 = vld [vmem:[%s2 + $0x8] sm:$0x3]
      %v519 = vld [vmem:[%s2 + $0xa] sm:$0x3]
      %v520 = vld [vmem:[%s2 + $0xc] sm:$0x3]
      %v521 = vld [vmem:[%s2 + $0xe] sm:$0x3]
      %v522 = vld [vmem:[%s2 + $0x10] sm:$0x3]
      %v523 = vld [vmem:[#allocation2] sm:$0xff]
      %v524 = vld [vmem:[#allocation2 + $0x8] sm:$0xff]
      %v525 = vld [vmem:[#allocation2 + $0x18] sm:$0xff]
      %v526 = vld [vmem:[#allocation2 + $0x20] sm:$0xff]
      %v527 = vld [vmem:[#allocation2 + $0x30] sm:$0xff]
      %v528 = vld [vmem:[#allocation2 + $0x38] sm:$0xff]
      %v529 = vld [vmem:[#allocation2 + $0x48] sm:$0xff]
      %v530 = vld [vmem:[#allocation2 + $0x50] sm:$0xff]
      %v531 = vld [vmem:[#allocation2 + $0x60] sm:$0xff]
      %v532 = vld [vmem:[#allocation2 + $0x68] sm:$0xff]
      %v533 = vld [vmem:[#allocation2 + $0x78] sm:$0xff]
      %v534 = vld [vmem:[#allocation2 + $0x80] sm:$0xff]
      %v535 = vld [vmem:[#allocation2 + $0x90] sm:$0xff]
      %v536 = vld [vmem:[#allocation2 + $0x98] sm:$0xff]
      %v537 = vld [vmem:[#allocation2 + $0xa8] sm:$0xff]
      %v538 = vld [vmem:[#allocation2 + $0xb0] sm:$0xff]
      %v539 = vld [vmem:[#allocation2 + $0xc0] sm:$0xff]
      %v540 = vld [vmem:[#allocation2 + $0xc8] sm:$0xff]
      %v541 = vld [vmem:[#allocation2 + $0xd8] sm:$0xff]
      %v542 = vld [vmem:[#allocation2 + $0xe0] sm:$0xff]
      %v543 = vld [vmem:[#allocation2 + $0xf0] sm:$0xff]
      %v544 = vld [vmem:[#allocation2 + $0xf8] sm:$0xff]
      %v545 = vld [vmem:[#allocation2 + $0x108] sm:$0xff]
      %v546 = vld [vmem:[#allocation2 + $0x110] sm:$0xff]
      %v547 = vld [vmem:[#allocation2 + $0x120] sm:$0xff]
      %v548 = vld [vmem:[#allocation2 + $0x128] sm:$0xff]
      %v549 = vld [vmem:[#allocation2 + $0x138] sm:$0xff]
      %v550 = vld [vmem:[#allocation2 + $0x140] sm:$0xff]
      %v551 = vld [vmem:[#allocation2 + $0x150] sm:$0xff]
      %v552 = vld [vmem:[#allocation2 + $0x158] sm:$0xff]
      %v553 = vld [vmem:[#allocation2 + $0x168] sm:$0xff]
      %v554 = vld [vmem:[#allocation2 + $0x170] sm:$0xff]
      %v555 = vpack.c.bf16 %v524, %v523
      %v556 = vpack.c.bf16 %v526, %v525
      %v557 = vpack.c.bf16 %v528, %v527
      %v558 = vpack.c.bf16 %v530, %v529
      %v559 = vpack.c.bf16 %v532, %v531
      %v560 = vpack.c.bf16 %v534, %v533
      %v561 = vpack.c.bf16 %v536, %v535
      %v562 = vpack.c.bf16 %v538, %v537
      %v563 = vpack.c.bf16 %v540, %v539
      %v564 = vpack.c.bf16 %v542, %v541
      %v565 = vpack.c.bf16 %v544, %v543
      %v566 = vpack.c.bf16 %v546, %v545
      %v567 = vpack.c.bf16 %v548, %v547
      %v568 = vpack.c.bf16 %v550, %v549
      %v569 = vpack.c.bf16 %v552, %v551
      %v570 = vpack.c.bf16 %v554, %v553
      %v572 = vsel %vm481, %v555, 0
      %v575 = vsel %vm481, %v556, 0
      %v578 = vsel %vm481, %v557, 0
      %v581 = vsel %vm481, %v558, 0
      %v584 = vsel %vm481, %v559, 0
      %v587 = vsel %vm481, %v560, 0
      %v590 = vsel %vm481, %v561, 0
      %v593 = vsel %vm481, %v562, 0
      %v596 = vsel %vm481, %v563, 0
      %v599 = vsel %vm481, %v564, 0
      %v602 = vsel %vm481, %v565, 0
      %v605 = vsel %vm481, %v566, 0
      %v608 = vsel %vm481, %v567, 0
      %v611 = vsel %vm481, %v568, 0
      %v614 = vsel %vm481, %v569, 0
      %v617 = vsel %vm481, %v570, 0
      %vm619 = vcmask 1041408
      %v621 = vsel %vm619, %v514, 0
      %623 = vmatprep.subr.bf16.mxu0 0
      %624 = vmatpush1.bf16.msra.mxu0 %v621
      %625 = vmatprep.subr.bf16.mxu0 0
      %626 = vmatpush1.bf16.msra.mxu0 0
      %627 = vmatprep.subr.bf16.mxu0 0
      %628 = vmatpush1.bf16.msra.mxu0 0
      %629 = vmatprep.subr.bf16.mxu0 0
      %630 = vmatpush1.bf16.msra.mxu0 0
      %631 = vmatprep.subr.bf16.mxu0 0
      %632 = vmatpush1.bf16.msra.mxu0 0
      %633 = vmatprep.subr.bf16.mxu0 0
      %634 = vmatpush1.bf16.msra.mxu0 0
      %635 = vmatprep.subr.bf16.mxu0 0
      %636 = vmatpush1.bf16.msra.mxu0 0
      %637 = vmatprep.subr.bf16.mxu0 0
      %638 = vmatpush1.bf16.msra.mxu0 0
      %639 = vmatprep.subr.bf16.mxu0 0
      %640 = vmatpush1.bf16.msra.mxu0 0
      %641 = vmatprep.subr.bf16.mxu0 0
      %642 = vmatpush1.bf16.msra.mxu0 0
      %643 = vmatprep.subr.bf16.mxu0 0
      %644 = vmatpush1.bf16.msra.mxu0 0
      %645 = vmatprep.subr.bf16.mxu0 0
      %646 = vmatpush1.bf16.msra.mxu0 0
      %647 = vmatprep.subr.bf16.mxu0 0
      %648 = vmatpush1.bf16.msra.mxu0 0
      %649 = vmatprep.subr.bf16.mxu0 0
      %650 = vmatpush1.bf16.msra.mxu0 0
      %651 = vmatprep.subr.bf16.mxu0 0
      %652 = vmatpush1.bf16.msra.mxu0 0
      %653 = vmatprep.subr.bf16.mxu0 0
      %654 = vmatpush1.bf16.msra.mxu0 0
      %655 = vmatprep.mubr.bf16.mxu0 0
      %656 = vmatmul.mubr.bf16.gmra.mrb[0].mxu0 %v572
      %v657 = vpop.f32.mrb[0].mxu0
      %v658 = vadd.f32 0.0, %v657
      %v659 = vpop.f32.mrb[0].mxu0
      %v660 = vpop.f32.mrb[0].mxu0
      %v661 = vadd.f32 0.0, %v660
      %v662 = vpop.f32.mrb[0].mxu0
      %663 = vmatprep.mubr.bf16.mxu0 0
      %664 = vmatmul.mubr.bf16.gmra.mrb[0].mxu0 %v575
      %v665 = vpop.f32.mrb[0].mxu0
      %v666 = vadd.f32 0.0, %v665
      %v667 = vpop.f32.mrb[0].mxu0
      %v668 = vpop.f32.mrb[0].mxu0
      %v669 = vadd.f32 0.0, %v668
      %v670 = vpop.f32.mrb[0].mxu0
      %671 = vmatprep.mubr.bf16.mxu0 0
      %672 = vmatmul.mubr.bf16.gmra.mrb[0].mxu0 %v578
      %v673 = vpop.f32.mrb[0].mxu0
      %v674 = vadd.f32 0.0, %v673
      %v675 = vpop.f32.mrb[0].mxu0
      %v676 = vpop.f32.mrb[0].mxu0
      %v677 = vadd.f32 0.0, %v676
      %v678 = vpop.f32.mrb[0].mxu0
      %679 = vmatprep.mubr.bf16.mxu0 0
      %680 = vmatmul.mubr.bf16.gmra.mrb[0].mxu0 %v581
      %v681 = vpop.f32.mrb[0].mxu0
      %v682 = vadd.f32 0.0, %v681
      %v683 = vpop.f32.mrb[0].mxu0
      %v684 = vpop.f32.mrb[0].mxu0
      %v685 = vadd.f32 0.0, %v684
      %v686 = vpop.f32.mrb[0].mxu0
      %687 = vmatprep.mubr.bf16.mxu0 0
      %688 = vmatmul.mubr.bf16.gmra.mrb[0].mxu0 %v584
      %v689 = vpop.f32.mrb[0].mxu0
      %v690 = vadd.f32 0.0, %v689
      %v691 = vpop.f32.mrb[0].mxu0
      %v692 = vpop.f32.mrb[0].mxu0
      %v693 = vadd.f32 0.0, %v692
      %v694 = vpop.f32.mrb[0].mxu0
      %695 = vmatprep.mubr.bf16.mxu0 0
      %696 = vmatmul.mubr.bf16.gmra.mrb[0].mxu0 %v587
      %v697 = vpop.f32.mrb[0].mxu0
      %v698 = vadd.f32 0.0, %v697
      %v699 = vpop.f32.mrb[0].mxu0
      %v700 = vpop.f32.mrb[0].mxu0
      %v701 = vadd.f32 0.0, %v700
      %v702 = vpop.f32.mrb[0].mxu0
      %703 = vmatprep.mubr.bf16.mxu0 0
      %704 = vmatmul.mubr.bf16.gmra.mrb[0].mxu0 %v590
      %v705 = vpop.f32.mrb[0].mxu0
      %v706 = vadd.f32 0.0, %v705
      %v707 = vpop.f32.mrb[0].mxu0
      %v708 = vpop.f32.mrb[0].mxu0
      %v709 = vadd.f32 0.0, %v708
      %v710 = vpop.f32.mrb[0].mxu0
      %711 = vmatprep.mubr.bf16.mxu0 0
      %712 = vmatmul.mubr.bf16.gmra.mrb[0].mxu0 %v593
      %v713 = vpop.f32.mrb[0].mxu0
      %v714 = vadd.f32 0.0, %v713
      %v715 = vpop.f32.mrb[0].mxu0
      %v716 = vpop.f32.mrb[0].mxu0
      %v717 = vadd.f32 0.0, %v716
      %v718 = vpop.f32.mrb[0].mxu0
      %719 = vmatprep.mubr.bf16.mxu0 0
      %720 = vmatmul.mubr.bf16.gmra.mrb[0].mxu0 %v596
      %v721 = vpop.f32.mrb[0].mxu0
      %v722 = vadd.f32 0.0, %v721
      %v723 = vpop.f32.mrb[0].mxu0
      %v724 = vpop.f32.mrb[0].mxu0
      %v725 = vadd.f32 0.0, %v724
      %v726 = vpop.f32.mrb[0].mxu0
      %727 = vmatprep.mubr.bf16.mxu0 0
      %728 = vmatmul.mubr.bf16.gmra.mrb[0].mxu0 %v599
      %v729 = vpop.f32.mrb[0].mxu0
      %v730 = vadd.f32 0.0, %v729
      %v731 = vpop.f32.mrb[0].mxu0
      %v732 = vpop.f32.mrb[0].mxu0
      %v733 = vadd.f32 0.0, %v732
      %v734 = vpop.f32.mrb[0].mxu0
      %735 = vmatprep.mubr.bf16.mxu0 0
      %736 = vmatmul.mubr.bf16.gmra.mrb[0].mxu0 %v602
      %v737 = vpop.f32.mrb[0].mxu0
      %v738 = vadd.f32 0.0, %v737
      %v739 = vpop.f32.mrb[0].mxu0
      %v740 = vpop.f32.mrb[0].mxu0
      %v741 = vadd.f32 0.0, %v740
      %v742 = vpop.f32.mrb[0].mxu0
      %743 = vmatprep.mubr.bf16.mxu0 0
      %744 = vmatmul.mubr.bf16.gmra.mrb[0].mxu0 %v605
      %v745 = vpop.f32.mrb[0].mxu0
      %v746 = vadd.f32 0.0, %v745
      %v747 = vpop.f32.mrb[0].mxu0
      %v748 = vpop.f32.mrb[0].mxu0
      %v749 = vadd.f32 0.0, %v748
      %v750 = vpop.f32.mrb[0].mxu0
      %751 = vmatprep.mubr.bf16.mxu0 0
      %752 = vmatmul.mubr.bf16.gmra.mrb[0].mxu0 %v608
      %v753 = vpop.f32.mrb[0].mxu0
      %v754 = vadd.f32 0.0, %v753
      %v755 = vpop.f32.mrb[0].mxu0
      %v756 = vpop.f32.mrb[0].mxu0
      %v757 = vadd.f32 0.0, %v756
      %v758 = vpop.f32.mrb[0].mxu0
      %759 = vmatprep.mubr.bf16.mxu0 0
      %760 = vmatmul.mubr.bf16.gmra.mrb[0].mxu0 %v611
      %v761 = vpop.f32.mrb[0].mxu0
      %v762 = vadd.f32 0.0, %v761
      %v763 = vpop.f32.mrb[0].mxu0
      %v764 = vpop.f32.mrb[0].mxu0
      %v765 = vadd.f32 0.0, %v764
      %v766 = vpop.f32.mrb[0].mxu0
      %767 = vmatprep.mubr.bf16.mxu0 0
      %768 = vmatmul.mubr.bf16.gmra.mrb[0].mxu0 %v614
      %v769 = vpop.f32.mrb[0].mxu0
      %v770 = vadd.f32 0.0, %v769
      %v771 = vpop.f32.mrb[0].mxu0
      %v772 = vpop.f32.mrb[0].mxu0
      %v773 = vadd.f32 0.0, %v772
      %v774 = vpop.f32.mrb[0].mxu0
      %775 = vmatprep.mubr.bf16.mxu0 0
      %776 = vmatmul.mubr.bf16.gmra.mrb[0].mxu0 %v617
      %v777 = vpop.f32.mrb[0].mxu0
      %v778 = vadd.f32 0.0, %v777
      %v779 = vpop.f32.mrb[0].mxu0
      %v780 = vpop.f32.mrb[0].mxu0
      %v781 = vadd.f32 0.0, %v780
      %v782 = vpop.f32.mrb[0].mxu0
      %783 = vdwg.mxu0
      %784 = vst.msk [vmem:[#allocation3] sm:$0xff] %vm481, %v658
      %785 = vst.msk [vmem:[#allocation3 + $0x8] sm:$0xff] %vm481, %v661
      %786 = vst.msk [vmem:[#allocation3 + $0x10] sm:$0xff] %vm481, %v666
      %787 = vst.msk [vmem:[#allocation3 + $0x18] sm:$0xff] %vm481, %v669
      %788 = vst.msk [vmem:[#allocation3 + $0x20] sm:$0xff] %vm481, %v674
      %789 = vst.msk [vmem:[#allocation3 + $0x28] sm:$0xff] %vm481, %v677
      %790 = vst.msk [vmem:[#allocation3 + $0x30] sm:$0xff] %vm481, %v682
      %791 = vst.msk [vmem:[#allocation3 + $0x38] sm:$0xff] %vm481, %v685
      %792 = vst.msk [vmem:[#allocation3 + $0x40] sm:$0xff] %vm481, %v690
      %793 = vst.msk [vmem:[#allocation3 + $0x48] sm:$0xff] %vm481, %v693
      %794 = vst.msk [vmem:[#allocation3 + $0x50] sm:$0xff] %vm481, %v698
      %795 = vst.msk [vmem:[#allocation3 + $0x58] sm:$0xff] %vm481, %v701
      %796 = vst.msk [vmem:[#allocation3 + $0x60] sm:$0xff] %vm481, %v706
      %797 = vst.msk [vmem:[#allocation3 + $0x68] sm:$0xff] %vm481, %v709
      %798 = vst.msk [vmem:[#allocation3 + $0x70] sm:$0xff] %vm481, %v714
      %799 = vst.msk [vmem:[#allocation3 + $0x78] sm:$0xff] %vm481, %v717
      %800 = vst.msk [vmem:[#allocation3 + $0x80] sm:$0xff] %vm481, %v722
      %801 = vst.msk [vmem:[#allocation3 + $0x88] sm:$0xff] %vm481, %v725
      %802 = vst.msk [vmem:[#allocation3 + $0x90] sm:$0xff] %vm481, %v730
      %803 = vst.msk [vmem:[#allocation3 + $0x98] sm:$0xff] %vm481, %v733
      %804 = vst.msk [vmem:[#allocation3 + $0xa0] sm:$0xff] %vm481, %v738
      %805 = vst.msk [vmem:[#allocation3 + $0xa8] sm:$0xff] %vm481, %v741
      %806 = vst.msk [vmem:[#allocation3 + $0xb0] sm:$0xff] %vm481, %v746
      %807 = vst.msk [vmem:[#allocation3 + $0xb8] sm:$0xff] %vm481, %v749
      %808 = vst.msk [vmem:[#allocation3 + $0xc0] sm:$0xff] %vm481, %v754
      %809 = vst.msk [vmem:[#allocation3 + $0xc8] sm:$0xff] %vm481, %v757
      %810 = vst.msk [vmem:[#allocation3 + $0xd0] sm:$0xff] %vm481, %v762
      %811 = vst.msk [vmem:[#allocation3 + $0xd8] sm:$0xff] %vm481, %v765
      %812 = vst.msk [vmem:[#allocation3 + $0xe0] sm:$0xff] %vm481, %v770
      %813 = vst.msk [vmem:[#allocation3 + $0xe8] sm:$0xff] %vm481, %v773
      %814 = vst.msk [vmem:[#allocation3 + $0xf0] sm:$0xff] %vm481, %v778
      %815 = vst.msk [vmem:[#allocation3 + $0xf8] sm:$0xff] %vm481, %v781
      %v816 = vld [vmem:[#allocation2 + $0x1] sm:$0xff]
      %v817 = vld [vmem:[#allocation2 + $0x9] sm:$0xff]
      %v818 = vld [vmem:[#allocation2 + $0x19] sm:$0xff]
      %v819 = vld [vmem:[#allocation2 + $0x21] sm:$0xff]
      %v820 = vld [vmem:[#allocation2 + $0x31] sm:$0xff]
      %v821 = vld [vmem:[#allocation2 + $0x39] sm:$0xff]
      %v822 = vld [vmem:[#allocation2 + $0x49] sm:$0xff]
      %v823 = vld [vmem:[#allocation2 + $0x51] sm:$0xff]
      %v824 = vld [vmem:[#allocation2 + $0x61] sm:$0xff]
      %v825 = vld [vmem:[#allocation2 + $0x69] sm:$0xff]
      %v826 = vld [vmem:[#allocation2 + $0x79] sm:$0xff]
      %v827 = vld [vmem:[#allocation2 + $0x81] sm:$0xff]
      %v828 = vld [vmem:[#allocation2 + $0x91] sm:$0xff]
      %v829 = vld [vmem:[#allocation2 + $0x99] sm:$0xff]
      %v830 = vld [vmem:[#allocation2 + $0xa9] sm:$0xff]
      %v831 = vld [vmem:[#allocation2 + $0xb1] sm:$0xff]
      %v832 = vld [vmem:[#allocation2 + $0xc1] sm:$0xff]
      %v833 = vld [vmem:[#allocation2 + $0xc9] sm:$0xff]
      %v834 = vld [vmem:[#allocation2 + $0xd9] sm:$0xff]
      %v835 = vld [vmem:[#allocation2 + $0xe1] sm:$0xff]
      %v836 = vld [vmem:[#allocation2 + $0xf1] sm:$0xff]
      %v837 = vld [vmem:[#allocation2 + $0xf9] sm:$0xff]
      %v838 = vld [vmem:[#allocation2 + $0x109] sm:$0xff]
      %v839 = vld [vmem:[#allocation2 + $0x111] sm:$0xff]
      %v840 = vld [vmem:[#allocation2 + $0x121] sm:$0xff]
      %v841 = vld [vmem:[#allocation2 + $0x129] sm:$0xff]
      %v842 = vld [vmem:[#allocation2 + $0x139] sm:$0xff]
      %v843 = vld [vmem:[#allocation2 + $0x141] sm:$0xff]
      %v844 = vld [vmem:[#allocation2 + $0x151] sm:$0xff]
      %v845 = vld [vmem:[#allocation2 + $0x159] sm:$0xff]
      %v846 = vld [vmem:[#allocation2 + $0x169] sm:$0xff]
      %v847 = vld [vmem:[#allocation2 + $0x171] sm:$0xff]
      %v848 = vpack.c.bf16 %v817, %v816
      %v849 = vpack.c.bf16 %v819, %v818
      %v850 = vpack.c.bf16 %v821, %v820
      %v851 = vpack.c.bf16 %v823, %v822
      %v852 = vpack.c.bf16 %v825, %v824
      %v853 = vpack.c.bf16 %v827, %v826
      %v854 = vpack.c.bf16 %v829, %v828
      %v855 = vpack.c.bf16 %v831, %v830
      %v856 = vpack.c.bf16 %v833, %v832
      %v857 = vpack.c.bf16 %v835, %v834
      %v858 = vpack.c.bf16 %v837, %v836
      %v859 = vpack.c.bf16 %v839, %v838
      %v860 = vpack.c.bf16 %v841, %v840
      %v861 = vpack.c.bf16 %v843, %v842
      %v862 = vpack.c.bf16 %v845, %v844
      %v863 = vpack.c.bf16 %v847, %v846
      %v865 = vsel %vm481, %v848, 0
      %v868 = vsel %vm481, %v849, 0
      %v871 = vsel %vm481, %v850, 0
      %v874 = vsel %vm481, %v851, 0
      %v877 = vsel %vm481, %v852, 0
      %v880 = vsel %vm481, %v853, 0
      %v883 = vsel %vm481, %v854, 0
      %v886 = vsel %vm481, %v855, 0
      %v889 = vsel %vm481, %v856, 0
      %v892 = vsel %vm481, %v857, 0
      %v895 = vsel %vm481, %v858, 0
      %v898 = vsel %vm481, %v859, 0
      %v901 = vsel %vm481, %v860, 0
      %v904 = vsel %vm481, %v861, 0
      %v907 = vsel %vm481, %v862, 0
      %v910 = vsel %vm481, %v863, 0
      %v913 = vsel %vm619, %v515, 0
      %915 = vmatprep.subr.bf16.mxu0 0
      %916 = vmatpush1.bf16.msra.mxu0 %v913
      %917 = vmatprep.subr.bf16.mxu0 0
      %918 = vmatpush1.bf16.msra.mxu0 0
      %919 = vmatprep.subr.bf16.mxu0 0
      %920 = vmatpush1.bf16.msra.mxu0 0
      %921 = vmatprep.subr.bf16.mxu0 0
      %922 = vmatpush1.bf16.msra.mxu0 0
      %923 = vmatprep.subr.bf16.mxu0 0
      %924 = vmatpush1.bf16.msra.mxu0 0
      %925 = vmatprep.subr.bf16.mxu0 0
      %926 = vmatpush1.bf16.msra.mxu0 0
      %927 = vmatprep.subr.bf16.mxu0 0
      %928 = vmatpush1.bf16.msra.mxu0 0
      %929 = vmatprep.subr.bf16.mxu0 0
      %930 = vmatpush1.bf16.msra.mxu0 0
      %931 = vmatprep.subr.bf16.mxu0 0
      %932 = vmatpush1.bf16.msra.mxu0 0
      %933 = vmatprep.subr.bf16.mxu0 0
      %934 = vmatpush1.bf16.msra.mxu0 0
      %935 = vmatprep.subr.bf16.mxu0 0
      %936 = vmatpush1.bf16.msra.mxu0 0
      %937 = vmatprep.subr.bf16.mxu0 0
      %938 = vmatpush1.bf16.msra.mxu0 0
      %939 = vmatprep.subr.bf16.mxu0 0
      %940 = vmatpush1.bf16.msra.mxu0 0
      %941 = vmatprep.subr.bf16.mxu0 0
      %942 = vmatpush1.bf16.msra.mxu0 0
      %943 = vmatprep.subr.bf16.mxu0 0
      %944 = vmatpush1.bf16.msra.mxu0 0
      %945 = vmatprep.subr.bf16.mxu0 0
      %946 = vmatpush1.bf16.msra.mxu0 0
      %947 = vmatprep.mubr.bf16.mxu0 0
      %948 = vmatmul.mubr.bf16.gmra.mrb[0].mxu0 %v865
      %v949 = vpop.f32.mrb[0].mxu0
      %v950 = vadd.f32 0.0, %v949
      %v951 = vpop.f32.mrb[0].mxu0
      %v952 = vpop.f32.mrb[0].mxu0
      %v953 = vadd.f32 0.0, %v952
      %v954 = vpop.f32.mrb[0].mxu0
      %955 = vmatprep.mubr.bf16.mxu0 0
      %956 = vmatmul.mubr.bf16.gmra.mrb[0].mxu0 %v868
      %v957 = vpop.f32.mrb[0].mxu0
      %v958 = vadd.f32 0.0, %v957
      %v959 = vpop.f32.mrb[0].mxu0
      %v960 = vpop.f32.mrb[0].mxu0
      %v961 = vadd.f32 0.0, %v960
      %v962 = vpop.f32.mrb[0].mxu0
      %963 = vmatprep.mubr.bf16.mxu0 0
      %964 = vmatmul.mubr.bf16.gmra.mrb[0].mxu0 %v871
      %v965 = vpop.f32.mrb[0].mxu0
      %v966 = vadd.f32 0.0, %v965
      %v967 = vpop.f32.mrb[0].mxu0
      %v968 = vpop.f32.mrb[0].mxu0
      %v969 = vadd.f32 0.0, %v968
      %v970 = vpop.f32.mrb[0].mxu0
      %971 = vmatprep.mubr.bf16.mxu0 0
      %972 = vmatmul.mubr.bf16.gmra.mrb[0].mxu0 %v874
      %v973 = vpop.f32.mrb[0].mxu0
      %v974 = vadd.f32 0.0, %v973
      %v975 = vpop.f32.mrb[0].mxu0
      %v976 = vpop.f32.mrb[0].mxu0
      %v977 = vadd.f32 0.0, %v976
      %v978 = vpop.f32.mrb[0].mxu0
      %979 = vmatprep.mubr.bf16.mxu0 0
      %980 = vmatmul.mubr.bf16.gmra.mrb[0].mxu0 %v877
      %v981 = vpop.f32.mrb[0].mxu0
      %v982 = vadd.f32 0.0, %v981
      %v983 = vpop.f32.mrb[0].mxu0
      %v984 = vpop.f32.mrb[0].mxu0
      %v985 = vadd.f32 0.0, %v984
      %v986 = vpop.f32.mrb[0].mxu0
      %987 = vmatprep.mubr.bf16.mxu0 0
      %988 = vmatmul.mubr.bf16.gmra.mrb[0].mxu0 %v880
      %v989 = vpop.f32.mrb[0].mxu0
      %v990 = vadd.f32 0.0, %v989
      %v991 = vpop.f32.mrb[0].mxu0
      %v992 = vpop.f32.mrb[0].mxu0
      %v993 = vadd.f32 0.0, %v992
      %v994 = vpop.f32.mrb[0].mxu0
      %995 = vmatprep.mubr.bf16.mxu0 0
      %996 = vmatmul.mubr.bf16.gmra.mrb[0].mxu0 %v883
      %v997 = vpop.f32.mrb[0].mxu0
      %v998 = vadd.f32 0.0, %v997
      %v999 = vpop.f32.mrb[0].mxu0
      %v1000 = vpop.f32.mrb[0].mxu0
      %v1001 = vadd.f32 0.0, %v1000
      %v1002 = vpop.f32.mrb[0].mxu0
      %1003 = vmatprep.mubr.bf16.mxu0 0
      %1004 = vmatmul.mubr.bf16.gmra.mrb[0].mxu0 %v886
      %v1005 = vpop.f32.mrb[0].mxu0
      %v1006 = vadd.f32 0.0, %v1005
      %v1007 = vpop.f32.mrb[0].mxu0
      %v1008 = vpop.f32.mrb[0].mxu0
      %v1009 = vadd.f32 0.0, %v1008
      %v1010 = vpop.f32.mrb[0].mxu0
      %1011 = vmatprep.mubr.bf16.mxu0 0
      %1012 = vmatmul.mubr.bf16.gmra.mrb[0].mxu0 %v889
      %v1013 = vpop.f32.mrb[0].mxu0
      %v1014 = vadd.f32 0.0, %v1013
      %v1015 = vpop.f32.mrb[0].mxu0
      %v1016 = vpop.f32.mrb[0].mxu0
      %v1017 = vadd.f32 0.0, %v1016
      %v1018 = vpop.f32.mrb[0].mxu0
      %1019 = vmatprep.mubr.bf16.mxu0 0
      %1020 = vmatmul.mubr.bf16.gmra.mrb[0].mxu0 %v892
      %v1021 = vpop.f32.mrb[0].mxu0
      %v1022 = vadd.f32 0.0, %v1021
      %v1023 = vpop.f32.mrb[0].mxu0
      %v1024 = vpop.f32.mrb[0].mxu0
      %v1025 = vadd.f32 0.0, %v1024
      %v1026 = vpop.f32.mrb[0].mxu0
      %1027 = vmatprep.mubr.bf16.mxu0 0
      %1028 = vmatmul.mubr.bf16.gmra.mrb[0].mxu0 %v895
      %v1029 = vpop.f32.mrb[0].mxu0
      %v1030 = vadd.f32 0.0, %v1029
      %v1031 = vpop.f32.mrb[0].mxu0
      %v1032 = vpop.f32.mrb[0].mxu0
      %v1033 = vadd.f32 0.0, %v1032
      %v1034 = vpop.f32.mrb[0].mxu0
      %1035 = vmatprep.mubr.bf16.mxu0 0
      %1036 = vmatmul.mubr.bf16.gmra.mrb[0].mxu0 %v898
      %v1037 = vpop.f32.mrb[0].mxu0
      %v1038 = vadd.f32 0.0, %v1037
      %v1039 = vpop.f32.mrb[0].mxu0
      %v1040 = vpop.f32.mrb[0].mxu0
      %v1041 = vadd.f32 0.0, %v1040
      %v1042 = vpop.f32.mrb[0].mxu0
      %1043 = vmatprep.mubr.bf16.mxu0 0
      %1044 = vmatmul.mubr.bf16.gmra.mrb[0].mxu0 %v901
      %v1045 = vpop.f32.mrb[0].mxu0
      %v1046 = vadd.f32 0.0, %v1045
      %v1047 = vpop.f32.mrb[0].mxu0
      %v1048 = vpop.f32.mrb[0].mxu0
      %v1049 = vadd.f32 0.0, %v1048
      %v1050 = vpop.f32.mrb[0].mxu0
      %1051 = vmatprep.mubr.bf16.mxu0 0
      %1052 = vmatmul.mubr.bf16.gmra.mrb[0].mxu0 %v904
      %v1053 = vpop.f32.mrb[0].mxu0
      %v1054 = vadd.f32 0.0, %v1053
      %v1055 = vpop.f32.mrb[0].mxu0
      %v1056 = vpop.f32.mrb[0].mxu0
      %v1057 = vadd.f32 0.0, %v1056
      %v1058 = vpop.f32.mrb[0].mxu0
      %1059 = vmatprep.mubr.bf16.mxu0 0
      %1060 = vmatmul.mubr.bf16.gmra.mrb[0].mxu0 %v907
      %v1061 = vpop.f32.mrb[0].mxu0
      %v1062 = vadd.f32 0.0, %v1061
      %v1063 = vpop.f32.mrb[0].mxu0
      %v1064 = vpop.f32.mrb[0].mxu0
      %v1065 = vadd.f32 0.0, %v1064
      %v1066 = vpop.f32.mrb[0].mxu0
      %1067 = vmatprep.mubr.bf16.mxu0 0
      %1068 = vmatmul.mubr.bf16.gmra.mrb[0].mxu0 %v910
      %v1069 = vpop.f32.mrb[0].mxu0
      %v1070 = vadd.f32 0.0, %v1069
      %v1071 = vpop.f32.mrb[0].mxu0
      %v1072 = vpop.f32.mrb[0].mxu0
      %v1073 = vadd.f32 0.0, %v1072
      %v1074 = vpop.f32.mrb[0].mxu0
      %1075 = vdwg.mxu0
      %v1076 = vld [vmem:[#allocation3] sm:$0xff]
      %v1077 = vld [vmem:[#allocation3 + $0x8] sm:$0xff]
      %v1078 = vld [vmem:[#allocation3 + $0x10] sm:$0xff]
      %v1079 = vld [vmem:[#allocation3 + $0x18] sm:$0xff]
      %v1080 = vld [vmem:[#allocation3 + $0x20] sm:$0xff]
      %v1081 = vld [vmem:[#allocation3 + $0x28] sm:$0xff]
      %v1082 = vld [vmem:[#allocation3 + $0x30] sm:$0xff]
      %v1083 = vld [vmem:[#allocation3 + $0x38] sm:$0xff]
      %v1084 = vld [vmem:[#allocation3 + $0x40] sm:$0xff]
      %v1085 = vld [vmem:[#allocation3 + $0x48] sm:$0xff]
      %v1086 = vld [vmem:[#allocation3 + $0x50] sm:$0xff]
      %v1087 = vld [vmem:[#allocation3 + $0x58] sm:$0xff]
      %v1088 = vld [vmem:[#allocation3 + $0x60] sm:$0xff]
      %v1089 = vld [vmem:[#allocation3 + $0x68] sm:$0xff]
      %v1090 = vld [vmem:[#allocation3 + $0x70] sm:$0xff]
      %v1091 = vld [vmem:[#allocation3 + $0x78] sm:$0xff]
      %v1092 = vld [vmem:[#allocation3 + $0x80] sm:$0xff]
      %v1093 = vld [vmem:[#allocation3 + $0x88] sm:$0xff]
      %v1094 = vld [vmem:[#allocation3 + $0x90] sm:$0xff]
      %v1095 = vld [vmem:[#allocation3 + $0x98] sm:$0xff]
      %v1096 = vld [vmem:[#allocation3 + $0xa0] sm:$0xff]
      %v1097 = vld [vmem:[#allocation3 + $0xa8] sm:$0xff]
      %v1098 = vld [vmem:[#allocation3 + $0xb0] sm:$0xff]
      %v1099 = vld [vmem:[#allocation3 + $0xb8] sm:$0xff]
      %v1100 = vld [vmem:[#allocation3 + $0xc0] sm:$0xff]
      %v1101 = vld [vmem:[#allocation3 + $0xc8] sm:$0xff]
      %v1102 = vld [vmem:[#allocation3 + $0xd0] sm:$0xff]
      %v1103 = vld [vmem:[#allocation3 + $0xd8] sm:$0xff]
      %v1104 = vld [vmem:[#allocation3 + $0xe0] sm:$0xff]
      %v1105 = vld [vmem:[#allocation3 + $0xe8] sm:$0xff]
      %v1106 = vld [vmem:[#allocation3 + $0xf0] sm:$0xff]
      %v1107 = vld [vmem:[#allocation3 + $0xf8] sm:$0xff]
      %v1108 = vadd.f32 %v1076, %v950
      %v1109 = vadd.f32 %v1077, %v953
      %v1110 = vadd.f32 %v1078, %v958
      %v1111 = vadd.f32 %v1079, %v961
      %v1112 = vadd.f32 %v1080, %v966
      %v1113 = vadd.f32 %v1081, %v969
      %v1114 = vadd.f32 %v1082, %v974
      %v1115 = vadd.f32 %v1083, %v977
      %v1116 = vadd.f32 %v1084, %v982
      %v1117 = vadd.f32 %v1085, %v985
      %v1118 = vadd.f32 %v1086, %v990
      %v1119 = vadd.f32 %v1087, %v993
      %v1120 = vadd.f32 %v1088, %v998
      %v1121 = vadd.f32 %v1089, %v1001
      %v1122 = vadd.f32 %v1090, %v1006
      %v1123 = vadd.f32 %v1091, %v1009
      %v1124 = vadd.f32 %v1092, %v1014
      %v1125 = vadd.f32 %v1093, %v1017
      %v1126 = vadd.f32 %v1094, %v1022
      %v1127 = vadd.f32 %v1095, %v1025
      %v1128 = vadd.f32 %v1096, %v1030
      %v1129 = vadd.f32 %v1097, %v1033
      %v1130 = vadd.f32 %v1098, %v1038
      %v1131 = vadd.f32 %v1099, %v1041
      %v1132 = vadd.f32 %v1100, %v1046
      %v1133 = vadd.f32 %v1101, %v1049
      %v1134 = vadd.f32 %v1102, %v1054
      %v1135 = vadd.f32 %v1103, %v1057
      %v1136 = vadd.f32 %v1104, %v1062
      %v1137 = vadd.f32 %v1105, %v1065
      %v1138 = vadd.f32 %v1106, %v1070
      %v1139 = vadd.f32 %v1107, %v1073
      %1140 = vst.msk [vmem:[#allocation3] sm:$0xff] %vm481, %v1108
      %1141 = vst.msk [vmem:[#allocation3 + $0x8] sm:$0xff] %vm481, %v1109
      %1142 = vst.msk [vmem:[#allocation3 + $0x10] sm:$0xff] %vm481, %v1110
      %1143 = vst.msk [vmem:[#allocation3 + $0x18] sm:$0xff] %vm481, %v1111
      %1144 = vst.msk [vmem:[#allocation3 + $0x20] sm:$0xff] %vm481, %v1112
      %1145 = vst.msk [vmem:[#allocation3 + $0x28] sm:$0xff] %vm481, %v1113
      %1146 = vst.msk [vmem:[#allocation3 + $0x30] sm:$0xff] %vm481, %v1114
      %1147 = vst.msk [vmem:[#allocation3 + $0x38] sm:$0xff] %vm481, %v1115
      %1148 = vst.msk [vmem:[#allocation3 + $0x40] sm:$0xff] %vm481, %v1116
      %1149 = vst.msk [vmem:[#allocation3 + $0x48] sm:$0xff] %vm481, %v1117
      %1150 = vst.msk [vmem:[#allocation3 + $0x50] sm:$0xff] %vm481, %v1118
      %1151 = vst.msk [vmem:[#allocation3 + $0x58] sm:$0xff] %vm481, %v1119
      %1152 = vst.msk [vmem:[#allocation3 + $0x60] sm:$0xff] %vm481, %v1120
      %1153 = vst.msk [vmem:[#allocation3 + $0x68] sm:$0xff] %vm481, %v1121
      %1154 = vst.msk [vmem:[#allocation3 + $0x70] sm:$0xff] %vm481, %v1122
      %1155 = vst.msk [vmem:[#allocation3 + $0x78] sm:$0xff] %vm481, %v1123
      %1156 = vst.msk [vmem:[#allocation3 + $0x80] sm:$0xff] %vm481, %v1124
      %1157 = vst.msk [vmem:[#allocation3 + $0x88] sm:$0xff] %vm481, %v1125
      %1158 = vst.msk [vmem:[#allocation3 + $0x90] sm:$0xff] %vm481, %v1126
      %1159 = vst.msk [vmem:[#allocation3 + $0x98] sm:$0xff] %vm481, %v1127
      %1160 = vst.msk [vmem:[#allocation3 + $0xa0] sm:$0xff] %vm481, %v1128
      %1161 = vst.msk [vmem:[#allocation3 + $0xa8] sm:$0xff] %vm481, %v1129
      %1162 = vst.msk [vmem:[#allocation3 + $0xb0] sm:$0xff] %vm481, %v1130
      %1163 = vst.msk [vmem:[#allocation3 + $0xb8] sm:$0xff] %vm481, %v1131
      %1164 = vst.msk [vmem:[#allocation3 + $0xc0] sm:$0xff] %vm481, %v1132
      %1165 = vst.msk [vmem:[#allocation3 + $0xc8] sm:$0xff] %vm481, %v1133
      %1166 = vst.msk [vmem:[#allocation3 + $0xd0] sm:$0xff] %vm481, %v1134
      %1167 = vst.msk [vmem:[#allocation3 + $0xd8] sm:$0xff] %vm481, %v1135
      %1168 = vst.msk [vmem:[#allocation3 + $0xe0] sm:$0xff] %vm481, %v1136
      %1169 = vst.msk [vmem:[#allocation3 + $0xe8] sm:$0xff] %vm481, %v1137
      %1170 = vst.msk [vmem:[#allocation3 + $0xf0] sm:$0xff] %vm481, %v1138
      %1171 = vst.msk [vmem:[#allocation3 + $0xf8] sm:$0xff] %vm481, %v1139
      %v1172 = vld [vmem:[#allocation2 + $0x2] sm:$0xff]
      %v1173 = vld [vmem:[#allocation2 + $0xa] sm:$0xff]
      %v1174 = vld [vmem:[#allocation2 + $0x1a] sm:$0xff]
      %v1175 = vld [vmem:[#allocation2 + $0x22] sm:$0xff]
      %v1176 = vld [vmem:[#allocation2 + $0x32] sm:$0xff]
      %v1177 = vld [vmem:[#allocation2 + $0x3a] sm:$0xff]
      %v1178 = vld [vmem:[#allocation2 + $0x4a] sm:$0xff]
      %v1179 = vld [vmem:[#allocation2 + $0x52] sm:$0xff]
      %v1180 = vld [vmem:[#allocation2 + $0x62] sm:$0xff]
      %v1181 = vld [vmem:[#allocation2 + $0x6a] sm:$0xff]
      %v1182 = vld [vmem:[#allocation2 + $0x7a] sm:$0xff]
      %v1183 = vld [vmem:[#allocation2 + $0x82] sm:$0xff]
      %v1184 = vld [vmem:[#allocation2 + $0x92] sm:$0xff]
      %v1185 = vld [vmem:[#allocation2 + $0x9a] sm:$0xff]
      %v1186 = vld [vmem:[#allocation2 + $0xaa] sm:$0xff]
      %v1187 = vld [vmem:[#allocation2 + $0xb2] sm:$0xff]
      %v1188 = vld [vmem:[#allocation2 + $0xc2] sm:$0xff]
      %v1189 = vld [vmem:[#allocation2 + $0xca] sm:$0xff]
      %v1190 = vld [vmem:[#allocation2 + $0xda] sm:$0xff]
      %v1191 = vld [vmem:[#allocation2 + $0xe2] sm:$0xff]
      %v1192 = vld [vmem:[#allocation2 + $0xf2] sm:$0xff]
      %v1193 = vld [vmem:[#allocation2 + $0xfa] sm:$0xff]
      %v1194 = vld [vmem:[#allocation2 + $0x10a] sm:$0xff]
      %v1195 = vld [vmem:[#allocation2 + $0x112] sm:$0xff]
      %v1196 = vld [vmem:[#allocation2 + $0x122] sm:$0xff]
      %v1197 = vld [vmem:[#allocation2 + $0x12a] sm:$0xff]
      %v1198 = vld [vmem:[#allocation2 + $0x13a] sm:$0xff]
      %v1199 = vld [vmem:[#allocation2 + $0x142] sm:$0xff]
      %v1200 = vld [vmem:[#allocation2 + $0x152] sm:$0xff]
      %v1201 = vld [vmem:[#allocation2 + $0x15a] sm:$0xff]
      %v1202 = vld [vmem:[#allocation2 + $0x16a] sm:$0xff]
      %v1203 = vld [vmem:[#allocation2 + $0x172] sm:$0xff]
      %v1204 = vpack.c.bf16 %v1173, %v1172
      %v1205 = vpack.c.bf16 %v1175, %v1174
      %v1206 = vpack.c.bf16 %v1177, %v1176
      %v1207 = vpack.c.bf16 %v1179, %v1178
      %v1208 = vpack.c.bf16 %v1181, %v1180
      %v1209 = vpack.c.bf16 %v1183, %v1182
      %v1210 = vpack.c.bf16 %v1185, %v1184
      %v1211 = vpack.c.bf16 %v1187, %v1186
      %v1212 = vpack.c.bf16 %v1189, %v1188
      %v1213 = vpack.c.bf16 %v1191, %v1190
      %v1214 = vpack.c.bf16 %v1193, %v1192
      %v1215 = vpack.c.bf16 %v1195, %v1194
      %v1216 = vpack.c.bf16 %v1197, %v1196
      %v1217 = vpack.c.bf16 %v1199, %v1198
      %v1218 = vpack.c.bf16 %v1201, %v1200
      %v1219 = vpack.c.bf16 %v1203, %v1202
      %v1221 = vsel %vm481, %v1204, 0
      %v1224 = vsel %vm481, %v1205, 0
      %v1227 = vsel %vm481, %v1206, 0
      %v1230 = vsel %vm481, %v1207, 0
      %v1233 = vsel %vm481, %v1208, 0
      %v1236 = vsel %vm481, %v1209, 0
      %v1239 = vsel %vm481, %v1210, 0
      %v1242 = vsel %vm481, %v1211, 0
      %v1245 = vsel %vm481, %v1212, 0
      %v1248 = vsel %vm481, %v1213, 0
      %v1251 = vsel %vm481, %v1214, 0
      %v1254 = vsel %vm481, %v1215, 0
      %v1257 = vsel %vm481, %v1216, 0
      %v1260 = vsel %vm481, %v1217, 0
      %v1263 = vsel %vm481, %v1218, 0
      %v1266 = vsel %vm481, %v1219, 0
      %v1269 = vsel %vm619, %v516, 0
      %1271 = vmatprep.subr.bf16.mxu0 0
      %1272 = vmatpush1.bf16.msra.mxu0 %v1269
      %1273 = vmatprep.subr.bf16.mxu0 0
      %1274 = vmatpush1.bf16.msra.mxu0 0
      %1275 = vmatprep.subr.bf16.mxu0 0
      %1276 = vmatpush1.bf16.msra.mxu0 0
      %1277 = vmatprep.subr.bf16.mxu0 0
      %1278 = vmatpush1.bf16.msra.mxu0 0
      %1279 = vmatprep.subr.bf16.mxu0 0
      %1280 = vmatpush1.bf16.msra.mxu0 0
      %1281 = vmatprep.subr.bf16.mxu0 0
      %1282 = vmatpush1.bf16.msra.mxu0 0
      %1283 = vmatprep.subr.bf16.mxu0 0
      %1284 = vmatpush1.bf16.msra.mxu0 0
      %1285 = vmatprep.subr.bf16.mxu0 0
      %1286 = vmatpush1.bf16.msra.mxu0 0
      %1287 = vmatprep.subr.bf16.mxu0 0
      %1288 = vmatpush1.bf16.msra.mxu0 0
      %1289 = vmatprep.subr.bf16.mxu0 0
      %1290 = vmatpush1.bf16.msra.mxu0 0
      %1291 = vmatprep.subr.bf16.mxu0 0
      %1292 = vmatpush1.bf16.msra.mxu0 0
      %1293 = vmatprep.subr.bf16.mxu0 0
      %1294 = vmatpush1.bf16.msra.mxu0 0
      %1295 = vmatprep.subr.bf16.mxu0 0
      %1296 = vmatpush1.bf16.msra.mxu0 0
      %1297 = vmatprep.subr.bf16.mxu0 0
      %1298 = vmatpush1.bf16.msra.mxu0 0
      %1299 = vmatprep.subr.bf16.mxu0 0
      %1300 = vmatpush1.bf16.msra.mxu0 0
      %1301 = vmatprep.subr.bf16.mxu0 0
      %1302 = vmatpush1.bf16.msra.mxu0 0
      %1303 = vmatprep.mubr.bf16.mxu0 0
      %1304 = vmatmul.mubr.bf16.gmra.mrb[0].mxu0 %v1221
      %v1305 = vpop.f32.mrb[0].mxu0
      %v1306 = vadd.f32 0.0, %v1305
      %v1307 = vpop.f32.mrb[0].mxu0
      %v1308 = vpop.f32.mrb[0].mxu0
      %v1309 = vadd.f32 0.0, %v1308
      %v1310 = vpop.f32.mrb[0].mxu0
      %1311 = vmatprep.mubr.bf16.mxu0 0
      %1312 = vmatmul.mubr.bf16.gmra.mrb[0].mxu0 %v1224
      %v1313 = vpop.f32.mrb[0].mxu0
      %v1314 = vadd.f32 0.0, %v1313
      %v1315 = vpop.f32.mrb[0].mxu0
      %v1316 = vpop.f32.mrb[0].mxu0
      %v1317 = vadd.f32 0.0, %v1316
      %v1318 = vpop.f32.mrb[0].mxu0
      %1319 = vmatprep.mubr.bf16.mxu0 0
      %1320 = vmatmul.mubr.bf16.gmra.mrb[0].mxu0 %v1227
      %v1321 = vpop.f32.mrb[0].mxu0
      %v1322 = vadd.f32 0.0, %v1321
      %v1323 = vpop.f32.mrb[0].mxu0
      %v1324 = vpop.f32.mrb[0].mxu0
      %v1325 = vadd.f32 0.0, %v1324
      %v1326 = vpop.f32.mrb[0].mxu0
      %1327 = vmatprep.mubr.bf16.mxu0 0
      %1328 = vmatmul.mubr.bf16.gmra.mrb[0].mxu0 %v1230
      %v1329 = vpop.f32.mrb[0].mxu0
      %v1330 = vadd.f32 0.0, %v1329
      %v1331 = vpop.f32.mrb[0].mxu0
      %v1332 = vpop.f32.mrb[0].mxu0
      %v1333 = vadd.f32 0.0, %v1332
      %v1334 = vpop.f32.mrb[0].mxu0
      %1335 = vmatprep.mubr.bf16.mxu0 0
      %1336 = vmatmul.mubr.bf16.gmra.mrb[0].mxu0 %v1233
      %v1337 = vpop.f32.mrb[0].mxu0
      %v1338 = vadd.f32 0.0, %v1337
      %v1339 = vpop.f32.mrb[0].mxu0
      %v1340 = vpop.f32.mrb[0].mxu0
      %v1341 = vadd.f32 0.0, %v1340
      %v1342 = vpop.f32.mrb[0].mxu0
      %1343 = vmatprep.mubr.bf16.mxu0 0
      %1344 = vmatmul.mubr.bf16.gmra.mrb[0].mxu0 %v1236
      %v1345 = vpop.f32.mrb[0].mxu0
      %v1346 = vadd.f32 0.0, %v1345
      %v1347 = vpop.f32.mrb[0].mxu0
      %v1348 = vpop.f32.mrb[0].mxu0
      %v1349 = vadd.f32 0.0, %v1348
      %v1350 = vpop.f32.mrb[0].mxu0
      %1351 = vmatprep.mubr.bf16.mxu0 0
      %1352 = vmatmul.mubr.bf16.gmra.mrb[0].mxu0 %v1239
      %v1353 = vpop.f32.mrb[0].mxu0
      %v1354 = vadd.f32 0.0, %v1353
      %v1355 = vpop.f32.mrb[0].mxu0
      %v1356 = vpop.f32.mrb[0].mxu0
      %v1357 = vadd.f32 0.0, %v1356
      %v1358 = vpop.f32.mrb[0].mxu0
      %1359 = vmatprep.mubr.bf16.mxu0 0
      %1360 = vmatmul.mubr.bf16.gmra.mrb[0].mxu0 %v1242
      %v1361 = vpop.f32.mrb[0].mxu0
      %v1362 = vadd.f32 0.0, %v1361
      %v1363 = vpop.f32.mrb[0].mxu0
      %v1364 = vpop.f32.mrb[0].mxu0
      %v1365 = vadd.f32 0.0, %v1364
      %v1366 = vpop.f32.mrb[0].mxu0
      %1367 = vmatprep.mubr.bf16.mxu0 0
      %1368 = vmatmul.mubr.bf16.gmra.mrb[0].mxu0 %v1245
      %v1369 = vpop.f32.mrb[0].mxu0
      %v1370 = vadd.f32 0.0, %v1369
      %v1371 = vpop.f32.mrb[0].mxu0
      %v1372 = vpop.f32.mrb[0].mxu0
      %v1373 = vadd.f32 0.0, %v1372
      %v1374 = vpop.f32.mrb[0].mxu0
      %1375 = vmatprep.mubr.bf16.mxu0 0
      %1376 = vmatmul.mubr.bf16.gmra.mrb[0].mxu0 %v1248
      %v1377 = vpop.f32.mrb[0].mxu0
      %v1378 = vadd.f32 0.0, %v1377
      %v1379 = vpop.f32.mrb[0].mxu0
      %v1380 = vpop.f32.mrb[0].mxu0
      %v1381 = vadd.f32 0.0, %v1380
      %v1382 = vpop.f32.mrb[0].mxu0
      %1383 = vmatprep.mubr.bf16.mxu0 0
      %1384 = vmatmul.mubr.bf16.gmra.mrb[0].mxu0 %v1251
      %v1385 = vpop.f32.mrb[0].mxu0
      %v1386 = vadd.f32 0.0, %v1385
      %v1387 = vpop.f32.mrb[0].mxu0
      %v1388 = vpop.f32.mrb[0].mxu0
      %v1389 = vadd.f32 0.0, %v1388
      %v1390 = vpop.f32.mrb[0].mxu0
      %1391 = vmatprep.mubr.bf16.mxu0 0
      %1392 = vmatmul.mubr.bf16.gmra.mrb[0].mxu0 %v1254
      %v1393 = vpop.f32.mrb[0].mxu0
      %v1394 = vadd.f32 0.0, %v1393
      %v1395 = vpop.f32.mrb[0].mxu0
      %v1396 = vpop.f32.mrb[0].mxu0
      %v1397 = vadd.f32 0.0, %v1396
      %v1398 = vpop.f32.mrb[0].mxu0
      %1399 = vmatprep.mubr.bf16.mxu0 0
      %1400 = vmatmul.mubr.bf16.gmra.mrb[0].mxu0 %v1257
      %v1401 = vpop.f32.mrb[0].mxu0
      %v1402 = vadd.f32 0.0, %v1401
      %v1403 = vpop.f32.mrb[0].mxu0
      %v1404 = vpop.f32.mrb[0].mxu0
      %v1405 = vadd.f32 0.0, %v1404
      %v1406 = vpop.f32.mrb[0].mxu0
      %1407 = vmatprep.mubr.bf16.mxu0 0
      %1408 = vmatmul.mubr.bf16.gmra.mrb[0].mxu0 %v1260
      %v1409 = vpop.f32.mrb[0].mxu0
      %v1410 = vadd.f32 0.0, %v1409
      %v1411 = vpop.f32.mrb[0].mxu0
      %v1412 = vpop.f32.mrb[0].mxu0
      %v1413 = vadd.f32 0.0, %v1412
      %v1414 = vpop.f32.mrb[0].mxu0
      %1415 = vmatprep.mubr.bf16.mxu0 0
      %1416 = vmatmul.mubr.bf16.gmra.mrb[0].mxu0 %v1263
      %v1417 = vpop.f32.mrb[0].mxu0
      %v1418 = vadd.f32 0.0, %v1417
      %v1419 = vpop.f32.mrb[0].mxu0
      %v1420 = vpop.f32.mrb[0].mxu0
      %v1421 = vadd.f32 0.0, %v1420
      %v1422 = vpop.f32.mrb[0].mxu0
      %1423 = vmatprep.mubr.bf16.mxu0 0
      %1424 = vmatmul.mubr.bf16.gmra.mrb[0].mxu0 %v1266
      %v1425 = vpop.f32.mrb[0].mxu0
      %v1426 = vadd.f32 0.0, %v1425
      %v1427 = vpop.f32.mrb[0].mxu0
      %v1428 = vpop.f32.mrb[0].mxu0
      %v1429 = vadd.f32 0.0, %v1428
      %v1430 = vpop.f32.mrb[0].mxu0
      %1431 = vdwg.mxu0
      %v1432 = vld [vmem:[#allocation3] sm:$0xff]
      %v1433 = vld [vmem:[#allocation3 + $0x8] sm:$0xff]
      %v1434 = vld [vmem:[#allocation3 + $0x10] sm:$0xff]
      %v1435 = vld [vmem:[#allocation3 + $0x18] sm:$0xff]
      %v1436 = vld [vmem:[#allocation3 + $0x20] sm:$0xff]
      %v1437 = vld [vmem:[#allocation3 + $0x28] sm:$0xff]
      %v1438 = vld [vmem:[#allocation3 + $0x30] sm:$0xff]
      %v1439 = vld [vmem:[#allocation3 + $0x38] sm:$0xff]
      %v1440 = vld [vmem:[#allocation3 + $0x40] sm:$0xff]
      %v1441 = vld [vmem:[#allocation3 + $0x48] sm:$0xff]
      %v1442 = vld [vmem:[#allocation3 + $0x50] sm:$0xff]
      %v1443 = vld [vmem:[#allocation3 + $0x58] sm:$0xff]
      %v1444 = vld [vmem:[#allocation3 + $0x60] sm:$0xff]
      %v1445 = vld [vmem:[#allocation3 + $0x68] sm:$0xff]
      %v1446 = vld [vmem:[#allocation3 + $0x70] sm:$0xff]
      %v1447 = vld [vmem:[#allocation3 + $0x78] sm:$0xff]
      %v1448 = vld [vmem:[#allocation3 + $0x80] sm:$0xff]
      %v1449 = vld [vmem:[#allocation3 + $0x88] sm:$0xff]
      %v1450 = vld [vmem:[#allocation3 + $0x90] sm:$0xff]
      %v1451 = vld [vmem:[#allocation3 + $0x98] sm:$0xff]
      %v1452 = vld [vmem:[#allocation3 + $0xa0] sm:$0xff]
      %v1453 = vld [vmem:[#allocation3 + $0xa8] sm:$0xff]
      %v1454 = vld [vmem:[#allocation3 + $0xb0] sm:$0xff]
      %v1455 = vld [vmem:[#allocation3 + $0xb8] sm:$0xff]
      %v1456 = vld [vmem:[#allocation3 + $0xc0] sm:$0xff]
      %v1457 = vld [vmem:[#allocation3 + $0xc8] sm:$0xff]
      %v1458 = vld [vmem:[#allocation3 + $0xd0] sm:$0xff]
      %v1459 = vld [vmem:[#allocation3 + $0xd8] sm:$0xff]
      %v1460 = vld [vmem:[#allocation3 + $0xe0] sm:$0xff]
      %v1461 = vld [vmem:[#allocation3 + $0xe8] sm:$0xff]
      %v1462 = vld [vmem:[#allocation3 + $0xf0] sm:$0xff]
      %v1463 = vld [vmem:[#allocation3 + $0xf8] sm:$0xff]
      %v1464 = vadd.f32 %v1432, %v1306
      %v1465 = vadd.f32 %v1433, %v1309
      %v1466 = vadd.f32 %v1434, %v1314
      %v1467 = vadd.f32 %v1435, %v1317
      %v1468 = vadd.f32 %v1436, %v1322
      %v1469 = vadd.f32 %v1437, %v1325
      %v1470 = vadd.f32 %v1438, %v1330
      %v1471 = vadd.f32 %v1439, %v1333
      %v1472 = vadd.f32 %v1440, %v1338
      %v1473 = vadd.f32 %v1441, %v1341
      %v1474 = vadd.f32 %v1442, %v1346
      %v1475 = vadd.f32 %v1443, %v1349
      %v1476 = vadd.f32 %v1444, %v1354
      %v1477 = vadd.f32 %v1445, %v1357
      %v1478 = vadd.f32 %v1446, %v1362
      %v1479 = vadd.f32 %v1447, %v1365
      %v1480 = vadd.f32 %v1448, %v1370
      %v1481 = vadd.f32 %v1449, %v1373
      %v1482 = vadd.f32 %v1450, %v1378
      %v1483 = vadd.f32 %v1451, %v1381
      %v1484 = vadd.f32 %v1452, %v1386
      %v1485 = vadd.f32 %v1453, %v1389
      %v1486 = vadd.f32 %v1454, %v1394
      %v1487 = vadd.f32 %v1455, %v1397
      %v1488 = vadd.f32 %v1456, %v1402
      %v1489 = vadd.f32 %v1457, %v1405
      %v1490 = vadd.f32 %v1458, %v1410
      %v1491 = vadd.f32 %v1459, %v1413
      %v1492 = vadd.f32 %v1460, %v1418
      %v1493 = vadd.f32 %v1461, %v1421
      %v1494 = vadd.f32 %v1462, %v1426
      %v1495 = vadd.f32 %v1463, %v1429
      %1496 = vst.msk [vmem:[#allocation3] sm:$0xff] %vm481, %v1464
      %1497 = vst.msk [vmem:[#allocation3 + $0x8] sm:$0xff] %vm481, %v1465
      %1498 = vst.msk [vmem:[#allocation3 + $0x10] sm:$0xff] %vm481, %v1466
      %1499 = vst.msk [vmem:[#allocation3 + $0x18] sm:$0xff] %vm481, %v1467
      %1500 = vst.msk [vmem:[#allocation3 + $0x20] sm:$0xff] %vm481, %v1468
      %1501 = vst.msk [vmem:[#allocation3 + $0x28] sm:$0xff] %vm481, %v1469
      %1502 = vst.msk [vmem:[#allocation3 + $0x30] sm:$0xff] %vm481, %v1470
      %1503 = vst.msk [vmem:[#allocation3 + $0x38] sm:$0xff] %vm481, %v1471
      %1504 = vst.msk [vmem:[#allocation3 + $0x40] sm:$0xff] %vm481, %v1472
      %1505 = vst.msk [vmem:[#allocation3 + $0x48] sm:$0xff] %vm481, %v1473
      %1506 = vst.msk [vmem:[#allocation3 + $0x50] sm:$0xff] %vm481, %v1474
      %1507 = vst.msk [vmem:[#allocation3 + $0x58] sm:$0xff] %vm481, %v1475
      %1508 = vst.msk [vmem:[#allocation3 + $0x60] sm:$0xff] %vm481, %v1476
      %1509 = vst.msk [vmem:[#allocation3 + $0x68] sm:$0xff] %vm481, %v1477
      %1510 = vst.msk [vmem:[#allocation3 + $0x70] sm:$0xff] %vm481, %v1478
      %1511 = vst.msk [vmem:[#allocation3 + $0x78] sm:$0xff] %vm481, %v1479
      %1512 = vst.msk [vmem:[#allocation3 + $0x80] sm:$0xff] %vm481, %v1480
      %1513 = vst.msk [vmem:[#allocation3 + $0x88] sm:$0xff] %vm481, %v1481
      %1514 = vst.msk [vmem:[#allocation3 + $0x90] sm:$0xff] %vm481, %v1482
      %1515 = vst.msk [vmem:[#allocation3 + $0x98] sm:$0xff] %vm481, %v1483
      %1516 = vst.msk [vmem:[#allocation3 + $0xa0] sm:$0xff] %vm481, %v1484
      %1517 = vst.msk [vmem:[#allocation3 + $0xa8] sm:$0xff] %vm481, %v1485
      %1518 = vst.msk [vmem:[#allocation3 + $0xb0] sm:$0xff] %vm481, %v1486
      %1519 = vst.msk [vmem:[#allocation3 + $0xb8] sm:$0xff] %vm481, %v1487
      %1520 = vst.msk [vmem:[#allocation3 + $0xc0] sm:$0xff] %vm481, %v1488
      %1521 = vst.msk [vmem:[#allocation3 + $0xc8] sm:$0xff] %vm481, %v1489
      %1522 = vst.msk [vmem:[#allocation3 + $0xd0] sm:$0xff] %vm481, %v1490
      %1523 = vst.msk [vmem:[#allocation3 + $0xd8] sm:$0xff] %vm481, %v1491
      %1524 = vst.msk [vmem:[#allocation3 + $0xe0] sm:$0xff] %vm481, %v1492
      %1525 = vst.msk [vmem:[#allocation3 + $0xe8] sm:$0xff] %vm481, %v1493
      %1526 = vst.msk [vmem:[#allocation3 + $0xf0] sm:$0xff] %vm481, %v1494
      %1527 = vst.msk [vmem:[#allocation3 + $0xf8] sm:$0xff] %vm481, %v1495
      %v1528 = vld [vmem:[%s480] sm:$0xff]
      %v1529 = vld [vmem:[%s480 + $0x8] sm:$0xff]
      %v1530 = vld [vmem:[%s480 + $0x18] sm:$0xff]
      %v1531 = vld [vmem:[%s480 + $0x20] sm:$0xff]
      %v1532 = vld [vmem:[%s480 + $0x30] sm:$0xff]
      %v1533 = vld [vmem:[%s480 + $0x38] sm:$0xff]
      %v1534 = vld [vmem:[%s480 + $0x48] sm:$0xff]
      %v1535 = vld [vmem:[%s480 + $0x50] sm:$0xff]
      %v1536 = vld [vmem:[%s480 + $0x60] sm:$0xff]
      %v1537 = vld [vmem:[%s480 + $0x68] sm:$0xff]
      %v1538 = vld [vmem:[%s480 + $0x78] sm:$0xff]
      %v1539 = vld [vmem:[%s480 + $0x80] sm:$0xff]
      %v1540 = vld [vmem:[%s480 + $0x90] sm:$0xff]
      %v1541 = vld [vmem:[%s480 + $0x98] sm:$0xff]
      %v1542 = vld [vmem:[%s480 + $0xa8] sm:$0xff]
      %v1543 = vld [vmem:[%s480 + $0xb0] sm:$0xff]
      %v1544 = vld [vmem:[%s480 + $0xc0] sm:$0xff]
      %v1545 = vld [vmem:[%s480 + $0xc8] sm:$0xff]
      %v1546 = vld [vmem:[%s480 + $0xd8] sm:$0xff]
      %v1547 = vld [vmem:[%s480 + $0xe0] sm:$0xff]
      %v1548 = vld [vmem:[%s480 + $0xf0] sm:$0xff]
      %v1549 = vld [vmem:[%s480 + $0xf8] sm:$0xff]
      %v1550 = vld [vmem:[%s480 + $0x108] sm:$0xff]
      %v1551 = vld [vmem:[%s480 + $0x110] sm:$0xff]
      %v1552 = vld [vmem:[%s480 + $0x120] sm:$0xff]
      %v1553 = vld [vmem:[%s480 + $0x128] sm:$0xff]
      %v1554 = vld [vmem:[%s480 + $0x138] sm:$0xff]
      %v1555 = vld [vmem:[%s480 + $0x140] sm:$0xff]
      %v1556 = vld [vmem:[%s480 + $0x150] sm:$0xff]
      %v1557 = vld [vmem:[%s480 + $0x158] sm:$0xff]
      %v1558 = vld [vmem:[%s480 + $0x168] sm:$0xff]
      %v1559 = vld [vmem:[%s480 + $0x170] sm:$0xff]
      %v1560 = vpack.c.bf16 %v1529, %v1528
      %v1561 = vpack.c.bf16 %v1531, %v1530
      %v1562 = vpack.c.bf16 %v1533, %v1532
      %v1563 = vpack.c.bf16 %v1535, %v1534
      %v1564 = vpack.c.bf16 %v1537, %v1536
      %v1565 = vpack.c.bf16 %v1539, %v1538
      %v1566 = vpack.c.bf16 %v1541, %v1540
      %v1567 = vpack.c.bf16 %v1543, %v1542
      %v1568 = vpack.c.bf16 %v1545, %v1544
      %v1569 = vpack.c.bf16 %v1547, %v1546
      %v1570 = vpack.c.bf16 %v1549, %v1548
      %v1571 = vpack.c.bf16 %v1551, %v1550
      %v1572 = vpack.c.bf16 %v1553, %v1552
      %v1573 = vpack.c.bf16 %v1555, %v1554
      %v1574 = vpack.c.bf16 %v1557, %v1556
      %v1575 = vpack.c.bf16 %v1559, %v1558
      %v1577 = vsel %vm481, %v1560, 0
      %v1580 = vsel %vm481, %v1561, 0
      %v1583 = vsel %vm481, %v1562, 0
      %v1586 = vsel %vm481, %v1563, 0
      %v1589 = vsel %vm481, %v1564, 0
      %v1592 = vsel %vm481, %v1565, 0
      %v1595 = vsel %vm481, %v1566, 0
      %v1598 = vsel %vm481, %v1567, 0
      %v1601 = vsel %vm481, %v1568, 0
      %v1604 = vsel %vm481, %v1569, 0
      %v1607 = vsel %vm481, %v1570, 0
      %v1610 = vsel %vm481, %v1571, 0
      %v1613 = vsel %vm481, %v1572, 0
      %v1616 = vsel %vm481, %v1573, 0
      %v1619 = vsel %vm481, %v1574, 0
      %v1622 = vsel %vm481, %v1575, 0
      %v1625 = vsel %vm619, %v517, 0
      %1627 = vmatprep.subr.bf16.mxu0 0
      %1628 = vmatpush1.bf16.msra.mxu0 %v1625
      %1629 = vmatprep.subr.bf16.mxu0 0
      %1630 = vmatpush1.bf16.msra.mxu0 0
      %1631 = vmatprep.subr.bf16.mxu0 0
      %1632 = vmatpush1.bf16.msra.mxu0 0
      %1633 = vmatprep.subr.bf16.mxu0 0
      %1634 = vmatpush1.bf16.msra.mxu0 0
      %1635 = vmatprep.subr.bf16.mxu0 0
      %1636 = vmatpush1.bf16.msra.mxu0 0
      %1637 = vmatprep.subr.bf16.mxu0 0
      %1638 = vmatpush1.bf16.msra.mxu0 0
      %1639 = vmatprep.subr.bf16.mxu0 0
      %1640 = vmatpush1.bf16.msra.mxu0 0
      %1641 = vmatprep.subr.bf16.mxu0 0
      %1642 = vmatpush1.bf16.msra.mxu0 0
      %1643 = vmatprep.subr.bf16.mxu0 0
      %1644 = vmatpush1.bf16.msra.mxu0 0
      %1645 = vmatprep.subr.bf16.mxu0 0
      %1646 = vmatpush1.bf16.msra.mxu0 0
      %1647 = vmatprep.subr.bf16.mxu0 0
      %1648 = vmatpush1.bf16.msra.mxu0 0
      %1649 = vmatprep.subr.bf16.mxu0 0
      %1650 = vmatpush1.bf16.msra.mxu0 0
      %1651 = vmatprep.subr.bf16.mxu0 0
      %1652 = vmatpush1.bf16.msra.mxu0 0
      %1653 = vmatprep.subr.bf16.mxu0 0
      %1654 = vmatpush1.bf16.msra.mxu0 0
      %1655 = vmatprep.subr.bf16.mxu0 0
      %1656 = vmatpush1.bf16.msra.mxu0 0
      %1657 = vmatprep.subr.bf16.mxu0 0
      %1658 = vmatpush1.bf16.msra.mxu0 0
      %1659 = vmatprep.mubr.bf16.mxu0 0
      %1660 = vmatmul.mubr.bf16.gmra.mrb[0].mxu0 %v1577
      %v1661 = vpop.f32.mrb[0].mxu0
      %v1662 = vadd.f32 0.0, %v1661
      %v1663 = vpop.f32.mrb[0].mxu0
      %v1664 = vpop.f32.mrb[0].mxu0
      %v1665 = vadd.f32 0.0, %v1664
      %v1666 = vpop.f32.mrb[0].mxu0
      %1667 = vmatprep.mubr.bf16.mxu0 0
      %1668 = vmatmul.mubr.bf16.gmra.mrb[0].mxu0 %v1580
      %v1669 = vpop.f32.mrb[0].mxu0
      %v1670 = vadd.f32 0.0, %v1669
      %v1671 = vpop.f32.mrb[0].mxu0
      %v1672 = vpop.f32.mrb[0].mxu0
      %v1673 = vadd.f32 0.0, %v1672
      %v1674 = vpop.f32.mrb[0].mxu0
      %1675 = vmatprep.mubr.bf16.mxu0 0
      %1676 = vmatmul.mubr.bf16.gmra.mrb[0].mxu0 %v1583
      %v1677 = vpop.f32.mrb[0].mxu0
      %v1678 = vadd.f32 0.0, %v1677
      %v1679 = vpop.f32.mrb[0].mxu0
      %v1680 = vpop.f32.mrb[0].mxu0
      %v1681 = vadd.f32 0.0, %v1680
      %v1682 = vpop.f32.mrb[0].mxu0
      %1683 = vmatprep.mubr.bf16.mxu0 0
      %1684 = vmatmul.mubr.bf16.gmra.mrb[0].mxu0 %v1586
      %v1685 = vpop.f32.mrb[0].mxu0
      %v1686 = vadd.f32 0.0, %v1685
      %v1687 = vpop.f32.mrb[0].mxu0
      %v1688 = vpop.f32.mrb[0].mxu0
      %v1689 = vadd.f32 0.0, %v1688
      %v1690 = vpop.f32.mrb[0].mxu0
      %1691 = vmatprep.mubr.bf16.mxu0 0
      %1692 = vmatmul.mubr.bf16.gmra.mrb[0].mxu0 %v1589
      %v1693 = vpop.f32.mrb[0].mxu0
      %v1694 = vadd.f32 0.0, %v1693
      %v1695 = vpop.f32.mrb[0].mxu0
      %v1696 = vpop.f32.mrb[0].mxu0
      %v1697 = vadd.f32 0.0, %v1696
      %v1698 = vpop.f32.mrb[0].mxu0
      %1699 = vmatprep.mubr.bf16.mxu0 0
      %1700 = vmatmul.mubr.bf16.gmra.mrb[0].mxu0 %v1592
      %v1701 = vpop.f32.mrb[0].mxu0
      %v1702 = vadd.f32 0.0, %v1701
      %v1703 = vpop.f32.mrb[0].mxu0
      %v1704 = vpop.f32.mrb[0].mxu0
      %v1705 = vadd.f32 0.0, %v1704
      %v1706 = vpop.f32.mrb[0].mxu0
      %1707 = vmatprep.mubr.bf16.mxu0 0
      %1708 = vmatmul.mubr.bf16.gmra.mrb[0].mxu0 %v1595
      %v1709 = vpop.f32.mrb[0].mxu0
      %v1710 = vadd.f32 0.0, %v1709
      %v1711 = vpop.f32.mrb[0].mxu0
      %v1712 = vpop.f32.mrb[0].mxu0
      %v1713 = vadd.f32 0.0, %v1712
      %v1714 = vpop.f32.mrb[0].mxu0
      %1715 = vmatprep.mubr.bf16.mxu0 0
      %1716 = vmatmul.mubr.bf16.gmra.mrb[0].mxu0 %v1598
      %v1717 = vpop.f32.mrb[0].mxu0
      %v1718 = vadd.f32 0.0, %v1717
      %v1719 = vpop.f32.mrb[0].mxu0
      %v1720 = vpop.f32.mrb[0].mxu0
      %v1721 = vadd.f32 0.0, %v1720
      %v1722 = vpop.f32.mrb[0].mxu0
      %1723 = vmatprep.mubr.bf16.mxu0 0
      %1724 = vmatmul.mubr.bf16.gmra.mrb[0].mxu0 %v1601
      %v1725 = vpop.f32.mrb[0].mxu0
      %v1726 = vadd.f32 0.0, %v1725
      %v1727 = vpop.f32.mrb[0].mxu0
      %v1728 = vpop.f32.mrb[0].mxu0
      %v1729 = vadd.f32 0.0, %v1728
      %v1730 = vpop.f32.mrb[0].mxu0
      %1731 = vmatprep.mubr.bf16.mxu0 0
      %1732 = vmatmul.mubr.bf16.gmra.mrb[0].mxu0 %v1604
      %v1733 = vpop.f32.mrb[0].mxu0
      %v1734 = vadd.f32 0.0, %v1733
      %v1735 = vpop.f32.mrb[0].mxu0
      %v1736 = vpop.f32.mrb[0].mxu0
      %v1737 = vadd.f32 0.0, %v1736
      %v1738 = vpop.f32.mrb[0].mxu0
      %1739 = vmatprep.mubr.bf16.mxu0 0
      %1740 = vmatmul.mubr.bf16.gmra.mrb[0].mxu0 %v1607
      %v1741 = vpop.f32.mrb[0].mxu0
      %v1742 = vadd.f32 0.0, %v1741
      %v1743 = vpop.f32.mrb[0].mxu0
      %v1744 = vpop.f32.mrb[0].mxu0
      %v1745 = vadd.f32 0.0, %v1744
      %v1746 = vpop.f32.mrb[0].mxu0
      %1747 = vmatprep.mubr.bf16.mxu0 0
      %1748 = vmatmul.mubr.bf16.gmra.mrb[0].mxu0 %v1610
      %v1749 = vpop.f32.mrb[0].mxu0
      %v1750 = vadd.f32 0.0, %v1749
      %v1751 = vpop.f32.mrb[0].mxu0
      %v1752 = vpop.f32.mrb[0].mxu0
      %v1753 = vadd.f32 0.0, %v1752
      %v1754 = vpop.f32.mrb[0].mxu0
      %1755 = vmatprep.mubr.bf16.mxu0 0
      %1756 = vmatmul.mubr.bf16.gmra.mrb[0].mxu0 %v1613
      %v1757 = vpop.f32.mrb[0].mxu0
      %v1758 = vadd.f32 0.0, %v1757
      %v1759 = vpop.f32.mrb[0].mxu0
      %v1760 = vpop.f32.mrb[0].mxu0
      %v1761 = vadd.f32 0.0, %v1760
      %v1762 = vpop.f32.mrb[0].mxu0
      %1763 = vmatprep.mubr.bf16.mxu0 0
      %1764 = vmatmul.mubr.bf16.gmra.mrb[0].mxu0 %v1616
      %v1765 = vpop.f32.mrb[0].mxu0
      %v1766 = vadd.f32 0.0, %v1765
      %v1767 = vpop.f32.mrb[0].mxu0
      %v1768 = vpop.f32.mrb[0].mxu0
      %v1769 = vadd.f32 0.0, %v1768
      %v1770 = vpop.f32.mrb[0].mxu0
      %1771 = vmatprep.mubr.bf16.mxu0 0
      %1772 = vmatmul.mubr.bf16.gmra.mrb[0].mxu0 %v1619
      %v1773 = vpop.f32.mrb[0].mxu0
      %v1774 = vadd.f32 0.0, %v1773
      %v1775 = vpop.f32.mrb[0].mxu0
      %v1776 = vpop.f32.mrb[0].mxu0
      %v1777 = vadd.f32 0.0, %v1776
      %v1778 = vpop.f32.mrb[0].mxu0
      %1779 = vmatprep.mubr.bf16.mxu0 0
      %1780 = vmatmul.mubr.bf16.gmra.mrb[0].mxu0 %v1622
      %v1781 = vpop.f32.mrb[0].mxu0
      %v1782 = vadd.f32 0.0, %v1781
      %v1783 = vpop.f32.mrb[0].mxu0
      %v1784 = vpop.f32.mrb[0].mxu0
      %v1785 = vadd.f32 0.0, %v1784
      %v1786 = vpop.f32.mrb[0].mxu0
      %1787 = vdwg.mxu0
      %v1788 = vld [vmem:[#allocation3] sm:$0xff]
      %v1789 = vld [vmem:[#allocation3 + $0x8] sm:$0xff]
      %v1790 = vld [vmem:[#allocation3 + $0x10] sm:$0xff]
      %v1791 = vld [vmem:[#allocation3 + $0x18] sm:$0xff]
      %v1792 = vld [vmem:[#allocation3 + $0x20] sm:$0xff]
      %v1793 = vld [vmem:[#allocation3 + $0x28] sm:$0xff]
      %v1794 = vld [vmem:[#allocation3 + $0x30] sm:$0xff]
      %v1795 = vld [vmem:[#allocation3 + $0x38] sm:$0xff]
      %v1796 = vld [vmem:[#allocation3 + $0x40] sm:$0xff]
      %v1797 = vld [vmem:[#allocation3 + $0x48] sm:$0xff]
      %v1798 = vld [vmem:[#allocation3 + $0x50] sm:$0xff]
      %v1799 = vld [vmem:[#allocation3 + $0x58] sm:$0xff]
      %v1800 = vld [vmem:[#allocation3 + $0x60] sm:$0xff]
      %v1801 = vld [vmem:[#allocation3 + $0x68] sm:$0xff]
      %v1802 = vld [vmem:[#allocation3 + $0x70] sm:$0xff]
      %v1803 = vld [vmem:[#allocation3 + $0x78] sm:$0xff]
      %v1804 = vld [vmem:[#allocation3 + $0x80] sm:$0xff]
      %v1805 = vld [vmem:[#allocation3 + $0x88] sm:$0xff]
      %v1806 = vld [vmem:[#allocation3 + $0x90] sm:$0xff]
      %v1807 = vld [vmem:[#allocation3 + $0x98] sm:$0xff]
      %v1808 = vld [vmem:[#allocation3 + $0xa0] sm:$0xff]
      %v1809 = vld [vmem:[#allocation3 + $0xa8] sm:$0xff]
      %v1810 = vld [vmem:[#allocation3 + $0xb0] sm:$0xff]
      %v1811 = vld [vmem:[#allocation3 + $0xb8] sm:$0xff]
      %v1812 = vld [vmem:[#allocation3 + $0xc0] sm:$0xff]
      %v1813 = vld [vmem:[#allocation3 + $0xc8] sm:$0xff]
      %v1814 = vld [vmem:[#allocation3 + $0xd0] sm:$0xff]
      %v1815 = vld [vmem:[#allocation3 + $0xd8] sm:$0xff]
      %v1816 = vld [vmem:[#allocation3 + $0xe0] sm:$0xff]
      %v1817 = vld [vmem:[#allocation3 + $0xe8] sm:$0xff]
      %v1818 = vld [vmem:[#allocation3 + $0xf0] sm:$0xff]
      %v1819 = vld [vmem:[#allocation3 + $0xf8] sm:$0xff]
      %v1820 = vadd.f32 %v1788, %v1662
      %v1821 = vadd.f32 %v1789, %v1665
      %v1822 = vadd.f32 %v1790, %v1670
      %v1823 = vadd.f32 %v1791, %v1673
      %v1824 = vadd.f32 %v1792, %v1678
      %v1825 = vadd.f32 %v1793, %v1681
      %v1826 = vadd.f32 %v1794, %v1686
      %v1827 = vadd.f32 %v1795, %v1689
      %v1828 = vadd.f32 %v1796, %v1694
      %v1829 = vadd.f32 %v1797, %v1697
      %v1830 = vadd.f32 %v1798, %v1702
      %v1831 = vadd.f32 %v1799, %v1705
      %v1832 = vadd.f32 %v1800, %v1710
      %v1833 = vadd.f32 %v1801, %v1713
      %v1834 = vadd.f32 %v1802, %v1718
      %v1835 = vadd.f32 %v1803, %v1721
      %v1836 = vadd.f32 %v1804, %v1726
      %v1837 = vadd.f32 %v1805, %v1729
      %v1838 = vadd.f32 %v1806, %v1734
      %v1839 = vadd.f32 %v1807, %v1737
      %v1840 = vadd.f32 %v1808, %v1742
      %v1841 = vadd.f32 %v1809, %v1745
      %v1842 = vadd.f32 %v1810, %v1750
      %v1843 = vadd.f32 %v1811, %v1753
      %v1844 = vadd.f32 %v1812, %v1758
      %v1845 = vadd.f32 %v1813, %v1761
      %v1846 = vadd.f32 %v1814, %v1766
      %v1847 = vadd.f32 %v1815, %v1769
      %v1848 = vadd.f32 %v1816, %v1774
      %v1849 = vadd.f32 %v1817, %v1777
      %v1850 = vadd.f32 %v1818, %v1782
      %v1851 = vadd.f32 %v1819, %v1785
      %1852 = vst.msk [vmem:[#allocation3] sm:$0xff] %vm481, %v1820
      %1853 = vst.msk [vmem:[#allocation3 + $0x8] sm:$0xff] %vm481, %v1821
      %1854 = vst.msk [vmem:[#allocation3 + $0x10] sm:$0xff] %vm481, %v1822
      %1855 = vst.msk [vmem:[#allocation3 + $0x18] sm:$0xff] %vm481, %v1823
      %1856 = vst.msk [vmem:[#allocation3 + $0x20] sm:$0xff] %vm481, %v1824
      %1857 = vst.msk [vmem:[#allocation3 + $0x28] sm:$0xff] %vm481, %v1825
      %1858 = vst.msk [vmem:[#allocation3 + $0x30] sm:$0xff] %vm481, %v1826
      %1859 = vst.msk [vmem:[#allocation3 + $0x38] sm:$0xff] %vm481, %v1827
      %1860 = vst.msk [vmem:[#allocation3 + $0x40] sm:$0xff] %vm481, %v1828
      %1861 = vst.msk [vmem:[#allocation3 + $0x48] sm:$0xff] %vm481, %v1829
      %1862 = vst.msk [vmem:[#allocation3 + $0x50] sm:$0xff] %vm481, %v1830
      %1863 = vst.msk [vmem:[#allocation3 + $0x58] sm:$0xff] %vm481, %v1831
      %1864 = vst.msk [vmem:[#allocation3 + $0x60] sm:$0xff] %vm481, %v1832
      %1865 = vst.msk [vmem:[#allocation3 + $0x68] sm:$0xff] %vm481, %v1833
      %1866 = vst.msk [vmem:[#allocation3 + $0x70] sm:$0xff] %vm481, %v1834
      %1867 = vst.msk [vmem:[#allocation3 + $0x78] sm:$0xff] %vm481, %v1835
      %1868 = vst.msk [vmem:[#allocation3 + $0x80] sm:$0xff] %vm481, %v1836
      %1869 = vst.msk [vmem:[#allocation3 + $0x88] sm:$0xff] %vm481, %v1837
      %1870 = vst.msk [vmem:[#allocation3 + $0x90] sm:$0xff] %vm481, %v1838
      %1871 = vst.msk [vmem:[#allocation3 + $0x98] sm:$0xff] %vm481, %v1839
      %1872 = vst.msk [vmem:[#allocation3 + $0xa0] sm:$0xff] %vm481, %v1840
      %1873 = vst.msk [vmem:[#allocation3 + $0xa8] sm:$0xff] %vm481, %v1841
      %1874 = vst.msk [vmem:[#allocation3 + $0xb0] sm:$0xff] %vm481, %v1842
      %1875 = vst.msk [vmem:[#allocation3 + $0xb8] sm:$0xff] %vm481, %v1843
      %1876 = vst.msk [vmem:[#allocation3 + $0xc0] sm:$0xff] %vm481, %v1844
      %1877 = vst.msk [vmem:[#allocation3 + $0xc8] sm:$0xff] %vm481, %v1845
      %1878 = vst.msk [vmem:[#allocation3 + $0xd0] sm:$0xff] %vm481, %v1846
      %1879 = vst.msk [vmem:[#allocation3 + $0xd8] sm:$0xff] %vm481, %v1847
      %1880 = vst.msk [vmem:[#allocation3 + $0xe0] sm:$0xff] %vm481, %v1848
      %1881 = vst.msk [vmem:[#allocation3 + $0xe8] sm:$0xff] %vm481, %v1849
      %1882 = vst.msk [vmem:[#allocation3 + $0xf0] sm:$0xff] %vm481, %v1850
      %1883 = vst.msk [vmem:[#allocation3 + $0xf8] sm:$0xff] %vm481, %v1851
      %v1884 = vld [vmem:[%s480 + $0x1] sm:$0xff]
      %v1885 = vld [vmem:[%s480 + $0x9] sm:$0xff]
      %v1886 = vld [vmem:[%s480 + $0x19] sm:$0xff]
      %v1887 = vld [vmem:[%s480 + $0x21] sm:$0xff]
      %v1888 = vld [vmem:[%s480 + $0x31] sm:$0xff]
      %v1889 = vld [vmem:[%s480 + $0x39] sm:$0xff]
      %v1890 = vld [vmem:[%s480 + $0x49] sm:$0xff]
      %v1891 = vld [vmem:[%s480 + $0x51] sm:$0xff]
      %v1892 = vld [vmem:[%s480 + $0x61] sm:$0xff]
      %v1893 = vld [vmem:[%s480 + $0x69] sm:$0xff]
      %v1894 = vld [vmem:[%s480 + $0x79] sm:$0xff]
      %v1895 = vld [vmem:[%s480 + $0x81] sm:$0xff]
      %v1896 = vld [vmem:[%s480 + $0x91] sm:$0xff]
      %v1897 = vld [vmem:[%s480 + $0x99] sm:$0xff]
      %v1898 = vld [vmem:[%s480 + $0xa9] sm:$0xff]
      %v1899 = vld [vmem:[%s480 + $0xb1] sm:$0xff]
      %v1900 = vld [vmem:[%s480 + $0xc1] sm:$0xff]
      %v1901 = vld [vmem:[%s480 + $0xc9] sm:$0xff]
      %v1902 = vld [vmem:[%s480 + $0xd9] sm:$0xff]
      %v1903 = vld [vmem:[%s480 + $0xe1] sm:$0xff]
      %v1904 = vld [vmem:[%s480 + $0xf1] sm:$0xff]
      %v1905 = vld [vmem:[%s480 + $0xf9] sm:$0xff]
      %v1906 = vld [vmem:[%s480 + $0x109] sm:$0xff]
      %v1907 = vld [vmem:[%s480 + $0x111] sm:$0xff]
      %v1908 = vld [vmem:[%s480 + $0x121] sm:$0xff]
      %v1909 = vld [vmem:[%s480 + $0x129] sm:$0xff]
      %v1910 = vld [vmem:[%s480 + $0x139] sm:$0xff]
      %v1911 = vld [vmem:[%s480 + $0x141] sm:$0xff]
      %v1912 = vld [vmem:[%s480 + $0x151] sm:$0xff]
      %v1913 = vld [vmem:[%s480 + $0x159] sm:$0xff]
      %v1914 = vld [vmem:[%s480 + $0x169] sm:$0xff]
      %v1915 = vld [vmem:[%s480 + $0x171] sm:$0xff]
      %v1916 = vpack.c.bf16 %v1885, %v1884
      %v1917 = vpack.c.bf16 %v1887, %v1886
      %v1918 = vpack.c.bf16 %v1889, %v1888
      %v1919 = vpack.c.bf16 %v1891, %v1890
      %v1920 = vpack.c.bf16 %v1893, %v1892
      %v1921 = vpack.c.bf16 %v1895, %v1894
      %v1922 = vpack.c.bf16 %v1897, %v1896
      %v1923 = vpack.c.bf16 %v1899, %v1898
      %v1924 = vpack.c.bf16 %v1901, %v1900
      %v1925 = vpack.c.bf16 %v1903, %v1902
      %v1926 = vpack.c.bf16 %v1905, %v1904
      %v1927 = vpack.c.bf16 %v1907, %v1906
      %v1928 = vpack.c.bf16 %v1909, %v1908
      %v1929 = vpack.c.bf16 %v1911, %v1910
      %v1930 = vpack.c.bf16 %v1913, %v1912
      %v1931 = vpack.c.bf16 %v1915, %v1914
      %v1933 = vsel %vm481, %v1916, 0
      %v1936 = vsel %vm481, %v1917, 0
      %v1939 = vsel %vm481, %v1918, 0
      %v1942 = vsel %vm481, %v1919, 0
      %v1945 = vsel %vm481, %v1920, 0
      %v1948 = vsel %vm481, %v1921, 0
      %v1951 = vsel %vm481, %v1922, 0
      %v1954 = vsel %vm481, %v1923, 0
      %v1957 = vsel %vm481, %v1924, 0
      %v1960 = vsel %vm481, %v1925, 0
      %v1963 = vsel %vm481, %v1926, 0
      %v1966 = vsel %vm481, %v1927, 0
      %v1969 = vsel %vm481, %v1928, 0
      %v1972 = vsel %vm481, %v1929, 0
      %v1975 = vsel %vm481, %v1930, 0
      %v1978 = vsel %vm481, %v1931, 0
      %v1981 = vsel %vm619, %v518, 0
      %1983 = vmatprep.subr.bf16.mxu0 0
      %1984 = vmatpush1.bf16.msra.mxu0 %v1981
      %1985 = vmatprep.subr.bf16.mxu0 0
      %1986 = vmatpush1.bf16.msra.mxu0 0
      %1987 = vmatprep.subr.bf16.mxu0 0
      %1988 = vmatpush1.bf16.msra.mxu0 0
      %1989 = vmatprep.subr.bf16.mxu0 0
      %1990 = vmatpush1.bf16.msra.mxu0 0
      %1991 = vmatprep.subr.bf16.mxu0 0
      %1992 = vmatpush1.bf16.msra.mxu0 0
      %1993 = vmatprep.subr.bf16.mxu0 0
      %1994 = vmatpush1.bf16.msra.mxu0 0
      %1995 = vmatprep.subr.bf16.mxu0 0
      %1996 = vmatpush1.bf16.msra.mxu0 0
      %1997 = vmatprep.subr.bf16.mxu0 0
      %1998 = vmatpush1.bf16.msra.mxu0 0
      %1999 = vmatprep.subr.bf16.mxu0 0
      %2000 = vmatpush1.bf16.msra.mxu0 0
      %2001 = vmatprep.subr.bf16.mxu0 0
      %2002 = vmatpush1.bf16.msra.mxu0 0
      %2003 = vmatprep.subr.bf16.mxu0 0
      %2004 = vmatpush1.bf16.msra.mxu0 0
      %2005 = vmatprep.subr.bf16.mxu0 0
      %2006 = vmatpush1.bf16.msra.mxu0 0
      %2007 = vmatprep.subr.bf16.mxu0 0
      %2008 = vmatpush1.bf16.msra.mxu0 0
      %2009 = vmatprep.subr.bf16.mxu0 0
      %2010 = vmatpush1.bf16.msra.mxu0 0
      %2011 = vmatprep.subr.bf16.mxu0 0
      %2012 = vmatpush1.bf16.msra.mxu0 0
      %2013 = vmatprep.subr.bf16.mxu0 0
      %2014 = vmatpush1.bf16.msra.mxu0 0
      %2015 = vmatprep.mubr.bf16.mxu0 0
      %2016 = vmatmul.mubr.bf16.gmra.mrb[0].mxu0 %v1933
      %v2017 = vpop.f32.mrb[0].mxu0
      %v2018 = vadd.f32 0.0, %v2017
      %v2019 = vpop.f32.mrb[0].mxu0
      %v2020 = vpop.f32.mrb[0].mxu0
      %v2021 = vadd.f32 0.0, %v2020
      %v2022 = vpop.f32.mrb[0].mxu0
      %2023 = vmatprep.mubr.bf16.mxu0 0
      %2024 = vmatmul.mubr.bf16.gmra.mrb[0].mxu0 %v1936
      %v2025 = vpop.f32.mrb[0].mxu0
      %v2026 = vadd.f32 0.0, %v2025
      %v2027 = vpop.f32.mrb[0].mxu0
      %v2028 = vpop.f32.mrb[0].mxu0
      %v2029 = vadd.f32 0.0, %v2028
      %v2030 = vpop.f32.mrb[0].mxu0
      %2031 = vmatprep.mubr.bf16.mxu0 0
      %2032 = vmatmul.mubr.bf16.gmra.mrb[0].mxu0 %v1939
      %v2033 = vpop.f32.mrb[0].mxu0
      %v2034 = vadd.f32 0.0, %v2033
      %v2035 = vpop.f32.mrb[0].mxu0
      %v2036 = vpop.f32.mrb[0].mxu0
      %v2037 = vadd.f32 0.0, %v2036
      %v2038 = vpop.f32.mrb[0].mxu0
      %2039 = vmatprep.mubr.bf16.mxu0 0
      %2040 = vmatmul.mubr.bf16.gmra.mrb[0].mxu0 %v1942
      %v2041 = vpop.f32.mrb[0].mxu0
      %v2042 = vadd.f32 0.0, %v2041
      %v2043 = vpop.f32.mrb[0].mxu0
      %v2044 = vpop.f32.mrb[0].mxu0
      %v2045 = vadd.f32 0.0, %v2044
      %v2046 = vpop.f32.mrb[0].mxu0
      %2047 = vmatprep.mubr.bf16.mxu0 0
      %2048 = vmatmul.mubr.bf16.gmra.mrb[0].mxu0 %v1945
      %v2049 = vpop.f32.mrb[0].mxu0
      %v2050 = vadd.f32 0.0, %v2049
      %v2051 = vpop.f32.mrb[0].mxu0
      %v2052 = vpop.f32.mrb[0].mxu0
      %v2053 = vadd.f32 0.0, %v2052
      %v2054 = vpop.f32.mrb[0].mxu0
      %2055 = vmatprep.mubr.bf16.mxu0 0
      %2056 = vmatmul.mubr.bf16.gmra.mrb[0].mxu0 %v1948
      %v2057 = vpop.f32.mrb[0].mxu0
      %v2058 = vadd.f32 0.0, %v2057
      %v2059 = vpop.f32.mrb[0].mxu0
      %v2060 = vpop.f32.mrb[0].mxu0
      %v2061 = vadd.f32 0.0, %v2060
      %v2062 = vpop.f32.mrb[0].mxu0
      %2063 = vmatprep.mubr.bf16.mxu0 0
      %2064 = vmatmul.mubr.bf16.gmra.mrb[0].mxu0 %v1951
      %v2065 = vpop.f32.mrb[0].mxu0
      %v2066 = vadd.f32 0.0, %v2065
      %v2067 = vpop.f32.mrb[0].mxu0
      %v2068 = vpop.f32.mrb[0].mxu0
      %v2069 = vadd.f32 0.0, %v2068
      %v2070 = vpop.f32.mrb[0].mxu0
      %2071 = vmatprep.mubr.bf16.mxu0 0
      %2072 = vmatmul.mubr.bf16.gmra.mrb[0].mxu0 %v1954
      %v2073 = vpop.f32.mrb[0].mxu0
      %v2074 = vadd.f32 0.0, %v2073
      %v2075 = vpop.f32.mrb[0].mxu0
      %v2076 = vpop.f32.mrb[0].mxu0
      %v2077 = vadd.f32 0.0, %v2076
      %v2078 = vpop.f32.mrb[0].mxu0
      %2079 = vmatprep.mubr.bf16.mxu0 0
      %2080 = vmatmul.mubr.bf16.gmra.mrb[0].mxu0 %v1957
      %v2081 = vpop.f32.mrb[0].mxu0
      %v2082 = vadd.f32 0.0, %v2081
      %v2083 = vpop.f32.mrb[0].mxu0
      %v2084 = vpop.f32.mrb[0].mxu0
      %v2085 = vadd.f32 0.0, %v2084
      %v2086 = vpop.f32.mrb[0].mxu0
      %2087 = vmatprep.mubr.bf16.mxu0 0
      %2088 = vmatmul.mubr.bf16.gmra.mrb[0].mxu0 %v1960
      %v2089 = vpop.f32.mrb[0].mxu0
      %v2090 = vadd.f32 0.0, %v2089
      %v2091 = vpop.f32.mrb[0].mxu0
      %v2092 = vpop.f32.mrb[0].mxu0
      %v2093 = vadd.f32 0.0, %v2092
      %v2094 = vpop.f32.mrb[0].mxu0
      %2095 = vmatprep.mubr.bf16.mxu0 0
      %2096 = vmatmul.mubr.bf16.gmra.mrb[0].mxu0 %v1963
      %v2097 = vpop.f32.mrb[0].mxu0
      %v2098 = vadd.f32 0.0, %v2097
      %v2099 = vpop.f32.mrb[0].mxu0
      %v2100 = vpop.f32.mrb[0].mxu0
      %v2101 = vadd.f32 0.0, %v2100
      %v2102 = vpop.f32.mrb[0].mxu0
      %2103 = vmatprep.mubr.bf16.mxu0 0
      %2104 = vmatmul.mubr.bf16.gmra.mrb[0].mxu0 %v1966
      %v2105 = vpop.f32.mrb[0].mxu0
      %v2106 = vadd.f32 0.0, %v2105
      %v2107 = vpop.f32.mrb[0].mxu0
      %v2108 = vpop.f32.mrb[0].mxu0
      %v2109 = vadd.f32 0.0, %v2108
      %v2110 = vpop.f32.mrb[0].mxu0
      %2111 = vmatprep.mubr.bf16.mxu0 0
      %2112 = vmatmul.mubr.bf16.gmra.mrb[0].mxu0 %v1969
      %v2113 = vpop.f32.mrb[0].mxu0
      %v2114 = vadd.f32 0.0, %v2113
      %v2115 = vpop.f32.mrb[0].mxu0
      %v2116 = vpop.f32.mrb[0].mxu0
      %v2117 = vadd.f32 0.0, %v2116
      %v2118 = vpop.f32.mrb[0].mxu0
      %2119 = vmatprep.mubr.bf16.mxu0 0
      %2120 = vmatmul.mubr.bf16.gmra.mrb[0].mxu0 %v1972
      %v2121 = vpop.f32.mrb[0].mxu0
      %v2122 = vadd.f32 0.0, %v2121
      %v2123 = vpop.f32.mrb[0].mxu0
      %v2124 = vpop.f32.mrb[0].mxu0
      %v2125 = vadd.f32 0.0, %v2124
      %v2126 = vpop.f32.mrb[0].mxu0
      %2127 = vmatprep.mubr.bf16.mxu0 0
      %2128 = vmatmul.mubr.bf16.gmra.mrb[0].mxu0 %v1975
      %v2129 = vpop.f32.mrb[0].mxu0
      %v2130 = vadd.f32 0.0, %v2129
      %v2131 = vpop.f32.mrb[0].mxu0
      %v2132 = vpop.f32.mrb[0].mxu0
      %v2133 = vadd.f32 0.0, %v2132
      %v2134 = vpop.f32.mrb[0].mxu0
      %2135 = vmatprep.mubr.bf16.mxu0 0
      %2136 = vmatmul.mubr.bf16.gmra.mrb[0].mxu0 %v1978
      %v2137 = vpop.f32.mrb[0].mxu0
      %v2138 = vadd.f32 0.0, %v2137
      %v2139 = vpop.f32.mrb[0].mxu0
      %v2140 = vpop.f32.mrb[0].mxu0
      %v2141 = vadd.f32 0.0, %v2140
      %v2142 = vpop.f32.mrb[0].mxu0
      %2143 = vdwg.mxu0
      %v2144 = vld [vmem:[#allocation3] sm:$0xff]
      %v2145 = vld [vmem:[#allocation3 + $0x8] sm:$0xff]
      %v2146 = vld [vmem:[#allocation3 + $0x10] sm:$0xff]
      %v2147 = vld [vmem:[#allocation3 + $0x18] sm:$0xff]
      %v2148 = vld [vmem:[#allocation3 + $0x20] sm:$0xff]
      %v2149 = vld [vmem:[#allocation3 + $0x28] sm:$0xff]
      %v2150 = vld [vmem:[#allocation3 + $0x30] sm:$0xff]
      %v2151 = vld [vmem:[#allocation3 + $0x38] sm:$0xff]
      %v2152 = vld [vmem:[#allocation3 + $0x40] sm:$0xff]
      %v2153 = vld [vmem:[#allocation3 + $0x48] sm:$0xff]
      %v2154 = vld [vmem:[#allocation3 + $0x50] sm:$0xff]
      %v2155 = vld [vmem:[#allocation3 + $0x58] sm:$0xff]
      %v2156 = vld [vmem:[#allocation3 + $0x60] sm:$0xff]
      %v2157 = vld [vmem:[#allocation3 + $0x68] sm:$0xff]
      %v2158 = vld [vmem:[#allocation3 + $0x70] sm:$0xff]
      %v2159 = vld [vmem:[#allocation3 + $0x78] sm:$0xff]
      %v2160 = vld [vmem:[#allocation3 + $0x80] sm:$0xff]
      %v2161 = vld [vmem:[#allocation3 + $0x88] sm:$0xff]
      %v2162 = vld [vmem:[#allocation3 + $0x90] sm:$0xff]
      %v2163 = vld [vmem:[#allocation3 + $0x98] sm:$0xff]
      %v2164 = vld [vmem:[#allocation3 + $0xa0] sm:$0xff]
      %v2165 = vld [vmem:[#allocation3 + $0xa8] sm:$0xff]
      %v2166 = vld [vmem:[#allocation3 + $0xb0] sm:$0xff]
      %v2167 = vld [vmem:[#allocation3 + $0xb8] sm:$0xff]
      %v2168 = vld [vmem:[#allocation3 + $0xc0] sm:$0xff]
      %v2169 = vld [vmem:[#allocation3 + $0xc8] sm:$0xff]
      %v2170 = vld [vmem:[#allocation3 + $0xd0] sm:$0xff]
      %v2171 = vld [vmem:[#allocation3 + $0xd8] sm:$0xff]
      %v2172 = vld [vmem:[#allocation3 + $0xe0] sm:$0xff]
      %v2173 = vld [vmem:[#allocation3 + $0xe8] sm:$0xff]
      %v2174 = vld [vmem:[#allocation3 + $0xf0] sm:$0xff]
      %v2175 = vld [vmem:[#allocation3 + $0xf8] sm:$0xff]
      %v2176 = vadd.f32 %v2144, %v2018
      %v2177 = vadd.f32 %v2145, %v2021
      %v2178 = vadd.f32 %v2146, %v2026
      %v2179 = vadd.f32 %v2147, %v2029
      %v2180 = vadd.f32 %v2148, %v2034
      %v2181 = vadd.f32 %v2149, %v2037
      %v2182 = vadd.f32 %v2150, %v2042
      %v2183 = vadd.f32 %v2151, %v2045
      %v2184 = vadd.f32 %v2152, %v2050
      %v2185 = vadd.f32 %v2153, %v2053
      %v2186 = vadd.f32 %v2154, %v2058
      %v2187 = vadd.f32 %v2155, %v2061
      %v2188 = vadd.f32 %v2156, %v2066
      %v2189 = vadd.f32 %v2157, %v2069
      %v2190 = vadd.f32 %v2158, %v2074
      %v2191 = vadd.f32 %v2159, %v2077
      %v2192 = vadd.f32 %v2160, %v2082
      %v2193 = vadd.f32 %v2161, %v2085
      %v2194 = vadd.f32 %v2162, %v2090
      %v2195 = vadd.f32 %v2163, %v2093
      %v2196 = vadd.f32 %v2164, %v2098
      %v2197 = vadd.f32 %v2165, %v2101
      %v2198 = vadd.f32 %v2166, %v2106
      %v2199 = vadd.f32 %v2167, %v2109
      %v2200 = vadd.f32 %v2168, %v2114
      %v2201 = vadd.f32 %v2169, %v2117
      %v2202 = vadd.f32 %v2170, %v2122
      %v2203 = vadd.f32 %v2171, %v2125
      %v2204 = vadd.f32 %v2172, %v2130
      %v2205 = vadd.f32 %v2173, %v2133
      %v2206 = vadd.f32 %v2174, %v2138
      %v2207 = vadd.f32 %v2175, %v2141
      %2208 = vst.msk [vmem:[#allocation3] sm:$0xff] %vm481, %v2176
      %2209 = vst.msk [vmem:[#allocation3 + $0x8] sm:$0xff] %vm481, %v2177
      %2210 = vst.msk [vmem:[#allocation3 + $0x10] sm:$0xff] %vm481, %v2178
      %2211 = vst.msk [vmem:[#allocation3 + $0x18] sm:$0xff] %vm481, %v2179
      %2212 = vst.msk [vmem:[#allocation3 + $0x20] sm:$0xff] %vm481, %v2180
      %2213 = vst.msk [vmem:[#allocation3 + $0x28] sm:$0xff] %vm481, %v2181
      %2214 = vst.msk [vmem:[#allocation3 + $0x30] sm:$0xff] %vm481, %v2182
      %2215 = vst.msk [vmem:[#allocation3 + $0x38] sm:$0xff] %vm481, %v2183
      %2216 = vst.msk [vmem:[#allocation3 + $0x40] sm:$0xff] %vm481, %v2184
      %2217 = vst.msk [vmem:[#allocation3 + $0x48] sm:$0xff] %vm481, %v2185
      %2218 = vst.msk [vmem:[#allocation3 + $0x50] sm:$0xff] %vm481, %v2186
      %2219 = vst.msk [vmem:[#allocation3 + $0x58] sm:$0xff] %vm481, %v2187
      %2220 = vst.msk [vmem:[#allocation3 + $0x60] sm:$0xff] %vm481, %v2188
      %2221 = vst.msk [vmem:[#allocation3 + $0x68] sm:$0xff] %vm481, %v2189
      %2222 = vst.msk [vmem:[#allocation3 + $0x70] sm:$0xff] %vm481, %v2190
      %2223 = vst.msk [vmem:[#allocation3 + $0x78] sm:$0xff] %vm481, %v2191
      %2224 = vst.msk [vmem:[#allocation3 + $0x80] sm:$0xff] %vm481, %v2192
      %2225 = vst.msk [vmem:[#allocation3 + $0x88] sm:$0xff] %vm481, %v2193
      %2226 = vst.msk [vmem:[#allocation3 + $0x90] sm:$0xff] %vm481, %v2194
      %2227 = vst.msk [vmem:[#allocation3 + $0x98] sm:$0xff] %vm481, %v2195
      %2228 = vst.msk [vmem:[#allocation3 + $0xa0] sm:$0xff] %vm481, %v2196
      %2229 = vst.msk [vmem:[#allocation3 + $0xa8] sm:$0xff] %vm481, %v2197
      %2230 = vst.msk [vmem:[#allocation3 + $0xb0] sm:$0xff] %vm481, %v2198
      %2231 = vst.msk [vmem:[#allocation3 + $0xb8] sm:$0xff] %vm481, %v2199
      %2232 = vst.msk [vmem:[#allocation3 + $0xc0] sm:$0xff] %vm481, %v2200
      %2233 = vst.msk [vmem:[#allocation3 + $0xc8] sm:$0xff] %vm481, %v2201
      %2234 = vst.msk [vmem:[#allocation3 + $0xd0] sm:$0xff] %vm481, %v2202
      %2235 = vst.msk [vmem:[#allocation3 + $0xd8] sm:$0xff] %vm481, %v2203
      %2236 = vst.msk [vmem:[#allocation3 + $0xe0] sm:$0xff] %vm481, %v2204
      %2237 = vst.msk [vmem:[#allocation3 + $0xe8] sm:$0xff] %vm481, %v2205
      %2238 = vst.msk [vmem:[#allocation3 + $0xf0] sm:$0xff] %vm481, %v2206
      %2239 = vst.msk [vmem:[#allocation3 + $0xf8] sm:$0xff] %vm481, %v2207
      %v2240 = vld [vmem:[%s480 + $0x2] sm:$0xff]
      %v2241 = vld [vmem:[%s480 + $0xa] sm:$0xff]
      %v2242 = vld [vmem:[%s480 + $0x1a] sm:$0xff]
      %v2243 = vld [vmem:[%s480 + $0x22] sm:$0xff]
      %v2244 = vld [vmem:[%s480 + $0x32] sm:$0xff]
      %v2245 = vld [vmem:[%s480 + $0x3a] sm:$0xff]
      %v2246 = vld [vmem:[%s480 + $0x4a] sm:$0xff]
      %v2247 = vld [vmem:[%s480 + $0x52] sm:$0xff]
      %v2248 = vld [vmem:[%s480 + $0x62] sm:$0xff]
      %v2249 = vld [vmem:[%s480 + $0x6a] sm:$0xff]
      %v2250 = vld [vmem:[%s480 + $0x7a] sm:$0xff]
      %v2251 = vld [vmem:[%s480 + $0x82] sm:$0xff]
      %v2252 = vld [vmem:[%s480 + $0x92] sm:$0xff]
      %v2253 = vld [vmem:[%s480 + $0x9a] sm:$0xff]
      %v2254 = vld [vmem:[%s480 + $0xaa] sm:$0xff]
      %v2255 = vld [vmem:[%s480 + $0xb2] sm:$0xff]
      %v2256 = vld [vmem:[%s480 + $0xc2] sm:$0xff]
      %v2257 = vld [vmem:[%s480 + $0xca] sm:$0xff]
      %v2258 = vld [vmem:[%s480 + $0xda] sm:$0xff]
      %v2259 = vld [vmem:[%s480 + $0xe2] sm:$0xff]
      %v2260 = vld [vmem:[%s480 + $0xf2] sm:$0xff]
      %v2261 = vld [vmem:[%s480 + $0xfa] sm:$0xff]
      %v2262 = vld [vmem:[%s480 + $0x10a] sm:$0xff]
      %v2263 = vld [vmem:[%s480 + $0x112] sm:$0xff]
      %v2264 = vld [vmem:[%s480 + $0x122] sm:$0xff]
      %v2265 = vld [vmem:[%s480 + $0x12a] sm:$0xff]
      %v2266 = vld [vmem:[%s480 + $0x13a] sm:$0xff]
      %v2267 = vld [vmem:[%s480 + $0x142] sm:$0xff]
      %v2268 = vld [vmem:[%s480 + $0x152] sm:$0xff]
      %v2269 = vld [vmem:[%s480 + $0x15a] sm:$0xff]
      %v2270 = vld [vmem:[%s480 + $0x16a] sm:$0xff]
      %v2271 = vld [vmem:[%s480 + $0x172] sm:$0xff]
      %v2272 = vpack.c.bf16 %v2241, %v2240
      %v2273 = vpack.c.bf16 %v2243, %v2242
      %v2274 = vpack.c.bf16 %v2245, %v2244
      %v2275 = vpack.c.bf16 %v2247, %v2246
      %v2276 = vpack.c.bf16 %v2249, %v2248
      %v2277 = vpack.c.bf16 %v2251, %v2250
      %v2278 = vpack.c.bf16 %v2253, %v2252
      %v2279 = vpack.c.bf16 %v2255, %v2254
      %v2280 = vpack.c.bf16 %v2257, %v2256
      %v2281 = vpack.c.bf16 %v2259, %v2258
      %v2282 = vpack.c.bf16 %v2261, %v2260
      %v2283 = vpack.c.bf16 %v2263, %v2262
      %v2284 = vpack.c.bf16 %v2265, %v2264
      %v2285 = vpack.c.bf16 %v2267, %v2266
      %v2286 = vpack.c.bf16 %v2269, %v2268
      %v2287 = vpack.c.bf16 %v2271, %v2270
      %v2289 = vsel %vm481, %v2272, 0
      %v2292 = vsel %vm481, %v2273, 0
      %v2295 = vsel %vm481, %v2274, 0
      %v2298 = vsel %vm481, %v2275, 0
      %v2301 = vsel %vm481, %v2276, 0
      %v2304 = vsel %vm481, %v2277, 0
      %v2307 = vsel %vm481, %v2278, 0
      %v2310 = vsel %vm481, %v2279, 0
      %v2313 = vsel %vm481, %v2280, 0
      %v2316 = vsel %vm481, %v2281, 0
      %v2319 = vsel %vm481, %v2282, 0
      %v2322 = vsel %vm481, %v2283, 0
      %v2325 = vsel %vm481, %v2284, 0
      %v2328 = vsel %vm481, %v2285, 0
      %v2331 = vsel %vm481, %v2286, 0
      %v2334 = vsel %vm481, %v2287, 0
      %v2337 = vsel %vm619, %v519, 0
      %2339 = vmatprep.subr.bf16.mxu0 0
      %2340 = vmatpush1.bf16.msra.mxu0 %v2337
      %2341 = vmatprep.subr.bf16.mxu0 0
      %2342 = vmatpush1.bf16.msra.mxu0 0
      %2343 = vmatprep.subr.bf16.mxu0 0
      %2344 = vmatpush1.bf16.msra.mxu0 0
      %2345 = vmatprep.subr.bf16.mxu0 0
      %2346 = vmatpush1.bf16.msra.mxu0 0
      %2347 = vmatprep.subr.bf16.mxu0 0
      %2348 = vmatpush1.bf16.msra.mxu0 0
      %2349 = vmatprep.subr.bf16.mxu0 0
      %2350 = vmatpush1.bf16.msra.mxu0 0
      %2351 = vmatprep.subr.bf16.mxu0 0
      %2352 = vmatpush1.bf16.msra.mxu0 0
      %2353 = vmatprep.subr.bf16.mxu0 0
      %2354 = vmatpush1.bf16.msra.mxu0 0
      %2355 = vmatprep.subr.bf16.mxu0 0
      %2356 = vmatpush1.bf16.msra.mxu0 0
      %2357 = vmatprep.subr.bf16.mxu0 0
      %2358 = vmatpush1.bf16.msra.mxu0 0
      %2359 = vmatprep.subr.bf16.mxu0 0
      %2360 = vmatpush1.bf16.msra.mxu0 0
      %2361 = vmatprep.subr.bf16.mxu0 0
      %2362 = vmatpush1.bf16.msra.mxu0 0
      %2363 = vmatprep.subr.bf16.mxu0 0
      %2364 = vmatpush1.bf16.msra.mxu0 0
      %2365 = vmatprep.subr.bf16.mxu0 0
      %2366 = vmatpush1.bf16.msra.mxu0 0
      %2367 = vmatprep.subr.bf16.mxu0 0
      %2368 = vmatpush1.bf16.msra.mxu0 0
      %2369 = vmatprep.subr.bf16.mxu0 0
      %2370 = vmatpush1.bf16.msra.mxu0 0
      %2371 = vmatprep.mubr.bf16.mxu0 0
      %2372 = vmatmul.mubr.bf16.gmra.mrb[0].mxu0 %v2289
      %v2373 = vpop.f32.mrb[0].mxu0
      %v2374 = vadd.f32 0.0, %v2373
      %v2375 = vpop.f32.mrb[0].mxu0
      %v2376 = vpop.f32.mrb[0].mxu0
      %v2377 = vadd.f32 0.0, %v2376
      %v2378 = vpop.f32.mrb[0].mxu0
      %2379 = vmatprep.mubr.bf16.mxu0 0
      %2380 = vmatmul.mubr.bf16.gmra.mrb[0].mxu0 %v2292
      %v2381 = vpop.f32.mrb[0].mxu0
      %v2382 = vadd.f32 0.0, %v2381
      %v2383 = vpop.f32.mrb[0].mxu0
      %v2384 = vpop.f32.mrb[0].mxu0
      %v2385 = vadd.f32 0.0, %v2384
      %v2386 = vpop.f32.mrb[0].mxu0
      %2387 = vmatprep.mubr.bf16.mxu0 0
      %2388 = vmatmul.mubr.bf16.gmra.mrb[0].mxu0 %v2295
      %v2389 = vpop.f32.mrb[0].mxu0
      %v2390 = vadd.f32 0.0, %v2389
      %v2391 = vpop.f32.mrb[0].mxu0
      %v2392 = vpop.f32.mrb[0].mxu0
      %v2393 = vadd.f32 0.0, %v2392
      %v2394 = vpop.f32.mrb[0].mxu0
      %2395 = vmatprep.mubr.bf16.mxu0 0
      %2396 = vmatmul.mubr.bf16.gmra.mrb[0].mxu0 %v2298
      %v2397 = vpop.f32.mrb[0].mxu0
      %v2398 = vadd.f32 0.0, %v2397
      %v2399 = vpop.f32.mrb[0].mxu0
      %v2400 = vpop.f32.mrb[0].mxu0
      %v2401 = vadd.f32 0.0, %v2400
      %v2402 = vpop.f32.mrb[0].mxu0
      %2403 = vmatprep.mubr.bf16.mxu0 0
      %2404 = vmatmul.mubr.bf16.gmra.mrb[0].mxu0 %v2301
      %v2405 = vpop.f32.mrb[0].mxu0
      %v2406 = vadd.f32 0.0, %v2405
      %v2407 = vpop.f32.mrb[0].mxu0
      %v2408 = vpop.f32.mrb[0].mxu0
      %v2409 = vadd.f32 0.0, %v2408
      %v2410 = vpop.f32.mrb[0].mxu0
      %2411 = vmatprep.mubr.bf16.mxu0 0
      %2412 = vmatmul.mubr.bf16.gmra.mrb[0].mxu0 %v2304
      %v2413 = vpop.f32.mrb[0].mxu0
      %v2414 = vadd.f32 0.0, %v2413
      %v2415 = vpop.f32.mrb[0].mxu0
      %v2416 = vpop.f32.mrb[0].mxu0
      %v2417 = vadd.f32 0.0, %v2416
      %v2418 = vpop.f32.mrb[0].mxu0
      %2419 = vmatprep.mubr.bf16.mxu0 0
      %2420 = vmatmul.mubr.bf16.gmra.mrb[0].mxu0 %v2307
      %v2421 = vpop.f32.mrb[0].mxu0
      %v2422 = vadd.f32 0.0, %v2421
      %v2423 = vpop.f32.mrb[0].mxu0
      %v2424 = vpop.f32.mrb[0].mxu0
      %v2425 = vadd.f32 0.0, %v2424
      %v2426 = vpop.f32.mrb[0].mxu0
      %2427 = vmatprep.mubr.bf16.mxu0 0
      %2428 = vmatmul.mubr.bf16.gmra.mrb[0].mxu0 %v2310
      %v2429 = vpop.f32.mrb[0].mxu0
      %v2430 = vadd.f32 0.0, %v2429
      %v2431 = vpop.f32.mrb[0].mxu0
      %v2432 = vpop.f32.mrb[0].mxu0
      %v2433 = vadd.f32 0.0, %v2432
      %v2434 = vpop.f32.mrb[0].mxu0
      %2435 = vmatprep.mubr.bf16.mxu0 0
      %2436 = vmatmul.mubr.bf16.gmra.mrb[0].mxu0 %v2313
      %v2437 = vpop.f32.mrb[0].mxu0
      %v2438 = vadd.f32 0.0, %v2437
      %v2439 = vpop.f32.mrb[0].mxu0
      %v2440 = vpop.f32.mrb[0].mxu0
      %v2441 = vadd.f32 0.0, %v2440
      %v2442 = vpop.f32.mrb[0].mxu0
      %2443 = vmatprep.mubr.bf16.mxu0 0
      %2444 = vmatmul.mubr.bf16.gmra.mrb[0].mxu0 %v2316
      %v2445 = vpop.f32.mrb[0].mxu0
      %v2446 = vadd.f32 0.0, %v2445
      %v2447 = vpop.f32.mrb[0].mxu0
      %v2448 = vpop.f32.mrb[0].mxu0
      %v2449 = vadd.f32 0.0, %v2448
      %v2450 = vpop.f32.mrb[0].mxu0
      %2451 = vmatprep.mubr.bf16.mxu0 0
      %2452 = vmatmul.mubr.bf16.gmra.mrb[0].mxu0 %v2319
      %v2453 = vpop.f32.mrb[0].mxu0
      %v2454 = vadd.f32 0.0, %v2453
      %v2455 = vpop.f32.mrb[0].mxu0
      %v2456 = vpop.f32.mrb[0].mxu0
      %v2457 = vadd.f32 0.0, %v2456
      %v2458 = vpop.f32.mrb[0].mxu0
      %2459 = vmatprep.mubr.bf16.mxu0 0
      %2460 = vmatmul.mubr.bf16.gmra.mrb[0].mxu0 %v2322
      %v2461 = vpop.f32.mrb[0].mxu0
      %v2462 = vadd.f32 0.0, %v2461
      %v2463 = vpop.f32.mrb[0].mxu0
      %v2464 = vpop.f32.mrb[0].mxu0
      %v2465 = vadd.f32 0.0, %v2464
      %v2466 = vpop.f32.mrb[0].mxu0
      %2467 = vmatprep.mubr.bf16.mxu0 0
      %2468 = vmatmul.mubr.bf16.gmra.mrb[0].mxu0 %v2325
      %v2469 = vpop.f32.mrb[0].mxu0
      %v2470 = vadd.f32 0.0, %v2469
      %v2471 = vpop.f32.mrb[0].mxu0
      %v2472 = vpop.f32.mrb[0].mxu0
      %v2473 = vadd.f32 0.0, %v2472
      %v2474 = vpop.f32.mrb[0].mxu0
      %2475 = vmatprep.mubr.bf16.mxu0 0
      %2476 = vmatmul.mubr.bf16.gmra.mrb[0].mxu0 %v2328
      %v2477 = vpop.f32.mrb[0].mxu0
      %v2478 = vadd.f32 0.0, %v2477
      %v2479 = vpop.f32.mrb[0].mxu0
      %v2480 = vpop.f32.mrb[0].mxu0
      %v2481 = vadd.f32 0.0, %v2480
      %v2482 = vpop.f32.mrb[0].mxu0
      %2483 = vmatprep.mubr.bf16.mxu0 0
      %2484 = vmatmul.mubr.bf16.gmra.mrb[0].mxu0 %v2331
      %v2485 = vpop.f32.mrb[0].mxu0
      %v2486 = vadd.f32 0.0, %v2485
      %v2487 = vpop.f32.mrb[0].mxu0
      %v2488 = vpop.f32.mrb[0].mxu0
      %v2489 = vadd.f32 0.0, %v2488
      %v2490 = vpop.f32.mrb[0].mxu0
      %2491 = vmatprep.mubr.bf16.mxu0 0
      %2492 = vmatmul.mubr.bf16.gmra.mrb[0].mxu0 %v2334
      %v2493 = vpop.f32.mrb[0].mxu0
      %v2494 = vadd.f32 0.0, %v2493
      %v2495 = vpop.f32.mrb[0].mxu0
      %v2496 = vpop.f32.mrb[0].mxu0
      %v2497 = vadd.f32 0.0, %v2496
      %v2498 = vpop.f32.mrb[0].mxu0
      %2499 = vdwg.mxu0
      %v2500 = vld [vmem:[#allocation3] sm:$0xff]
      %v2501 = vld [vmem:[#allocation3 + $0x8] sm:$0xff]
      %v2502 = vld [vmem:[#allocation3 + $0x10] sm:$0xff]
      %v2503 = vld [vmem:[#allocation3 + $0x18] sm:$0xff]
      %v2504 = vld [vmem:[#allocation3 + $0x20] sm:$0xff]
      %v2505 = vld [vmem:[#allocation3 + $0x28] sm:$0xff]
      %v2506 = vld [vmem:[#allocation3 + $0x30] sm:$0xff]
      %v2507 = vld [vmem:[#allocation3 + $0x38] sm:$0xff]
      %v2508 = vld [vmem:[#allocation3 + $0x40] sm:$0xff]
      %v2509 = vld [vmem:[#allocation3 + $0x48] sm:$0xff]
      %v2510 = vld [vmem:[#allocation3 + $0x50] sm:$0xff]
      %v2511 = vld [vmem:[#allocation3 + $0x58] sm:$0xff]
      %v2512 = vld [vmem:[#allocation3 + $0x60] sm:$0xff]
      %v2513 = vld [vmem:[#allocation3 + $0x68] sm:$0xff]
      %v2514 = vld [vmem:[#allocation3 + $0x70] sm:$0xff]
      %v2515 = vld [vmem:[#allocation3 + $0x78] sm:$0xff]
      %v2516 = vld [vmem:[#allocation3 + $0x80] sm:$0xff]
      %v2517 = vld [vmem:[#allocation3 + $0x88] sm:$0xff]
      %v2518 = vld [vmem:[#allocation3 + $0x90] sm:$0xff]
      %v2519 = vld [vmem:[#allocation3 + $0x98] sm:$0xff]
      %v2520 = vld [vmem:[#allocation3 + $0xa0] sm:$0xff]
      %v2521 = vld [vmem:[#allocation3 + $0xa8] sm:$0xff]
      %v2522 = vld [vmem:[#allocation3 + $0xb0] sm:$0xff]
      %v2523 = vld [vmem:[#allocation3 + $0xb8] sm:$0xff]
      %v2524 = vld [vmem:[#allocation3 + $0xc0] sm:$0xff]
      %v2525 = vld [vmem:[#allocation3 + $0xc8] sm:$0xff]
      %v2526 = vld [vmem:[#allocation3 + $0xd0] sm:$0xff]
      %v2527 = vld [vmem:[#allocation3 + $0xd8] sm:$0xff]
      %v2528 = vld [vmem:[#allocation3 + $0xe0] sm:$0xff]
      %v2529 = vld [vmem:[#allocation3 + $0xe8] sm:$0xff]
      %v2530 = vld [vmem:[#allocation3 + $0xf0] sm:$0xff]
      %v2531 = vld [vmem:[#allocation3 + $0xf8] sm:$0xff]
      %v2532 = vadd.f32 %v2500, %v2374
      %v2533 = vadd.f32 %v2501, %v2377
      %v2534 = vadd.f32 %v2502, %v2382
      %v2535 = vadd.f32 %v2503, %v2385
      %v2536 = vadd.f32 %v2504, %v2390
      %v2537 = vadd.f32 %v2505, %v2393
      %v2538 = vadd.f32 %v2506, %v2398
      %v2539 = vadd.f32 %v2507, %v2401
      %v2540 = vadd.f32 %v2508, %v2406
      %v2541 = vadd.f32 %v2509, %v2409
      %v2542 = vadd.f32 %v2510, %v2414
      %v2543 = vadd.f32 %v2511, %v2417
      %v2544 = vadd.f32 %v2512, %v2422
      %v2545 = vadd.f32 %v2513, %v2425
      %v2546 = vadd.f32 %v2514, %v2430
      %v2547 = vadd.f32 %v2515, %v2433
      %v2548 = vadd.f32 %v2516, %v2438
      %v2549 = vadd.f32 %v2517, %v2441
      %v2550 = vadd.f32 %v2518, %v2446
      %v2551 = vadd.f32 %v2519, %v2449
      %v2552 = vadd.f32 %v2520, %v2454
      %v2553 = vadd.f32 %v2521, %v2457
      %v2554 = vadd.f32 %v2522, %v2462
      %v2555 = vadd.f32 %v2523, %v2465
      %v2556 = vadd.f32 %v2524, %v2470
      %v2557 = vadd.f32 %v2525, %v2473
      %v2558 = vadd.f32 %v2526, %v2478
      %v2559 = vadd.f32 %v2527, %v2481
      %v2560 = vadd.f32 %v2528, %v2486
      %v2561 = vadd.f32 %v2529, %v2489
      %v2562 = vadd.f32 %v2530, %v2494
      %v2563 = vadd.f32 %v2531, %v2497
      %2564 = vst.msk [vmem:[#allocation3] sm:$0xff] %vm481, %v2532
      %2565 = vst.msk [vmem:[#allocation3 + $0x8] sm:$0xff] %vm481, %v2533
      %2566 = vst.msk [vmem:[#allocation3 + $0x10] sm:$0xff] %vm481, %v2534
      %2567 = vst.msk [vmem:[#allocation3 + $0x18] sm:$0xff] %vm481, %v2535
      %2568 = vst.msk [vmem:[#allocation3 + $0x20] sm:$0xff] %vm481, %v2536
      %2569 = vst.msk [vmem:[#allocation3 + $0x28] sm:$0xff] %vm481, %v2537
      %2570 = vst.msk [vmem:[#allocation3 + $0x30] sm:$0xff] %vm481, %v2538
      %2571 = vst.msk [vmem:[#allocation3 + $0x38] sm:$0xff] %vm481, %v2539
      %2572 = vst.msk [vmem:[#allocation3 + $0x40] sm:$0xff] %vm481, %v2540
      %2573 = vst.msk [vmem:[#allocation3 + $0x48] sm:$0xff] %vm481, %v2541
      %2574 = vst.msk [vmem:[#allocation3 + $0x50] sm:$0xff] %vm481, %v2542
      %2575 = vst.msk [vmem:[#allocation3 + $0x58] sm:$0xff] %vm481, %v2543
      %2576 = vst.msk [vmem:[#allocation3 + $0x60] sm:$0xff] %vm481, %v2544
      %2577 = vst.msk [vmem:[#allocation3 + $0x68] sm:$0xff] %vm481, %v2545
      %2578 = vst.msk [vmem:[#allocation3 + $0x70] sm:$0xff] %vm481, %v2546
      %2579 = vst.msk [vmem:[#allocation3 + $0x78] sm:$0xff] %vm481, %v2547
      %2580 = vst.msk [vmem:[#allocation3 + $0x80] sm:$0xff] %vm481, %v2548
      %2581 = vst.msk [vmem:[#allocation3 + $0x88] sm:$0xff] %vm481, %v2549
      %2582 = vst.msk [vmem:[#allocation3 + $0x90] sm:$0xff] %vm481, %v2550
      %2583 = vst.msk [vmem:[#allocation3 + $0x98] sm:$0xff] %vm481, %v2551
      %2584 = vst.msk [vmem:[#allocation3 + $0xa0] sm:$0xff] %vm481, %v2552
      %2585 = vst.msk [vmem:[#allocation3 + $0xa8] sm:$0xff] %vm481, %v2553
      %2586 = vst.msk [vmem:[#allocation3 + $0xb0] sm:$0xff] %vm481, %v2554
      %2587 = vst.msk [vmem:[#allocation3 + $0xb8] sm:$0xff] %vm481, %v2555
      %2588 = vst.msk [vmem:[#allocation3 + $0xc0] sm:$0xff] %vm481, %v2556
      %2589 = vst.msk [vmem:[#allocation3 + $0xc8] sm:$0xff] %vm481, %v2557
      %2590 = vst.msk [vmem:[#allocation3 + $0xd0] sm:$0xff] %vm481, %v2558
      %2591 = vst.msk [vmem:[#allocation3 + $0xd8] sm:$0xff] %vm481, %v2559
      %2592 = vst.msk [vmem:[#allocation3 + $0xe0] sm:$0xff] %vm481, %v2560
      %2593 = vst.msk [vmem:[#allocation3 + $0xe8] sm:$0xff] %vm481, %v2561
      %2594 = vst.msk [vmem:[#allocation3 + $0xf0] sm:$0xff] %vm481, %v2562
      %2595 = vst.msk [vmem:[#allocation3 + $0xf8] sm:$0xff] %vm481, %v2563
      %s2596 = scalar_lea.vmem [#allocation2], 48
      %v2597 = vld [vmem:[%s2596] sm:$0xff]
      %v2598 = vld [vmem:[%s2596 + $0x8] sm:$0xff]
      %v2599 = vld [vmem:[%s2596 + $0x18] sm:$0xff]
      %v2600 = vld [vmem:[%s2596 + $0x20] sm:$0xff]
      %v2601 = vld [vmem:[%s2596 + $0x30] sm:$0xff]
      %v2602 = vld [vmem:[%s2596 + $0x38] sm:$0xff]
      %v2603 = vld [vmem:[%s2596 + $0x48] sm:$0xff]
      %v2604 = vld [vmem:[%s2596 + $0x50] sm:$0xff]
      %v2605 = vld [vmem:[%s2596 + $0x60] sm:$0xff]
      %v2606 = vld [vmem:[%s2596 + $0x68] sm:$0xff]
      %v2607 = vld [vmem:[%s2596 + $0x78] sm:$0xff]
      %v2608 = vld [vmem:[%s2596 + $0x80] sm:$0xff]
      %v2609 = vld [vmem:[%s2596 + $0x90] sm:$0xff]
      %v2610 = vld [vmem:[%s2596 + $0x98] sm:$0xff]
      %v2611 = vld [vmem:[%s2596 + $0xa8] sm:$0xff]
      %v2612 = vld [vmem:[%s2596 + $0xb0] sm:$0xff]
      %v2613 = vld [vmem:[%s2596 + $0xc0] sm:$0xff]
      %v2614 = vld [vmem:[%s2596 + $0xc8] sm:$0xff]
      %v2615 = vld [vmem:[%s2596 + $0xd8] sm:$0xff]
      %v2616 = vld [vmem:[%s2596 + $0xe0] sm:$0xff]
      %v2617 = vld [vmem:[%s2596 + $0xf0] sm:$0xff]
      %v2618 = vld [vmem:[%s2596 + $0xf8] sm:$0xff]
      %v2619 = vld [vmem:[%s2596 + $0x108] sm:$0xff]
      %v2620 = vld [vmem:[%s2596 + $0x110] sm:$0xff]
      %v2621 = vld [vmem:[%s2596 + $0x120] sm:$0xff]
      %v2622 = vld [vmem:[%s2596 + $0x128] sm:$0xff]
      %v2623 = vld [vmem:[%s2596 + $0x138] sm:$0xff]
      %v2624 = vld [vmem:[%s2596 + $0x140] sm:$0xff]
      %v2625 = vld [vmem:[%s2596 + $0x150] sm:$0xff]
      %v2626 = vld [vmem:[%s2596 + $0x158] sm:$0xff]
      %v2627 = vld [vmem:[%s2596 + $0x168] sm:$0xff]
      %v2628 = vld [vmem:[%s2596 + $0x170] sm:$0xff]
      %v2629 = vpack.c.bf16 %v2598, %v2597
      %v2630 = vpack.c.bf16 %v2600, %v2599
      %v2631 = vpack.c.bf16 %v2602, %v2601
      %v2632 = vpack.c.bf16 %v2604, %v2603
      %v2633 = vpack.c.bf16 %v2606, %v2605
      %v2634 = vpack.c.bf16 %v2608, %v2607
      %v2635 = vpack.c.bf16 %v2610, %v2609
      %v2636 = vpack.c.bf16 %v2612, %v2611
      %v2637 = vpack.c.bf16 %v2614, %v2613
      %v2638 = vpack.c.bf16 %v2616, %v2615
      %v2639 = vpack.c.bf16 %v2618, %v2617
      %v2640 = vpack.c.bf16 %v2620, %v2619
      %v2641 = vpack.c.bf16 %v2622, %v2621
      %v2642 = vpack.c.bf16 %v2624, %v2623
      %v2643 = vpack.c.bf16 %v2626, %v2625
      %v2644 = vpack.c.bf16 %v2628, %v2627
      %v2646 = vsel %vm481, %v2629, 0
      %v2649 = vsel %vm481, %v2630, 0
      %v2652 = vsel %vm481, %v2631, 0
      %v2655 = vsel %vm481, %v2632, 0
      %v2658 = vsel %vm481, %v2633, 0
      %v2661 = vsel %vm481, %v2634, 0
      %v2664 = vsel %vm481, %v2635, 0
      %v2667 = vsel %vm481, %v2636, 0
      %v2670 = vsel %vm481, %v2637, 0
      %v2673 = vsel %vm481, %v2638, 0
      %v2676 = vsel %vm481, %v2639, 0
      %v2679 = vsel %vm481, %v2640, 0
      %v2682 = vsel %vm481, %v2641, 0
      %v2685 = vsel %vm481, %v2642, 0
      %v2688 = vsel %vm481, %v2643, 0
      %v2691 = vsel %vm481, %v2644, 0
      %v2694 = vsel %vm619, %v520, 0
      %2696 = vmatprep.subr.bf16.mxu0 0
      %2697 = vmatpush1.bf16.msra.mxu0 %v2694
      %2698 = vmatprep.subr.bf16.mxu0 0
      %2699 = vmatpush1.bf16.msra.mxu0 0
      %2700 = vmatprep.subr.bf16.mxu0 0
      %2701 = vmatpush1.bf16.msra.mxu0 0
      %2702 = vmatprep.subr.bf16.mxu0 0
      %2703 = vmatpush1.bf16.msra.mxu0 0
      %2704 = vmatprep.subr.bf16.mxu0 0
      %2705 = vmatpush1.bf16.msra.mxu0 0
      %2706 = vmatprep.subr.bf16.mxu0 0
      %2707 = vmatpush1.bf16.msra.mxu0 0
      %2708 = vmatprep.subr.bf16.mxu0 0
      %2709 = vmatpush1.bf16.msra.mxu0 0
      %2710 = vmatprep.subr.bf16.mxu0 0
      %2711 = vmatpush1.bf16.msra.mxu0 0
      %2712 = vmatprep.subr.bf16.mxu0 0
      %2713 = vmatpush1.bf16.msra.mxu0 0
      %2714 = vmatprep.subr.bf16.mxu0 0
      %2715 = vmatpush1.bf16.msra.mxu0 0
      %2716 = vmatprep.subr.bf16.mxu0 0
      %2717 = vmatpush1.bf16.msra.mxu0 0
      %2718 = vmatprep.subr.bf16.mxu0 0
      %2719 = vmatpush1.bf16.msra.mxu0 0
      %2720 = vmatprep.subr.bf16.mxu0 0
      %2721 = vmatpush1.bf16.msra.mxu0 0
      %2722 = vmatprep.subr.bf16.mxu0 0
      %2723 = vmatpush1.bf16.msra.mxu0 0
      %2724 = vmatprep.subr.bf16.mxu0 0
      %2725 = vmatpush1.bf16.msra.mxu0 0
      %2726 = vmatprep.subr.bf16.mxu0 0
      %2727 = vmatpush1.bf16.msra.mxu0 0
      %2728 = vmatprep.mubr.bf16.mxu0 0
      %2729 = vmatmul.mubr.bf16.gmra.mrb[0].mxu0 %v2646
      %v2730 = vpop.f32.mrb[0].mxu0
      %v2731 = vadd.f32 0.0, %v2730
      %v2732 = vpop.f32.mrb[0].mxu0
      %v2733 = vpop.f32.mrb[0].mxu0
      %v2734 = vadd.f32 0.0, %v2733
      %v2735 = vpop.f32.mrb[0].mxu0
      %2736 = vmatprep.mubr.bf16.mxu0 0
      %2737 = vmatmul.mubr.bf16.gmra.mrb[0].mxu0 %v2649
      %v2738 = vpop.f32.mrb[0].mxu0
      %v2739 = vadd.f32 0.0, %v2738
      %v2740 = vpop.f32.mrb[0].mxu0
      %v2741 = vpop.f32.mrb[0].mxu0
      %v2742 = vadd.f32 0.0, %v2741
      %v2743 = vpop.f32.mrb[0].mxu0
      %2744 = vmatprep.mubr.bf16.mxu0 0
      %2745 = vmatmul.mubr.bf16.gmra.mrb[0].mxu0 %v2652
      %v2746 = vpop.f32.mrb[0].mxu0
      %v2747 = vadd.f32 0.0, %v2746
      %v2748 = vpop.f32.mrb[0].mxu0
      %v2749 = vpop.f32.mrb[0].mxu0
      %v2750 = vadd.f32 0.0, %v2749
      %v2751 = vpop.f32.mrb[0].mxu0
      %2752 = vmatprep.mubr.bf16.mxu0 0
      %2753 = vmatmul.mubr.bf16.gmra.mrb[0].mxu0 %v2655
      %v2754 = vpop.f32.mrb[0].mxu0
      %v2755 = vadd.f32 0.0, %v2754
      %v2756 = vpop.f32.mrb[0].mxu0
      %v2757 = vpop.f32.mrb[0].mxu0
      %v2758 = vadd.f32 0.0, %v2757
      %v2759 = vpop.f32.mrb[0].mxu0
      %2760 = vmatprep.mubr.bf16.mxu0 0
      %2761 = vmatmul.mubr.bf16.gmra.mrb[0].mxu0 %v2658
      %v2762 = vpop.f32.mrb[0].mxu0
      %v2763 = vadd.f32 0.0, %v2762
      %v2764 = vpop.f32.mrb[0].mxu0
      %v2765 = vpop.f32.mrb[0].mxu0
      %v2766 = vadd.f32 0.0, %v2765
      %v2767 = vpop.f32.mrb[0].mxu0
      %2768 = vmatprep.mubr.bf16.mxu0 0
      %2769 = vmatmul.mubr.bf16.gmra.mrb[0].mxu0 %v2661
      %v2770 = vpop.f32.mrb[0].mxu0
      %v2771 = vadd.f32 0.0, %v2770
      %v2772 = vpop.f32.mrb[0].mxu0
      %v2773 = vpop.f32.mrb[0].mxu0
      %v2774 = vadd.f32 0.0, %v2773
      %v2775 = vpop.f32.mrb[0].mxu0
      %2776 = vmatprep.mubr.bf16.mxu0 0
      %2777 = vmatmul.mubr.bf16.gmra.mrb[0].mxu0 %v2664
      %v2778 = vpop.f32.mrb[0].mxu0
      %v2779 = vadd.f32 0.0, %v2778
      %v2780 = vpop.f32.mrb[0].mxu0
      %v2781 = vpop.f32.mrb[0].mxu0
      %v2782 = vadd.f32 0.0, %v2781
      %v2783 = vpop.f32.mrb[0].mxu0
      %2784 = vmatprep.mubr.bf16.mxu0 0
      %2785 = vmatmul.mubr.bf16.gmra.mrb[0].mxu0 %v2667
      %v2786 = vpop.f32.mrb[0].mxu0
      %v2787 = vadd.f32 0.0, %v2786
      %v2788 = vpop.f32.mrb[0].mxu0
      %v2789 = vpop.f32.mrb[0].mxu0
      %v2790 = vadd.f32 0.0, %v2789
      %v2791 = vpop.f32.mrb[0].mxu0
      %2792 = vmatprep.mubr.bf16.mxu0 0
      %2793 = vmatmul.mubr.bf16.gmra.mrb[0].mxu0 %v2670
      %v2794 = vpop.f32.mrb[0].mxu0
      %v2795 = vadd.f32 0.0, %v2794
      %v2796 = vpop.f32.mrb[0].mxu0
      %v2797 = vpop.f32.mrb[0].mxu0
      %v2798 = vadd.f32 0.0, %v2797
      %v2799 = vpop.f32.mrb[0].mxu0
      %2800 = vmatprep.mubr.bf16.mxu0 0
      %2801 = vmatmul.mubr.bf16.gmra.mrb[0].mxu0 %v2673
      %v2802 = vpop.f32.mrb[0].mxu0
      %v2803 = vadd.f32 0.0, %v2802
      %v2804 = vpop.f32.mrb[0].mxu0
      %v2805 = vpop.f32.mrb[0].mxu0
      %v2806 = vadd.f32 0.0, %v2805
      %v2807 = vpop.f32.mrb[0].mxu0
      %2808 = vmatprep.mubr.bf16.mxu0 0
      %2809 = vmatmul.mubr.bf16.gmra.mrb[0].mxu0 %v2676
      %v2810 = vpop.f32.mrb[0].mxu0
      %v2811 = vadd.f32 0.0, %v2810
      %v2812 = vpop.f32.mrb[0].mxu0
      %v2813 = vpop.f32.mrb[0].mxu0
      %v2814 = vadd.f32 0.0, %v2813
      %v2815 = vpop.f32.mrb[0].mxu0
      %2816 = vmatprep.mubr.bf16.mxu0 0
      %2817 = vmatmul.mubr.bf16.gmra.mrb[0].mxu0 %v2679
      %v2818 = vpop.f32.mrb[0].mxu0
      %v2819 = vadd.f32 0.0, %v2818
      %v2820 = vpop.f32.mrb[0].mxu0
      %v2821 = vpop.f32.mrb[0].mxu0
      %v2822 = vadd.f32 0.0, %v2821
      %v2823 = vpop.f32.mrb[0].mxu0
      %2824 = vmatprep.mubr.bf16.mxu0 0
      %2825 = vmatmul.mubr.bf16.gmra.mrb[0].mxu0 %v2682
      %v2826 = vpop.f32.mrb[0].mxu0
      %v2827 = vadd.f32 0.0, %v2826
      %v2828 = vpop.f32.mrb[0].mxu0
      %v2829 = vpop.f32.mrb[0].mxu0
      %v2830 = vadd.f32 0.0, %v2829
      %v2831 = vpop.f32.mrb[0].mxu0
      %2832 = vmatprep.mubr.bf16.mxu0 0
      %2833 = vmatmul.mubr.bf16.gmra.mrb[0].mxu0 %v2685
      %v2834 = vpop.f32.mrb[0].mxu0
      %v2835 = vadd.f32 0.0, %v2834
      %v2836 = vpop.f32.mrb[0].mxu0
      %v2837 = vpop.f32.mrb[0].mxu0
      %v2838 = vadd.f32 0.0, %v2837
      %v2839 = vpop.f32.mrb[0].mxu0
      %2840 = vmatprep.mubr.bf16.mxu0 0
      %2841 = vmatmul.mubr.bf16.gmra.mrb[0].mxu0 %v2688
      %v2842 = vpop.f32.mrb[0].mxu0
      %v2843 = vadd.f32 0.0, %v2842
      %v2844 = vpop.f32.mrb[0].mxu0
      %v2845 = vpop.f32.mrb[0].mxu0
      %v2846 = vadd.f32 0.0, %v2845
      %v2847 = vpop.f32.mrb[0].mxu0
      %2848 = vmatprep.mubr.bf16.mxu0 0
      %2849 = vmatmul.mubr.bf16.gmra.mrb[0].mxu0 %v2691
      %v2850 = vpop.f32.mrb[0].mxu0
      %v2851 = vadd.f32 0.0, %v2850
      %v2852 = vpop.f32.mrb[0].mxu0
      %v2853 = vpop.f32.mrb[0].mxu0
      %v2854 = vadd.f32 0.0, %v2853
      %v2855 = vpop.f32.mrb[0].mxu0
      %2856 = vdwg.mxu0
      %v2857 = vld [vmem:[#allocation3] sm:$0xff]
      %v2858 = vld [vmem:[#allocation3 + $0x8] sm:$0xff]
      %v2859 = vld [vmem:[#allocation3 + $0x10] sm:$0xff]
      %v2860 = vld [vmem:[#allocation3 + $0x18] sm:$0xff]
      %v2861 = vld [vmem:[#allocation3 + $0x20] sm:$0xff]
      %v2862 = vld [vmem:[#allocation3 + $0x28] sm:$0xff]
      %v2863 = vld [vmem:[#allocation3 + $0x30] sm:$0xff]
      %v2864 = vld [vmem:[#allocation3 + $0x38] sm:$0xff]
      %v2865 = vld [vmem:[#allocation3 + $0x40] sm:$0xff]
      %v2866 = vld [vmem:[#allocation3 + $0x48] sm:$0xff]
      %v2867 = vld [vmem:[#allocation3 + $0x50] sm:$0xff]
      %v2868 = vld [vmem:[#allocation3 + $0x58] sm:$0xff]
      %v2869 = vld [vmem:[#allocation3 + $0x60] sm:$0xff]
      %v2870 = vld [vmem:[#allocation3 + $0x68] sm:$0xff]
      %v2871 = vld [vmem:[#allocation3 + $0x70] sm:$0xff]
      %v2872 = vld [vmem:[#allocation3 + $0x78] sm:$0xff]
      %v2873 = vld [vmem:[#allocation3 + $0x80] sm:$0xff]
      %v2874 = vld [vmem:[#allocation3 + $0x88] sm:$0xff]
      %v2875 = vld [vmem:[#allocation3 + $0x90] sm:$0xff]
      %v2876 = vld [vmem:[#allocation3 + $0x98] sm:$0xff]
      %v2877 = vld [vmem:[#allocation3 + $0xa0] sm:$0xff]
      %v2878 = vld [vmem:[#allocation3 + $0xa8] sm:$0xff]
      %v2879 = vld [vmem:[#allocation3 + $0xb0] sm:$0xff]
      %v2880 = vld [vmem:[#allocation3 + $0xb8] sm:$0xff]
      %v2881 = vld [vmem:[#allocation3 + $0xc0] sm:$0xff]
      %v2882 = vld [vmem:[#allocation3 + $0xc8] sm:$0xff]
      %v2883 = vld [vmem:[#allocation3 + $0xd0] sm:$0xff]
      %v2884 = vld [vmem:[#allocation3 + $0xd8] sm:$0xff]
      %v2885 = vld [vmem:[#allocation3 + $0xe0] sm:$0xff]
      %v2886 = vld [vmem:[#allocation3 + $0xe8] sm:$0xff]
      %v2887 = vld [vmem:[#allocation3 + $0xf0] sm:$0xff]
      %v2888 = vld [vmem:[#allocation3 + $0xf8] sm:$0xff]
      %v2889 = vadd.f32 %v2857, %v2731
      %v2890 = vadd.f32 %v2858, %v2734
      %v2891 = vadd.f32 %v2859, %v2739
      %v2892 = vadd.f32 %v2860, %v2742
      %v2893 = vadd.f32 %v2861, %v2747
      %v2894 = vadd.f32 %v2862, %v2750
      %v2895 = vadd.f32 %v2863, %v2755
      %v2896 = vadd.f32 %v2864, %v2758
      %v2897 = vadd.f32 %v2865, %v2763
      %v2898 = vadd.f32 %v2866, %v2766
      %v2899 = vadd.f32 %v2867, %v2771
      %v2900 = vadd.f32 %v2868, %v2774
      %v2901 = vadd.f32 %v2869, %v2779
      %v2902 = vadd.f32 %v2870, %v2782
      %v2903 = vadd.f32 %v2871, %v2787
      %v2904 = vadd.f32 %v2872, %v2790
      %v2905 = vadd.f32 %v2873, %v2795
      %v2906 = vadd.f32 %v2874, %v2798
      %v2907 = vadd.f32 %v2875, %v2803
      %v2908 = vadd.f32 %v2876, %v2806
      %v2909 = vadd.f32 %v2877, %v2811
      %v2910 = vadd.f32 %v2878, %v2814
      %v2911 = vadd.f32 %v2879, %v2819
      %v2912 = vadd.f32 %v2880, %v2822
      %v2913 = vadd.f32 %v2881, %v2827
      %v2914 = vadd.f32 %v2882, %v2830
      %v2915 = vadd.f32 %v2883, %v2835
      %v2916 = vadd.f32 %v2884, %v2838
      %v2917 = vadd.f32 %v2885, %v2843
      %v2918 = vadd.f32 %v2886, %v2846
      %v2919 = vadd.f32 %v2887, %v2851
      %v2920 = vadd.f32 %v2888, %v2854
      %2921 = vst.msk [vmem:[#allocation3] sm:$0xff] %vm481, %v2889
      %2922 = vst.msk [vmem:[#allocation3 + $0x8] sm:$0xff] %vm481, %v2890
      %2923 = vst.msk [vmem:[#allocation3 + $0x10] sm:$0xff] %vm481, %v2891
      %2924 = vst.msk [vmem:[#allocation3 + $0x18] sm:$0xff] %vm481, %v2892
      %2925 = vst.msk [vmem:[#allocation3 + $0x20] sm:$0xff] %vm481, %v2893
      %2926 = vst.msk [vmem:[#allocation3 + $0x28] sm:$0xff] %vm481, %v2894
      %2927 = vst.msk [vmem:[#allocation3 + $0x30] sm:$0xff] %vm481, %v2895
      %2928 = vst.msk [vmem:[#allocation3 + $0x38] sm:$0xff] %vm481, %v2896
      %2929 = vst.msk [vmem:[#allocation3 + $0x40] sm:$0xff] %vm481, %v2897
      %2930 = vst.msk [vmem:[#allocation3 + $0x48] sm:$0xff] %vm481, %v2898
      %2931 = vst.msk [vmem:[#allocation3 + $0x50] sm:$0xff] %vm481, %v2899
      %2932 = vst.msk [vmem:[#allocation3 + $0x58] sm:$0xff] %vm481, %v2900
      %2933 = vst.msk [vmem:[#allocation3 + $0x60] sm:$0xff] %vm481, %v2901
      %2934 = vst.msk [vmem:[#allocation3 + $0x68] sm:$0xff] %vm481, %v2902
      %2935 = vst.msk [vmem:[#allocation3 + $0x70] sm:$0xff] %vm481, %v2903
      %2936 = vst.msk [vmem:[#allocation3 + $0x78] sm:$0xff] %vm481, %v2904
      %2937 = vst.msk [vmem:[#allocation3 + $0x80] sm:$0xff] %vm481, %v2905
      %2938 = vst.msk [vmem:[#allocation3 + $0x88] sm:$0xff] %vm481, %v2906
      %2939 = vst.msk [vmem:[#allocation3 + $0x90] sm:$0xff] %vm481, %v2907
      %2940 = vst.msk [vmem:[#allocation3 + $0x98] sm:$0xff] %vm481, %v2908
      %2941 = vst.msk [vmem:[#allocation3 + $0xa0] sm:$0xff] %vm481, %v2909
      %2942 = vst.msk [vmem:[#allocation3 + $0xa8] sm:$0xff] %vm481, %v2910
      %2943 = vst.msk [vmem:[#allocation3 + $0xb0] sm:$0xff] %vm481, %v2911
      %2944 = vst.msk [vmem:[#allocation3 + $0xb8] sm:$0xff] %vm481, %v2912
      %2945 = vst.msk [vmem:[#allocation3 + $0xc0] sm:$0xff] %vm481, %v2913
      %2946 = vst.msk [vmem:[#allocation3 + $0xc8] sm:$0xff] %vm481, %v2914
      %2947 = vst.msk [vmem:[#allocation3 + $0xd0] sm:$0xff] %vm481, %v2915
      %2948 = vst.msk [vmem:[#allocation3 + $0xd8] sm:$0xff] %vm481, %v2916
      %2949 = vst.msk [vmem:[#allocation3 + $0xe0] sm:$0xff] %vm481, %v2917
      %2950 = vst.msk [vmem:[#allocation3 + $0xe8] sm:$0xff] %vm481, %v2918
      %2951 = vst.msk [vmem:[#allocation3 + $0xf0] sm:$0xff] %vm481, %v2919
      %2952 = vst.msk [vmem:[#allocation3 + $0xf8] sm:$0xff] %vm481, %v2920
      %v2953 = vld [vmem:[%s2596 + $0x1] sm:$0xff]
      %v2954 = vld [vmem:[%s2596 + $0x9] sm:$0xff]
      %v2955 = vld [vmem:[%s2596 + $0x19] sm:$0xff]
      %v2956 = vld [vmem:[%s2596 + $0x21] sm:$0xff]
      %v2957 = vld [vmem:[%s2596 + $0x31] sm:$0xff]
      %v2958 = vld [vmem:[%s2596 + $0x39] sm:$0xff]
      %v2959 = vld [vmem:[%s2596 + $0x49] sm:$0xff]
      %v2960 = vld [vmem:[%s2596 + $0x51] sm:$0xff]
      %v2961 = vld [vmem:[%s2596 + $0x61] sm:$0xff]
      %v2962 = vld [vmem:[%s2596 + $0x69] sm:$0xff]
      %v2963 = vld [vmem:[%s2596 + $0x79] sm:$0xff]
      %v2964 = vld [vmem:[%s2596 + $0x81] sm:$0xff]
      %v2965 = vld [vmem:[%s2596 + $0x91] sm:$0xff]
      %v2966 = vld [vmem:[%s2596 + $0x99] sm:$0xff]
      %v2967 = vld [vmem:[%s2596 + $0xa9] sm:$0xff]
      %v2968 = vld [vmem:[%s2596 + $0xb1] sm:$0xff]
      %v2969 = vld [vmem:[%s2596 + $0xc1] sm:$0xff]
      %v2970 = vld [vmem:[%s2596 + $0xc9] sm:$0xff]
      %v2971 = vld [vmem:[%s2596 + $0xd9] sm:$0xff]
      %v2972 = vld [vmem:[%s2596 + $0xe1] sm:$0xff]
      %v2973 = vld [vmem:[%s2596 + $0xf1] sm:$0xff]
      %v2974 = vld [vmem:[%s2596 + $0xf9] sm:$0xff]
      %v2975 = vld [vmem:[%s2596 + $0x109] sm:$0xff]
      %v2976 = vld [vmem:[%s2596 + $0x111] sm:$0xff]
      %v2977 = vld [vmem:[%s2596 + $0x121] sm:$0xff]
      %v2978 = vld [vmem:[%s2596 + $0x129] sm:$0xff]
      %v2979 = vld [vmem:[%s2596 + $0x139] sm:$0xff]
      %v2980 = vld [vmem:[%s2596 + $0x141] sm:$0xff]
      %v2981 = vld [vmem:[%s2596 + $0x151] sm:$0xff]
      %v2982 = vld [vmem:[%s2596 + $0x159] sm:$0xff]
      %v2983 = vld [vmem:[%s2596 + $0x169] sm:$0xff]
      %v2984 = vld [vmem:[%s2596 + $0x171] sm:$0xff]
      %v2985 = vpack.c.bf16 %v2954, %v2953
      %v2986 = vpack.c.bf16 %v2956, %v2955
      %v2987 = vpack.c.bf16 %v2958, %v2957
      %v2988 = vpack.c.bf16 %v2960, %v2959
      %v2989 = vpack.c.bf16 %v2962, %v2961
      %v2990 = vpack.c.bf16 %v2964, %v2963
      %v2991 = vpack.c.bf16 %v2966, %v2965
      %v2992 = vpack.c.bf16 %v2968, %v2967
      %v2993 = vpack.c.bf16 %v2970, %v2969
      %v2994 = vpack.c.bf16 %v2972, %v2971
      %v2995 = vpack.c.bf16 %v2974, %v2973
      %v2996 = vpack.c.bf16 %v2976, %v2975
      %v2997 = vpack.c.bf16 %v2978, %v2977
      %v2998 = vpack.c.bf16 %v2980, %v2979
      %v2999 = vpack.c.bf16 %v2982, %v2981
      %v3000 = vpack.c.bf16 %v2984, %v2983
      %v3002 = vsel %vm481, %v2985, 0
      %v3005 = vsel %vm481, %v2986, 0
      %v3008 = vsel %vm481, %v2987, 0
      %v3011 = vsel %vm481, %v2988, 0
      %v3014 = vsel %vm481, %v2989, 0
      %v3017 = vsel %vm481, %v2990, 0
      %v3020 = vsel %vm481, %v2991, 0
      %v3023 = vsel %vm481, %v2992, 0
      %v3026 = vsel %vm481, %v2993, 0
      %v3029 = vsel %vm481, %v2994, 0
      %v3032 = vsel %vm481, %v2995, 0
      %v3035 = vsel %vm481, %v2996, 0
      %v3038 = vsel %vm481, %v2997, 0
      %v3041 = vsel %vm481, %v2998, 0
      %v3044 = vsel %vm481, %v2999, 0
      %v3047 = vsel %vm481, %v3000, 0
      %v3050 = vsel %vm619, %v521, 0
      %3052 = vmatprep.subr.bf16.mxu0 0
      %3053 = vmatpush1.bf16.msra.mxu0 %v3050
      %3054 = vmatprep.subr.bf16.mxu0 0
      %3055 = vmatpush1.bf16.msra.mxu0 0
      %3056 = vmatprep.subr.bf16.mxu0 0
      %3057 = vmatpush1.bf16.msra.mxu0 0
      %3058 = vmatprep.subr.bf16.mxu0 0
      %3059 = vmatpush1.bf16.msra.mxu0 0
      %3060 = vmatprep.subr.bf16.mxu0 0
      %3061 = vmatpush1.bf16.msra.mxu0 0
      %3062 = vmatprep.subr.bf16.mxu0 0
      %3063 = vmatpush1.bf16.msra.mxu0 0
      %3064 = vmatprep.subr.bf16.mxu0 0
      %3065 = vmatpush1.bf16.msra.mxu0 0
      %3066 = vmatprep.subr.bf16.mxu0 0
      %3067 = vmatpush1.bf16.msra.mxu0 0
      %3068 = vmatprep.subr.bf16.mxu0 0
      %3069 = vmatpush1.bf16.msra.mxu0 0
      %3070 = vmatprep.subr.bf16.mxu0 0
      %3071 = vmatpush1.bf16.msra.mxu0 0
      %3072 = vmatprep.subr.bf16.mxu0 0
      %3073 = vmatpush1.bf16.msra.mxu0 0
      %3074 = vmatprep.subr.bf16.mxu0 0
      %3075 = vmatpush1.bf16.msra.mxu0 0
      %3076 = vmatprep.subr.bf16.mxu0 0
      %3077 = vmatpush1.bf16.msra.mxu0 0
      %3078 = vmatprep.subr.bf16.mxu0 0
      %3079 = vmatpush1.bf16.msra.mxu0 0
      %3080 = vmatprep.subr.bf16.mxu0 0
      %3081 = vmatpush1.bf16.msra.mxu0 0
      %3082 = vmatprep.subr.bf16.mxu0 0
      %3083 = vmatpush1.bf16.msra.mxu0 0
      %3084 = vmatprep.mubr.bf16.mxu0 0
      %3085 = vmatmul.mubr.bf16.gmra.mrb[0].mxu0 %v3002
      %v3086 = vpop.f32.mrb[0].mxu0
      %v3087 = vadd.f32 0.0, %v3086
      %v3088 = vpop.f32.mrb[0].mxu0
      %v3089 = vpop.f32.mrb[0].mxu0
      %v3090 = vadd.f32 0.0, %v3089
      %v3091 = vpop.f32.mrb[0].mxu0
      %3092 = vmatprep.mubr.bf16.mxu0 0
      %3093 = vmatmul.mubr.bf16.gmra.mrb[0].mxu0 %v3005
      %v3094 = vpop.f32.mrb[0].mxu0
      %v3095 = vadd.f32 0.0, %v3094
      %v3096 = vpop.f32.mrb[0].mxu0
      %v3097 = vpop.f32.mrb[0].mxu0
      %v3098 = vadd.f32 0.0, %v3097
      %v3099 = vpop.f32.mrb[0].mxu0
      %3100 = vmatprep.mubr.bf16.mxu0 0
      %3101 = vmatmul.mubr.bf16.gmra.mrb[0].mxu0 %v3008
      %v3102 = vpop.f32.mrb[0].mxu0
      %v3103 = vadd.f32 0.0, %v3102
      %v3104 = vpop.f32.mrb[0].mxu0
      %v3105 = vpop.f32.mrb[0].mxu0
      %v3106 = vadd.f32 0.0, %v3105
      %v3107 = vpop.f32.mrb[0].mxu0
      %3108 = vmatprep.mubr.bf16.mxu0 0
      %3109 = vmatmul.mubr.bf16.gmra.mrb[0].mxu0 %v3011
      %v3110 = vpop.f32.mrb[0].mxu0
      %v3111 = vadd.f32 0.0, %v3110
      %v3112 = vpop.f32.mrb[0].mxu0
      %v3113 = vpop.f32.mrb[0].mxu0
      %v3114 = vadd.f32 0.0, %v3113
      %v3115 = vpop.f32.mrb[0].mxu0
      %3116 = vmatprep.mubr.bf16.mxu0 0
      %3117 = vmatmul.mubr.bf16.gmra.mrb[0].mxu0 %v3014
      %v3118 = vpop.f32.mrb[0].mxu0
      %v3119 = vadd.f32 0.0, %v3118
      %v3120 = vpop.f32.mrb[0].mxu0
      %v3121 = vpop.f32.mrb[0].mxu0
      %v3122 = vadd.f32 0.0, %v3121
      %v3123 = vpop.f32.mrb[0].mxu0
      %3124 = vmatprep.mubr.bf16.mxu0 0
      %3125 = vmatmul.mubr.bf16.gmra.mrb[0].mxu0 %v3017
      %v3126 = vpop.f32.mrb[0].mxu0
      %v3127 = vadd.f32 0.0, %v3126
      %v3128 = vpop.f32.mrb[0].mxu0
      %v3129 = vpop.f32.mrb[0].mxu0
      %v3130 = vadd.f32 0.0, %v3129
      %v3131 = vpop.f32.mrb[0].mxu0
      %3132 = vmatprep.mubr.bf16.mxu0 0
      %3133 = vmatmul.mubr.bf16.gmra.mrb[0].mxu0 %v3020
      %v3134 = vpop.f32.mrb[0].mxu0
      %v3135 = vadd.f32 0.0, %v3134
      %v3136 = vpop.f32.mrb[0].mxu0
      %v3137 = vpop.f32.mrb[0].mxu0
      %v3138 = vadd.f32 0.0, %v3137
      %v3139 = vpop.f32.mrb[0].mxu0
      %3140 = vmatprep.mubr.bf16.mxu0 0
      %3141 = vmatmul.mubr.bf16.gmra.mrb[0].mxu0 %v3023
      %v3142 = vpop.f32.mrb[0].mxu0
      %v3143 = vadd.f32 0.0, %v3142
      %v3144 = vpop.f32.mrb[0].mxu0
      %v3145 = vpop.f32.mrb[0].mxu0
      %v3146 = vadd.f32 0.0, %v3145
      %v3147 = vpop.f32.mrb[0].mxu0
      %3148 = vmatprep.mubr.bf16.mxu0 0
      %3149 = vmatmul.mubr.bf16.gmra.mrb[0].mxu0 %v3026
      %v3150 = vpop.f32.mrb[0].mxu0
      %v3151 = vadd.f32 0.0, %v3150
      %v3152 = vpop.f32.mrb[0].mxu0
      %v3153 = vpop.f32.mrb[0].mxu0
      %v3154 = vadd.f32 0.0, %v3153
      %v3155 = vpop.f32.mrb[0].mxu0
      %3156 = vmatprep.mubr.bf16.mxu0 0
      %3157 = vmatmul.mubr.bf16.gmra.mrb[0].mxu0 %v3029
      %v3158 = vpop.f32.mrb[0].mxu0
      %v3159 = vadd.f32 0.0, %v3158
      %v3160 = vpop.f32.mrb[0].mxu0
      %v3161 = vpop.f32.mrb[0].mxu0
      %v3162 = vadd.f32 0.0, %v3161
      %v3163 = vpop.f32.mrb[0].mxu0
      %3164 = vmatprep.mubr.bf16.mxu0 0
      %3165 = vmatmul.mubr.bf16.gmra.mrb[0].mxu0 %v3032
      %v3166 = vpop.f32.mrb[0].mxu0
      %v3167 = vadd.f32 0.0, %v3166
      %v3168 = vpop.f32.mrb[0].mxu0
      %v3169 = vpop.f32.mrb[0].mxu0
      %v3170 = vadd.f32 0.0, %v3169
      %v3171 = vpop.f32.mrb[0].mxu0
      %3172 = vmatprep.mubr.bf16.mxu0 0
      %3173 = vmatmul.mubr.bf16.gmra.mrb[0].mxu0 %v3035
      %v3174 = vpop.f32.mrb[0].mxu0
      %v3175 = vadd.f32 0.0, %v3174
      %v3176 = vpop.f32.mrb[0].mxu0
      %v3177 = vpop.f32.mrb[0].mxu0
      %v3178 = vadd.f32 0.0, %v3177
      %v3179 = vpop.f32.mrb[0].mxu0
      %3180 = vmatprep.mubr.bf16.mxu0 0
      %3181 = vmatmul.mubr.bf16.gmra.mrb[0].mxu0 %v3038
      %v3182 = vpop.f32.mrb[0].mxu0
      %v3183 = vadd.f32 0.0, %v3182
      %v3184 = vpop.f32.mrb[0].mxu0
      %v3185 = vpop.f32.mrb[0].mxu0
      %v3186 = vadd.f32 0.0, %v3185
      %v3187 = vpop.f32.mrb[0].mxu0
      %3188 = vmatprep.mubr.bf16.mxu0 0
      %3189 = vmatmul.mubr.bf16.gmra.mrb[0].mxu0 %v3041
      %v3190 = vpop.f32.mrb[0].mxu0
      %v3191 = vadd.f32 0.0, %v3190
      %v3192 = vpop.f32.mrb[0].mxu0
      %v3193 = vpop.f32.mrb[0].mxu0
      %v3194 = vadd.f32 0.0, %v3193
      %v3195 = vpop.f32.mrb[0].mxu0
      %3196 = vmatprep.mubr.bf16.mxu0 0
      %3197 = vmatmul.mubr.bf16.gmra.mrb[0].mxu0 %v3044
      %v3198 = vpop.f32.mrb[0].mxu0
      %v3199 = vadd.f32 0.0, %v3198
      %v3200 = vpop.f32.mrb[0].mxu0
      %v3201 = vpop.f32.mrb[0].mxu0
      %v3202 = vadd.f32 0.0, %v3201
      %v3203 = vpop.f32.mrb[0].mxu0
      %3204 = vmatprep.mubr.bf16.mxu0 0
      %3205 = vmatmul.mubr.bf16.gmra.mrb[0].mxu0 %v3047
      %v3206 = vpop.f32.mrb[0].mxu0
      %v3207 = vadd.f32 0.0, %v3206
      %v3208 = vpop.f32.mrb[0].mxu0
      %v3209 = vpop.f32.mrb[0].mxu0
      %v3210 = vadd.f32 0.0, %v3209
      %v3211 = vpop.f32.mrb[0].mxu0
      %3212 = vdwg.mxu0
      %v3213 = vld [vmem:[#allocation3] sm:$0xff]
      %v3214 = vld [vmem:[#allocation3 + $0x8] sm:$0xff]
      %v3215 = vld [vmem:[#allocation3 + $0x10] sm:$0xff]
      %v3216 = vld [vmem:[#allocation3 + $0x18] sm:$0xff]
      %v3217 = vld [vmem:[#allocation3 + $0x20] sm:$0xff]
      %v3218 = vld [vmem:[#allocation3 + $0x28] sm:$0xff]
      %v3219 = vld [vmem:[#allocation3 + $0x30] sm:$0xff]
      %v3220 = vld [vmem:[#allocation3 + $0x38] sm:$0xff]
      %v3221 = vld [vmem:[#allocation3 + $0x40] sm:$0xff]
      %v3222 = vld [vmem:[#allocation3 + $0x48] sm:$0xff]
      %v3223 = vld [vmem:[#allocation3 + $0x50] sm:$0xff]
      %v3224 = vld [vmem:[#allocation3 + $0x58] sm:$0xff]
      %v3225 = vld [vmem:[#allocation3 + $0x60] sm:$0xff]
      %v3226 = vld [vmem:[#allocation3 + $0x68] sm:$0xff]
      %v3227 = vld [vmem:[#allocation3 + $0x70] sm:$0xff]
      %v3228 = vld [vmem:[#allocation3 + $0x78] sm:$0xff]
      %v3229 = vld [vmem:[#allocation3 + $0x80] sm:$0xff]
      %v3230 = vld [vmem:[#allocation3 + $0x88] sm:$0xff]
      %v3231 = vld [vmem:[#allocation3 + $0x90] sm:$0xff]
      %v3232 = vld [vmem:[#allocation3 + $0x98] sm:$0xff]
      %v3233 = vld [vmem:[#allocation3 + $0xa0] sm:$0xff]
      %v3234 = vld [vmem:[#allocation3 + $0xa8] sm:$0xff]
      %v3235 = vld [vmem:[#allocation3 + $0xb0] sm:$0xff]
      %v3236 = vld [vmem:[#allocation3 + $0xb8] sm:$0xff]
      %v3237 = vld [vmem:[#allocation3 + $0xc0] sm:$0xff]
      %v3238 = vld [vmem:[#allocation3 + $0xc8] sm:$0xff]
      %v3239 = vld [vmem:[#allocation3 + $0xd0] sm:$0xff]
      %v3240 = vld [vmem:[#allocation3 + $0xd8] sm:$0xff]
      %v3241 = vld [vmem:[#allocation3 + $0xe0] sm:$0xff]
      %v3242 = vld [vmem:[#allocation3 + $0xe8] sm:$0xff]
      %v3243 = vld [vmem:[#allocation3 + $0xf0] sm:$0xff]
      %v3244 = vld [vmem:[#allocation3 + $0xf8] sm:$0xff]
      %v3245 = vadd.f32 %v3213, %v3087
      %v3246 = vadd.f32 %v3214, %v3090
      %v3247 = vadd.f32 %v3215, %v3095
      %v3248 = vadd.f32 %v3216, %v3098
      %v3249 = vadd.f32 %v3217, %v3103
      %v3250 = vadd.f32 %v3218, %v3106
      %v3251 = vadd.f32 %v3219, %v3111
      %v3252 = vadd.f32 %v3220, %v3114
      %v3253 = vadd.f32 %v3221, %v3119
      %v3254 = vadd.f32 %v3222, %v3122
      %v3255 = vadd.f32 %v3223, %v3127
      %v3256 = vadd.f32 %v3224, %v3130
      %v3257 = vadd.f32 %v3225, %v3135
      %v3258 = vadd.f32 %v3226, %v3138
      %v3259 = vadd.f32 %v3227, %v3143
      %v3260 = vadd.f32 %v3228, %v3146
      %v3261 = vadd.f32 %v3229, %v3151
      %v3262 = vadd.f32 %v3230, %v3154
      %v3263 = vadd.f32 %v3231, %v3159
      %v3264 = vadd.f32 %v3232, %v3162
      %v3265 = vadd.f32 %v3233, %v3167
      %v3266 = vadd.f32 %v3234, %v3170
      %v3267 = vadd.f32 %v3235, %v3175
      %v3268 = vadd.f32 %v3236, %v3178
      %v3269 = vadd.f32 %v3237, %v3183
      %v3270 = vadd.f32 %v3238, %v3186
      %v3271 = vadd.f32 %v3239, %v3191
      %v3272 = vadd.f32 %v3240, %v3194
      %v3273 = vadd.f32 %v3241, %v3199
      %v3274 = vadd.f32 %v3242, %v3202
      %v3275 = vadd.f32 %v3243, %v3207
      %v3276 = vadd.f32 %v3244, %v3210
      %3277 = vst.msk [vmem:[#allocation3] sm:$0xff] %vm481, %v3245
      %3278 = vst.msk [vmem:[#allocation3 + $0x8] sm:$0xff] %vm481, %v3246
      %3279 = vst.msk [vmem:[#allocation3 + $0x10] sm:$0xff] %vm481, %v3247
      %3280 = vst.msk [vmem:[#allocation3 + $0x18] sm:$0xff] %vm481, %v3248
      %3281 = vst.msk [vmem:[#allocation3 + $0x20] sm:$0xff] %vm481, %v3249
      %3282 = vst.msk [vmem:[#allocation3 + $0x28] sm:$0xff] %vm481, %v3250
      %3283 = vst.msk [vmem:[#allocation3 + $0x30] sm:$0xff] %vm481, %v3251
      %3284 = vst.msk [vmem:[#allocation3 + $0x38] sm:$0xff] %vm481, %v3252
      %3285 = vst.msk [vmem:[#allocation3 + $0x40] sm:$0xff] %vm481, %v3253
      %3286 = vst.msk [vmem:[#allocation3 + $0x48] sm:$0xff] %vm481, %v3254
      %3287 = vst.msk [vmem:[#allocation3 + $0x50] sm:$0xff] %vm481, %v3255
      %3288 = vst.msk [vmem:[#allocation3 + $0x58] sm:$0xff] %vm481, %v3256
      %3289 = vst.msk [vmem:[#allocation3 + $0x60] sm:$0xff] %vm481, %v3257
      %3290 = vst.msk [vmem:[#allocation3 + $0x68] sm:$0xff] %vm481, %v3258
      %3291 = vst.msk [vmem:[#allocation3 + $0x70] sm:$0xff] %vm481, %v3259
      %3292 = vst.msk [vmem:[#allocation3 + $0x78] sm:$0xff] %vm481, %v3260
      %3293 = vst.msk [vmem:[#allocation3 + $0x80] sm:$0xff] %vm481, %v3261
      %3294 = vst.msk [vmem:[#allocation3 + $0x88] sm:$0xff] %vm481, %v3262
      %3295 = vst.msk [vmem:[#allocation3 + $0x90] sm:$0xff] %vm481, %v3263
      %3296 = vst.msk [vmem:[#allocation3 + $0x98] sm:$0xff] %vm481, %v3264
      %3297 = vst.msk [vmem:[#allocation3 + $0xa0] sm:$0xff] %vm481, %v3265
      %3298 = vst.msk [vmem:[#allocation3 + $0xa8] sm:$0xff] %vm481, %v3266
      %3299 = vst.msk [vmem:[#allocation3 + $0xb0] sm:$0xff] %vm481, %v3267
      %3300 = vst.msk [vmem:[#allocation3 + $0xb8] sm:$0xff] %vm481, %v3268
      %3301 = vst.msk [vmem:[#allocation3 + $0xc0] sm:$0xff] %vm481, %v3269
      %3302 = vst.msk [vmem:[#allocation3 + $0xc8] sm:$0xff] %vm481, %v3270
      %3303 = vst.msk [vmem:[#allocation3 + $0xd0] sm:$0xff] %vm481, %v3271
      %3304 = vst.msk [vmem:[#allocation3 + $0xd8] sm:$0xff] %vm481, %v3272
      %3305 = vst.msk [vmem:[#allocation3 + $0xe0] sm:$0xff] %vm481, %v3273
      %3306 = vst.msk [vmem:[#allocation3 + $0xe8] sm:$0xff] %vm481, %v3274
      %3307 = vst.msk [vmem:[#allocation3 + $0xf0] sm:$0xff] %vm481, %v3275
      %3308 = vst.msk [vmem:[#allocation3 + $0xf8] sm:$0xff] %vm481, %v3276
      %v3309 = vld [vmem:[%s2596 + $0x2] sm:$0xff]
      %v3310 = vld [vmem:[%s2596 + $0xa] sm:$0xff]
      %v3311 = vld [vmem:[%s2596 + $0x1a] sm:$0xff]
      %v3312 = vld [vmem:[%s2596 + $0x22] sm:$0xff]
      %v3313 = vld [vmem:[%s2596 + $0x32] sm:$0xff]
      %v3314 = vld [vmem:[%s2596 + $0x3a] sm:$0xff]
      %v3315 = vld [vmem:[%s2596 + $0x4a] sm:$0xff]
      %v3316 = vld [vmem:[%s2596 + $0x52] sm:$0xff]
      %v3317 = vld [vmem:[%s2596 + $0x62] sm:$0xff]
      %v3318 = vld [vmem:[%s2596 + $0x6a] sm:$0xff]
      %v3319 = vld [vmem:[%s2596 + $0x7a] sm:$0xff]
      %v3320 = vld [vmem:[%s2596 + $0x82] sm:$0xff]
      %v3321 = vld [vmem:[%s2596 + $0x92] sm:$0xff]
      %v3322 = vld [vmem:[%s2596 + $0x9a] sm:$0xff]
      %v3323 = vld [vmem:[%s2596 + $0xaa] sm:$0xff]
      %v3324 = vld [vmem:[%s2596 + $0xb2] sm:$0xff]
      %v3325 = vld [vmem:[%s2596 + $0xc2] sm:$0xff]
      %v3326 = vld [vmem:[%s2596 + $0xca] sm:$0xff]
      %v3327 = vld [vmem:[%s2596 + $0xda] sm:$0xff]
      %v3328 = vld [vmem:[%s2596 + $0xe2] sm:$0xff]
      %v3329 = vld [vmem:[%s2596 + $0xf2] sm:$0xff]
      %v3330 = vld [vmem:[%s2596 + $0xfa] sm:$0xff]
      %v3331 = vld [vmem:[%s2596 + $0x10a] sm:$0xff]
      %v3332 = vld [vmem:[%s2596 + $0x112] sm:$0xff]
      %v3333 = vld [vmem:[%s2596 + $0x122] sm:$0xff]
      %v3334 = vld [vmem:[%s2596 + $0x12a] sm:$0xff]
      %v3335 = vld [vmem:[%s2596 + $0x13a] sm:$0xff]
      %v3336 = vld [vmem:[%s2596 + $0x142] sm:$0xff]
      %v3337 = vld [vmem:[%s2596 + $0x152] sm:$0xff]
      %v3338 = vld [vmem:[%s2596 + $0x15a] sm:$0xff]
      %v3339 = vld [vmem:[%s2596 + $0x16a] sm:$0xff]
      %v3340 = vld [vmem:[%s2596 + $0x172] sm:$0xff]
      %v3341 = vpack.c.bf16 %v3310, %v3309
      %v3342 = vpack.c.bf16 %v3312, %v3311
      %v3343 = vpack.c.bf16 %v3314, %v3313
      %v3344 = vpack.c.bf16 %v3316, %v3315
      %v3345 = vpack.c.bf16 %v3318, %v3317
      %v3346 = vpack.c.bf16 %v3320, %v3319
      %v3347 = vpack.c.bf16 %v3322, %v3321
      %v3348 = vpack.c.bf16 %v3324, %v3323
      %v3349 = vpack.c.bf16 %v3326, %v3325
      %v3350 = vpack.c.bf16 %v3328, %v3327
      %v3351 = vpack.c.bf16 %v3330, %v3329
      %v3352 = vpack.c.bf16 %v3332, %v3331
      %v3353 = vpack.c.bf16 %v3334, %v3333
      %v3354 = vpack.c.bf16 %v3336, %v3335
      %v3355 = vpack.c.bf16 %v3338, %v3337
      %v3356 = vpack.c.bf16 %v3340, %v3339
      %v3358 = vsel %vm481, %v3341, 0
      %v3361 = vsel %vm481, %v3342, 0
      %v3364 = vsel %vm481, %v3343, 0
      %v3367 = vsel %vm481, %v3344, 0
      %v3370 = vsel %vm481, %v3345, 0
      %v3373 = vsel %vm481, %v3346, 0
      %v3376 = vsel %vm481, %v3347, 0
      %v3379 = vsel %vm481, %v3348, 0
      %v3382 = vsel %vm481, %v3349, 0
      %v3385 = vsel %vm481, %v3350, 0
      %v3388 = vsel %vm481, %v3351, 0
      %v3391 = vsel %vm481, %v3352, 0
      %v3394 = vsel %vm481, %v3353, 0
      %v3397 = vsel %vm481, %v3354, 0
      %v3400 = vsel %vm481, %v3355, 0
      %v3403 = vsel %vm481, %v3356, 0
      %v3406 = vsel %vm619, %v522, 0
      %3408 = vmatprep.subr.bf16.mxu0 0
      %3409 = vmatpush1.bf16.msra.mxu0 %v3406
      %3410 = vmatprep.subr.bf16.mxu0 0
      %3411 = vmatpush1.bf16.msra.mxu0 0
      %3412 = vmatprep.subr.bf16.mxu0 0
      %3413 = vmatpush1.bf16.msra.mxu0 0
      %3414 = vmatprep.subr.bf16.mxu0 0
      %3415 = vmatpush1.bf16.msra.mxu0 0
      %3416 = vmatprep.subr.bf16.mxu0 0
      %3417 = vmatpush1.bf16.msra.mxu0 0
      %3418 = vmatprep.subr.bf16.mxu0 0
      %3419 = vmatpush1.bf16.msra.mxu0 0
      %3420 = vmatprep.subr.bf16.mxu0 0
      %3421 = vmatpush1.bf16.msra.mxu0 0
      %3422 = vmatprep.subr.bf16.mxu0 0
      %3423 = vmatpush1.bf16.msra.mxu0 0
      %3424 = vmatprep.subr.bf16.mxu0 0
      %3425 = vmatpush1.bf16.msra.mxu0 0
      %3426 = vmatprep.subr.bf16.mxu0 0
      %3427 = vmatpush1.bf16.msra.mxu0 0
      %3428 = vmatprep.subr.bf16.mxu0 0
      %3429 = vmatpush1.bf16.msra.mxu0 0
      %3430 = vmatprep.subr.bf16.mxu0 0
      %3431 = vmatpush1.bf16.msra.mxu0 0
      %3432 = vmatprep.subr.bf16.mxu0 0
      %3433 = vmatpush1.bf16.msra.mxu0 0
      %3434 = vmatprep.subr.bf16.mxu0 0
      %3435 = vmatpush1.bf16.msra.mxu0 0
      %3436 = vmatprep.subr.bf16.mxu0 0
      %3437 = vmatpush1.bf16.msra.mxu0 0
      %3438 = vmatprep.subr.bf16.mxu0 0
      %3439 = vmatpush1.bf16.msra.mxu0 0
      %3440 = vmatprep.mubr.bf16.mxu0 0
      %3441 = vmatmul.mubr.bf16.gmra.mrb[0].mxu0 %v3358
      %v3442 = vpop.f32.mrb[0].mxu0
      %v3443 = vadd.f32 0.0, %v3442
      %v3444 = vpop.f32.mrb[0].mxu0
      %v3445 = vpop.f32.mrb[0].mxu0
      %v3446 = vadd.f32 0.0, %v3445
      %v3447 = vpop.f32.mrb[0].mxu0
      %3448 = vmatprep.mubr.bf16.mxu0 0
      %3449 = vmatmul.mubr.bf16.gmra.mrb[0].mxu0 %v3361
      %v3450 = vpop.f32.mrb[0].mxu0
      %v3451 = vadd.f32 0.0, %v3450
      %v3452 = vpop.f32.mrb[0].mxu0
      %v3453 = vpop.f32.mrb[0].mxu0
      %v3454 = vadd.f32 0.0, %v3453
      %v3455 = vpop.f32.mrb[0].mxu0
      %3456 = vmatprep.mubr.bf16.mxu0 0
      %3457 = vmatmul.mubr.bf16.gmra.mrb[0].mxu0 %v3364
      %v3458 = vpop.f32.mrb[0].mxu0
      %v3459 = vadd.f32 0.0, %v3458
      %v3460 = vpop.f32.mrb[0].mxu0
      %v3461 = vpop.f32.mrb[0].mxu0
      %v3462 = vadd.f32 0.0, %v3461
      %v3463 = vpop.f32.mrb[0].mxu0
      %3464 = vmatprep.mubr.bf16.mxu0 0
      %3465 = vmatmul.mubr.bf16.gmra.mrb[0].mxu0 %v3367
      %v3466 = vpop.f32.mrb[0].mxu0
      %v3467 = vadd.f32 0.0, %v3466
      %v3468 = vpop.f32.mrb[0].mxu0
      %v3469 = vpop.f32.mrb[0].mxu0
      %v3470 = vadd.f32 0.0, %v3469
      %v3471 = vpop.f32.mrb[0].mxu0
      %3472 = vmatprep.mubr.bf16.mxu0 0
      %3473 = vmatmul.mubr.bf16.gmra.mrb[0].mxu0 %v3370
      %v3474 = vpop.f32.mrb[0].mxu0
      %v3475 = vadd.f32 0.0, %v3474
      %v3476 = vpop.f32.mrb[0].mxu0
      %v3477 = vpop.f32.mrb[0].mxu0
      %v3478 = vadd.f32 0.0, %v3477
      %v3479 = vpop.f32.mrb[0].mxu0
      %3480 = vmatprep.mubr.bf16.mxu0 0
      %3481 = vmatmul.mubr.bf16.gmra.mrb[0].mxu0 %v3373
      %v3482 = vpop.f32.mrb[0].mxu0
      %v3483 = vadd.f32 0.0, %v3482
      %v3484 = vpop.f32.mrb[0].mxu0
      %v3485 = vpop.f32.mrb[0].mxu0
      %v3486 = vadd.f32 0.0, %v3485
      %v3487 = vpop.f32.mrb[0].mxu0
      %3488 = vmatprep.mubr.bf16.mxu0 0
      %3489 = vmatmul.mubr.bf16.gmra.mrb[0].mxu0 %v3376
      %v3490 = vpop.f32.mrb[0].mxu0
      %v3491 = vadd.f32 0.0, %v3490
      %v3492 = vpop.f32.mrb[0].mxu0
      %v3493 = vpop.f32.mrb[0].mxu0
      %v3494 = vadd.f32 0.0, %v3493
      %v3495 = vpop.f32.mrb[0].mxu0
      %3496 = vmatprep.mubr.bf16.mxu0 0
      %3497 = vmatmul.mubr.bf16.gmra.mrb[0].mxu0 %v3379
      %v3498 = vpop.f32.mrb[0].mxu0
      %v3499 = vadd.f32 0.0, %v3498
      %v3500 = vpop.f32.mrb[0].mxu0
      %v3501 = vpop.f32.mrb[0].mxu0
      %v3502 = vadd.f32 0.0, %v3501
      %v3503 = vpop.f32.mrb[0].mxu0
      %3504 = vmatprep.mubr.bf16.mxu0 0
      %3505 = vmatmul.mubr.bf16.gmra.mrb[0].mxu0 %v3382
      %v3506 = vpop.f32.mrb[0].mxu0
      %v3507 = vadd.f32 0.0, %v3506
      %v3508 = vpop.f32.mrb[0].mxu0
      %v3509 = vpop.f32.mrb[0].mxu0
      %v3510 = vadd.f32 0.0, %v3509
      %v3511 = vpop.f32.mrb[0].mxu0
      %3512 = vmatprep.mubr.bf16.mxu0 0
      %3513 = vmatmul.mubr.bf16.gmra.mrb[0].mxu0 %v3385
      %v3514 = vpop.f32.mrb[0].mxu0
      %v3515 = vadd.f32 0.0, %v3514
      %v3516 = vpop.f32.mrb[0].mxu0
      %v3517 = vpop.f32.mrb[0].mxu0
      %v3518 = vadd.f32 0.0, %v3517
      %v3519 = vpop.f32.mrb[0].mxu0
      %3520 = vmatprep.mubr.bf16.mxu0 0
      %3521 = vmatmul.mubr.bf16.gmra.mrb[0].mxu0 %v3388
      %v3522 = vpop.f32.mrb[0].mxu0
      %v3523 = vadd.f32 0.0, %v3522
      %v3524 = vpop.f32.mrb[0].mxu0
      %v3525 = vpop.f32.mrb[0].mxu0
      %v3526 = vadd.f32 0.0, %v3525
      %v3527 = vpop.f32.mrb[0].mxu0
      %3528 = vmatprep.mubr.bf16.mxu0 0
      %3529 = vmatmul.mubr.bf16.gmra.mrb[0].mxu0 %v3391
      %v3530 = vpop.f32.mrb[0].mxu0
      %v3531 = vadd.f32 0.0, %v3530
      %v3532 = vpop.f32.mrb[0].mxu0
      %v3533 = vpop.f32.mrb[0].mxu0
      %v3534 = vadd.f32 0.0, %v3533
      %v3535 = vpop.f32.mrb[0].mxu0
      %3536 = vmatprep.mubr.bf16.mxu0 0
      %3537 = vmatmul.mubr.bf16.gmra.mrb[0].mxu0 %v3394
      %v3538 = vpop.f32.mrb[0].mxu0
      %v3539 = vadd.f32 0.0, %v3538
      %v3540 = vpop.f32.mrb[0].mxu0
      %v3541 = vpop.f32.mrb[0].mxu0
      %v3542 = vadd.f32 0.0, %v3541
      %v3543 = vpop.f32.mrb[0].mxu0
      %3544 = vmatprep.mubr.bf16.mxu0 0
      %3545 = vmatmul.mubr.bf16.gmra.mrb[0].mxu0 %v3397
      %v3546 = vpop.f32.mrb[0].mxu0
      %v3547 = vadd.f32 0.0, %v3546
      %v3548 = vpop.f32.mrb[0].mxu0
      %v3549 = vpop.f32.mrb[0].mxu0
      %v3550 = vadd.f32 0.0, %v3549
      %v3551 = vpop.f32.mrb[0].mxu0
      %3552 = vmatprep.mubr.bf16.mxu0 0
      %3553 = vmatmul.mubr.bf16.gmra.mrb[0].mxu0 %v3400
      %v3554 = vpop.f32.mrb[0].mxu0
      %v3555 = vadd.f32 0.0, %v3554
      %v3556 = vpop.f32.mrb[0].mxu0
      %v3557 = vpop.f32.mrb[0].mxu0
      %v3558 = vadd.f32 0.0, %v3557
      %v3559 = vpop.f32.mrb[0].mxu0
      %3560 = vmatprep.mubr.bf16.mxu0 0
      %3561 = vmatmul.mubr.bf16.gmra.mrb[0].mxu0 %v3403
      %v3562 = vpop.f32.mrb[0].mxu0
      %v3563 = vadd.f32 0.0, %v3562
      %v3564 = vpop.f32.mrb[0].mxu0
      %v3565 = vpop.f32.mrb[0].mxu0
      %v3566 = vadd.f32 0.0, %v3565
      %v3567 = vpop.f32.mrb[0].mxu0
      %3568 = vdwg.mxu0
      %v3569 = vld [vmem:[#allocation3] sm:$0xff]
      %v3570 = vld [vmem:[#allocation3 + $0x8] sm:$0xff]
      %v3571 = vld [vmem:[#allocation3 + $0x10] sm:$0xff]
      %v3572 = vld [vmem:[#allocation3 + $0x18] sm:$0xff]
      %v3573 = vld [vmem:[#allocation3 + $0x20] sm:$0xff]
      %v3574 = vld [vmem:[#allocation3 + $0x28] sm:$0xff]
      %v3575 = vld [vmem:[#allocation3 + $0x30] sm:$0xff]
      %v3576 = vld [vmem:[#allocation3 + $0x38] sm:$0xff]
      %v3577 = vld [vmem:[#allocation3 + $0x40] sm:$0xff]
      %v3578 = vld [vmem:[#allocation3 + $0x48] sm:$0xff]
      %v3579 = vld [vmem:[#allocation3 + $0x50] sm:$0xff]
      %v3580 = vld [vmem:[#allocation3 + $0x58] sm:$0xff]
      %v3581 = vld [vmem:[#allocation3 + $0x60] sm:$0xff]
      %v3582 = vld [vmem:[#allocation3 + $0x68] sm:$0xff]
      %v3583 = vld [vmem:[#allocation3 + $0x70] sm:$0xff]
      %v3584 = vld [vmem:[#allocation3 + $0x78] sm:$0xff]
      %v3585 = vld [vmem:[#allocation3 + $0x80] sm:$0xff]
      %v3586 = vld [vmem:[#allocation3 + $0x88] sm:$0xff]
      %v3587 = vld [vmem:[#allocation3 + $0x90] sm:$0xff]
      %v3588 = vld [vmem:[#allocation3 + $0x98] sm:$0xff]
      %v3589 = vld [vmem:[#allocation3 + $0xa0] sm:$0xff]
      %v3590 = vld [vmem:[#allocation3 + $0xa8] sm:$0xff]
      %v3591 = vld [vmem:[#allocation3 + $0xb0] sm:$0xff]
      %v3592 = vld [vmem:[#allocation3 + $0xb8] sm:$0xff]
      %v3593 = vld [vmem:[#allocation3 + $0xc0] sm:$0xff]
      %v3594 = vld [vmem:[#allocation3 + $0xc8] sm:$0xff]
      %v3595 = vld [vmem:[#allocation3 + $0xd0] sm:$0xff]
      %v3596 = vld [vmem:[#allocation3 + $0xd8] sm:$0xff]
      %v3597 = vld [vmem:[#allocation3 + $0xe0] sm:$0xff]
      %v3598 = vld [vmem:[#allocation3 + $0xe8] sm:$0xff]
      %v3599 = vld [vmem:[#allocation3 + $0xf0] sm:$0xff]
      %v3600 = vld [vmem:[#allocation3 + $0xf8] sm:$0xff]
      %v3601 = vadd.f32 %v3569, %v3443
      %v3602 = vadd.f32 %v3570, %v3446
      %v3603 = vadd.f32 %v3571, %v3451
      %v3604 = vadd.f32 %v3572, %v3454
      %v3605 = vadd.f32 %v3573, %v3459
      %v3606 = vadd.f32 %v3574, %v3462
      %v3607 = vadd.f32 %v3575, %v3467
      %v3608 = vadd.f32 %v3576, %v3470
      %v3609 = vadd.f32 %v3577, %v3475
      %v3610 = vadd.f32 %v3578, %v3478
      %v3611 = vadd.f32 %v3579, %v3483
      %v3612 = vadd.f32 %v3580, %v3486
      %v3613 = vadd.f32 %v3581, %v3491
      %v3614 = vadd.f32 %v3582, %v3494
      %v3615 = vadd.f32 %v3583, %v3499
      %v3616 = vadd.f32 %v3584, %v3502
      %v3617 = vadd.f32 %v3585, %v3507
      %v3618 = vadd.f32 %v3586, %v3510
      %v3619 = vadd.f32 %v3587, %v3515
      %v3620 = vadd.f32 %v3588, %v3518
      %v3621 = vadd.f32 %v3589, %v3523
      %v3622 = vadd.f32 %v3590, %v3526
      %v3623 = vadd.f32 %v3591, %v3531
      %v3624 = vadd.f32 %v3592, %v3534
      %v3625 = vadd.f32 %v3593, %v3539
      %v3626 = vadd.f32 %v3594, %v3542
      %v3627 = vadd.f32 %v3595, %v3547
      %v3628 = vadd.f32 %v3596, %v3550
      %v3629 = vadd.f32 %v3597, %v3555
      %v3630 = vadd.f32 %v3598, %v3558
      %v3631 = vadd.f32 %v3599, %v3563
      %v3632 = vadd.f32 %v3600, %v3566
      %3633 = vst.msk [vmem:[#allocation3] sm:$0xff] %vm481, %v3601
      %3634 = vst.msk [vmem:[#allocation3 + $0x8] sm:$0xff] %vm481, %v3602
      %3635 = vst.msk [vmem:[#allocation3 + $0x10] sm:$0xff] %vm481, %v3603
      %3636 = vst.msk [vmem:[#allocation3 + $0x18] sm:$0xff] %vm481, %v3604
      %3637 = vst.msk [vmem:[#allocation3 + $0x20] sm:$0xff] %vm481, %v3605
      %3638 = vst.msk [vmem:[#allocation3 + $0x28] sm:$0xff] %vm481, %v3606
      %3639 = vst.msk [vmem:[#allocation3 + $0x30] sm:$0xff] %vm481, %v3607
      %3640 = vst.msk [vmem:[#allocation3 + $0x38] sm:$0xff] %vm481, %v3608
      %3641 = vst.msk [vmem:[#allocation3 + $0x40] sm:$0xff] %vm481, %v3609
      %3642 = vst.msk [vmem:[#allocation3 + $0x48] sm:$0xff] %vm481, %v3610
      %3643 = vst.msk [vmem:[#allocation3 + $0x50] sm:$0xff] %vm481, %v3611
      %3644 = vst.msk [vmem:[#allocation3 + $0x58] sm:$0xff] %vm481, %v3612
      %3645 = vst.msk [vmem:[#allocation3 + $0x60] sm:$0xff] %vm481, %v3613
      %3646 = vst.msk [vmem:[#allocation3 + $0x68] sm:$0xff] %vm481, %v3614
      %3647 = vst.msk [vmem:[#allocation3 + $0x70] sm:$0xff] %vm481, %v3615
      %3648 = vst.msk [vmem:[#allocation3 + $0x78] sm:$0xff] %vm481, %v3616
      %3649 = vst.msk [vmem:[#allocation3 + $0x80] sm:$0xff] %vm481, %v3617
      %3650 = vst.msk [vmem:[#allocation3 + $0x88] sm:$0xff] %vm481, %v3618
      %3651 = vst.msk [vmem:[#allocation3 + $0x90] sm:$0xff] %vm481, %v3619
      %3652 = vst.msk [vmem:[#allocation3 + $0x98] sm:$0xff] %vm481, %v3620
      %3653 = vst.msk [vmem:[#allocation3 + $0xa0] sm:$0xff] %vm481, %v3621
      %3654 = vst.msk [vmem:[#allocation3 + $0xa8] sm:$0xff] %vm481, %v3622
      %3655 = vst.msk [vmem:[#allocation3 + $0xb0] sm:$0xff] %vm481, %v3623
      %3656 = vst.msk [vmem:[#allocation3 + $0xb8] sm:$0xff] %vm481, %v3624
      %3657 = vst.msk [vmem:[#allocation3 + $0xc0] sm:$0xff] %vm481, %v3625
      %3658 = vst.msk [vmem:[#allocation3 + $0xc8] sm:$0xff] %vm481, %v3626
      %3659 = vst.msk [vmem:[#allocation3 + $0xd0] sm:$0xff] %vm481, %v3627
      %3660 = vst.msk [vmem:[#allocation3 + $0xd8] sm:$0xff] %vm481, %v3628
      %3661 = vst.msk [vmem:[#allocation3 + $0xe0] sm:$0xff] %vm481, %v3629
      %3662 = vst.msk [vmem:[#allocation3 + $0xe8] sm:$0xff] %vm481, %v3630
      %3663 = vst.msk [vmem:[#allocation3 + $0xf0] sm:$0xff] %vm481, %v3631
      %3664 = vst.msk [vmem:[#allocation3 + $0xf8] sm:$0xff] %vm481, %v3632
      %v3665 = vld [vmem:[#allocation3] sm:$0xff]
      %v3666 = vld [vmem:[#allocation3 + $0x8] sm:$0xff]
      %v3667 = vld [vmem:[#allocation3 + $0x10] sm:$0xff]
      %v3668 = vld [vmem:[#allocation3 + $0x18] sm:$0xff]
      %v3669 = vld [vmem:[#allocation3 + $0x20] sm:$0xff]
      %v3670 = vld [vmem:[#allocation3 + $0x28] sm:$0xff]
      %v3671 = vld [vmem:[#allocation3 + $0x30] sm:$0xff]
      %v3672 = vld [vmem:[#allocation3 + $0x38] sm:$0xff]
      %v3673 = vld [vmem:[#allocation3 + $0x40] sm:$0xff]
      %v3674 = vld [vmem:[#allocation3 + $0x48] sm:$0xff]
      %v3675 = vld [vmem:[#allocation3 + $0x50] sm:$0xff]
      %v3676 = vld [vmem:[#allocation3 + $0x58] sm:$0xff]
      %v3677 = vld [vmem:[#allocation3 + $0x60] sm:$0xff]
      %v3678 = vld [vmem:[#allocation3 + $0x68] sm:$0xff]
      %v3679 = vld [vmem:[#allocation3 + $0x70] sm:$0xff]
      %v3680 = vld [vmem:[#allocation3 + $0x78] sm:$0xff]
      %v3681 = vld [vmem:[#allocation3 + $0x80] sm:$0xff]
      %v3682 = vld [vmem:[#allocation3 + $0x88] sm:$0xff]
      %v3683 = vld [vmem:[#allocation3 + $0x90] sm:$0xff]
      %v3684 = vld [vmem:[#allocation3 + $0x98] sm:$0xff]
      %v3685 = vld [vmem:[#allocation3 + $0xa0] sm:$0xff]
      %v3686 = vld [vmem:[#allocation3 + $0xa8] sm:$0xff]
      %v3687 = vld [vmem:[#allocation3 + $0xb0] sm:$0xff]
      %v3688 = vld [vmem:[#allocation3 + $0xb8] sm:$0xff]
      %v3689 = vld [vmem:[#allocation3 + $0xc0] sm:$0xff]
      %v3690 = vld [vmem:[#allocation3 + $0xc8] sm:$0xff]
      %v3691 = vld [vmem:[#allocation3 + $0xd0] sm:$0xff]
      %v3692 = vld [vmem:[#allocation3 + $0xd8] sm:$0xff]
      %v3693 = vld [vmem:[#allocation3 + $0xe0] sm:$0xff]
      %v3694 = vld [vmem:[#allocation3 + $0xe8] sm:$0xff]
      %v3695 = vld [vmem:[#allocation3 + $0xf0] sm:$0xff]
      %v3696 = vld [vmem:[#allocation3 + $0xf8] sm:$0xff]
      %v3697 = vpack.c.bf16 %v3666, %v3665
      %v3698 = vpack.c.bf16 %v3668, %v3667
      %v3699 = vpack.c.bf16 %v3670, %v3669
      %v3700 = vpack.c.bf16 %v3672, %v3671
      %v3701 = vpack.c.bf16 %v3674, %v3673
      %v3702 = vpack.c.bf16 %v3676, %v3675
      %v3703 = vpack.c.bf16 %v3678, %v3677
      %v3704 = vpack.c.bf16 %v3680, %v3679
      %v3705 = vpack.c.bf16 %v3682, %v3681
      %v3706 = vpack.c.bf16 %v3684, %v3683
      %v3707 = vpack.c.bf16 %v3686, %v3685
      %v3708 = vpack.c.bf16 %v3688, %v3687
      %v3709 = vpack.c.bf16 %v3690, %v3689
      %v3710 = vpack.c.bf16 %v3692, %v3691
      %v3711 = vpack.c.bf16 %v3694, %v3693
      %v3712 = vpack.c.bf16 %v3696, %v3695
      %v3729 = vunpack.c.l.b16 %v3697
      %v3730 = vunpack.c.h.b16 %v3697
      %v3731 = vunpack.c.l.b16 %v3698
      %v3732 = vunpack.c.h.b16 %v3698
      %v3733 = vunpack.c.l.b16 %v3699
      %v3734 = vunpack.c.h.b16 %v3699
      %v3735 = vunpack.c.l.b16 %v3700
      %v3736 = vunpack.c.h.b16 %v3700
      %v3737 = vunpack.c.l.b16 %v3701
      %v3738 = vunpack.c.h.b16 %v3701
      %v3739 = vunpack.c.l.b16 %v3702
      %v3740 = vunpack.c.h.b16 %v3702
      %v3741 = vunpack.c.l.b16 %v3703
      %v3742 = vunpack.c.h.b16 %v3703
      %v3743 = vunpack.c.l.b16 %v3704
      %v3744 = vunpack.c.h.b16 %v3704
      %v3745 = vunpack.c.l.b16 %v3705
      %v3746 = vunpack.c.h.b16 %v3705
      %v3747 = vunpack.c.l.b16 %v3706
      %v3748 = vunpack.c.h.b16 %v3706
      %v3749 = vunpack.c.l.b16 %v3707
      %v3750 = vunpack.c.h.b16 %v3707
      %v3751 = vunpack.c.l.b16 %v3708
      %v3752 = vunpack.c.h.b16 %v3708
      %v3753 = vunpack.c.l.b16 %v3709
      %v3754 = vunpack.c.h.b16 %v3709
      %v3755 = vunpack.c.l.b16 %v3710
      %v3756 = vunpack.c.h.b16 %v3710
      %v3757 = vunpack.c.l.b16 %v3711
      %v3758 = vunpack.c.h.b16 %v3711
      %v3759 = vunpack.c.l.b16 %v3712
      %v3760 = vunpack.c.h.b16 %v3712
      %v3761 = vpack.c.b16 %v3729, %v3729
      %v3762 = vpack.c.b16 %v3730, %v3730
      %v3763 = vpack.c.b16 %v3731, %v3731
      %v3764 = vpack.c.b16 %v3732, %v3732
      %v3765 = vpack.c.b16 %v3733, %v3733
      %v3766 = vpack.c.b16 %v3734, %v3734
      %v3767 = vpack.c.b16 %v3735, %v3735
      %v3768 = vpack.c.b16 %v3736, %v3736
      %v3769 = vpack.c.b16 %v3737, %v3737
      %v3770 = vpack.c.b16 %v3738, %v3738
      %v3771 = vpack.c.b16 %v3739, %v3739
      %v3772 = vpack.c.b16 %v3740, %v3740
      %v3773 = vpack.c.b16 %v3741, %v3741
      %v3774 = vpack.c.b16 %v3742, %v3742
      %v3775 = vpack.c.b16 %v3743, %v3743
      %v3776 = vpack.c.b16 %v3744, %v3744
      %v3777 = vpack.c.b16 %v3745, %v3745
      %v3778 = vpack.c.b16 %v3746, %v3746
      %v3779 = vpack.c.b16 %v3747, %v3747
      %v3780 = vpack.c.b16 %v3748, %v3748
      %v3781 = vpack.c.b16 %v3749, %v3749
      %v3782 = vpack.c.b16 %v3750, %v3750
      %v3783 = vpack.c.b16 %v3751, %v3751
      %v3784 = vpack.c.b16 %v3752, %v3752
      %v3785 = vpack.c.b16 %v3753, %v3753
      %v3786 = vpack.c.b16 %v3754, %v3754
      %v3787 = vpack.c.b16 %v3755, %v3755
      %v3788 = vpack.c.b16 %v3756, %v3756
      %v3789 = vpack.c.b16 %v3757, %v3757
      %v3790 = vpack.c.b16 %v3758, %v3758
      %v3791 = vpack.c.b16 %v3759, %v3759
      %v3792 = vpack.c.b16 %v3760, %v3760
      %vm3825 = vcmask 27648
      %3826 = vst.msk [vmem:[%s249] sm:$0xf] %vm3825, %v3761
      %3827 = vst.msk [vmem:[%s249 + $0x4] sm:$0xf] %vm3825, %v3762
      %3828 = vst.msk [vmem:[%s249 + $0x8] sm:$0xf] %vm3825, %v3763
      %3829 = vst.msk [vmem:[%s249 + $0xc] sm:$0xf] %vm3825, %v3764
      %3830 = vst.msk [vmem:[%s249 + $0x10] sm:$0xf] %vm3825, %v3765
      %3831 = vst.msk [vmem:[%s249 + $0x14] sm:$0xf] %vm3825, %v3766
      %3832 = vst.msk [vmem:[%s249 + $0x18] sm:$0xf] %vm3825, %v3767
      %3833 = vst.msk [vmem:[%s249 + $0x1c] sm:$0xf] %vm3825, %v3768
      %3834 = vst.msk [vmem:[%s249 + $0x20] sm:$0xf] %vm3825, %v3769
      %3835 = vst.msk [vmem:[%s249 + $0x24] sm:$0xf] %vm3825, %v3770
      %3836 = vst.msk [vmem:[%s249 + $0x28] sm:$0xf] %vm3825, %v3771
      %3837 = vst.msk [vmem:[%s249 + $0x2c] sm:$0xf] %vm3825, %v3772
      %3838 = vst.msk [vmem:[%s249 + $0x30] sm:$0xf] %vm3825, %v3773
      %3839 = vst.msk [vmem:[%s249 + $0x34] sm:$0xf] %vm3825, %v3774
      %3840 = vst.msk [vmem:[%s249 + $0x38] sm:$0xf] %vm3825, %v3775
      %3841 = vst.msk [vmem:[%s249 + $0x3c] sm:$0xf] %vm3825, %v3776
      %3842 = vst.msk [vmem:[%s249 + $0x40] sm:$0xf] %vm3825, %v3777
      %3843 = vst.msk [vmem:[%s249 + $0x44] sm:$0xf] %vm3825, %v3778
      %3844 = vst.msk [vmem:[%s249 + $0x48] sm:$0xf] %vm3825, %v3779
      %3845 = vst.msk [vmem:[%s249 + $0x4c] sm:$0xf] %vm3825, %v3780
      %3846 = vst.msk [vmem:[%s249 + $0x50] sm:$0xf] %vm3825, %v3781
      %3847 = vst.msk [vmem:[%s249 + $0x54] sm:$0xf] %vm3825, %v3782
      %3848 = vst.msk [vmem:[%s249 + $0x58] sm:$0xf] %vm3825, %v3783
      %3849 = vst.msk [vmem:[%s249 + $0x5c] sm:$0xf] %vm3825, %v3784
      %3850 = vst.msk [vmem:[%s249 + $0x60] sm:$0xf] %vm3825, %v3785
      %3851 = vst.msk [vmem:[%s249 + $0x64] sm:$0xf] %vm3825, %v3786
      %3852 = vst.msk [vmem:[%s249 + $0x68] sm:$0xf] %vm3825, %v3787
      %3853 = vst.msk [vmem:[%s249 + $0x6c] sm:$0xf] %vm3825, %v3788
      %3854 = vst.msk [vmem:[%s249 + $0x70] sm:$0xf] %vm3825, %v3789
      %3855 = vst.msk [vmem:[%s249 + $0x74] sm:$0xf] %vm3825, %v3790
      %3856 = vst.msk [vmem:[%s249 + $0x78] sm:$0xf] %vm3825, %v3791
      %3857 = vst.msk [vmem:[%s249 + $0x7c] sm:$0xf] %vm3825, %v3792
      %p3858 = scmp.eq.s32.totalorder %s18, 1
      // Predicated region
      $region45: #{bottleneck_forward.5} parent=39 // pred_check
        %p3859 = pneg %p251
      $region46: #{bottleneck_forward.5} parent=39 // pred_check_branch
        %3861 = sbr.rel (%p3859) target = $region48
      $region47: #{bottleneck_forward.5} parent=39 // pred_region
        %vm3862 = vcmask 24576
        %3863 = vst.msk [vmem:[#allocation4] sm:$0x1] %vm3862, 0.0
        %3864 = vst.msk [vmem:[#allocation5] sm:$0x1] %vm3862, 0.0
      $region48: #{bottleneck_forward.5} parent=39 // pred_fallthru
        _
      %v3865 = vld [vmem:[#allocation4] sm:$0x1]
      %v3866 = vsel %vm481, %v3665, 0.0
      %v3867 = vsel %vm481, %v3666, 0.0
      %v3868 = vadd.f32 %v3866, %v3867
      %v3869 = vsel %vm481, %v3667, 0.0
      %v3870 = vadd.f32 %v3868, %v3869
      %v3871 = vsel %vm481, %v3668, 0.0
      %v3872 = vadd.f32 %v3870, %v3871
      %v3873 = vsel %vm481, %v3669, 0.0
      %v3874 = vadd.f32 %v3872, %v3873
      %v3875 = vsel %vm481, %v3670, 0.0
      %v3876 = vadd.f32 %v3874, %v3875
      %v3877 = vsel %vm481, %v3671, 0.0
      %v3878 = vadd.f32 %v3876, %v3877
      %v3879 = vsel %vm481, %v3672, 0.0
      %v3880 = vadd.f32 %v3878, %v3879
      %v3881 = vsel %vm481, %v3673, 0.0
      %v3882 = vadd.f32 %v3880, %v3881
      %v3883 = vsel %vm481, %v3674, 0.0
      %v3884 = vadd.f32 %v3882, %v3883
      %v3885 = vsel %vm481, %v3675, 0.0
      %v3886 = vadd.f32 %v3884, %v3885
      %v3887 = vsel %vm481, %v3676, 0.0
      %v3888 = vadd.f32 %v3886, %v3887
      %v3889 = vsel %vm481, %v3677, 0.0
      %v3890 = vadd.f32 %v3888, %v3889
      %v3891 = vsel %vm481, %v3678, 0.0
      %v3892 = vadd.f32 %v3890, %v3891
      %v3893 = vsel %vm481, %v3679, 0.0
      %v3894 = vadd.f32 %v3892, %v3893
      %v3895 = vsel %vm481, %v3680, 0.0
      %v3896 = vadd.f32 %v3894, %v3895
      %v3897 = vsel %vm481, %v3681, 0.0
      %v3898 = vadd.f32 %v3896, %v3897
      %v3899 = vsel %vm481, %v3682, 0.0
      %v3900 = vadd.f32 %v3898, %v3899
      %v3901 = vsel %vm481, %v3683, 0.0
      %v3902 = vadd.f32 %v3900, %v3901
      %v3903 = vsel %vm481, %v3684, 0.0
      %v3904 = vadd.f32 %v3902, %v3903
      %v3905 = vsel %vm481, %v3685, 0.0
      %v3906 = vadd.f32 %v3904, %v3905
      %v3907 = vsel %vm481, %v3686, 0.0
      %v3908 = vadd.f32 %v3906, %v3907
      %v3909 = vsel %vm481, %v3687, 0.0
      %v3910 = vadd.f32 %v3908, %v3909
      %v3911 = vsel %vm481, %v3688, 0.0
      %v3912 = vadd.f32 %v3910, %v3911
      %v3913 = vsel %vm481, %v3689, 0.0
      %v3914 = vadd.f32 %v3912, %v3913
      %v3915 = vsel %vm481, %v3690, 0.0
      %v3916 = vadd.f32 %v3914, %v3915
      %v3917 = vsel %vm481, %v3691, 0.0
      %v3918 = vadd.f32 %v3916, %v3917
      %v3919 = vsel %vm481, %v3692, 0.0
      %v3920 = vadd.f32 %v3918, %v3919
      %v3921 = vsel %vm481, %v3693, 0.0
      %v3922 = vadd.f32 %v3920, %v3921
      %v3923 = vsel %vm481, %v3694, 0.0
      %v3924 = vadd.f32 %v3922, %v3923
      %v3925 = vsel %vm481, %v3695, 0.0
      %v3926 = vadd.f32 %v3924, %v3925
      %v3927 = vsel %vm481, %v3696, 0.0
      %v3928 = vadd.f32 %v3926, %v3927
      %v3929 = vrot.slane %v3928, 4
      %v3930 = vadd.f32 %v3928, %v3929
      %v3931 = vrot.slane %v3930, 2
      %v3932 = vadd.f32 %v3930, %v3931
      %v3933 = vrot.slane %v3932, 1
      %v3934 = vadd.f32 %v3932, %v3933
      %v3935 = vadd.f32 %v3865, %v3934
      %vm3936 = vcmask 24576
      %3937 = vst.msk [vmem:[#allocation4] sm:$0x1] %vm3936, %v3935
      %v3938 = vld [vmem:[#allocation5] sm:$0x1]
      %v3939 = vmul.f32 %v3665, %v3665
      %v3940 = vmul.f32 %v3666, %v3666
      %v3941 = vmul.f32 %v3667, %v3667
      %v3942 = vmul.f32 %v3668, %v3668
      %v3943 = vmul.f32 %v3669, %v3669
      %v3944 = vmul.f32 %v3670, %v3670
      %v3945 = vmul.f32 %v3671, %v3671
      %v3946 = vmul.f32 %v3672, %v3672
      %v3947 = vmul.f32 %v3673, %v3673
      %v3948 = vmul.f32 %v3674, %v3674
      %v3949 = vmul.f32 %v3675, %v3675
      %v3950 = vmul.f32 %v3676, %v3676
      %v3951 = vmul.f32 %v3677, %v3677
      %v3952 = vmul.f32 %v3678, %v3678
      %v3953 = vmul.f32 %v3679, %v3679
      %v3954 = vmul.f32 %v3680, %v3680
      %v3955 = vmul.f32 %v3681, %v3681
      %v3956 = vmul.f32 %v3682, %v3682
      %v3957 = vmul.f32 %v3683, %v3683
      %v3958 = vmul.f32 %v3684, %v3684
      %v3959 = vmul.f32 %v3685, %v3685
      %v3960 = vmul.f32 %v3686, %v3686
      %v3961 = vmul.f32 %v3687, %v3687
      %v3962 = vmul.f32 %v3688, %v3688
      %v3963 = vmul.f32 %v3689, %v3689
      %v3964 = vmul.f32 %v3690, %v3690
      %v3965 = vmul.f32 %v3691, %v3691
      %v3966 = vmul.f32 %v3692, %v3692
      %v3967 = vmul.f32 %v3693, %v3693
      %v3968 = vmul.f32 %v3694, %v3694
      %v3969 = vmul.f32 %v3695, %v3695
      %v3970 = vmul.f32 %v3696, %v3696
      %v3971 = vsel %vm481, %v3939, 0.0
      %v3972 = vsel %vm481, %v3940, 0.0
      %v3973 = vadd.f32 %v3971, %v3972
      %v3974 = vsel %vm481, %v3941, 0.0
      %v3975 = vadd.f32 %v3973, %v3974
      %v3976 = vsel %vm481, %v3942, 0.0
      %v3977 = vadd.f32 %v3975, %v3976
      %v3978 = vsel %vm481, %v3943, 0.0
      %v3979 = vadd.f32 %v3977, %v3978
      %v3980 = vsel %vm481, %v3944, 0.0
      %v3981 = vadd.f32 %v3979, %v3980
      %v3982 = vsel %vm481, %v3945, 0.0
      %v3983 = vadd.f32 %v3981, %v3982
      %v3984 = vsel %vm481, %v3946, 0.0
      %v3985 = vadd.f32 %v3983, %v3984
      %v3986 = vsel %vm481, %v3947, 0.0
      %v3987 = vadd.f32 %v3985, %v3986
      %v3988 = vsel %vm481, %v3948, 0.0
      %v3989 = vadd.f32 %v3987, %v3988
      %v3990 = vsel %vm481, %v3949, 0.0
      %v3991 = vadd.f32 %v3989, %v3990
      %v3992 = vsel %vm481, %v3950, 0.0
      %v3993 = vadd.f32 %v3991, %v3992
      %v3994 = vsel %vm481, %v3951, 0.0
      %v3995 = vadd.f32 %v3993, %v3994
      %v3996 = vsel %vm481, %v3952, 0.0
      %v3997 = vadd.f32 %v3995, %v3996
      %v3998 = vsel %vm481, %v3953, 0.0
      %v3999 = vadd.f32 %v3997, %v3998
      %v4000 = vsel %vm481, %v3954, 0.0
      %v4001 = vadd.f32 %v3999, %v4000
      %v4002 = vsel %vm481, %v3955, 0.0
      %v4003 = vadd.f32 %v4001, %v4002
      %v4004 = vsel %vm481, %v3956, 0.0
      %v4005 = vadd.f32 %v4003, %v4004
      %v4006 = vsel %vm481, %v3957, 0.0
      %v4007 = vadd.f32 %v4005, %v4006
      %v4008 = vsel %vm481, %v3958, 0.0
      %v4009 = vadd.f32 %v4007, %v4008
      %v4010 = vsel %vm481, %v3959, 0.0
      %v4011 = vadd.f32 %v4009, %v4010
      %v4012 = vsel %vm481, %v3960, 0.0
      %v4013 = vadd.f32 %v4011, %v4012
      %v4014 = vsel %vm481, %v3961, 0.0
      %v4015 = vadd.f32 %v4013, %v4014
      %v4016 = vsel %vm481, %v3962, 0.0
      %v4017 = vadd.f32 %v4015, %v4016
      %v4018 = vsel %vm481, %v3963, 0.0
      %v4019 = vadd.f32 %v4017, %v4018
      %v4020 = vsel %vm481, %v3964, 0.0
      %v4021 = vadd.f32 %v4019, %v4020
      %v4022 = vsel %vm481, %v3965, 0.0
      %v4023 = vadd.f32 %v4021, %v4022
      %v4024 = vsel %vm481, %v3966, 0.0
      %v4025 = vadd.f32 %v4023, %v4024
      %v4026 = vsel %vm481, %v3967, 0.0
      %v4027 = vadd.f32 %v4025, %v4026
      %v4028 = vsel %vm481, %v3968, 0.0
      %v4029 = vadd.f32 %v4027, %v4028
      %v4030 = vsel %vm481, %v3969, 0.0
      %v4031 = vadd.f32 %v4029, %v4030
      %v4032 = vsel %vm481, %v3970, 0.0
      %v4033 = vadd.f32 %v4031, %v4032
      %v4034 = vrot.slane %v4033, 4
      %v4035 = vadd.f32 %v4033, %v4034
      %v4036 = vrot.slane %v4035, 2
      %v4037 = vadd.f32 %v4035, %v4036
      %v4038 = vrot.slane %v4037, 1
      %v4039 = vadd.f32 %v4037, %v4038
      %v4040 = vadd.f32 %v3938, %v4039
      %4041 = vst.msk [vmem:[#allocation5] sm:$0x1] %vm3936, %v4040
      // Predicated region
      $region49: #{bottleneck_forward.5} parent=39 // pred_check
        %p4042 = pneg %p3858
      $region50: #{bottleneck_forward.5} parent=39 // pred_check_branch
        %4044 = sbr.rel (%p4042) target = $region52
      $region51: #{bottleneck_forward.5} parent=39 // pred_region
        %v4045 = vld [vmem:[#allocation4] sm:$0x1]
        %v4046 = vmul.f32 %v4045, 0.001953125
        %v4047 = vld [vmem:[#allocation5] sm:$0x1]
        %v4048 = vmul.f32 %v4047, 0.001953125
        %v4049 = vmul.f32 %v4046, %v4046
        %v4050 = vsub.f32 %v4048, %v4049
        %v4051 = vld [vmem:[%s3] sm:$0x1]
        %v4052 = vadd.f32 %v4050, 1e-05
        %v4053 = vrsqrt.pop %v4052
        %v4054 = vmul.f32 %v4051, %v4053
        %v4055 = vld [vmem:[%s4] sm:$0x1]
        %v4056 = vmul.f32 %v4046, %v4054
        %v4057 = vsub.f32 %v4055, %v4056
        %v4059 = vlaneseq
        %v4060 = vshrl.u32 %v4059, 7
        %v4061 = vsub.s32 0, %v4060
        %v4062 = vrot.slane %v4057, %v4061
        %vm4064 = vcmask 1040384
        %v4065 = vsel %vm4064, %v4054, %v4062
        %vm4066 = vcmask 25600
        %4067 = vst.msk [vmem:[%s6] sm:$0x3] %vm4066, %v4065
      $region52: #{bottleneck_forward.5} parent=39 // pred_fallthru
        _
      %p4068 = scmp.lt.s32.totalorder %s18, 1
      %s4069 = scalar_select %p4068, %s18, 1
      %s4070 = smul.addr %s4069, 32
      %s4071 = smul.addr %s4070, 4
      %s4072 = scalar_lea.vmem %s5, %s4071
      // Predicated region
      $region53: #{bottleneck_forward.5} parent=39 // pred_check
        %p4073 = pneg %p146
      $region54: #{bottleneck_forward.5} parent=39 // pred_check_branch
        %4075 = sbr.rel (%p4073) target = $region56
      $region55: #{bottleneck_forward.5} parent=39 // pred_region
        _
      $region56: #{bottleneck_forward.5} parent=39 // pred_fallthru
        _
      // Predicated region
      $region57: #{bottleneck_forward.5} parent=39 // pred_check
        %p4076 = pneg %p167
      $region58: #{bottleneck_forward.5} parent=39 // pred_check_branch
        %4078 = sbr.rel (%p4076) target = $region60
      $region59: #{bottleneck_forward.5} parent=39 // pred_region
        _
      $region60: #{bottleneck_forward.5} parent=39 // pred_fallthru
        _
      // Predicated region
      $region61: #{bottleneck_forward.5} parent=39 // pred_check
        %p4079 = pneg %p167
      $region62: #{bottleneck_forward.5} parent=39 // pred_check_branch
        %4081 = sbr.rel (%p4079) target = $region64
      $region63: #{bottleneck_forward.5} parent=39 // pred_region
        _
      $region64: #{bottleneck_forward.5} parent=39 // pred_fallthru
        _
    $region40: #{bottleneck_forward.5} parent=5 // pred_fallthru
      _
    %p4082 = scmp.le.s32.totalorder 2, %s13
    // Predicated region
    $region65: #{bottleneck_forward.5} parent=5 // pred_check
      %p4083 = pneg %p4082
    $region66: #{bottleneck_forward.5} parent=5 // pred_check_branch
      %4085 = sbr.rel (%p4083) target = $region68
    $region67: #{bottleneck_forward.5} parent=5 // pred_region
      %s4086 = ssub.s32 %s13, 2
      // Predicated region
      $region69: #{bottleneck_forward.5} parent=67 // pred_check
        %p4087 = pneg %p152
      $region70: #{bottleneck_forward.5} parent=67 // pred_check_branch
        %4089 = sbr.rel (%p4087) target = $region72
      $region71: #{bottleneck_forward.5} parent=67 // pred_region
        %p4090 = scmp.lt.s32.totalorder %s19, 1
        %s4091 = scalar_select %p4090, %s19, 1
        %s4092 = smul.addr %s4091, 32
        %s4093 = smul.addr %s4092, 4
        %s4094 = scalar_lea.vmem %s5, %s4093
      $region72: #{bottleneck_forward.5} parent=67 // pred_fallthru
        _
    $region68: #{bottleneck_forward.5} parent=5 // pred_fallthru
      _
  $region6: #{bottleneck_forward.5} parent=0 // loop_footer
    %s17 = sadd.s32 1, %s13
  $region7: #{bottleneck_forward.5} parent=0 // loop_footer_branch
    %12 = sbr.rel target = $region3
  $region8: #{bottleneck_forward.5} parent=0 // loop_exit
    _

</llo_original>
